<compile_context>
chip_gen: v5e
topology: v5e:2x2
jax: 0.10.0
libtpu: 0.0.40
codegen_flags: <defaults>
</compile_context>

<pallas_src>
import functools

import jax
import jax.numpy as jnp
from jax.experimental import pallas as pl
from jax.experimental.pallas import tpu as pltpu


def _round_up(n, m):
    return (n + m - 1) // m * m


# ----------------------------------------------------------------------------
# Pallas kernel: K-packed GEMM + bias (+ residual) (+ ReLU), 1..2 output heads.
# All heads share the same (tm, K) bf16 patch LHS; each head does one MXU dot
# against its resident (K, C) weight and writes its own output tile.
# ----------------------------------------------------------------------------
def _conv_heads_kernel(*refs, n_heads, relus, has_residual):
    x_ref = refs[0]
    pos = 1
    w_refs, b_refs = [], []
    for _ in range(n_heads):
        w_refs.append(refs[pos])
        b_refs.append(refs[pos + 1])
        pos += 2
    r_ref = None
    if has_residual:
        r_ref = refs[pos]
        pos += 1
    o_refs = refs[pos:pos + n_heads]

    lhs = x_ref[...]                                   # (tm, K) bf16, read once
    for h in range(n_heads):
        y = jnp.dot(lhs, w_refs[h][...], preferred_element_type=jnp.float32)
        y = y + b_refs[h][...]                         # bias (BN folded in w)
        if has_residual and h == 0:
            y = y + r_ref[...]                         # identity add (f32)
        if relus[h]:
            y = jnp.maximum(y, 0.0)
        o_refs[h][...] = y.astype(o_refs[h].dtype)


def _pick_tm(m_rows, cout_total):
    """Row tile: big enough to keep the grid short (per-step overhead ~0.35us),
    small enough that the f32 accumulator tile stays ~<=128 KiB (vreg/VMEM
    pressure at Cout=128..256), and split in two when there is enough work so
    v7x's two TensorCores both get a 'parallel' grid step."""
    cap = max(128, min(4096, (128 * 1024) // (4 * max(cout_total, 1))))
    if m_rows >= 1024:
        cap = min(cap, _round_up((m_rows + 1) // 2, 8))
    return max(8, _round_up(min(m_rows, cap), 8))


# ----------------------------------------------------------------------------
# Conv (+folded BN +ReLU +residual) wrapper: bf16 patch slab built once at the
# output positions; all compute (K-packed matmul, epilogue) in one pallas_call.
# ----------------------------------------------------------------------------
def fused_conv(x, heads, *, stride, residual=None):
    """x: (N,H,W,Cin) f32 NHWC.
    heads: list of (w, bias, relu) with w: (kh,kw,Cin,C) f32 (BN scale folded),
           bias: (C,) f32.  Head 0 optionally gets `residual` added pre-ReLU.
    Returns a list of (N,Ho,Wo,C) f32 outputs (pad=(k-1)//2, given stride)."""
    N, H, W, Cin = x.shape
    kh, kw = heads[0][0].shape[:2]
    pad = (kh - 1) // 2
    Ho = (H + 2 * pad - kh) // stride + 1
    Wo = (W + 2 * pad - kw) // stride + 1
    M = N * Ho * Wo
    K = kh * kw * Cin

    # bf16 patch slab at output positions only (single pad+slice+concat fusion).
    xp = jnp.pad(x, ((0, 0), (pad, pad), (pad, pad), (0, 0))).astype(jnp.bfloat16)
    taps = [
        xp[:, dy:dy + (Ho - 1) * stride + 1:stride,
              dx:dx + (Wo - 1) * stride + 1:stride, :]
        for dy in range(kh) for dx in range(kw)
    ]
    lhs = jnp.concatenate(taps, axis=-1).reshape(M, K)

    cout_total = sum(int(w.shape[-1]) for (w, _, _) in heads)
    tm = _pick_tm(M, cout_total)
    Mp = _round_up(M, tm)
    grid = Mp // tm
    if Mp != M:
        lhs = jnp.pad(lhs, ((0, Mp - M), (0, 0)))

    args = [lhs]
    in_specs = [pl.BlockSpec((tm, K), lambda i: (i, 0))]
    relus, out_shapes, out_specs = [], [], []
    for (w, b, relu) in heads:
        C = int(w.shape[-1])
        args.append(w.reshape(K, C).astype(jnp.bfloat16))       # resident weights
        in_specs.append(pl.BlockSpec((K, C), lambda i: (0, 0)))
        args.append(b.reshape(1, C).astype(jnp.float32))         # resident bias
        in_specs.append(pl.BlockSpec((1, C), lambda i: (0, 0)))
        relus.append(bool(relu))
        out_shapes.append(jax.ShapeDtypeStruct((Mp, C), jnp.float32))
        out_specs.append(pl.BlockSpec((tm, C), lambda i: (i, 0)))

    has_residual = residual is not None
    if has_residual:
        C0 = int(heads[0][0].shape[-1])
        assert residual.shape == (N, Ho, Wo, C0)
        r = residual.astype(jnp.float32).reshape(M, C0)          # free reshape
        if Mp != M:
            r = jnp.pad(r, ((0, Mp - M), (0, 0)))
        args.append(r)
        in_specs.append(pl.BlockSpec((tm, C0), lambda i: (i, 0)))

    kernel = functools.partial(
        _conv_heads_kernel, n_heads=len(heads), relus=tuple(relus),
        has_residual=has_residual)

    # VMEM: LHS tile + resident weights/bias + residual/output tiles, with a
    # factor for double buffering + headroom (well under v7x's 64 MiB).
    per_step = (tm * K * 2
                + sum(K * int(w.shape[-1]) * 2 + int(w.shape[-1]) * 4
                      for (w, _, _) in heads)
                + (tm * int(heads[0][0].shape[-1]) * 4 if has_residual else 0)
                + tm * cout_total * 4)
    vmem_limit = int(min(56 * 2 ** 20, max(16 * 2 ** 20, 4 * per_step)))

    outs = pl.pallas_call(
        kernel,
        out_shape=tuple(out_shapes),
        grid=(grid,),
        in_specs=in_specs,
        out_specs=tuple(out_specs),
        compiler_params=pltpu.CompilerParams(
            dimension_semantics=("parallel",),
            vmem_limit_bytes=vmem_limit),
    )(*args)

    results = []
    for (w, _, _), o in zip(heads, outs):
        C = int(w.shape[-1])
        if Mp != M:
            o = o[:M]
        results.append(o.reshape(N, Ho, Wo, C))
    return results


def conv_bn_act(x, w, bn, *, stride, relu=True, residual=None):
    """Conv + eval-mode BN (scale folded into w, bias kept) + optional res/ReLU."""
    scale, bias = bn
    return fused_conv(x, [(w * scale, bias, relu)], stride=stride,
                      residual=residual)[0]


def conv1_with_downsample(x, blk, stride):
    """conv1(3x3, s)+BN+ReLU and the 1x1 downsample+BN merged into ONE
    pallas_call with TWO outputs (no post-hoc column slicing).  The 1x1
    downsample is embedded as the center tap of the 3x3 K-space."""
    scale1, bias1 = blk["bn1"]
    sds, bds = blk["ds_bn"]
    w1 = blk["conv1_w"] * scale1                        # (3,3,Cin,C1)
    wds = blk["ds_w"][0, 0] * sds                       # (Cin,Cds)
    wds_taps = jnp.zeros((3, 3) + wds.shape, w1.dtype).at[1, 1].set(wds)
    out1, identity = fused_conv(
        x, [(w1, bias1, True), (wds_taps, bds, False)], stride=stride)
    return out1, identity


# ----------------------------------------------------------------------------
# Deterministic parameter construction (mirrors ResNet_arch.__init__ shape logic)
# params: arrays only (jit-traced).  plan: static strides / downsample flags.
# ----------------------------------------------------------------------------
def _init_conv(key, kh, kw, cin, cout):
    fan = kh * kw * cin
    return jax.random.normal(key, (kh, kw, cin, cout), jnp.float32) * (2.0 / fan) ** 0.5


def _init_bn(key, c, eps=1e-5):
    k1, k2, k3, k4 = jax.random.split(key, 4)
    gamma = jax.random.uniform(k1, (c,), jnp.float32, 0.5, 1.5)
    beta = jax.random.normal(k2, (c,), jnp.float32) * 0.1
    mean = jax.random.normal(k3, (c,), jnp.float32) * 0.1
    var = jax.random.uniform(k4, (c,), jnp.float32, 0.5, 1.5)
    scale = gamma / jnp.sqrt(var + eps)
    bias = beta - mean * scale
    return scale, bias


def build_resnet(key, arch, base_channel, strides, expansion=1):
    arch_list = [[int(a) for a in s] for s in arch.split("-")]
    keys = iter(jax.random.split(key, 512))
    params = {
        "conv1_w": _init_conv(next(keys), 3, 3, 3, base_channel // 2),
        "bn1": _init_bn(next(keys), base_channel // 2),
        "conv2_w": _init_conv(next(keys), 3, 3, base_channel // 2, base_channel),
        "bn2": _init_bn(next(keys), base_channel),
    }
    stages, plan = [], []
    total_expand = 0
    inplanes = planes = base_channel
    for i, stage_arch in enumerate(arch_list):
        total_expand += stage_arch.count(2)
        stage_stride = strides[i]
        blocks, bplans = [], []
        p = planes
        inp = inplanes
        for j, layer_type in enumerate(stage_arch):
            s = stage_stride if j == 0 else 1
            if layer_type == 2:
                p *= 2
            blk = {
                "conv1_w": _init_conv(next(keys), 3, 3, inp, p),
                "bn1": _init_bn(next(keys), p),
                "conv2_w": _init_conv(next(keys), 3, 3, p, p * expansion),
                "bn2": _init_bn(next(keys), p * expansion),
            }
            has_ds = (s != 1) or (inp != p * expansion)
            if has_ds:
                blk["ds_w"] = _init_conv(next(keys), 1, 1, inp, p * expansion)
                blk["ds_bn"] = _init_bn(next(keys), p * expansion)
            blocks.append(blk)
            bplans.append({"stride": s, "has_ds": has_ds})
            inp = p * expansion
        stages.append(blocks)
        plan.append(bplans)
        planes = base_channel * 2 ** total_expand
        inplanes = planes * expansion
    params["stages"] = stages
    return params, plan


# ----------------------------------------------------------------------------
# Forward: matches ResNet_arch.forward — returns the 4 stage outputs ("blocks")
# ----------------------------------------------------------------------------
def make_forward(plan):
    def forward(params, x_nchw):
        x = jnp.transpose(x_nchw, (0, 2, 3, 1)).astype(jnp.float32)  # NCHW->NHWC
        x = conv_bn_act(x, params["conv1_w"], params["bn1"], stride=2)
        x = conv_bn_act(x, params["conv2_w"], params["bn2"], stride=2)

        stage_outputs = []
        for stage_params, stage_plan in zip(params["stages"], plan):
            for blk, bplan in zip(stage_params, stage_plan):
                s = bplan["stride"]
                if bplan["has_ds"]:
                    out1, identity = conv1_with_downsample(x, blk, s)
                else:
                    identity = x
                    out1 = conv_bn_act(x, blk["conv1_w"], blk["bn1"], stride=s)
                # conv2 + BN + residual add + ReLU fused into one pallas_call
                x = conv_bn_act(out1, blk["conv2_w"], blk["bn2"], stride=1,
                                residual=identity)
            stage_outputs.append(jnp.transpose(x, (0, 3, 1, 2)))  # back to NCHW
        return stage_outputs
    return forward


if __name__ == "__main__":
    key = jax.random.PRNGKey(0)
    pkey, xkey = jax.random.split(key)

    arch = "11-21-21-21"
    base_channel = 16
    strides = [1, 2, 2, 2]

    params, plan = build_resnet(pkey, arch, base_channel, strides)
    x = jax.random.normal(xkey, (2, 3, 64, 64), jnp.float32)  # NCHW, small

    fwd = jax.jit(make_forward(plan))
    outs = fwd(params, x)
    for o in outs:
        jax.block_until_ready(o)

    expected = [(2, 16, 16, 16), (2, 32, 8, 8), (2, 64, 4, 4), (2, 128, 2, 2)]
    assert [tuple(o.shape) for o in outs] == expected, \
        [tuple(o.shape) for o in outs]
    assert all(bool(jnp.isfinite(o).all()) for o in outs)

    print("KERNEL_OK")
</pallas_src>

<mosaic_0001>
module attributes {stable_mosaic.version = 11 : i64} {
  func.func @_conv_heads_kernel(%arg0: i32, %arg1: memref<1024x27xbf16, #tpu.memory_space<vmem>>, %arg2: memref<27x8xbf16, #tpu.memory_space<vmem>>, %arg3: memref<1x8xf32, #tpu.memory_space<vmem>>, %arg4: memref<1024x8xf32, #tpu.memory_space<vmem>>) attributes {dimension_semantics = [#tpu.dimension_semantics<parallel>], iteration_bounds = array<i64: 2>, scalar_prefetch = 0 : i64, scratch_operands = 0 : i64, tpu.core_type = #tpu.core_type<tc>, window_params = [{transform_indices = @transform_0, window_bounds = array<i64: 1024, 27>}, {pipeline_mode = #tpu.pipeline_mode<synchronous>, transform_indices = @transform_1, window_bounds = array<i64: 27, 8>}, {pipeline_mode = #tpu.pipeline_mode<synchronous>, transform_indices = @transform_2, window_bounds = array<i64: 1, 8>}, {transform_indices = @transform_3, window_bounds = array<i64: 1024, 8>}]} {
    %c0 = arith.constant 0 : index
    %c0_0 = arith.constant 0 : index
    %0 = vector.load %arg1[%c0, %c0_0] : memref<1024x27xbf16, #tpu.memory_space<vmem>>, vector<1024x27xbf16>
    %c0_1 = arith.constant 0 : index
    %c0_2 = arith.constant 0 : index
    %1 = vector.load %arg2[%c0_1, %c0_2] : memref<27x8xbf16, #tpu.memory_space<vmem>>, vector<27x8xbf16>
    %cst = arith.constant dense<0.000000e+00> : vector<1024x8xf32>
    %2 = tpu.matmul %0, %1, %cst {dimension_numbers = #tpu.dot_dimension_numbers<[1], [0], [0], [1], [0, 0, 1, 1], [], []>} : vector<1024x27xbf16>, vector<27x8xbf16>, vector<1024x8xf32> -> vector<1024x8xf32>
    %c0_3 = arith.constant 0 : index
    %c0_4 = arith.constant 0 : index
    %3 = vector.load %arg3[%c0_3, %c0_4] : memref<1x8xf32, #tpu.memory_space<vmem>>, vector<1x8xf32>
    %4 = vector.broadcast %3 : vector<1x8xf32> to vector<1024x8xf32>
    %5 = arith.addf %2, %4 : vector<1024x8xf32>
    %cst_5 = arith.constant 0.000000e+00 : f32
    %6 = vector.broadcast %cst_5 : f32 to vector<1024x8xf32>
    %7 = arith.maximumf %5, %6 : vector<1024x8xf32>
    %c0_6 = arith.constant 0 : index
    %c0_7 = arith.constant 0 : index
    %8 = vector.load %arg4[%c0_6, %c0_7] : memref<1024x8xf32, #tpu.memory_space<vmem>>, vector<1024x8xf32>
    tpu.vector_store %arg4[%c0_6, %c0_7], %7 {strides = array<i32>} : memref<1024x8xf32, #tpu.memory_space<vmem>>, vector<1024x8xf32>,
    return
  }
  func.func @transform_0(%arg0: i32) -> (i32, i32) {
    %c0_i32 = arith.constant 0 : i32
    %c0_i32_0 = arith.constant 0 : i32
    return %arg0, %c0_i32 : i32, i32
  }
  func.func @transform_1(%arg0: i32) -> (i32, i32) {
    %c0_i32 = arith.constant 0 : i32
    %c0_i32_0 = arith.constant 0 : i32
    %c0_i32_1 = arith.constant 0 : i32
    return %c0_i32, %c0_i32_0 : i32, i32
  }
  func.func @transform_2(%arg0: i32) -> (i32, i32) {
    %c0_i32 = arith.constant 0 : i32
    %c0_i32_0 = arith.constant 0 : i32
    %c0_i32_1 = arith.constant 0 : i32
    return %c0_i32, %c0_i32_0 : i32, i32
  }
  func.func @transform_3(%arg0: i32) -> (i32, i32) {
    %c0_i32 = arith.constant 0 : i32
    %c0_i32_0 = arith.constant 0 : i32
    return %arg0, %c0_i32 : i32, i32
  }
}

module attributes {stable_mosaic.version = 11 : i64} {
  func.func @_conv_heads_kernel(%arg0: i32, %arg1: memref<512x72xbf16, #tpu.memory_space<vmem>>, %arg2: memref<72x16xbf16, #tpu.memory_space<vmem>>, %arg3: memref<1x16xf32, #tpu.memory_space<vmem>>, %arg4: memref<512x16xf32, #tpu.memory_space<vmem>>) attributes {dimension_semantics = [#tpu.dimension_semantics<parallel>], iteration_bounds = array<i64: 1>, scalar_prefetch = 0 : i64, scratch_operands = 0 : i64, tpu.core_type = #tpu.core_type<tc>, window_params = [{transform_indices = @transform_0, window_bounds = array<i64: 512, 72>}, {pipeline_mode = #tpu.pipeline_mode<synchronous>, transform_indices = @transform_1, window_bounds = array<i64: 72, 16>}, {pipeline_mode = #tpu.pipeline_mode<synchronous>, transform_indices = @transform_2, window_bounds = array<i64: 1, 16>}, {transform_indices = @transform_3, window_bounds = array<i64: 512, 16>}]} {
    %c0 = arith.constant 0 : index
    %c0_0 = arith.constant 0 : index
    %0 = vector.load %arg1[%c0, %c0_0] : memref<512x72xbf16, #tpu.memory_space<vmem>>, vector<512x72xbf16>
    %c0_1 = arith.constant 0 : index
    %c0_2 = arith.constant 0 : index
    %1 = vector.load %arg2[%c0_1, %c0_2] : memref<72x16xbf16, #tpu.memory_space<vmem>>, vector<72x16xbf16>
    %cst = arith.constant dense<0.000000e+00> : vector<512x16xf32>
    %2 = tpu.matmul %0, %1, %cst {dimension_numbers = #tpu.dot_dimension_numbers<[1], [0], [0], [1], [0, 0, 1, 1], [], []>} : vector<512x72xbf16>, vector<72x16xbf16>, vector<512x16xf32> -> vector<512x16xf32>
    %c0_3 = arith.constant 0 : index
    %c0_4 = arith.constant 0 : index
    %3 = vector.load %arg3[%c0_3, %c0_4] : memref<1x16xf32, #tpu.memory_space<vmem>>, vector<1x16xf32>
    %4 = vector.broadcast %3 : vector<1x16xf32> to vector<512x16xf32>
    %5 = arith.addf %2, %4 : vector<512x16xf32>
    %cst_5 = arith.constant 0.000000e+00 : f32
    %6 = vector.broadcast %cst_5 : f32 to vector<512x16xf32>
    %7 = arith.maximumf %5, %6 : vector<512x16xf32>
    %c0_6 = arith.constant 0 : index
    %c0_7 = arith.constant 0 : index
    %8 = vector.load %arg4[%c0_6, %c0_7] : memref<512x16xf32, #tpu.memory_space<vmem>>, vector<512x16xf32>
    tpu.vector_store %arg4[%c0_6, %c0_7], %7 {strides = array<i32>} : memref<512x16xf32, #tpu.memory_space<vmem>>, vector<512x16xf32>,
    return
  }
  func.func @transform_0(%arg0: i32) -> (i32, i32) {
    %c0_i32 = arith.constant 0 : i32
    %c0_i32_0 = arith.constant 0 : i32
    return %arg0, %c0_i32 : i32, i32
  }
  func.func @transform_1(%arg0: i32) -> (i32, i32) {
    %c0_i32 = arith.constant 0 : i32
    %c0_i32_0 = arith.constant 0 : i32
    %c0_i32_1 = arith.constant 0 : i32
    return %c0_i32, %c0_i32_0 : i32, i32
  }
  func.func @transform_2(%arg0: i32) -> (i32, i32) {
    %c0_i32 = arith.constant 0 : i32
    %c0_i32_0 = arith.constant 0 : i32
    %c0_i32_1 = arith.constant 0 : i32
    return %c0_i32, %c0_i32_0 : i32, i32
  }
  func.func @transform_3(%arg0: i32) -> (i32, i32) {
    %c0_i32 = arith.constant 0 : i32
    %c0_i32_0 = arith.constant 0 : i32
    return %arg0, %c0_i32 : i32, i32
  }
}

module attributes {stable_mosaic.version = 11 : i64} {
  func.func @_conv_heads_kernel(%arg0: i32, %arg1: memref<512x144xbf16, #tpu.memory_space<vmem>>, %arg2: memref<144x16xbf16, #tpu.memory_space<vmem>>, %arg3: memref<1x16xf32, #tpu.memory_space<vmem>>, %arg4: memref<512x16xf32, #tpu.memory_space<vmem>>) attributes {dimension_semantics = [#tpu.dimension_semantics<parallel>], iteration_bounds = array<i64: 1>, scalar_prefetch = 0 : i64, scratch_operands = 0 : i64, tpu.core_type = #tpu.core_type<tc>, window_params = [{transform_indices = @transform_0, window_bounds = array<i64: 512, 144>}, {pipeline_mode = #tpu.pipeline_mode<synchronous>, transform_indices = @transform_1, window_bounds = array<i64: 144, 16>}, {pipeline_mode = #tpu.pipeline_mode<synchronous>, transform_indices = @transform_2, window_bounds = array<i64: 1, 16>}, {transform_indices = @transform_3, window_bounds = array<i64: 512, 16>}]} {
    %c0 = arith.constant 0 : index
    %c0_0 = arith.constant 0 : index
    %0 = vector.load %arg1[%c0, %c0_0] : memref<512x144xbf16, #tpu.memory_space<vmem>>, vector<512x144xbf16>
    %c0_1 = arith.constant 0 : index
    %c0_2 = arith.constant 0 : index
    %1 = vector.load %arg2[%c0_1, %c0_2] : memref<144x16xbf16, #tpu.memory_space<vmem>>, vector<144x16xbf16>
    %cst = arith.constant dense<0.000000e+00> : vector<512x16xf32>
    %2 = tpu.matmul %0, %1, %cst {dimension_numbers = #tpu.dot_dimension_numbers<[1], [0], [0], [1], [0, 0, 1, 1], [], []>} : vector<512x144xbf16>, vector<144x16xbf16>, vector<512x16xf32> -> vector<512x16xf32>
    %c0_3 = arith.constant 0 : index
    %c0_4 = arith.constant 0 : index
    %3 = vector.load %arg3[%c0_3, %c0_4] : memref<1x16xf32, #tpu.memory_space<vmem>>, vector<1x16xf32>
    %4 = vector.broadcast %3 : vector<1x16xf32> to vector<512x16xf32>
    %5 = arith.addf %2, %4 : vector<512x16xf32>
    %cst_5 = arith.constant 0.000000e+00 : f32
    %6 = vector.broadcast %cst_5 : f32 to vector<512x16xf32>
    %7 = arith.maximumf %5, %6 : vector<512x16xf32>
    %c0_6 = arith.constant 0 : index
    %c0_7 = arith.constant 0 : index
    %8 = vector.load %arg4[%c0_6, %c0_7] : memref<512x16xf32, #tpu.memory_space<vmem>>, vector<512x16xf32>
    tpu.vector_store %arg4[%c0_6, %c0_7], %7 {strides = array<i32>} : memref<512x16xf32, #tpu.memory_space<vmem>>, vector<512x16xf32>,
    return
  }
  func.func @transform_0(%arg0: i32) -> (i32, i32) {
    %c0_i32 = arith.constant 0 : i32
    %c0_i32_0 = arith.constant 0 : i32
    return %arg0, %c0_i32 : i32, i32
  }
  func.func @transform_1(%arg0: i32) -> (i32, i32) {
    %c0_i32 = arith.constant 0 : i32
    %c0_i32_0 = arith.constant 0 : i32
    %c0_i32_1 = arith.constant 0 : i32
    return %c0_i32, %c0_i32_0 : i32, i32
  }
  func.func @transform_2(%arg0: i32) -> (i32, i32) {
    %c0_i32 = arith.constant 0 : i32
    %c0_i32_0 = arith.constant 0 : i32
    %c0_i32_1 = arith.constant 0 : i32
    return %c0_i32, %c0_i32_0 : i32, i32
  }
  func.func @transform_3(%arg0: i32) -> (i32, i32) {
    %c0_i32 = arith.constant 0 : i32
    %c0_i32_0 = arith.constant 0 : i32
    return %arg0, %c0_i32 : i32, i32
  }
}

module attributes {stable_mosaic.version = 11 : i64} {
  func.func @_conv_heads_kernel(%arg0: i32, %arg1: memref<512x144xbf16, #tpu.memory_space<vmem>>, %arg2: memref<144x16xbf16, #tpu.memory_space<vmem>>, %arg3: memref<1x16xf32, #tpu.memory_space<vmem>>, %arg4: memref<512x16xf32, #tpu.memory_space<vmem>>, %arg5: memref<512x16xf32, #tpu.memory_space<vmem>>) attributes {dimension_semantics = [#tpu.dimension_semantics<parallel>], iteration_bounds = array<i64: 1>, scalar_prefetch = 0 : i64, scratch_operands = 0 : i64, tpu.core_type = #tpu.core_type<tc>, window_params = [{transform_indices = @transform_0, window_bounds = array<i64: 512, 144>}, {pipeline_mode = #tpu.pipeline_mode<synchronous>, transform_indices = @transform_1, window_bounds = array<i64: 144, 16>}, {pipeline_mode = #tpu.pipeline_mode<synchronous>, transform_indices = @transform_2, window_bounds = array<i64: 1, 16>}, {transform_indices = @transform_3, window_bounds = array<i64: 512, 16>}, {transform_indices = @transform_4, window_bounds = array<i64: 512, 16>}]} {
    %c0 = arith.constant 0 : index
    %c0_0 = arith.constant 0 : index
    %0 = vector.load %arg1[%c0, %c0_0] : memref<512x144xbf16, #tpu.memory_space<vmem>>, vector<512x144xbf16>
    %c0_1 = arith.constant 0 : index
    %c0_2 = arith.constant 0 : index
    %1 = vector.load %arg2[%c0_1, %c0_2] : memref<144x16xbf16, #tpu.memory_space<vmem>>, vector<144x16xbf16>
    %cst = arith.constant dense<0.000000e+00> : vector<512x16xf32>
    %2 = tpu.matmul %0, %1, %cst {dimension_numbers = #tpu.dot_dimension_numbers<[1], [0], [0], [1], [0, 0, 1, 1], [], []>} : vector<512x144xbf16>, vector<144x16xbf16>, vector<512x16xf32> -> vector<512x16xf32>
    %c0_3 = arith.constant 0 : index
    %c0_4 = arith.constant 0 : index
    %3 = vector.load %arg3[%c0_3, %c0_4] : memref<1x16xf32, #tpu.memory_space<vmem>>, vector<1x16xf32>
    %4 = vector.broadcast %3 : vector<1x16xf32> to vector<512x16xf32>
    %5 = arith.addf %2, %4 : vector<512x16xf32>
    %c0_5 = arith.constant 0 : index
    %c0_6 = arith.constant 0 : index
    %6 = vector.load %arg4[%c0_5, %c0_6] : memref<512x16xf32, #tpu.memory_space<vmem>>, vector<512x16xf32>
    %7 = arith.addf %5, %6 : vector<512x16xf32>
    %cst_7 = arith.constant 0.000000e+00 : f32
    %8 = vector.broadcast %cst_7 : f32 to vector<512x16xf32>
    %9 = arith.maximumf %7, %8 : vector<512x16xf32>
    %c0_8 = arith.constant 0 : index
    %c0_9 = arith.constant 0 : index
    %10 = vector.load %arg5[%c0_8, %c0_9] : memref<512x16xf32, #tpu.memory_space<vmem>>, vector<512x16xf32>
    tpu.vector_store %arg5[%c0_8, %c0_9], %9 {strides = array<i32>} : memref<512x16xf32, #tpu.memory_space<vmem>>, vector<512x16xf32>,
    return
  }
  func.func @transform_0(%arg0: i32) -> (i32, i32) {
    %c0_i32 = arith.constant 0 : i32
    %c0_i32_0 = arith.constant 0 : i32
    return %arg0, %c0_i32 : i32, i32
  }
  func.func @transform_1(%arg0: i32) -> (i32, i32) {
    %c0_i32 = arith.constant 0 : i32
    %c0_i32_0 = arith.constant 0 : i32
    %c0_i32_1 = arith.constant 0 : i32
    return %c0_i32, %c0_i32_0 : i32, i32
  }
  func.func @transform_2(%arg0: i32) -> (i32, i32) {
    %c0_i32 = arith.constant 0 : i32
    %c0_i32_0 = arith.constant 0 : i32
    %c0_i32_1 = arith.constant 0 : i32
    return %c0_i32, %c0_i32_0 : i32, i32
  }
  func.func @transform_3(%arg0: i32) -> (i32, i32) {
    %c0_i32 = arith.constant 0 : i32
    %c0_i32_0 = arith.constant 0 : i32
    return %arg0, %c0_i32 : i32, i32
  }
  func.func @transform_4(%arg0: i32) -> (i32, i32) {
    %c0_i32 = arith.constant 0 : i32
    %c0_i32_0 = arith.constant 0 : i32
    return %arg0, %c0_i32 : i32, i32
  }
}

module attributes {stable_mosaic.version = 11 : i64} {
  func.func @_conv_heads_kernel(%arg0: i32, %arg1: memref<128x144xbf16, #tpu.memory_space<vmem>>, %arg2: memref<144x32xbf16, #tpu.memory_space<vmem>>, %arg3: memref<1x32xf32, #tpu.memory_space<vmem>>, %arg4: memref<144x32xbf16, #tpu.memory_space<vmem>>, %arg5: memref<1x32xf32, #tpu.memory_space<vmem>>, %arg6: memref<128x32xf32, #tpu.memory_space<vmem>>, %arg7: memref<128x32xf32, #tpu.memory_space<vmem>>) attributes {dimension_semantics = [#tpu.dimension_semantics<parallel>], iteration_bounds = array<i64: 1>, scalar_prefetch = 0 : i64, scratch_operands = 0 : i64, tpu.core_type = #tpu.core_type<tc>, window_params = [{transform_indices = @transform_0, window_bounds = array<i64: 128, 144>}, {pipeline_mode = #tpu.pipeline_mode<synchronous>, transform_indices = @transform_1, window_bounds = array<i64: 144, 32>}, {pipeline_mode = #tpu.pipeline_mode<synchronous>, transform_indices = @transform_2, window_bounds = array<i64: 1, 32>}, {pipeline_mode = #tpu.pipeline_mode<synchronous>, transform_indices = @transform_3, window_bounds = array<i64: 144, 32>}, {pipeline_mode = #tpu.pipeline_mode<synchronous>, transform_indices = @transform_4, window_bounds = array<i64: 1, 32>}, {transform_indices = @transform_5, window_bounds = array<i64: 128, 32>}, {transform_indices = @transform_6, window_bounds = array<i64: 128, 32>}]} {
    %c0 = arith.constant 0 : index
    %c0_0 = arith.constant 0 : index
    %0 = vector.load %arg1[%c0, %c0_0] : memref<128x144xbf16, #tpu.memory_space<vmem>>, vector<128x144xbf16>
    %c0_1 = arith.constant 0 : index
    %c0_2 = arith.constant 0 : index
    %1 = vector.load %arg2[%c0_1, %c0_2] : memref<144x32xbf16, #tpu.memory_space<vmem>>, vector<144x32xbf16>
    %cst = arith.constant dense<0.000000e+00> : vector<128x32xf32>
    %2 = tpu.matmul %0, %1, %cst {dimension_numbers = #tpu.dot_dimension_numbers<[1], [0], [0], [1], [0, 0, 1, 1], [], []>} : vector<128x144xbf16>, vector<144x32xbf16>, vector<128x32xf32> -> vector<128x32xf32>
    %c0_3 = arith.constant 0 : index
    %c0_4 = arith.constant 0 : index
    %3 = vector.load %arg3[%c0_3, %c0_4] : memref<1x32xf32, #tpu.memory_space<vmem>>, vector<1x32xf32>
    %4 = vector.broadcast %3 : vector<1x32xf32> to vector<128x32xf32>
    %5 = arith.addf %2, %4 : vector<128x32xf32>
    %cst_5 = arith.constant 0.000000e+00 : f32
    %6 = vector.broadcast %cst_5 : f32 to vector<128x32xf32>
    %7 = arith.maximumf %5, %6 : vector<128x32xf32>
    %c0_6 = arith.constant 0 : index
    %c0_7 = arith.constant 0 : index
    %8 = vector.load %arg6[%c0_6, %c0_7] : memref<128x32xf32, #tpu.memory_space<vmem>>, vector<128x32xf32>
    tpu.vector_store %arg6[%c0_6, %c0_7], %7 {strides = array<i32>} : memref<128x32xf32, #tpu.memory_space<vmem>>, vector<128x32xf32>,
    %c0_8 = arith.constant 0 : index
    %c0_9 = arith.constant 0 : index
    %9 = vector.load %arg4[%c0_8, %c0_9] : memref<144x32xbf16, #tpu.memory_space<vmem>>, vector<144x32xbf16>
    %cst_10 = arith.constant dense<0.000000e+00> : vector<128x32xf32>
    %10 = tpu.matmul %0, %9, %cst_10 {dimension_numbers = #tpu.dot_dimension_numbers<[1], [0], [0], [1], [0, 0, 1, 1], [], []>} : vector<128x144xbf16>, vector<144x32xbf16>, vector<128x32xf32> -> vector<128x32xf32>
    %c0_11 = arith.constant 0 : index
    %c0_12 = arith.constant 0 : index
    %11 = vector.load %arg5[%c0_11, %c0_12] : memref<1x32xf32, #tpu.memory_space<vmem>>, vector<1x32xf32>
    %12 = vector.broadcast %11 : vector<1x32xf32> to vector<128x32xf32>
    %13 = arith.addf %10, %12 : vector<128x32xf32>
    %c0_13 = arith.constant 0 : index
    %c0_14 = arith.constant 0 : index
    %14 = vector.load %arg7[%c0_13, %c0_14] : memref<128x32xf32, #tpu.memory_space<vmem>>, vector<128x32xf32>
    tpu.vector_store %arg7[%c0_13, %c0_14], %13 {strides = array<i32>} : memref<128x32xf32, #tpu.memory_space<vmem>>, vector<128x32xf32>,
    return
  }
  func.func @transform_0(%arg0: i32) -> (i32, i32) {
    %c0_i32 = arith.constant 0 : i32
    %c0_i32_0 = arith.constant 0 : i32
    return %arg0, %c0_i32 : i32, i32
  }
  func.func @transform_1(%arg0: i32) -> (i32, i32) {
    %c0_i32 = arith.constant 0 : i32
    %c0_i32_0 = arith.constant 0 : i32
    %c0_i32_1 = arith.constant 0 : i32
    return %c0_i32, %c0_i32_0 : i32, i32
  }
  func.func @transform_2(%arg0: i32) -> (i32, i32) {
    %c0_i32 = arith.constant 0 : i32
    %c0_i32_0 = arith.constant 0 : i32
    %c0_i32_1 = arith.constant 0 : i32
    return %c0_i32, %c0_i32_0 : i32, i32
  }
  func.func @transform_3(%arg0: i32) -> (i32, i32) {
    %c0_i32 = arith.constant 0 : i32
    %c0_i32_0 = arith.constant 0 : i32
    %c0_i32_1 = arith.constant 0 : i32
    return %c0_i32, %c0_i32_0 : i32, i32
  }
  func.func @transform_4(%arg0: i32) -> (i32, i32) {
    %c0_i32 = arith.constant 0 : i32
    %c0_i32_0 = arith.constant 0 : i32
    %c0_i32_1 = arith.constant 0 : i32
    return %c0_i32, %c0_i32_0 : i32, i32
  }
  func.func @transform_5(%arg0: i32) -> (i32, i32) {
    %c0_i32 = arith.constant 0 : i32
    %c0_i32_0 = arith.constant 0 : i32
    return %arg0, %c0_i32 : i32, i32
  }
  func.func @transform_6(%arg0: i32) -> (i32, i32) {
    %c0_i32 = arith.constant 0 : i32
    %c0_i32_0 = arith.constant 0 : i32
    return %arg0, %c0_i32 : i32, i32
  }
}

module attributes {stable_mosaic.version = 11 : i64} {
  func.func @_conv_heads_kernel(%arg0: i32, %arg1: memref<128x288xbf16, #tpu.memory_space<vmem>>, %arg2: memref<288x32xbf16, #tpu.memory_space<vmem>>, %arg3: memref<1x32xf32, #tpu.memory_space<vmem>>, %arg4: memref<128x32xf32, #tpu.memory_space<vmem>>) attributes {dimension_semantics = [#tpu.dimension_semantics<parallel>], iteration_bounds = array<i64: 1>, scalar_prefetch = 0 : i64, scratch_operands = 0 : i64, tpu.core_type = #tpu.core_type<tc>, window_params = [{transform_indices = @transform_0, window_bounds = array<i64: 128, 288>}, {pipeline_mode = #tpu.pipeline_mode<synchronous>, transform_indices = @transform_1, window_bounds = array<i64: 288, 32>}, {pipeline_mode = #tpu.pipeline_mode<synchronous>, transform_indices = @transform_2, window_bounds = array<i64: 1, 32>}, {transform_indices = @transform_3, window_bounds = array<i64: 128, 32>}]} {
    %c0 = arith.constant 0 : index
    %c0_0 = arith.constant 0 : index
    %0 = vector.load %arg1[%c0, %c0_0] : memref<128x288xbf16, #tpu.memory_space<vmem>>, vector<128x288xbf16>
    %c0_1 = arith.constant 0 : index
    %c0_2 = arith.constant 0 : index
    %1 = vector.load %arg2[%c0_1, %c0_2] : memref<288x32xbf16, #tpu.memory_space<vmem>>, vector<288x32xbf16>
    %cst = arith.constant dense<0.000000e+00> : vector<128x32xf32>
    %2 = tpu.matmul %0, %1, %cst {dimension_numbers = #tpu.dot_dimension_numbers<[1], [0], [0], [1], [0, 0, 1, 1], [], []>} : vector<128x288xbf16>, vector<288x32xbf16>, vector<128x32xf32> -> vector<128x32xf32>
    %c0_3 = arith.constant 0 : index
    %c0_4 = arith.constant 0 : index
    %3 = vector.load %arg3[%c0_3, %c0_4] : memref<1x32xf32, #tpu.memory_space<vmem>>, vector<1x32xf32>
    %4 = vector.broadcast %3 : vector<1x32xf32> to vector<128x32xf32>
    %5 = arith.addf %2, %4 : vector<128x32xf32>
    %cst_5 = arith.constant 0.000000e+00 : f32
    %6 = vector.broadcast %cst_5 : f32 to vector<128x32xf32>
    %7 = arith.maximumf %5, %6 : vector<128x32xf32>
    %c0_6 = arith.constant 0 : index
    %c0_7 = arith.constant 0 : index
    %8 = vector.load %arg4[%c0_6, %c0_7] : memref<128x32xf32, #tpu.memory_space<vmem>>, vector<128x32xf32>
    tpu.vector_store %arg4[%c0_6, %c0_7], %7 {strides = array<i32>} : memref<128x32xf32, #tpu.memory_space<vmem>>, vector<128x32xf32>,
    return
  }
  func.func @transform_0(%arg0: i32) -> (i32, i32) {
    %c0_i32 = arith.constant 0 : i32
    %c0_i32_0 = arith.constant 0 : i32
    return %arg0, %c0_i32 : i32, i32
  }
  func.func @transform_1(%arg0: i32) -> (i32, i32) {
    %c0_i32 = arith.constant 0 : i32
    %c0_i32_0 = arith.constant 0 : i32
    %c0_i32_1 = arith.constant 0 : i32
    return %c0_i32, %c0_i32_0 : i32, i32
  }
  func.func @transform_2(%arg0: i32) -> (i32, i32) {
    %c0_i32 = arith.constant 0 : i32
    %c0_i32_0 = arith.constant 0 : i32
    %c0_i32_1 = arith.constant 0 : i32
    return %c0_i32, %c0_i32_0 : i32, i32
  }
  func.func @transform_3(%arg0: i32) -> (i32, i32) {
    %c0_i32 = arith.constant 0 : i32
    %c0_i32_0 = arith.constant 0 : i32
    return %arg0, %c0_i32 : i32, i32
  }
}

module attributes {stable_mosaic.version = 11 : i64} {
  func.func @_conv_heads_kernel(%arg0: i32, %arg1: memref<128x288xbf16, #tpu.memory_space<vmem>>, %arg2: memref<288x32xbf16, #tpu.memory_space<vmem>>, %arg3: memref<1x32xf32, #tpu.memory_space<vmem>>, %arg4: memref<128x32xf32, #tpu.memory_space<vmem>>, %arg5: memref<128x32xf32, #tpu.memory_space<vmem>>) attributes {dimension_semantics = [#tpu.dimension_semantics<parallel>], iteration_bounds = array<i64: 1>, scalar_prefetch = 0 : i64, scratch_operands = 0 : i64, tpu.core_type = #tpu.core_type<tc>, window_params = [{transform_indices = @transform_0, window_bounds = array<i64: 128, 288>}, {pipeline_mode = #tpu.pipeline_mode<synchronous>, transform_indices = @transform_1, window_bounds = array<i64: 288, 32>}, {pipeline_mode = #tpu.pipeline_mode<synchronous>, transform_indices = @transform_2, window_bounds = array<i64: 1, 32>}, {transform_indices = @transform_3, window_bounds = array<i64: 128, 32>}, {transform_indices = @transform_4, window_bounds = array<i64: 128, 32>}]} {
    %c0 = arith.constant 0 : index
    %c0_0 = arith.constant 0 : index
    %0 = vector.load %arg1[%c0, %c0_0] : memref<128x288xbf16, #tpu.memory_space<vmem>>, vector<128x288xbf16>
    %c0_1 = arith.constant 0 : index
    %c0_2 = arith.constant 0 : index
    %1 = vector.load %arg2[%c0_1, %c0_2] : memref<288x32xbf16, #tpu.memory_space<vmem>>, vector<288x32xbf16>
    %cst = arith.constant dense<0.000000e+00> : vector<128x32xf32>
    %2 = tpu.matmul %0, %1, %cst {dimension_numbers = #tpu.dot_dimension_numbers<[1], [0], [0], [1], [0, 0, 1, 1], [], []>} : vector<128x288xbf16>, vector<288x32xbf16>, vector<128x32xf32> -> vector<128x32xf32>
    %c0_3 = arith.constant 0 : index
    %c0_4 = arith.constant 0 : index
    %3 = vector.load %arg3[%c0_3, %c0_4] : memref<1x32xf32, #tpu.memory_space<vmem>>, vector<1x32xf32>
    %4 = vector.broadcast %3 : vector<1x32xf32> to vector<128x32xf32>
    %5 = arith.addf %2, %4 : vector<128x32xf32>
    %c0_5 = arith.constant 0 : index
    %c0_6 = arith.constant 0 : index
    %6 = vector.load %arg4[%c0_5, %c0_6] : memref<128x32xf32, #tpu.memory_space<vmem>>, vector<128x32xf32>
    %7 = arith.addf %5, %6 : vector<128x32xf32>
    %cst_7 = arith.constant 0.000000e+00 : f32
    %8 = vector.broadcast %cst_7 : f32 to vector<128x32xf32>
    %9 = arith.maximumf %7, %8 : vector<128x32xf32>
    %c0_8 = arith.constant 0 : index
    %c0_9 = arith.constant 0 : index
    %10 = vector.load %arg5[%c0_8, %c0_9] : memref<128x32xf32, #tpu.memory_space<vmem>>, vector<128x32xf32>
    tpu.vector_store %arg5[%c0_8, %c0_9], %9 {strides = array<i32>} : memref<128x32xf32, #tpu.memory_space<vmem>>, vector<128x32xf32>,
    return
  }
  func.func @transform_0(%arg0: i32) -> (i32, i32) {
    %c0_i32 = arith.constant 0 : i32
    %c0_i32_0 = arith.constant 0 : i32
    return %arg0, %c0_i32 : i32, i32
  }
  func.func @transform_1(%arg0: i32) -> (i32, i32) {
    %c0_i32 = arith.constant 0 : i32
    %c0_i32_0 = arith.constant 0 : i32
    %c0_i32_1 = arith.constant 0 : i32
    return %c0_i32, %c0_i32_0 : i32, i32
  }
  func.func @transform_2(%arg0: i32) -> (i32, i32) {
    %c0_i32 = arith.constant 0 : i32
    %c0_i32_0 = arith.constant 0 : i32
    %c0_i32_1 = arith.constant 0 : i32
    return %c0_i32, %c0_i32_0 : i32, i32
  }
  func.func @transform_3(%arg0: i32) -> (i32, i32) {
    %c0_i32 = arith.constant 0 : i32
    %c0_i32_0 = arith.constant 0 : i32
    return %arg0, %c0_i32 : i32, i32
  }
  func.func @transform_4(%arg0: i32) -> (i32, i32) {
    %c0_i32 = arith.constant 0 : i32
    %c0_i32_0 = arith.constant 0 : i32
    return %arg0, %c0_i32 : i32, i32
  }
}

module attributes {stable_mosaic.version = 11 : i64} {
  func.func @_conv_heads_kernel(%arg0: i32, %arg1: memref<32x288xbf16, #tpu.memory_space<vmem>>, %arg2: memref<288x64xbf16, #tpu.memory_space<vmem>>, %arg3: memref<1x64xf32, #tpu.memory_space<vmem>>, %arg4: memref<288x64xbf16, #tpu.memory_space<vmem>>, %arg5: memref<1x64xf32, #tpu.memory_space<vmem>>, %arg6: memref<32x64xf32, #tpu.memory_space<vmem>>, %arg7: memref<32x64xf32, #tpu.memory_space<vmem>>) attributes {dimension_semantics = [#tpu.dimension_semantics<parallel>], iteration_bounds = array<i64: 1>, scalar_prefetch = 0 : i64, scratch_operands = 0 : i64, tpu.core_type = #tpu.core_type<tc>, window_params = [{transform_indices = @transform_0, window_bounds = array<i64: 32, 288>}, {pipeline_mode = #tpu.pipeline_mode<synchronous>, transform_indices = @transform_1, window_bounds = array<i64: 288, 64>}, {pipeline_mode = #tpu.pipeline_mode<synchronous>, transform_indices = @transform_2, window_bounds = array<i64: 1, 64>}, {pipeline_mode = #tpu.pipeline_mode<synchronous>, transform_indices = @transform_3, window_bounds = array<i64: 288, 64>}, {pipeline_mode = #tpu.pipeline_mode<synchronous>, transform_indices = @transform_4, window_bounds = array<i64: 1, 64>}, {transform_indices = @transform_5, window_bounds = array<i64: 32, 64>}, {transform_indices = @transform_6, window_bounds = array<i64: 32, 64>}]} {
    %c0 = arith.constant 0 : index
    %c0_0 = arith.constant 0 : index
    %0 = vector.load %arg1[%c0, %c0_0] : memref<32x288xbf16, #tpu.memory_space<vmem>>, vector<32x288xbf16>
    %c0_1 = arith.constant 0 : index
    %c0_2 = arith.constant 0 : index
    %1 = vector.load %arg2[%c0_1, %c0_2] : memref<288x64xbf16, #tpu.memory_space<vmem>>, vector<288x64xbf16>
    %cst = arith.constant dense<0.000000e+00> : vector<32x64xf32>
    %2 = tpu.matmul %0, %1, %cst {dimension_numbers = #tpu.dot_dimension_numbers<[1], [0], [0], [1], [0, 0, 1, 1], [], []>} : vector<32x288xbf16>, vector<288x64xbf16>, vector<32x64xf32> -> vector<32x64xf32>
    %c0_3 = arith.constant 0 : index
    %c0_4 = arith.constant 0 : index
    %3 = vector.load %arg3[%c0_3, %c0_4] : memref<1x64xf32, #tpu.memory_space<vmem>>, vector<1x64xf32>
    %4 = vector.broadcast %3 : vector<1x64xf32> to vector<32x64xf32>
    %5 = arith.addf %2, %4 : vector<32x64xf32>
    %cst_5 = arith.constant 0.000000e+00 : f32
    %6 = vector.broadcast %cst_5 : f32 to vector<32x64xf32>
    %7 = arith.maximumf %5, %6 : vector<32x64xf32>
    %c0_6 = arith.constant 0 : index
    %c0_7 = arith.constant 0 : index
    %8 = vector.load %arg6[%c0_6, %c0_7] : memref<32x64xf32, #tpu.memory_space<vmem>>, vector<32x64xf32>
    tpu.vector_store %arg6[%c0_6, %c0_7], %7 {strides = array<i32>} : memref<32x64xf32, #tpu.memory_space<vmem>>, vector<32x64xf32>,
    %c0_8 = arith.constant 0 : index
    %c0_9 = arith.constant 0 : index
    %9 = vector.load %arg4[%c0_8, %c0_9] : memref<288x64xbf16, #tpu.memory_space<vmem>>, vector<288x64xbf16>
    %cst_10 = arith.constant dense<0.000000e+00> : vector<32x64xf32>
    %10 = tpu.matmul %0, %9, %cst_10 {dimension_numbers = #tpu.dot_dimension_numbers<[1], [0], [0], [1], [0, 0, 1, 1], [], []>} : vector<32x288xbf16>, vector<288x64xbf16>, vector<32x64xf32> -> vector<32x64xf32>
    %c0_11 = arith.constant 0 : index
    %c0_12 = arith.constant 0 : index
    %11 = vector.load %arg5[%c0_11, %c0_12] : memref<1x64xf32, #tpu.memory_space<vmem>>, vector<1x64xf32>
    %12 = vector.broadcast %11 : vector<1x64xf32> to vector<32x64xf32>
    %13 = arith.addf %10, %12 : vector<32x64xf32>
    %c0_13 = arith.constant 0 : index
    %c0_14 = arith.constant 0 : index
    %14 = vector.load %arg7[%c0_13, %c0_14] : memref<32x64xf32, #tpu.memory_space<vmem>>, vector<32x64xf32>
    tpu.vector_store %arg7[%c0_13, %c0_14], %13 {strides = array<i32>} : memref<32x64xf32, #tpu.memory_space<vmem>>, vector<32x64xf32>,
    return
  }
  func.func @transform_0(%arg0: i32) -> (i32, i32) {
    %c0_i32 = arith.constant 0 : i32
    %c0_i32_0 = arith.constant 0 : i32
    return %arg0, %c0_i32 : i32, i32
  }
  func.func @transform_1(%arg0: i32) -> (i32, i32) {
    %c0_i32 = arith.constant 0 : i32
    %c0_i32_0 = arith.constant 0 : i32
    %c0_i32_1 = arith.constant 0 : i32
    return %c0_i32, %c0_i32_0 : i32, i32
  }
  func.func @transform_2(%arg0: i32) -> (i32, i32) {
    %c0_i32 = arith.constant 0 : i32
    %c0_i32_0 = arith.constant 0 : i32
    %c0_i32_1 = arith.constant 0 : i32
    return %c0_i32, %c0_i32_0 : i32, i32
  }
  func.func @transform_3(%arg0: i32) -> (i32, i32) {
    %c0_i32 = arith.constant 0 : i32
    %c0_i32_0 = arith.constant 0 : i32
    %c0_i32_1 = arith.constant 0 : i32
    return %c0_i32, %c0_i32_0 : i32, i32
  }
  func.func @transform_4(%arg0: i32) -> (i32, i32) {
    %c0_i32 = arith.constant 0 : i32
    %c0_i32_0 = arith.constant 0 : i32
    %c0_i32_1 = arith.constant 0 : i32
    return %c0_i32, %c0_i32_0 : i32, i32
  }
  func.func @transform_5(%arg0: i32) -> (i32, i32) {
    %c0_i32 = arith.constant 0 : i32
    %c0_i32_0 = arith.constant 0 : i32
    return %arg0, %c0_i32 : i32, i32
  }
  func.func @transform_6(%arg0: i32) -> (i32, i32) {
    %c0_i32 = arith.constant 0 : i32
    %c0_i32_0 = arith.constant 0 : i32
    return %arg0, %c0_i32 : i32, i32
  }
}

module attributes {stable_mosaic.version = 11 : i64} {
  func.func @_conv_heads_kernel(%arg0: i32, %arg1: memref<32x576xbf16, #tpu.memory_space<vmem>>, %arg2: memref<576x64xbf16, #tpu.memory_space<vmem>>, %arg3: memref<1x64xf32, #tpu.memory_space<vmem>>, %arg4: memref<32x64xf32, #tpu.memory_space<vmem>>, %arg5: memref<32x64xf32, #tpu.memory_space<vmem>>) attributes {dimension_semantics = [#tpu.dimension_semantics<parallel>], iteration_bounds = array<i64: 1>, scalar_prefetch = 0 : i64, scratch_operands = 0 : i64, tpu.core_type = #tpu.core_type<tc>, window_params = [{transform_indices = @transform_0, window_bounds = array<i64: 32, 576>}, {pipeline_mode = #tpu.pipeline_mode<synchronous>, transform_indices = @transform_1, window_bounds = array<i64: 576, 64>}, {pipeline_mode = #tpu.pipeline_mode<synchronous>, transform_indices = @transform_2, window_bounds = array<i64: 1, 64>}, {transform_indices = @transform_3, window_bounds = array<i64: 32, 64>}, {transform_indices = @transform_4, window_bounds = array<i64: 32, 64>}]} {
    %c0 = arith.constant 0 : index
    %c0_0 = arith.constant 0 : index
    %0 = vector.load %arg1[%c0, %c0_0] : memref<32x576xbf16, #tpu.memory_space<vmem>>, vector<32x576xbf16>
    %c0_1 = arith.constant 0 : index
    %c0_2 = arith.constant 0 : index
    %1 = vector.load %arg2[%c0_1, %c0_2] : memref<576x64xbf16, #tpu.memory_space<vmem>>, vector<576x64xbf16>
    %cst = arith.constant dense<0.000000e+00> : vector<32x64xf32>
    %2 = tpu.matmul %0, %1, %cst {dimension_numbers = #tpu.dot_dimension_numbers<[1], [0], [0], [1], [0, 0, 1, 1], [], []>} : vector<32x576xbf16>, vector<576x64xbf16>, vector<32x64xf32> -> vector<32x64xf32>
    %c0_3 = arith.constant 0 : index
    %c0_4 = arith.constant 0 : index
    %3 = vector.load %arg3[%c0_3, %c0_4] : memref<1x64xf32, #tpu.memory_space<vmem>>, vector<1x64xf32>
    %4 = vector.broadcast %3 : vector<1x64xf32> to vector<32x64xf32>
    %5 = arith.addf %2, %4 : vector<32x64xf32>
    %c0_5 = arith.constant 0 : index
    %c0_6 = arith.constant 0 : index
    %6 = vector.load %arg4[%c0_5, %c0_6] : memref<32x64xf32, #tpu.memory_space<vmem>>, vector<32x64xf32>
    %7 = arith.addf %5, %6 : vector<32x64xf32>
    %cst_7 = arith.constant 0.000000e+00 : f32
    %8 = vector.broadcast %cst_7 : f32 to vector<32x64xf32>
    %9 = arith.maximumf %7, %8 : vector<32x64xf32>
    %c0_8 = arith.constant 0 : index
    %c0_9 = arith.constant 0 : index
    %10 = vector.load %arg5[%c0_8, %c0_9] : memref<32x64xf32, #tpu.memory_space<vmem>>, vector<32x64xf32>
    tpu.vector_store %arg5[%c0_8, %c0_9], %9 {strides = array<i32>} : memref<32x64xf32, #tpu.memory_space<vmem>>, vector<32x64xf32>,
    return
  }
  func.func @transform_0(%arg0: i32) -> (i32, i32) {
    %c0_i32 = arith.constant 0 : i32
    %c0_i32_0 = arith.constant 0 : i32
    return %arg0, %c0_i32 : i32, i32
  }
  func.func @transform_1(%arg0: i32) -> (i32, i32) {
    %c0_i32 = arith.constant 0 : i32
    %c0_i32_0 = arith.constant 0 : i32
    %c0_i32_1 = arith.constant 0 : i32
    return %c0_i32, %c0_i32_0 : i32, i32
  }
  func.func @transform_2(%arg0: i32) -> (i32, i32) {
    %c0_i32 = arith.constant 0 : i32
    %c0_i32_0 = arith.constant 0 : i32
    %c0_i32_1 = arith.constant 0 : i32
    return %c0_i32, %c0_i32_0 : i32, i32
  }
  func.func @transform_3(%arg0: i32) -> (i32, i32) {
    %c0_i32 = arith.constant 0 : i32
    %c0_i32_0 = arith.constant 0 : i32
    return %arg0, %c0_i32 : i32, i32
  }
  func.func @transform_4(%arg0: i32) -> (i32, i32) {
    %c0_i32 = arith.constant 0 : i32
    %c0_i32_0 = arith.constant 0 : i32
    return %arg0, %c0_i32 : i32, i32
  }
}

module attributes {stable_mosaic.version = 11 : i64} {
  func.func @_conv_heads_kernel(%arg0: i32, %arg1: memref<32x576xbf16, #tpu.memory_space<vmem>>, %arg2: memref<576x64xbf16, #tpu.memory_space<vmem>>, %arg3: memref<1x64xf32, #tpu.memory_space<vmem>>, %arg4: memref<32x64xf32, #tpu.memory_space<vmem>>) attributes {dimension_semantics = [#tpu.dimension_semantics<parallel>], iteration_bounds = array<i64: 1>, scalar_prefetch = 0 : i64, scratch_operands = 0 : i64, tpu.core_type = #tpu.core_type<tc>, window_params = [{transform_indices = @transform_0, window_bounds = array<i64: 32, 576>}, {pipeline_mode = #tpu.pipeline_mode<synchronous>, transform_indices = @transform_1, window_bounds = array<i64: 576, 64>}, {pipeline_mode = #tpu.pipeline_mode<synchronous>, transform_indices = @transform_2, window_bounds = array<i64: 1, 64>}, {transform_indices = @transform_3, window_bounds = array<i64: 32, 64>}]} {
    %c0 = arith.constant 0 : index
    %c0_0 = arith.constant 0 : index
    %0 = vector.load %arg1[%c0, %c0_0] : memref<32x576xbf16, #tpu.memory_space<vmem>>, vector<32x576xbf16>
    %c0_1 = arith.constant 0 : index
    %c0_2 = arith.constant 0 : index
    %1 = vector.load %arg2[%c0_1, %c0_2] : memref<576x64xbf16, #tpu.memory_space<vmem>>, vector<576x64xbf16>
    %cst = arith.constant dense<0.000000e+00> : vector<32x64xf32>
    %2 = tpu.matmul %0, %1, %cst {dimension_numbers = #tpu.dot_dimension_numbers<[1], [0], [0], [1], [0, 0, 1, 1], [], []>} : vector<32x576xbf16>, vector<576x64xbf16>, vector<32x64xf32> -> vector<32x64xf32>
    %c0_3 = arith.constant 0 : index
    %c0_4 = arith.constant 0 : index
    %3 = vector.load %arg3[%c0_3, %c0_4] : memref<1x64xf32, #tpu.memory_space<vmem>>, vector<1x64xf32>
    %4 = vector.broadcast %3 : vector<1x64xf32> to vector<32x64xf32>
    %5 = arith.addf %2, %4 : vector<32x64xf32>
    %cst_5 = arith.constant 0.000000e+00 : f32
    %6 = vector.broadcast %cst_5 : f32 to vector<32x64xf32>
    %7 = arith.maximumf %5, %6 : vector<32x64xf32>
    %c0_6 = arith.constant 0 : index
    %c0_7 = arith.constant 0 : index
    %8 = vector.load %arg4[%c0_6, %c0_7] : memref<32x64xf32, #tpu.memory_space<vmem>>, vector<32x64xf32>
    tpu.vector_store %arg4[%c0_6, %c0_7], %7 {strides = array<i32>} : memref<32x64xf32, #tpu.memory_space<vmem>>, vector<32x64xf32>,
    return
  }
  func.func @transform_0(%arg0: i32) -> (i32, i32) {
    %c0_i32 = arith.constant 0 : i32
    %c0_i32_0 = arith.constant 0 : i32
    return %arg0, %c0_i32 : i32, i32
  }
  func.func @transform_1(%arg0: i32) -> (i32, i32) {
    %c0_i32 = arith.constant 0 : i32
    %c0_i32_0 = arith.constant 0 : i32
    %c0_i32_1 = arith.constant 0 : i32
    return %c0_i32, %c0_i32_0 : i32, i32
  }
  func.func @transform_2(%arg0: i32) -> (i32, i32) {
    %c0_i32 = arith.constant 0 : i32
    %c0_i32_0 = arith.constant 0 : i32
    %c0_i32_1 = arith.constant 0 : i32
    return %c0_i32, %c0_i32_0 : i32, i32
  }
  func.func @transform_3(%arg0: i32) -> (i32, i32) {
    %c0_i32 = arith.constant 0 : i32
    %c0_i32_0 = arith.constant 0 : i32
    return %arg0, %c0_i32 : i32, i32
  }
}

module attributes {stable_mosaic.version = 11 : i64} {
  func.func @_conv_heads_kernel(%arg0: i32, %arg1: memref<8x576xbf16, #tpu.memory_space<vmem>>, %arg2: memref<576x128xbf16, #tpu.memory_space<vmem>>, %arg3: memref<1x128xf32, #tpu.memory_space<vmem>>, %arg4: memref<576x128xbf16, #tpu.memory_space<vmem>>, %arg5: memref<1x128xf32, #tpu.memory_space<vmem>>, %arg6: memref<8x128xf32, #tpu.memory_space<vmem>>, %arg7: memref<8x128xf32, #tpu.memory_space<vmem>>) attributes {dimension_semantics = [#tpu.dimension_semantics<parallel>], iteration_bounds = array<i64: 1>, scalar_prefetch = 0 : i64, scratch_operands = 0 : i64, tpu.core_type = #tpu.core_type<tc>, window_params = [{transform_indices = @transform_0, window_bounds = array<i64: 8, 576>}, {pipeline_mode = #tpu.pipeline_mode<synchronous>, transform_indices = @transform_1, window_bounds = array<i64: 576, 128>}, {pipeline_mode = #tpu.pipeline_mode<synchronous>, transform_indices = @transform_2, window_bounds = array<i64: 1, 128>}, {pipeline_mode = #tpu.pipeline_mode<synchronous>, transform_indices = @transform_3, window_bounds = array<i64: 576, 128>}, {pipeline_mode = #tpu.pipeline_mode<synchronous>, transform_indices = @transform_4, window_bounds = array<i64: 1, 128>}, {transform_indices = @transform_5, window_bounds = array<i64: 8, 128>}, {transform_indices = @transform_6, window_bounds = array<i64: 8, 128>}]} {
    %c0 = arith.constant 0 : index
    %c0_0 = arith.constant 0 : index
    %0 = vector.load %arg1[%c0, %c0_0] : memref<8x576xbf16, #tpu.memory_space<vmem>>, vector<8x576xbf16>
    %c0_1 = arith.constant 0 : index
    %c0_2 = arith.constant 0 : index
    %1 = vector.load %arg2[%c0_1, %c0_2] : memref<576x128xbf16, #tpu.memory_space<vmem>>, vector<576x128xbf16>
    %cst = arith.constant dense<0.000000e+00> : vector<8x128xf32>
    %2 = tpu.matmul %0, %1, %cst {dimension_numbers = #tpu.dot_dimension_numbers<[1], [0], [0], [1], [0, 0, 1, 1], [], []>} : vector<8x576xbf16>, vector<576x128xbf16>, vector<8x128xf32> -> vector<8x128xf32>
    %c0_3 = arith.constant 0 : index
    %c0_4 = arith.constant 0 : index
    %3 = vector.load %arg3[%c0_3, %c0_4] : memref<1x128xf32, #tpu.memory_space<vmem>>, vector<1x128xf32>
    %4 = vector.broadcast %3 : vector<1x128xf32> to vector<8x128xf32>
    %5 = arith.addf %2, %4 : vector<8x128xf32>
    %cst_5 = arith.constant 0.000000e+00 : f32
    %6 = vector.broadcast %cst_5 : f32 to vector<8x128xf32>
    %7 = arith.maximumf %5, %6 : vector<8x128xf32>
    %c0_6 = arith.constant 0 : index
    %c0_7 = arith.constant 0 : index
    %8 = vector.load %arg6[%c0_6, %c0_7] : memref<8x128xf32, #tpu.memory_space<vmem>>, vector<8x128xf32>
    tpu.vector_store %arg6[%c0_6, %c0_7], %7 {strides = array<i32>} : memref<8x128xf32, #tpu.memory_space<vmem>>, vector<8x128xf32>,
    %c0_8 = arith.constant 0 : index
    %c0_9 = arith.constant 0 : index
    %9 = vector.load %arg4[%c0_8, %c0_9] : memref<576x128xbf16, #tpu.memory_space<vmem>>, vector<576x128xbf16>
    %cst_10 = arith.constant dense<0.000000e+00> : vector<8x128xf32>
    %10 = tpu.matmul %0, %9, %cst_10 {dimension_numbers = #tpu.dot_dimension_numbers<[1], [0], [0], [1], [0, 0, 1, 1], [], []>} : vector<8x576xbf16>, vector<576x128xbf16>, vector<8x128xf32> -> vector<8x128xf32>
    %c0_11 = arith.constant 0 : index
    %c0_12 = arith.constant 0 : index
    %11 = vector.load %arg5[%c0_11, %c0_12] : memref<1x128xf32, #tpu.memory_space<vmem>>, vector<1x128xf32>
    %12 = vector.broadcast %11 : vector<1x128xf32> to vector<8x128xf32>
    %13 = arith.addf %10, %12 : vector<8x128xf32>
    %c0_13 = arith.constant 0 : index
    %c0_14 = arith.constant 0 : index
    %14 = vector.load %arg7[%c0_13, %c0_14] : memref<8x128xf32, #tpu.memory_space<vmem>>, vector<8x128xf32>
    tpu.vector_store %arg7[%c0_13, %c0_14], %13 {strides = array<i32>} : memref<8x128xf32, #tpu.memory_space<vmem>>, vector<8x128xf32>,
    return
  }
  func.func @transform_0(%arg0: i32) -> (i32, i32) {
    %c0_i32 = arith.constant 0 : i32
    %c0_i32_0 = arith.constant 0 : i32
    return %arg0, %c0_i32 : i32, i32
  }
  func.func @transform_1(%arg0: i32) -> (i32, i32) {
    %c0_i32 = arith.constant 0 : i32
    %c0_i32_0 = arith.constant 0 : i32
    %c0_i32_1 = arith.constant 0 : i32
    return %c0_i32, %c0_i32_0 : i32, i32
  }
  func.func @transform_2(%arg0: i32) -> (i32, i32) {
    %c0_i32 = arith.constant 0 : i32
    %c0_i32_0 = arith.constant 0 : i32
    %c0_i32_1 = arith.constant 0 : i32
    return %c0_i32, %c0_i32_0 : i32, i32
  }
  func.func @transform_3(%arg0: i32) -> (i32, i32) {
    %c0_i32 = arith.constant 0 : i32
    %c0_i32_0 = arith.constant 0 : i32
    %c0_i32_1 = arith.constant 0 : i32
    return %c0_i32, %c0_i32_0 : i32, i32
  }
  func.func @transform_4(%arg0: i32) -> (i32, i32) {
    %c0_i32 = arith.constant 0 : i32
    %c0_i32_0 = arith.constant 0 : i32
    %c0_i32_1 = arith.constant 0 : i32
    return %c0_i32, %c0_i32_0 : i32, i32
  }
  func.func @transform_5(%arg0: i32) -> (i32, i32) {
    %c0_i32 = arith.constant 0 : i32
    %c0_i32_0 = arith.constant 0 : i32
    return %arg0, %c0_i32 : i32, i32
  }
  func.func @transform_6(%arg0: i32) -> (i32, i32) {
    %c0_i32 = arith.constant 0 : i32
    %c0_i32_0 = arith.constant 0 : i32
    return %arg0, %c0_i32 : i32, i32
  }
}

module attributes {stable_mosaic.version = 11 : i64} {
  func.func @_conv_heads_kernel(%arg0: i32, %arg1: memref<8x1152xbf16, #tpu.memory_space<vmem>>, %arg2: memref<1152x128xbf16, #tpu.memory_space<vmem>>, %arg3: memref<1x128xf32, #tpu.memory_space<vmem>>, %arg4: memref<8x128xf32, #tpu.memory_space<vmem>>, %arg5: memref<8x128xf32, #tpu.memory_space<vmem>>) attributes {dimension_semantics = [#tpu.dimension_semantics<parallel>], iteration_bounds = array<i64: 1>, scalar_prefetch = 0 : i64, scratch_operands = 0 : i64, tpu.core_type = #tpu.core_type<tc>, window_params = [{transform_indices = @transform_0, window_bounds = array<i64: 8, 1152>}, {pipeline_mode = #tpu.pipeline_mode<synchronous>, transform_indices = @transform_1, window_bounds = array<i64: 1152, 128>}, {pipeline_mode = #tpu.pipeline_mode<synchronous>, transform_indices = @transform_2, window_bounds = array<i64: 1, 128>}, {transform_indices = @transform_3, window_bounds = array<i64: 8, 128>}, {transform_indices = @transform_4, window_bounds = array<i64: 8, 128>}]} {
    %c0 = arith.constant 0 : index
    %c0_0 = arith.constant 0 : index
    %0 = vector.load %arg1[%c0, %c0_0] : memref<8x1152xbf16, #tpu.memory_space<vmem>>, vector<8x1152xbf16>
    %c0_1 = arith.constant 0 : index
    %c0_2 = arith.constant 0 : index
    %1 = vector.load %arg2[%c0_1, %c0_2] : memref<1152x128xbf16, #tpu.memory_space<vmem>>, vector<1152x128xbf16>
    %cst = arith.constant dense<0.000000e+00> : vector<8x128xf32>
    %2 = tpu.matmul %0, %1, %cst {dimension_numbers = #tpu.dot_dimension_numbers<[1], [0], [0], [1], [0, 0, 1, 1], [], []>} : vector<8x1152xbf16>, vector<1152x128xbf16>, vector<8x128xf32> -> vector<8x128xf32>
    %c0_3 = arith.constant 0 : index
    %c0_4 = arith.constant 0 : index
    %3 = vector.load %arg3[%c0_3, %c0_4] : memref<1x128xf32, #tpu.memory_space<vmem>>, vector<1x128xf32>
    %4 = vector.broadcast %3 : vector<1x128xf32> to vector<8x128xf32>
    %5 = arith.addf %2, %4 : vector<8x128xf32>
    %c0_5 = arith.constant 0 : index
    %c0_6 = arith.constant 0 : index
    %6 = vector.load %arg4[%c0_5, %c0_6] : memref<8x128xf32, #tpu.memory_space<vmem>>, vector<8x128xf32>
    %7 = arith.addf %5, %6 : vector<8x128xf32>
    %cst_7 = arith.constant 0.000000e+00 : f32
    %8 = vector.broadcast %cst_7 : f32 to vector<8x128xf32>
    %9 = arith.maximumf %7, %8 : vector<8x128xf32>
    %c0_8 = arith.constant 0 : index
    %c0_9 = arith.constant 0 : index
    %10 = vector.load %arg5[%c0_8, %c0_9] : memref<8x128xf32, #tpu.memory_space<vmem>>, vector<8x128xf32>
    tpu.vector_store %arg5[%c0_8, %c0_9], %9 {strides = array<i32>} : memref<8x128xf32, #tpu.memory_space<vmem>>, vector<8x128xf32>,
    return
  }
  func.func @transform_0(%arg0: i32) -> (i32, i32) {
    %c0_i32 = arith.constant 0 : i32
    %c0_i32_0 = arith.constant 0 : i32
    return %arg0, %c0_i32 : i32, i32
  }
  func.func @transform_1(%arg0: i32) -> (i32, i32) {
    %c0_i32 = arith.constant 0 : i32
    %c0_i32_0 = arith.constant 0 : i32
    %c0_i32_1 = arith.constant 0 : i32
    return %c0_i32, %c0_i32_0 : i32, i32
  }
  func.func @transform_2(%arg0: i32) -> (i32, i32) {
    %c0_i32 = arith.constant 0 : i32
    %c0_i32_0 = arith.constant 0 : i32
    %c0_i32_1 = arith.constant 0 : i32
    return %c0_i32, %c0_i32_0 : i32, i32
  }
  func.func @transform_3(%arg0: i32) -> (i32, i32) {
    %c0_i32 = arith.constant 0 : i32
    %c0_i32_0 = arith.constant 0 : i32
    return %arg0, %c0_i32 : i32, i32
  }
  func.func @transform_4(%arg0: i32) -> (i32, i32) {
    %c0_i32 = arith.constant 0 : i32
    %c0_i32_0 = arith.constant 0 : i32
    return %arg0, %c0_i32 : i32, i32
  }
}

module attributes {stable_mosaic.version = 11 : i64} {
  func.func @_conv_heads_kernel(%arg0: i32, %arg1: memref<8x1152xbf16, #tpu.memory_space<vmem>>, %arg2: memref<1152x128xbf16, #tpu.memory_space<vmem>>, %arg3: memref<1x128xf32, #tpu.memory_space<vmem>>, %arg4: memref<8x128xf32, #tpu.memory_space<vmem>>) attributes {dimension_semantics = [#tpu.dimension_semantics<parallel>], iteration_bounds = array<i64: 1>, scalar_prefetch = 0 : i64, scratch_operands = 0 : i64, tpu.core_type = #tpu.core_type<tc>, window_params = [{transform_indices = @transform_0, window_bounds = array<i64: 8, 1152>}, {pipeline_mode = #tpu.pipeline_mode<synchronous>, transform_indices = @transform_1, window_bounds = array<i64: 1152, 128>}, {pipeline_mode = #tpu.pipeline_mode<synchronous>, transform_indices = @transform_2, window_bounds = array<i64: 1, 128>}, {transform_indices = @transform_3, window_bounds = array<i64: 8, 128>}]} {
    %c0 = arith.constant 0 : index
    %c0_0 = arith.constant 0 : index
    %0 = vector.load %arg1[%c0, %c0_0] : memref<8x1152xbf16, #tpu.memory_space<vmem>>, vector<8x1152xbf16>
    %c0_1 = arith.constant 0 : index
    %c0_2 = arith.constant 0 : index
    %1 = vector.load %arg2[%c0_1, %c0_2] : memref<1152x128xbf16, #tpu.memory_space<vmem>>, vector<1152x128xbf16>
    %cst = arith.constant dense<0.000000e+00> : vector<8x128xf32>
    %2 = tpu.matmul %0, %1, %cst {dimension_numbers = #tpu.dot_dimension_numbers<[1], [0], [0], [1], [0, 0, 1, 1], [], []>} : vector<8x1152xbf16>, vector<1152x128xbf16>, vector<8x128xf32> -> vector<8x128xf32>
    %c0_3 = arith.constant 0 : index
    %c0_4 = arith.constant 0 : index
    %3 = vector.load %arg3[%c0_3, %c0_4] : memref<1x128xf32, #tpu.memory_space<vmem>>, vector<1x128xf32>
    %4 = vector.broadcast %3 : vector<1x128xf32> to vector<8x128xf32>
    %5 = arith.addf %2, %4 : vector<8x128xf32>
    %cst_5 = arith.constant 0.000000e+00 : f32
    %6 = vector.broadcast %cst_5 : f32 to vector<8x128xf32>
    %7 = arith.maximumf %5, %6 : vector<8x128xf32>
    %c0_6 = arith.constant 0 : index
    %c0_7 = arith.constant 0 : index
    %8 = vector.load %arg4[%c0_6, %c0_7] : memref<8x128xf32, #tpu.memory_space<vmem>>, vector<8x128xf32>
    tpu.vector_store %arg4[%c0_6, %c0_7], %7 {strides = array<i32>} : memref<8x128xf32, #tpu.memory_space<vmem>>, vector<8x128xf32>,
    return
  }
  func.func @transform_0(%arg0: i32) -> (i32, i32) {
    %c0_i32 = arith.constant 0 : i32
    %c0_i32_0 = arith.constant 0 : i32
    return %arg0, %c0_i32 : i32, i32
  }
  func.func @transform_1(%arg0: i32) -> (i32, i32) {
    %c0_i32 = arith.constant 0 : i32
    %c0_i32_0 = arith.constant 0 : i32
    %c0_i32_1 = arith.constant 0 : i32
    return %c0_i32, %c0_i32_0 : i32, i32
  }
  func.func @transform_2(%arg0: i32) -> (i32, i32) {
    %c0_i32 = arith.constant 0 : i32
    %c0_i32_0 = arith.constant 0 : i32
    %c0_i32_1 = arith.constant 0 : i32
    return %c0_i32, %c0_i32_0 : i32, i32
  }
  func.func @transform_3(%arg0: i32) -> (i32, i32) {
    %c0_i32 = arith.constant 0 : i32
    %c0_i32_0 = arith.constant 0 : i32
    return %arg0, %c0_i32 : i32, i32
  }
}

module attributes {stable_mosaic.version = 11 : i64} {
  func.func @_conv_heads_kernel(%arg0: i32, %arg1: memref<8x1152xbf16, #tpu.memory_space<vmem>>, %arg2: memref<1152x128xbf16, #tpu.memory_space<vmem>>, %arg3: memref<1x128xf32, #tpu.memory_space<vmem>>, %arg4: memref<8x128xf32, #tpu.memory_space<vmem>>, %arg5: memref<8x128xf32, #tpu.memory_space<vmem>>) attributes {dimension_semantics = [#tpu.dimension_semantics<parallel>], iteration_bounds = array<i64: 1>, scalar_prefetch = 0 : i64, scratch_operands = 0 : i64, tpu.core_type = #tpu.core_type<tc>, window_params = [{transform_indices = @transform_0, window_bounds = array<i64: 8, 1152>}, {pipeline_mode = #tpu.pipeline_mode<synchronous>, transform_indices = @transform_1, window_bounds = array<i64: 1152, 128>}, {pipeline_mode = #tpu.pipeline_mode<synchronous>, transform_indices = @transform_2, window_bounds = array<i64: 1, 128>}, {transform_indices = @transform_3, window_bounds = array<i64: 8, 128>}, {transform_indices = @transform_4, window_bounds = array<i64: 8, 128>}]} {
    %c0 = arith.constant 0 : index
    %c0_0 = arith.constant 0 : index
    %0 = vector.load %arg1[%c0, %c0_0] : memref<8x1152xbf16, #tpu.memory_space<vmem>>, vector<8x1152xbf16>
    %c0_1 = arith.constant 0 : index
    %c0_2 = arith.constant 0 : index
    %1 = vector.load %arg2[%c0_1, %c0_2] : memref<1152x128xbf16, #tpu.memory_space<vmem>>, vector<1152x128xbf16>
    %cst = arith.constant dense<0.000000e+00> : vector<8x128xf32>
    %2 = tpu.matmul %0, %1, %cst {dimension_numbers = #tpu.dot_dimension_numbers<[1], [0], [0], [1], [0, 0, 1, 1], [], []>} : vector<8x1152xbf16>, vector<1152x128xbf16>, vector<8x128xf32> -> vector<8x128xf32>
    %c0_3 = arith.constant 0 : index
    %c0_4 = arith.constant 0 : index
    %3 = vector.load %arg3[%c0_3, %c0_4] : memref<1x128xf32, #tpu.memory_space<vmem>>, vector<1x128xf32>
    %4 = vector.broadcast %3 : vector<1x128xf32> to vector<8x128xf32>
    %5 = arith.addf %2, %4 : vector<8x128xf32>
    %c0_5 = arith.constant 0 : index
    %c0_6 = arith.constant 0 : index
    %6 = vector.load %arg4[%c0_5, %c0_6] : memref<8x128xf32, #tpu.memory_space<vmem>>, vector<8x128xf32>
    %7 = arith.addf %5, %6 : vector<8x128xf32>
    %cst_7 = arith.constant 0.000000e+00 : f32
    %8 = vector.broadcast %cst_7 : f32 to vector<8x128xf32>
    %9 = arith.maximumf %7, %8 : vector<8x128xf32>
    %c0_8 = arith.constant 0 : index
    %c0_9 = arith.constant 0 : index
    %10 = vector.load %arg5[%c0_8, %c0_9] : memref<8x128xf32, #tpu.memory_space<vmem>>, vector<8x128xf32>
    tpu.vector_store %arg5[%c0_8, %c0_9], %9 {strides = array<i32>} : memref<8x128xf32, #tpu.memory_space<vmem>>, vector<8x128xf32>,
    return
  }
  func.func @transform_0(%arg0: i32) -> (i32, i32) {
    %c0_i32 = arith.constant 0 : i32
    %c0_i32_0 = arith.constant 0 : i32
    return %arg0, %c0_i32 : i32, i32
  }
  func.func @transform_1(%arg0: i32) -> (i32, i32) {
    %c0_i32 = arith.constant 0 : i32
    %c0_i32_0 = arith.constant 0 : i32
    %c0_i32_1 = arith.constant 0 : i32
    return %c0_i32, %c0_i32_0 : i32, i32
  }
  func.func @transform_2(%arg0: i32) -> (i32, i32) {
    %c0_i32 = arith.constant 0 : i32
    %c0_i32_0 = arith.constant 0 : i32
    %c0_i32_1 = arith.constant 0 : i32
    return %c0_i32, %c0_i32_0 : i32, i32
  }
  func.func @transform_3(%arg0: i32) -> (i32, i32) {
    %c0_i32 = arith.constant 0 : i32
    %c0_i32_0 = arith.constant 0 : i32
    return %arg0, %c0_i32 : i32, i32
  }
  func.func @transform_4(%arg0: i32) -> (i32, i32) {
    %c0_i32 = arith.constant 0 : i32
    %c0_i32_0 = arith.constant 0 : i32
    return %arg0, %c0_i32 : i32, i32
  }
}

</mosaic_0001>

<llo_original>
// kernel: forward.18
$region0: #{forward.18}
  #allocation0 [shape = 'u32[]', space=smem, size = 0x4, offset = 0x4, fixed_abs, tag = 'smem constant byte address 0x4 - core index']
  #allocation1 [shape = 'u32[72,128]{1,0:T(1,128)}', space=vmem, size = 0x9000, scoped, tag = 'internal scratch']
  %s0 = inlined_call_operand.vmem [shape: bf16[2048,27], index: 0, kind: input, shape index: {}]
  %s1 = inlined_call_operand.vmem [shape: bf16[27,8], index: 1, kind: input, shape index: {}]
  %s2 = inlined_call_operand.vmem [shape: f32[1,8], index: 2, kind: input, shape index: {}]
  %s3 = inlined_call_operand.vmem [shape: f32[2048,8], index: 3, kind: output, shape index: {}]
  %s4 = sld [smem:[#allocation0]]
  $region45: #{forward.18} parent=0
    _
  %s6 = ssub.s32 1, %s4
  %s7 = scalar_select 0, %s6, %s4
  loop: start=0, step=1, limit=4
  $region2: #{forward.18} parent=0 // loop_pre_header
    _
  $region3: #{forward.18} parent=0 // loop_header
    %s9 = sphi 0, %s13
    %p10 = scmp.ge.s32.totalorder %s9, 4
    %s19 = sphi 0, %s21
    %s22 = sphi 0, %s19
    %s23 = sphi 0, %s22
    %s39 = sphi 0, %s23
    %s43 = sphi 0, %s43
    %s45 = sphi 0, %s43
    %s46 = sphi 0, %s45
    %s60 = sphi 0, %s46
    %s64 = sphi 0, %s64
    %s66 = sphi 0, %s64
    %s67 = sphi 0, %s66
    %s81 = sphi 0, %s67
    %s87 = sphi 0, %s89
    %s90 = sphi 0, %s87
    %s91 = sphi 0, %s90
    %s107 = sphi 0, %s91
  $region4: #{forward.18} parent=0 // loop_header_branch
    %12 = sbr.rel (%p10) target = $region8
  $region5: #{forward.18} parent=0 // loop_body
    %s14 = ssub.s32 %s9, 1
    %s15 = ssub.s32 %s9, 2
    %s16 = sadd.s32 %s9, 1
    %s17 = ssub.s32 %s9, %s16
    %p18 = scmp.eq.s32.totalorder %s17, 0
    %s20 = sadd.s32 %s19, 1
    %s21 = scalar_select %p18, %s19, %s20
    %p24 = pneg %p18
    %p25 = scmp.eq.s32.totalorder %s9, 1
    %p26 = por %p24, %p25
    %p27 = scmp.ne.s32.totalorder %s19, %s22
    %p28 = scmp.eq.s32.totalorder %s9, 0
    %p29 = por %p27, %p28
    %p30 = scmp.ne.s32.totalorder %s19, %s22
    %p31 = scmp.eq.s32.totalorder %s14, 1
    %p32 = por %p30, %p31
    %p33 = scmp.ne.s32.totalorder %s22, %s23
    %p34 = scmp.eq.s32.totalorder %s14, 0
    %p35 = por %p33, %p34
    %p36 = scmp.ne.s32.totalorder %s22, %s23
    %p37 = scmp.eq.s32.totalorder %s15, 1
    %p38 = por %p36, %p37
    %p40 = scmp.ne.s32.totalorder %s23, %s39
    %p41 = scmp.eq.s32.totalorder %s15, 0
    %p42 = por %p40, %p41
    %s44 = sadd.s32 %s43, 1
    %p47 = scmp.eq.s32.totalorder %s9, 1
    %p48 = scmp.ne.s32.totalorder %s43, %s45
    %p49 = scmp.eq.s32.totalorder %s9, 0
    %p50 = por %p48, %p49
    %p51 = scmp.ne.s32.totalorder %s43, %s45
    %p52 = scmp.eq.s32.totalorder %s14, 1
    %p53 = por %p51, %p52
    %p54 = scmp.ne.s32.totalorder %s45, %s46
    %p55 = scmp.eq.s32.totalorder %s14, 0
    %p56 = por %p54, %p55
    %p57 = scmp.ne.s32.totalorder %s45, %s46
    %p58 = scmp.eq.s32.totalorder %s15, 1
    %p59 = por %p57, %p58
    %p61 = scmp.ne.s32.totalorder %s46, %s60
    %p62 = scmp.eq.s32.totalorder %s15, 0
    %p63 = por %p61, %p62
    %s65 = sadd.s32 %s64, 1
    %p68 = scmp.eq.s32.totalorder %s9, 1
    %p69 = scmp.ne.s32.totalorder %s64, %s66
    %p70 = scmp.eq.s32.totalorder %s9, 0
    %p71 = por %p69, %p70
    %p72 = scmp.ne.s32.totalorder %s64, %s66
    %p73 = scmp.eq.s32.totalorder %s14, 1
    %p74 = por %p72, %p73
    %p75 = scmp.ne.s32.totalorder %s66, %s67
    %p76 = scmp.eq.s32.totalorder %s14, 0
    %p77 = por %p75, %p76
    %p78 = scmp.ne.s32.totalorder %s66, %s67
    %p79 = scmp.eq.s32.totalorder %s15, 1
    %p80 = por %p78, %p79
    %p82 = scmp.ne.s32.totalorder %s67, %s81
    %p83 = scmp.eq.s32.totalorder %s15, 0
    %p84 = por %p82, %p83
    %s85 = ssub.s32 %s9, %s16
    %p86 = scmp.eq.s32.totalorder %s85, 0
    %s88 = sadd.s32 %s87, 1
    %s89 = scalar_select %p86, %s87, %s88
    %p92 = pneg %p86
    %p93 = scmp.eq.s32.totalorder %s9, 1
    %p94 = por %p92, %p93
    %p95 = scmp.ne.s32.totalorder %s87, %s90
    %p96 = scmp.eq.s32.totalorder %s9, 0
    %p97 = por %p95, %p96
    %p98 = scmp.ne.s32.totalorder %s87, %s90
    %p99 = scmp.eq.s32.totalorder %s14, 1
    %p100 = por %p98, %p99
    %p101 = scmp.ne.s32.totalorder %s90, %s91
    %p102 = scmp.eq.s32.totalorder %s14, 0
    %p103 = por %p101, %p102
    %p104 = scmp.ne.s32.totalorder %s90, %s91
    %p105 = scmp.eq.s32.totalorder %s15, 1
    %p106 = por %p104, %p105
    %p108 = scmp.ne.s32.totalorder %s91, %s107
    %p109 = scmp.eq.s32.totalorder %s15, 0
    %p110 = por %p108, %p109
    %p111 = scmp.le.s32.totalorder 1, %s9
    %p112 = scmp.lt.s32.totalorder %s9, 3
    %p113 = pnand %p111, %p112
    %p114 = pneg %p113
    // Predicated region
    $region9: #{forward.18} parent=5 // pred_check
      _
    $region10: #{forward.18} parent=5 // pred_check_branch
      %116 = sbr.rel (%p113) target = $region12
    $region11: #{forward.18} parent=5 // pred_region
      %s117 = ssub.s32 %s9, 1
      // Predicated region
      $region13: #{forward.18} parent=11 // pred_check
        %p118 = pneg %p56
      $region14: #{forward.18} parent=11 // pred_check_branch
        %120 = sbr.rel (%p118) target = $region16
      $region15: #{forward.18} parent=11 // pred_region
        _
      $region16: #{forward.18} parent=11 // pred_fallthru
        _
      // Predicated region
      $region17: #{forward.18} parent=11 // pred_check
        %p121 = pneg %p77
      $region18: #{forward.18} parent=11 // pred_check_branch
        %123 = sbr.rel (%p121) target = $region20
      $region19: #{forward.18} parent=11 // pred_region
        _
      $region20: #{forward.18} parent=11 // pred_fallthru
        _
    $region12: #{forward.18} parent=5 // pred_fallthru
      _
    %p124 = scmp.lt.s32.totalorder %s9, 2
    // Predicated region
    $region21: #{forward.18} parent=5 // pred_check
      %p125 = pneg %p124
    $region22: #{forward.18} parent=5 // pred_check_branch
      %127 = sbr.rel (%p125) target = $region24
    $region23: #{forward.18} parent=5 // pred_region
      // Predicated region
      $region25: #{forward.18} parent=23 // pred_check
        %p128 = pneg %p29
      $region26: #{forward.18} parent=23 // pred_check_branch
        %130 = sbr.rel (%p128) target = $region28
      $region27: #{forward.18} parent=23 // pred_region
        %s131 = smul.u32 128, %s9
        %p132 = scmp.lt.s32.totalorder %s131, 255
        %s133 = scalar_select %p132, %s131, 255
        %s134 = smul.addr %s133, 4
        %s135 = scalar_lea.vmem %s0, %s134
        %s136 = smul.u32 128, %s9
      $region28: #{forward.18} parent=23 // pred_fallthru
        _
    $region24: #{forward.18} parent=5 // pred_fallthru
      _
    %p137 = scmp.le.s32.totalorder 1, %s9
    %p138 = scmp.lt.s32.totalorder %s9, 3
    %p139 = pnand %p137, %p138
    %p140 = pneg %p139
    // Predicated region
    $region29: #{forward.18} parent=5 // pred_check
      _
    $region30: #{forward.18} parent=5 // pred_check_branch
      %142 = sbr.rel (%p139) target = $region32
    $region31: #{forward.18} parent=5 // pred_region
      %s143 = ssub.s32 %s9, 1
      %s144 = smul.u32 128, %s14
      %p145 = scmp.lt.s32.totalorder %s144, 255
      %s146 = scalar_select %p145, %s144, 255
      %s147 = smul.addr %s146, 4
      %s148 = scalar_lea.vmem %s0, %s147
      %p149 = pneg %p35
      %p150 = pneg %p32
      %p151 = pneg %p56
      %p152 = pneg %p53
      %p153 = pneg %p77
      %p154 = pneg %p74
      %p155 = pneg %p103
      %p156 = pneg %p100
      %s157 = smul.u32 128, %s14
      %p158 = scmp.lt.s32.totalorder %s157, 255
      %s159 = scalar_select %p158, %s157, 255
      %s160 = smul.addr %s159, 8
      %s161 = scalar_lea.vmem %s3, %s160
      %s162 = smul.u32 128, %s14
      %p163 = scmp.lt.s32.totalorder %s162, 255
      %s164 = scalar_select %p163, %s162, 255
      %s165 = smul.addr %s164, 4
      %s166 = scalar_lea.vmem %s0, %s165
      %s167 = smul.u32 128, %s14
      %s168 = smul.u32 128, %s14
      %p169 = scmp.lt.s32.totalorder %s168, 255
      %s170 = scalar_select %p169, %s168, 255
      %s171 = smul.addr %s170, 8
      %s172 = scalar_lea.vmem %s3, %s171
      %s173 = smul.u32 128, %s14
      %v175 = vld [vmem:[%s166] sm:$0xf]
      %v176 = vld [vmem:[%s166 + $0x4] sm:$0xf]
      %v177 = vld [vmem:[%s166 + $0x8] sm:$0xf]
      %v178 = vld [vmem:[%s166 + $0xc] sm:$0xf]
      %v179 = vld [vmem:[%s166 + $0x10] sm:$0xf]
      %v180 = vld [vmem:[%s166 + $0x14] sm:$0xf]
      %v181 = vld [vmem:[%s166 + $0x18] sm:$0xf]
      %v182 = vld [vmem:[%s166 + $0x1c] sm:$0xf]
      %v183 = vld [vmem:[%s166 + $0x20] sm:$0xf]
      %v184 = vld [vmem:[%s166 + $0x24] sm:$0xf]
      %v185 = vld [vmem:[%s166 + $0x28] sm:$0xf]
      %v186 = vld [vmem:[%s166 + $0x2c] sm:$0xf]
      %v187 = vld [vmem:[%s166 + $0x30] sm:$0xf]
      %v188 = vld [vmem:[%s166 + $0x34] sm:$0xf]
      %v189 = vld [vmem:[%s166 + $0x38] sm:$0xf]
      %v190 = vld [vmem:[%s166 + $0x3c] sm:$0xf]
      %v191 = vld [vmem:[%s166 + $0x40] sm:$0xf]
      %v192 = vld [vmem:[%s166 + $0x44] sm:$0xf]
      %v193 = vld [vmem:[%s166 + $0x48] sm:$0xf]
      %v194 = vld [vmem:[%s166 + $0x4c] sm:$0xf]
      %v195 = vld [vmem:[%s166 + $0x50] sm:$0xf]
      %v196 = vld [vmem:[%s166 + $0x54] sm:$0xf]
      %v197 = vld [vmem:[%s166 + $0x58] sm:$0xf]
      %v198 = vld [vmem:[%s166 + $0x5c] sm:$0xf]
      %v199 = vld [vmem:[%s166 + $0x60] sm:$0xf]
      %v200 = vld [vmem:[%s166 + $0x64] sm:$0xf]
      %v201 = vld [vmem:[%s166 + $0x68] sm:$0xf]
      %v202 = vld [vmem:[%s166 + $0x6c] sm:$0xf]
      %v203 = vld [vmem:[%s166 + $0x70] sm:$0xf]
      %v204 = vld [vmem:[%s166 + $0x74] sm:$0xf]
      %v205 = vld [vmem:[%s166 + $0x78] sm:$0xf]
      %v206 = vld [vmem:[%s166 + $0x7c] sm:$0xf]
      %v207 = vld [vmem:[%s166 + $0x80] sm:$0xf]
      %v208 = vld [vmem:[%s166 + $0x84] sm:$0xf]
      %v209 = vld [vmem:[%s166 + $0x88] sm:$0xf]
      %v210 = vld [vmem:[%s166 + $0x8c] sm:$0xf]
      %v211 = vld [vmem:[%s166 + $0x90] sm:$0xf]
      %v212 = vld [vmem:[%s166 + $0x94] sm:$0xf]
      %v213 = vld [vmem:[%s166 + $0x98] sm:$0xf]
      %v214 = vld [vmem:[%s166 + $0x9c] sm:$0xf]
      %v215 = vld [vmem:[%s166 + $0xa0] sm:$0xf]
      %v216 = vld [vmem:[%s166 + $0xa4] sm:$0xf]
      %v217 = vld [vmem:[%s166 + $0xa8] sm:$0xf]
      %v218 = vld [vmem:[%s166 + $0xac] sm:$0xf]
      %v219 = vld [vmem:[%s166 + $0xb0] sm:$0xf]
      %v220 = vld [vmem:[%s166 + $0xb4] sm:$0xf]
      %v221 = vld [vmem:[%s166 + $0xb8] sm:$0xf]
      %v222 = vld [vmem:[%s166 + $0xbc] sm:$0xf]
      %v223 = vld [vmem:[%s166 + $0xc0] sm:$0xf]
      %v224 = vld [vmem:[%s166 + $0xc4] sm:$0xf]
      %v225 = vld [vmem:[%s166 + $0xc8] sm:$0xf]
      %v226 = vld [vmem:[%s166 + $0xcc] sm:$0xf]
      %v227 = vld [vmem:[%s166 + $0xd0] sm:$0xf]
      %v228 = vld [vmem:[%s166 + $0xd4] sm:$0xf]
      %v229 = vld [vmem:[%s166 + $0xd8] sm:$0xf]
      %v230 = vld [vmem:[%s166 + $0xdc] sm:$0xf]
      %v231 = vld [vmem:[%s166 + $0xe0] sm:$0xf]
      %v232 = vld [vmem:[%s166 + $0xe4] sm:$0xf]
      %v233 = vld [vmem:[%s166 + $0xe8] sm:$0xf]
      %v234 = vld [vmem:[%s166 + $0xec] sm:$0xf]
      %v235 = vld [vmem:[%s166 + $0xf0] sm:$0xf]
      %v236 = vld [vmem:[%s166 + $0xf4] sm:$0xf]
      %v237 = vld [vmem:[%s166 + $0xf8] sm:$0xf]
      %v238 = vld [vmem:[%s166 + $0xfc] sm:$0xf]
      %v239 = vld [vmem:[%s166 + $0x100] sm:$0xf]
      %v240 = vld [vmem:[%s166 + $0x104] sm:$0xf]
      %v241 = vld [vmem:[%s166 + $0x108] sm:$0xf]
      %v242 = vld [vmem:[%s166 + $0x10c] sm:$0xf]
      %v243 = vld [vmem:[%s166 + $0x110] sm:$0xf]
      %v244 = vld [vmem:[%s166 + $0x114] sm:$0xf]
      %v245 = vld [vmem:[%s166 + $0x118] sm:$0xf]
      %v246 = vld [vmem:[%s166 + $0x11c] sm:$0xf]
      %v247 = vld [vmem:[%s166 + $0x120] sm:$0xf]
      %v248 = vld [vmem:[%s166 + $0x124] sm:$0xf]
      %v249 = vld [vmem:[%s166 + $0x128] sm:$0xf]
      %v250 = vld [vmem:[%s166 + $0x12c] sm:$0xf]
      %v251 = vld [vmem:[%s166 + $0x130] sm:$0xf]
      %v252 = vld [vmem:[%s166 + $0x134] sm:$0xf]
      %v253 = vld [vmem:[%s166 + $0x138] sm:$0xf]
      %v254 = vld [vmem:[%s166 + $0x13c] sm:$0xf]
      %v255 = vld [vmem:[%s166 + $0x140] sm:$0xf]
      %v256 = vld [vmem:[%s166 + $0x144] sm:$0xf]
      %v257 = vld [vmem:[%s166 + $0x148] sm:$0xf]
      %v258 = vld [vmem:[%s166 + $0x14c] sm:$0xf]
      %v259 = vld [vmem:[%s166 + $0x150] sm:$0xf]
      %v260 = vld [vmem:[%s166 + $0x154] sm:$0xf]
      %v261 = vld [vmem:[%s166 + $0x158] sm:$0xf]
      %v262 = vld [vmem:[%s166 + $0x15c] sm:$0xf]
      %v263 = vld [vmem:[%s166 + $0x160] sm:$0xf]
      %v264 = vld [vmem:[%s166 + $0x164] sm:$0xf]
      %v265 = vld [vmem:[%s166 + $0x168] sm:$0xf]
      %v266 = vld [vmem:[%s166 + $0x16c] sm:$0xf]
      %v267 = vld [vmem:[%s166 + $0x170] sm:$0xf]
      %v268 = vld [vmem:[%s166 + $0x174] sm:$0xf]
      %v269 = vld [vmem:[%s166 + $0x178] sm:$0xf]
      %v270 = vld [vmem:[%s166 + $0x17c] sm:$0xf]
      %v271 = vld [vmem:[%s166 + $0x180] sm:$0xf]
      %v272 = vld [vmem:[%s166 + $0x184] sm:$0xf]
      %v273 = vld [vmem:[%s166 + $0x188] sm:$0xf]
      %v274 = vld [vmem:[%s166 + $0x18c] sm:$0xf]
      %v275 = vld [vmem:[%s166 + $0x190] sm:$0xf]
      %v276 = vld [vmem:[%s166 + $0x194] sm:$0xf]
      %v277 = vld [vmem:[%s166 + $0x198] sm:$0xf]
      %v278 = vld [vmem:[%s166 + $0x19c] sm:$0xf]
      %v279 = vld [vmem:[%s166 + $0x1a0] sm:$0xf]
      %v280 = vld [vmem:[%s166 + $0x1a4] sm:$0xf]
      %v281 = vld [vmem:[%s166 + $0x1a8] sm:$0xf]
      %v282 = vld [vmem:[%s166 + $0x1ac] sm:$0xf]
      %v283 = vld [vmem:[%s166 + $0x1b0] sm:$0xf]
      %v284 = vld [vmem:[%s166 + $0x1b4] sm:$0xf]
      %v285 = vld [vmem:[%s166 + $0x1b8] sm:$0xf]
      %v286 = vld [vmem:[%s166 + $0x1bc] sm:$0xf]
      %v287 = vld [vmem:[%s166 + $0x1c0] sm:$0xf]
      %v288 = vld [vmem:[%s166 + $0x1c4] sm:$0xf]
      %v289 = vld [vmem:[%s166 + $0x1c8] sm:$0xf]
      %v290 = vld [vmem:[%s166 + $0x1cc] sm:$0xf]
      %v291 = vld [vmem:[%s166 + $0x1d0] sm:$0xf]
      %v292 = vld [vmem:[%s166 + $0x1d4] sm:$0xf]
      %v293 = vld [vmem:[%s166 + $0x1d8] sm:$0xf]
      %v294 = vld [vmem:[%s166 + $0x1dc] sm:$0xf]
      %v295 = vld [vmem:[%s166 + $0x1e0] sm:$0xf]
      %v296 = vld [vmem:[%s166 + $0x1e4] sm:$0xf]
      %v297 = vld [vmem:[%s166 + $0x1e8] sm:$0xf]
      %v298 = vld [vmem:[%s166 + $0x1ec] sm:$0xf]
      %v299 = vld [vmem:[%s166 + $0x1f0] sm:$0xf]
      %v300 = vld [vmem:[%s166 + $0x1f4] sm:$0xf]
      %v301 = vld [vmem:[%s166 + $0x1f8] sm:$0xf]
      %v302 = vld [vmem:[%s166 + $0x1fc] sm:$0xf]
      %v303 = vld [vmem:[%s1] sm:$0xf]
      %v304 = vld [vmem:[%s1 + $0x4] sm:$0xf]
      %v305 = vld [vmem:[%s1 + $0x8] sm:$0xf]
      %v306 = vld [vmem:[%s1 + $0xc] sm:$0x3]
      %v307 = vld [vmem:[%s2] sm:$0x1]
      %v309 = vperm.slane %v307, 0
      %v439 = vunpack.c.l.b16 %v175
      %v440 = vunpack.c.l.b16 %v176
      %v441 = vunpack.c.l.b16 %v177
      %v442 = vunpack.c.l.b16 %v178
      %v443 = vunpack.c.l.b16 %v179
      %v444 = vunpack.c.l.b16 %v180
      %v445 = vunpack.c.l.b16 %v181
      %v446 = vunpack.c.l.b16 %v182
      %v447 = vunpack.c.l.b16 %v183
      %v448 = vunpack.c.l.b16 %v184
      %v449 = vunpack.c.l.b16 %v185
      %v450 = vunpack.c.l.b16 %v186
      %v451 = vunpack.c.l.b16 %v187
      %v452 = vunpack.c.l.b16 %v188
      %v453 = vunpack.c.l.b16 %v189
      %v454 = vunpack.c.l.b16 %v190
      %v455 = vunpack.c.l.b16 %v191
      %v456 = vunpack.c.l.b16 %v192
      %v457 = vunpack.c.l.b16 %v193
      %v458 = vunpack.c.l.b16 %v194
      %v459 = vunpack.c.l.b16 %v195
      %v460 = vunpack.c.l.b16 %v196
      %v461 = vunpack.c.l.b16 %v197
      %v462 = vunpack.c.l.b16 %v198
      %v463 = vunpack.c.l.b16 %v199
      %v464 = vunpack.c.l.b16 %v200
      %v465 = vunpack.c.l.b16 %v201
      %v466 = vunpack.c.l.b16 %v202
      %v467 = vunpack.c.l.b16 %v203
      %v468 = vunpack.c.l.b16 %v204
      %v469 = vunpack.c.l.b16 %v205
      %v470 = vunpack.c.l.b16 %v206
      %v471 = vunpack.c.l.b16 %v207
      %v472 = vunpack.c.l.b16 %v208
      %v473 = vunpack.c.l.b16 %v209
      %v474 = vunpack.c.l.b16 %v210
      %v475 = vunpack.c.l.b16 %v211
      %v476 = vunpack.c.l.b16 %v212
      %v477 = vunpack.c.l.b16 %v213
      %v478 = vunpack.c.l.b16 %v214
      %v479 = vunpack.c.l.b16 %v215
      %v480 = vunpack.c.l.b16 %v216
      %v481 = vunpack.c.l.b16 %v217
      %v482 = vunpack.c.l.b16 %v218
      %v483 = vunpack.c.l.b16 %v219
      %v484 = vunpack.c.l.b16 %v220
      %v485 = vunpack.c.l.b16 %v221
      %v486 = vunpack.c.l.b16 %v222
      %v487 = vunpack.c.l.b16 %v223
      %v488 = vunpack.c.l.b16 %v224
      %v489 = vunpack.c.l.b16 %v225
      %v490 = vunpack.c.l.b16 %v226
      %v491 = vunpack.c.l.b16 %v227
      %v492 = vunpack.c.l.b16 %v228
      %v493 = vunpack.c.l.b16 %v229
      %v494 = vunpack.c.l.b16 %v230
      %v495 = vunpack.c.l.b16 %v231
      %v496 = vunpack.c.l.b16 %v232
      %v497 = vunpack.c.l.b16 %v233
      %v498 = vunpack.c.l.b16 %v234
      %v499 = vunpack.c.l.b16 %v235
      %v500 = vunpack.c.l.b16 %v236
      %v501 = vunpack.c.l.b16 %v237
      %v502 = vunpack.c.l.b16 %v238
      %v503 = vunpack.c.l.b16 %v239
      %v504 = vunpack.c.l.b16 %v240
      %v505 = vunpack.c.l.b16 %v241
      %v506 = vunpack.c.l.b16 %v242
      %v507 = vunpack.c.l.b16 %v243
      %v508 = vunpack.c.l.b16 %v244
      %v509 = vunpack.c.l.b16 %v245
      %v510 = vunpack.c.l.b16 %v246
      %v511 = vunpack.c.l.b16 %v247
      %v512 = vunpack.c.l.b16 %v248
      %v513 = vunpack.c.l.b16 %v249
      %v514 = vunpack.c.l.b16 %v250
      %v515 = vunpack.c.l.b16 %v251
      %v516 = vunpack.c.l.b16 %v252
      %v517 = vunpack.c.l.b16 %v253
      %v518 = vunpack.c.l.b16 %v254
      %v519 = vunpack.c.l.b16 %v255
      %v520 = vunpack.c.l.b16 %v256
      %v521 = vunpack.c.l.b16 %v257
      %v522 = vunpack.c.l.b16 %v258
      %v523 = vunpack.c.l.b16 %v259
      %v524 = vunpack.c.l.b16 %v260
      %v525 = vunpack.c.l.b16 %v261
      %v526 = vunpack.c.l.b16 %v262
      %v527 = vunpack.c.l.b16 %v263
      %v528 = vunpack.c.l.b16 %v264
      %v529 = vunpack.c.l.b16 %v265
      %v530 = vunpack.c.l.b16 %v266
      %v531 = vunpack.c.l.b16 %v267
      %v532 = vunpack.c.l.b16 %v268
      %v533 = vunpack.c.l.b16 %v269
      %v534 = vunpack.c.l.b16 %v270
      %v535 = vunpack.c.l.b16 %v271
      %v536 = vunpack.c.l.b16 %v272
      %v537 = vunpack.c.l.b16 %v273
      %v538 = vunpack.c.l.b16 %v274
      %v539 = vunpack.c.l.b16 %v275
      %v540 = vunpack.c.l.b16 %v276
      %v541 = vunpack.c.l.b16 %v277
      %v542 = vunpack.c.l.b16 %v278
      %v543 = vunpack.c.l.b16 %v279
      %v544 = vunpack.c.l.b16 %v280
      %v545 = vunpack.c.l.b16 %v281
      %v546 = vunpack.c.l.b16 %v282
      %v547 = vunpack.c.l.b16 %v283
      %v548 = vunpack.c.l.b16 %v284
      %v549 = vunpack.c.l.b16 %v285
      %v550 = vunpack.c.l.b16 %v286
      %v551 = vunpack.c.l.b16 %v287
      %v552 = vunpack.c.l.b16 %v288
      %v553 = vunpack.c.l.b16 %v289
      %v554 = vunpack.c.l.b16 %v290
      %v555 = vunpack.c.l.b16 %v291
      %v556 = vunpack.c.l.b16 %v292
      %v557 = vunpack.c.l.b16 %v293
      %v558 = vunpack.c.l.b16 %v294
      %v559 = vunpack.c.l.b16 %v295
      %v560 = vunpack.c.l.b16 %v296
      %v561 = vunpack.c.l.b16 %v297
      %v562 = vunpack.c.l.b16 %v298
      %v563 = vunpack.c.l.b16 %v299
      %v564 = vunpack.c.l.b16 %v300
      %v565 = vunpack.c.l.b16 %v301
      %v566 = vunpack.c.l.b16 %v302
      %v567 = vpack.c.b16 %v440, %v439
      %v568 = vpack.c.b16 %v442, %v441
      %v569 = vpack.c.b16 %v444, %v443
      %v570 = vpack.c.b16 %v446, %v445
      %v571 = vpack.c.b16 %v448, %v447
      %v572 = vpack.c.b16 %v450, %v449
      %v573 = vpack.c.b16 %v452, %v451
      %v574 = vpack.c.b16 %v454, %v453
      %v575 = vpack.c.b16 %v456, %v455
      %v576 = vpack.c.b16 %v458, %v457
      %v577 = vpack.c.b16 %v460, %v459
      %v578 = vpack.c.b16 %v462, %v461
      %v579 = vpack.c.b16 %v464, %v463
      %v580 = vpack.c.b16 %v466, %v465
      %v581 = vpack.c.b16 %v468, %v467
      %v582 = vpack.c.b16 %v470, %v469
      %v583 = vpack.c.b16 %v472, %v471
      %v584 = vpack.c.b16 %v474, %v473
      %v585 = vpack.c.b16 %v476, %v475
      %v586 = vpack.c.b16 %v478, %v477
      %v587 = vpack.c.b16 %v480, %v479
      %v588 = vpack.c.b16 %v482, %v481
      %v589 = vpack.c.b16 %v484, %v483
      %v590 = vpack.c.b16 %v486, %v485
      %v591 = vpack.c.b16 %v488, %v487
      %v592 = vpack.c.b16 %v490, %v489
      %v593 = vpack.c.b16 %v492, %v491
      %v594 = vpack.c.b16 %v494, %v493
      %v595 = vpack.c.b16 %v496, %v495
      %v596 = vpack.c.b16 %v498, %v497
      %v597 = vpack.c.b16 %v500, %v499
      %v598 = vpack.c.b16 %v502, %v501
      %v599 = vpack.c.b16 %v504, %v503
      %v600 = vpack.c.b16 %v506, %v505
      %v601 = vpack.c.b16 %v508, %v507
      %v602 = vpack.c.b16 %v510, %v509
      %v603 = vpack.c.b16 %v512, %v511
      %v604 = vpack.c.b16 %v514, %v513
      %v605 = vpack.c.b16 %v516, %v515
      %v606 = vpack.c.b16 %v518, %v517
      %v607 = vpack.c.b16 %v520, %v519
      %v608 = vpack.c.b16 %v522, %v521
      %v609 = vpack.c.b16 %v524, %v523
      %v610 = vpack.c.b16 %v526, %v525
      %v611 = vpack.c.b16 %v528, %v527
      %v612 = vpack.c.b16 %v530, %v529
      %v613 = vpack.c.b16 %v532, %v531
      %v614 = vpack.c.b16 %v534, %v533
      %v615 = vpack.c.b16 %v536, %v535
      %v616 = vpack.c.b16 %v538, %v537
      %v617 = vpack.c.b16 %v540, %v539
      %v618 = vpack.c.b16 %v542, %v541
      %v619 = vpack.c.b16 %v544, %v543
      %v620 = vpack.c.b16 %v546, %v545
      %v621 = vpack.c.b16 %v548, %v547
      %v622 = vpack.c.b16 %v550, %v549
      %v623 = vpack.c.b16 %v552, %v551
      %v624 = vpack.c.b16 %v554, %v553
      %v625 = vpack.c.b16 %v556, %v555
      %v626 = vpack.c.b16 %v558, %v557
      %v627 = vpack.c.b16 %v560, %v559
      %v628 = vpack.c.b16 %v562, %v561
      %v629 = vpack.c.b16 %v564, %v563
      %v630 = vpack.c.b16 %v566, %v565
      %v635 = vunpack.c.l.b16 %v303
      %v636 = vunpack.c.l.b16 %v304
      %v637 = vunpack.c.l.b16 %v305
      %v638 = vunpack.c.l.b16 %v306
      %v639 = vpack.c.b16 %v636, %v635
      %v640 = vpack.c.b16 %v638, %v637
      %vm642 = vcmask 220160
      %v644 = vsel %vm642, %v567, 0
      %v647 = vsel %vm642, %v568, 0
      %v650 = vsel %vm642, %v569, 0
      %v653 = vsel %vm642, %v570, 0
      %v656 = vsel %vm642, %v571, 0
      %v659 = vsel %vm642, %v572, 0
      %v662 = vsel %vm642, %v573, 0
      %v665 = vsel %vm642, %v574, 0
      %v668 = vsel %vm642, %v575, 0
      %v671 = vsel %vm642, %v576, 0
      %v674 = vsel %vm642, %v577, 0
      %v677 = vsel %vm642, %v578, 0
      %v680 = vsel %vm642, %v579, 0
      %v683 = vsel %vm642, %v580, 0
      %v686 = vsel %vm642, %v581, 0
      %v689 = vsel %vm642, %v582, 0
      %v692 = vsel %vm642, %v583, 0
      %v695 = vsel %vm642, %v584, 0
      %v698 = vsel %vm642, %v585, 0
      %v701 = vsel %vm642, %v586, 0
      %v704 = vsel %vm642, %v587, 0
      %v707 = vsel %vm642, %v588, 0
      %v710 = vsel %vm642, %v589, 0
      %v713 = vsel %vm642, %v590, 0
      %v716 = vsel %vm642, %v591, 0
      %v719 = vsel %vm642, %v592, 0
      %v722 = vsel %vm642, %v593, 0
      %v725 = vsel %vm642, %v594, 0
      %v728 = vsel %vm642, %v595, 0
      %v731 = vsel %vm642, %v596, 0
      %v734 = vsel %vm642, %v597, 0
      %v737 = vsel %vm642, %v598, 0
      %v740 = vsel %vm642, %v599, 0
      %v743 = vsel %vm642, %v600, 0
      %v746 = vsel %vm642, %v601, 0
      %v749 = vsel %vm642, %v602, 0
      %v752 = vsel %vm642, %v603, 0
      %v755 = vsel %vm642, %v604, 0
      %v758 = vsel %vm642, %v605, 0
      %v761 = vsel %vm642, %v606, 0
      %v764 = vsel %vm642, %v607, 0
      %v767 = vsel %vm642, %v608, 0
      %v770 = vsel %vm642, %v609, 0
      %v773 = vsel %vm642, %v610, 0
      %v776 = vsel %vm642, %v611, 0
      %v779 = vsel %vm642, %v612, 0
      %v782 = vsel %vm642, %v613, 0
      %v785 = vsel %vm642, %v614, 0
      %v788 = vsel %vm642, %v615, 0
      %v791 = vsel %vm642, %v616, 0
      %v794 = vsel %vm642, %v617, 0
      %v797 = vsel %vm642, %v618, 0
      %v800 = vsel %vm642, %v619, 0
      %v803 = vsel %vm642, %v620, 0
      %v806 = vsel %vm642, %v621, 0
      %v809 = vsel %vm642, %v622, 0
      %v812 = vsel %vm642, %v623, 0
      %v815 = vsel %vm642, %v624, 0
      %v818 = vsel %vm642, %v625, 0
      %v821 = vsel %vm642, %v626, 0
      %v824 = vsel %vm642, %v627, 0
      %v827 = vsel %vm642, %v628, 0
      %v830 = vsel %vm642, %v629, 0
      %v833 = vsel %vm642, %v630, 0
      %vm835 = vcmask 1044480
      %vm836 = vcmask 1045504
      %v837 = vsel %vm835, 4294967295, 65535
      %v838 = vsel %vm836, %v837, 0
      %v840 = vand.u32 %v640, %v838
      %842 = vmatpush.bf16.msra.mxu0 0
      %843 = vmatpush.bf16.msra.mxu0 0
      %844 = vmatpush.bf16.msra.mxu0 0
      %845 = vmatpush.bf16.msra.mxu0 0
      %846 = vmatpush.bf16.msra.mxu0 0
      %847 = vmatpush.bf16.msra.mxu0 0
      %848 = vmatpush.bf16.msra.mxu0 %v840
      %849 = vmatpush.bf16.msra.mxu0 %v639
      %850 = vmatmul.bf16.gmra.mxu0 %v644
      %v851 = vpop.f32.mrf.mxu0
      %v852 = vadd.f32 %v309, %v851
      %v853 = vpop.f32.mrf.mxu0
      %v854 = vadd.f32 %v309, %v853
      %855 = vmatmul.bf16.gmra.mxu0 %v647
      %v856 = vpop.f32.mrf.mxu0
      %v857 = vadd.f32 %v309, %v856
      %v858 = vpop.f32.mrf.mxu0
      %v859 = vadd.f32 %v309, %v858
      %860 = vmatmul.bf16.gmra.mxu0 %v650
      %v861 = vpop.f32.mrf.mxu0
      %v862 = vadd.f32 %v309, %v861
      %v863 = vpop.f32.mrf.mxu0
      %v864 = vadd.f32 %v309, %v863
      %865 = vmatmul.bf16.gmra.mxu0 %v653
      %v866 = vpop.f32.mrf.mxu0
      %v867 = vadd.f32 %v309, %v866
      %v868 = vpop.f32.mrf.mxu0
      %v869 = vadd.f32 %v309, %v868
      %870 = vmatmul.bf16.gmra.mxu0 %v656
      %v871 = vpop.f32.mrf.mxu0
      %v872 = vadd.f32 %v309, %v871
      %v873 = vpop.f32.mrf.mxu0
      %v874 = vadd.f32 %v309, %v873
      %875 = vmatmul.bf16.gmra.mxu0 %v659
      %v876 = vpop.f32.mrf.mxu0
      %v877 = vadd.f32 %v309, %v876
      %v878 = vpop.f32.mrf.mxu0
      %v879 = vadd.f32 %v309, %v878
      %880 = vmatmul.bf16.gmra.mxu0 %v662
      %v881 = vpop.f32.mrf.mxu0
      %v882 = vadd.f32 %v309, %v881
      %v883 = vpop.f32.mrf.mxu0
      %v884 = vadd.f32 %v309, %v883
      %885 = vmatmul.bf16.gmra.mxu0 %v665
      %v886 = vpop.f32.mrf.mxu0
      %v887 = vadd.f32 %v309, %v886
      %v888 = vpop.f32.mrf.mxu0
      %v889 = vadd.f32 %v309, %v888
      %890 = vmatmul.bf16.gmra.mxu0 %v668
      %v891 = vpop.f32.mrf.mxu0
      %v892 = vadd.f32 %v309, %v891
      %v893 = vpop.f32.mrf.mxu0
      %v894 = vadd.f32 %v309, %v893
      %895 = vmatmul.bf16.gmra.mxu0 %v671
      %v896 = vpop.f32.mrf.mxu0
      %v897 = vadd.f32 %v309, %v896
      %v898 = vpop.f32.mrf.mxu0
      %v899 = vadd.f32 %v309, %v898
      %900 = vmatmul.bf16.gmra.mxu0 %v674
      %v901 = vpop.f32.mrf.mxu0
      %v902 = vadd.f32 %v309, %v901
      %v903 = vpop.f32.mrf.mxu0
      %v904 = vadd.f32 %v309, %v903
      %905 = vmatmul.bf16.gmra.mxu0 %v677
      %v906 = vpop.f32.mrf.mxu0
      %v907 = vadd.f32 %v309, %v906
      %v908 = vpop.f32.mrf.mxu0
      %v909 = vadd.f32 %v309, %v908
      %910 = vmatmul.bf16.gmra.mxu0 %v680
      %v911 = vpop.f32.mrf.mxu0
      %v912 = vadd.f32 %v309, %v911
      %v913 = vpop.f32.mrf.mxu0
      %v914 = vadd.f32 %v309, %v913
      %915 = vmatmul.bf16.gmra.mxu0 %v683
      %v916 = vpop.f32.mrf.mxu0
      %v917 = vadd.f32 %v309, %v916
      %v918 = vpop.f32.mrf.mxu0
      %v919 = vadd.f32 %v309, %v918
      %920 = vmatmul.bf16.gmra.mxu0 %v686
      %v921 = vpop.f32.mrf.mxu0
      %v922 = vadd.f32 %v309, %v921
      %v923 = vpop.f32.mrf.mxu0
      %v924 = vadd.f32 %v309, %v923
      %925 = vmatmul.bf16.gmra.mxu0 %v689
      %v926 = vpop.f32.mrf.mxu0
      %v927 = vadd.f32 %v309, %v926
      %v928 = vpop.f32.mrf.mxu0
      %v929 = vadd.f32 %v309, %v928
      %930 = vmatmul.bf16.gmra.mxu0 %v692
      %v931 = vpop.f32.mrf.mxu0
      %v932 = vadd.f32 %v309, %v931
      %v933 = vpop.f32.mrf.mxu0
      %v934 = vadd.f32 %v309, %v933
      %935 = vmatmul.bf16.gmra.mxu0 %v695
      %v936 = vpop.f32.mrf.mxu0
      %v937 = vadd.f32 %v309, %v936
      %v938 = vpop.f32.mrf.mxu0
      %v939 = vadd.f32 %v309, %v938
      %940 = vmatmul.bf16.gmra.mxu0 %v698
      %v941 = vpop.f32.mrf.mxu0
      %v942 = vadd.f32 %v309, %v941
      %v943 = vpop.f32.mrf.mxu0
      %v944 = vadd.f32 %v309, %v943
      %945 = vmatmul.bf16.gmra.mxu0 %v701
      %v946 = vpop.f32.mrf.mxu0
      %v947 = vadd.f32 %v309, %v946
      %v948 = vpop.f32.mrf.mxu0
      %v949 = vadd.f32 %v309, %v948
      %950 = vmatmul.bf16.gmra.mxu0 %v704
      %v951 = vpop.f32.mrf.mxu0
      %v952 = vadd.f32 %v309, %v951
      %v953 = vpop.f32.mrf.mxu0
      %v954 = vadd.f32 %v309, %v953
      %955 = vmatmul.bf16.gmra.mxu0 %v707
      %v956 = vpop.f32.mrf.mxu0
      %v957 = vadd.f32 %v309, %v956
      %v958 = vpop.f32.mrf.mxu0
      %v959 = vadd.f32 %v309, %v958
      %960 = vmatmul.bf16.gmra.mxu0 %v710
      %v961 = vpop.f32.mrf.mxu0
      %v962 = vadd.f32 %v309, %v961
      %v963 = vpop.f32.mrf.mxu0
      %v964 = vadd.f32 %v309, %v963
      %965 = vmatmul.bf16.gmra.mxu0 %v713
      %v966 = vpop.f32.mrf.mxu0
      %v967 = vadd.f32 %v309, %v966
      %v968 = vpop.f32.mrf.mxu0
      %v969 = vadd.f32 %v309, %v968
      %970 = vmatmul.bf16.gmra.mxu0 %v716
      %v971 = vpop.f32.mrf.mxu0
      %v972 = vadd.f32 %v309, %v971
      %v973 = vpop.f32.mrf.mxu0
      %v974 = vadd.f32 %v309, %v973
      %975 = vmatmul.bf16.gmra.mxu0 %v719
      %v976 = vpop.f32.mrf.mxu0
      %v977 = vadd.f32 %v309, %v976
      %v978 = vpop.f32.mrf.mxu0
      %v979 = vadd.f32 %v309, %v978
      %980 = vmatmul.bf16.gmra.mxu0 %v722
      %v981 = vpop.f32.mrf.mxu0
      %v982 = vadd.f32 %v309, %v981
      %v983 = vpop.f32.mrf.mxu0
      %v984 = vadd.f32 %v309, %v983
      %985 = vmatmul.bf16.gmra.mxu0 %v725
      %v986 = vpop.f32.mrf.mxu0
      %v987 = vadd.f32 %v309, %v986
      %v988 = vpop.f32.mrf.mxu0
      %v989 = vadd.f32 %v309, %v988
      %990 = vmatmul.bf16.gmra.mxu0 %v728
      %v991 = vpop.f32.mrf.mxu0
      %v992 = vadd.f32 %v309, %v991
      %v993 = vpop.f32.mrf.mxu0
      %v994 = vadd.f32 %v309, %v993
      %995 = vmatmul.bf16.gmra.mxu0 %v731
      %v996 = vpop.f32.mrf.mxu0
      %v997 = vadd.f32 %v309, %v996
      %v998 = vpop.f32.mrf.mxu0
      %v999 = vadd.f32 %v309, %v998
      %1000 = vmatmul.bf16.gmra.mxu0 %v734
      %v1001 = vpop.f32.mrf.mxu0
      %v1002 = vadd.f32 %v309, %v1001
      %v1003 = vpop.f32.mrf.mxu0
      %v1004 = vadd.f32 %v309, %v1003
      %1005 = vmatmul.bf16.gmra.mxu0 %v737
      %v1006 = vpop.f32.mrf.mxu0
      %v1007 = vadd.f32 %v309, %v1006
      %v1008 = vpop.f32.mrf.mxu0
      %v1009 = vadd.f32 %v309, %v1008
      %1010 = vmatmul.bf16.gmra.mxu0 %v740
      %v1011 = vpop.f32.mrf.mxu0
      %v1012 = vadd.f32 %v309, %v1011
      %v1013 = vpop.f32.mrf.mxu0
      %v1014 = vadd.f32 %v309, %v1013
      %1015 = vmatmul.bf16.gmra.mxu0 %v743
      %v1016 = vpop.f32.mrf.mxu0
      %v1017 = vadd.f32 %v309, %v1016
      %v1018 = vpop.f32.mrf.mxu0
      %v1019 = vadd.f32 %v309, %v1018
      %1020 = vmatmul.bf16.gmra.mxu0 %v746
      %v1021 = vpop.f32.mrf.mxu0
      %v1022 = vadd.f32 %v309, %v1021
      %v1023 = vpop.f32.mrf.mxu0
      %v1024 = vadd.f32 %v309, %v1023
      %1025 = vmatmul.bf16.gmra.mxu0 %v749
      %v1026 = vpop.f32.mrf.mxu0
      %v1027 = vadd.f32 %v309, %v1026
      %v1028 = vpop.f32.mrf.mxu0
      %v1029 = vadd.f32 %v309, %v1028
      %1030 = vmatmul.bf16.gmra.mxu0 %v752
      %v1031 = vpop.f32.mrf.mxu0
      %v1032 = vadd.f32 %v309, %v1031
      %v1033 = vpop.f32.mrf.mxu0
      %v1034 = vadd.f32 %v309, %v1033
      %1035 = vmatmul.bf16.gmra.mxu0 %v755
      %v1036 = vpop.f32.mrf.mxu0
      %v1037 = vadd.f32 %v309, %v1036
      %v1038 = vpop.f32.mrf.mxu0
      %v1039 = vadd.f32 %v309, %v1038
      %1040 = vmatmul.bf16.gmra.mxu0 %v758
      %v1041 = vpop.f32.mrf.mxu0
      %v1042 = vadd.f32 %v309, %v1041
      %v1043 = vpop.f32.mrf.mxu0
      %v1044 = vadd.f32 %v309, %v1043
      %1045 = vmatmul.bf16.gmra.mxu0 %v761
      %v1046 = vpop.f32.mrf.mxu0
      %v1047 = vadd.f32 %v309, %v1046
      %v1048 = vpop.f32.mrf.mxu0
      %v1049 = vadd.f32 %v309, %v1048
      %1050 = vmatmul.bf16.gmra.mxu0 %v764
      %v1051 = vpop.f32.mrf.mxu0
      %v1052 = vadd.f32 %v309, %v1051
      %v1053 = vpop.f32.mrf.mxu0
      %v1054 = vadd.f32 %v309, %v1053
      %1055 = vmatmul.bf16.gmra.mxu0 %v767
      %v1056 = vpop.f32.mrf.mxu0
      %v1057 = vadd.f32 %v309, %v1056
      %v1058 = vpop.f32.mrf.mxu0
      %v1059 = vadd.f32 %v309, %v1058
      %1060 = vmatmul.bf16.gmra.mxu0 %v770
      %v1061 = vpop.f32.mrf.mxu0
      %v1062 = vadd.f32 %v309, %v1061
      %v1063 = vpop.f32.mrf.mxu0
      %v1064 = vadd.f32 %v309, %v1063
      %1065 = vmatmul.bf16.gmra.mxu0 %v773
      %v1066 = vpop.f32.mrf.mxu0
      %v1067 = vadd.f32 %v309, %v1066
      %v1068 = vpop.f32.mrf.mxu0
      %v1069 = vadd.f32 %v309, %v1068
      %1070 = vmatmul.bf16.gmra.mxu0 %v776
      %v1071 = vpop.f32.mrf.mxu0
      %v1072 = vadd.f32 %v309, %v1071
      %v1073 = vpop.f32.mrf.mxu0
      %v1074 = vadd.f32 %v309, %v1073
      %1075 = vmatmul.bf16.gmra.mxu0 %v779
      %v1076 = vpop.f32.mrf.mxu0
      %v1077 = vadd.f32 %v309, %v1076
      %v1078 = vpop.f32.mrf.mxu0
      %v1079 = vadd.f32 %v309, %v1078
      %1080 = vmatmul.bf16.gmra.mxu0 %v782
      %v1081 = vpop.f32.mrf.mxu0
      %v1082 = vadd.f32 %v309, %v1081
      %v1083 = vpop.f32.mrf.mxu0
      %v1084 = vadd.f32 %v309, %v1083
      %1085 = vmatmul.bf16.gmra.mxu0 %v785
      %v1086 = vpop.f32.mrf.mxu0
      %v1087 = vadd.f32 %v309, %v1086
      %v1088 = vpop.f32.mrf.mxu0
      %v1089 = vadd.f32 %v309, %v1088
      %1090 = vmatmul.bf16.gmra.mxu0 %v788
      %v1091 = vpop.f32.mrf.mxu0
      %v1092 = vadd.f32 %v309, %v1091
      %v1093 = vpop.f32.mrf.mxu0
      %v1094 = vadd.f32 %v309, %v1093
      %1095 = vmatmul.bf16.gmra.mxu0 %v791
      %v1096 = vpop.f32.mrf.mxu0
      %v1097 = vadd.f32 %v309, %v1096
      %v1098 = vpop.f32.mrf.mxu0
      %v1099 = vadd.f32 %v309, %v1098
      %1100 = vmatmul.bf16.gmra.mxu0 %v794
      %v1101 = vpop.f32.mrf.mxu0
      %v1102 = vadd.f32 %v309, %v1101
      %v1103 = vpop.f32.mrf.mxu0
      %v1104 = vadd.f32 %v309, %v1103
      %1105 = vmatmul.bf16.gmra.mxu0 %v797
      %v1106 = vpop.f32.mrf.mxu0
      %v1107 = vadd.f32 %v309, %v1106
      %v1108 = vpop.f32.mrf.mxu0
      %v1109 = vadd.f32 %v309, %v1108
      %1110 = vmatmul.bf16.gmra.mxu0 %v800
      %v1111 = vpop.f32.mrf.mxu0
      %v1112 = vadd.f32 %v309, %v1111
      %v1113 = vpop.f32.mrf.mxu0
      %v1114 = vadd.f32 %v309, %v1113
      %1115 = vmatmul.bf16.gmra.mxu0 %v803
      %v1116 = vpop.f32.mrf.mxu0
      %v1117 = vadd.f32 %v309, %v1116
      %v1118 = vpop.f32.mrf.mxu0
      %v1119 = vadd.f32 %v309, %v1118
      %1120 = vmatmul.bf16.gmra.mxu0 %v806
      %v1121 = vpop.f32.mrf.mxu0
      %v1122 = vadd.f32 %v309, %v1121
      %v1123 = vpop.f32.mrf.mxu0
      %v1124 = vadd.f32 %v309, %v1123
      %1125 = vmatmul.bf16.gmra.mxu0 %v809
      %v1126 = vpop.f32.mrf.mxu0
      %v1127 = vadd.f32 %v309, %v1126
      %v1128 = vpop.f32.mrf.mxu0
      %v1129 = vadd.f32 %v309, %v1128
      %1130 = vmatmul.bf16.gmra.mxu0 %v812
      %v1131 = vpop.f32.mrf.mxu0
      %v1132 = vadd.f32 %v309, %v1131
      %v1133 = vpop.f32.mrf.mxu0
      %v1134 = vadd.f32 %v309, %v1133
      %1135 = vmatmul.bf16.gmra.mxu0 %v815
      %v1136 = vpop.f32.mrf.mxu0
      %v1137 = vadd.f32 %v309, %v1136
      %v1138 = vpop.f32.mrf.mxu0
      %v1139 = vadd.f32 %v309, %v1138
      %1140 = vmatmul.bf16.gmra.mxu0 %v818
      %v1141 = vpop.f32.mrf.mxu0
      %v1142 = vadd.f32 %v309, %v1141
      %v1143 = vpop.f32.mrf.mxu0
      %v1144 = vadd.f32 %v309, %v1143
      %1145 = vmatmul.bf16.gmra.mxu0 %v821
      %v1146 = vpop.f32.mrf.mxu0
      %v1147 = vadd.f32 %v309, %v1146
      %v1148 = vpop.f32.mrf.mxu0
      %v1149 = vadd.f32 %v309, %v1148
      %1150 = vmatmul.bf16.gmra.mxu0 %v824
      %v1151 = vpop.f32.mrf.mxu0
      %v1152 = vadd.f32 %v309, %v1151
      %v1153 = vpop.f32.mrf.mxu0
      %v1154 = vadd.f32 %v309, %v1153
      %1155 = vmatmul.bf16.gmra.mxu0 %v827
      %v1156 = vpop.f32.mrf.mxu0
      %v1157 = vadd.f32 %v309, %v1156
      %v1158 = vpop.f32.mrf.mxu0
      %v1159 = vadd.f32 %v309, %v1158
      %1160 = vmatmul.bf16.gmra.mxu0 %v830
      %v1161 = vpop.f32.mrf.mxu0
      %v1162 = vadd.f32 %v309, %v1161
      %v1163 = vpop.f32.mrf.mxu0
      %v1164 = vadd.f32 %v309, %v1163
      %1165 = vmatmul.bf16.gmra.mxu0 %v833
      %v1166 = vpop.f32.mrf.mxu0
      %v1167 = vadd.f32 %v309, %v1166
      %v1168 = vpop.f32.mrf.mxu0
      %v1169 = vadd.f32 %v309, %v1168
      %1170 = vdwg.mxu0
      %v1171 = vmax.f32 %v852, 0.0
      %v1172 = vmax.f32 %v854, 0.0
      %v1173 = vmax.f32 %v857, 0.0
      %v1174 = vmax.f32 %v859, 0.0
      %v1175 = vmax.f32 %v862, 0.0
      %v1176 = vmax.f32 %v864, 0.0
      %v1177 = vmax.f32 %v867, 0.0
      %v1178 = vmax.f32 %v869, 0.0
      %v1179 = vmax.f32 %v872, 0.0
      %v1180 = vmax.f32 %v874, 0.0
      %v1181 = vmax.f32 %v877, 0.0
      %v1182 = vmax.f32 %v879, 0.0
      %v1183 = vmax.f32 %v882, 0.0
      %v1184 = vmax.f32 %v884, 0.0
      %v1185 = vmax.f32 %v887, 0.0
      %v1186 = vmax.f32 %v889, 0.0
      %v1187 = vmax.f32 %v892, 0.0
      %v1188 = vmax.f32 %v894, 0.0
      %v1189 = vmax.f32 %v897, 0.0
      %v1190 = vmax.f32 %v899, 0.0
      %v1191 = vmax.f32 %v902, 0.0
      %v1192 = vmax.f32 %v904, 0.0
      %v1193 = vmax.f32 %v907, 0.0
      %v1194 = vmax.f32 %v909, 0.0
      %v1195 = vmax.f32 %v912, 0.0
      %v1196 = vmax.f32 %v914, 0.0
      %v1197 = vmax.f32 %v917, 0.0
      %v1198 = vmax.f32 %v919, 0.0
      %v1199 = vmax.f32 %v922, 0.0
      %v1200 = vmax.f32 %v924, 0.0
      %v1201 = vmax.f32 %v927, 0.0
      %v1202 = vmax.f32 %v929, 0.0
      %v1203 = vmax.f32 %v932, 0.0
      %v1204 = vmax.f32 %v934, 0.0
      %v1205 = vmax.f32 %v937, 0.0
      %v1206 = vmax.f32 %v939, 0.0
      %v1207 = vmax.f32 %v942, 0.0
      %v1208 = vmax.f32 %v944, 0.0
      %v1209 = vmax.f32 %v947, 0.0
      %v1210 = vmax.f32 %v949, 0.0
      %v1211 = vmax.f32 %v952, 0.0
      %v1212 = vmax.f32 %v954, 0.0
      %v1213 = vmax.f32 %v957, 0.0
      %v1214 = vmax.f32 %v959, 0.0
      %v1215 = vmax.f32 %v962, 0.0
      %v1216 = vmax.f32 %v964, 0.0
      %v1217 = vmax.f32 %v967, 0.0
      %v1218 = vmax.f32 %v969, 0.0
      %v1219 = vmax.f32 %v972, 0.0
      %v1220 = vmax.f32 %v974, 0.0
      %v1221 = vmax.f32 %v977, 0.0
      %v1222 = vmax.f32 %v979, 0.0
      %v1223 = vmax.f32 %v982, 0.0
      %v1224 = vmax.f32 %v984, 0.0
      %v1225 = vmax.f32 %v987, 0.0
      %v1226 = vmax.f32 %v989, 0.0
      %v1227 = vmax.f32 %v992, 0.0
      %v1228 = vmax.f32 %v994, 0.0
      %v1229 = vmax.f32 %v997, 0.0
      %v1230 = vmax.f32 %v999, 0.0
      %v1231 = vmax.f32 %v1002, 0.0
      %v1232 = vmax.f32 %v1004, 0.0
      %v1233 = vmax.f32 %v1007, 0.0
      %v1234 = vmax.f32 %v1009, 0.0
      %v1235 = vmax.f32 %v1012, 0.0
      %v1236 = vmax.f32 %v1014, 0.0
      %v1237 = vmax.f32 %v1017, 0.0
      %v1238 = vmax.f32 %v1019, 0.0
      %v1239 = vmax.f32 %v1022, 0.0
      %v1240 = vmax.f32 %v1024, 0.0
      %v1241 = vmax.f32 %v1027, 0.0
      %v1242 = vmax.f32 %v1029, 0.0
      %v1243 = vmax.f32 %v1032, 0.0
      %v1244 = vmax.f32 %v1034, 0.0
      %v1245 = vmax.f32 %v1037, 0.0
      %v1246 = vmax.f32 %v1039, 0.0
      %v1247 = vmax.f32 %v1042, 0.0
      %v1248 = vmax.f32 %v1044, 0.0
      %v1249 = vmax.f32 %v1047, 0.0
      %v1250 = vmax.f32 %v1049, 0.0
      %v1251 = vmax.f32 %v1052, 0.0
      %v1252 = vmax.f32 %v1054, 0.0
      %v1253 = vmax.f32 %v1057, 0.0
      %v1254 = vmax.f32 %v1059, 0.0
      %v1255 = vmax.f32 %v1062, 0.0
      %v1256 = vmax.f32 %v1064, 0.0
      %v1257 = vmax.f32 %v1067, 0.0
      %v1258 = vmax.f32 %v1069, 0.0
      %v1259 = vmax.f32 %v1072, 0.0
      %v1260 = vmax.f32 %v1074, 0.0
      %v1261 = vmax.f32 %v1077, 0.0
      %v1262 = vmax.f32 %v1079, 0.0
      %v1263 = vmax.f32 %v1082, 0.0
      %v1264 = vmax.f32 %v1084, 0.0
      %v1265 = vmax.f32 %v1087, 0.0
      %v1266 = vmax.f32 %v1089, 0.0
      %v1267 = vmax.f32 %v1092, 0.0
      %v1268 = vmax.f32 %v1094, 0.0
      %v1269 = vmax.f32 %v1097, 0.0
      %v1270 = vmax.f32 %v1099, 0.0
      %v1271 = vmax.f32 %v1102, 0.0
      %v1272 = vmax.f32 %v1104, 0.0
      %v1273 = vmax.f32 %v1107, 0.0
      %v1274 = vmax.f32 %v1109, 0.0
      %v1275 = vmax.f32 %v1112, 0.0
      %v1276 = vmax.f32 %v1114, 0.0
      %v1277 = vmax.f32 %v1117, 0.0
      %v1278 = vmax.f32 %v1119, 0.0
      %v1279 = vmax.f32 %v1122, 0.0
      %v1280 = vmax.f32 %v1124, 0.0
      %v1281 = vmax.f32 %v1127, 0.0
      %v1282 = vmax.f32 %v1129, 0.0
      %v1283 = vmax.f32 %v1132, 0.0
      %v1284 = vmax.f32 %v1134, 0.0
      %v1285 = vmax.f32 %v1137, 0.0
      %v1286 = vmax.f32 %v1139, 0.0
      %v1287 = vmax.f32 %v1142, 0.0
      %v1288 = vmax.f32 %v1144, 0.0
      %v1289 = vmax.f32 %v1147, 0.0
      %v1290 = vmax.f32 %v1149, 0.0
      %v1291 = vmax.f32 %v1152, 0.0
      %v1292 = vmax.f32 %v1154, 0.0
      %v1293 = vmax.f32 %v1157, 0.0
      %v1294 = vmax.f32 %v1159, 0.0
      %v1295 = vmax.f32 %v1162, 0.0
      %v1296 = vmax.f32 %v1164, 0.0
      %v1297 = vmax.f32 %v1167, 0.0
      %v1298 = vmax.f32 %v1169, 0.0
      %vm1299 = vcmask 64512
      %1300 = vst.msk [vmem:[%s172] sm:$0xff] %vm1299, %v1171
      %1301 = vst.msk [vmem:[%s172 + $0x8] sm:$0xff] %vm1299, %v1172
      %1302 = vst.msk [vmem:[%s172 + $0x10] sm:$0xff] %vm1299, %v1173
      %1303 = vst.msk [vmem:[%s172 + $0x18] sm:$0xff] %vm1299, %v1174
      %1304 = vst.msk [vmem:[%s172 + $0x20] sm:$0xff] %vm1299, %v1175
      %1305 = vst.msk [vmem:[%s172 + $0x28] sm:$0xff] %vm1299, %v1176
      %1306 = vst.msk [vmem:[%s172 + $0x30] sm:$0xff] %vm1299, %v1177
      %1307 = vst.msk [vmem:[%s172 + $0x38] sm:$0xff] %vm1299, %v1178
      %1308 = vst.msk [vmem:[%s172 + $0x40] sm:$0xff] %vm1299, %v1179
      %1309 = vst.msk [vmem:[%s172 + $0x48] sm:$0xff] %vm1299, %v1180
      %1310 = vst.msk [vmem:[%s172 + $0x50] sm:$0xff] %vm1299, %v1181
      %1311 = vst.msk [vmem:[%s172 + $0x58] sm:$0xff] %vm1299, %v1182
      %1312 = vst.msk [vmem:[%s172 + $0x60] sm:$0xff] %vm1299, %v1183
      %1313 = vst.msk [vmem:[%s172 + $0x68] sm:$0xff] %vm1299, %v1184
      %1314 = vst.msk [vmem:[%s172 + $0x70] sm:$0xff] %vm1299, %v1185
      %1315 = vst.msk [vmem:[%s172 + $0x78] sm:$0xff] %vm1299, %v1186
      %1316 = vst.msk [vmem:[%s172 + $0x80] sm:$0xff] %vm1299, %v1187
      %1317 = vst.msk [vmem:[%s172 + $0x88] sm:$0xff] %vm1299, %v1188
      %1318 = vst.msk [vmem:[%s172 + $0x90] sm:$0xff] %vm1299, %v1189
      %1319 = vst.msk [vmem:[%s172 + $0x98] sm:$0xff] %vm1299, %v1190
      %1320 = vst.msk [vmem:[%s172 + $0xa0] sm:$0xff] %vm1299, %v1191
      %1321 = vst.msk [vmem:[%s172 + $0xa8] sm:$0xff] %vm1299, %v1192
      %1322 = vst.msk [vmem:[%s172 + $0xb0] sm:$0xff] %vm1299, %v1193
      %1323 = vst.msk [vmem:[%s172 + $0xb8] sm:$0xff] %vm1299, %v1194
      %1324 = vst.msk [vmem:[%s172 + $0xc0] sm:$0xff] %vm1299, %v1195
      %1325 = vst.msk [vmem:[%s172 + $0xc8] sm:$0xff] %vm1299, %v1196
      %1326 = vst.msk [vmem:[%s172 + $0xd0] sm:$0xff] %vm1299, %v1197
      %1327 = vst.msk [vmem:[%s172 + $0xd8] sm:$0xff] %vm1299, %v1198
      %1328 = vst.msk [vmem:[%s172 + $0xe0] sm:$0xff] %vm1299, %v1199
      %1329 = vst.msk [vmem:[%s172 + $0xe8] sm:$0xff] %vm1299, %v1200
      %1330 = vst.msk [vmem:[%s172 + $0xf0] sm:$0xff] %vm1299, %v1201
      %1331 = vst.msk [vmem:[%s172 + $0xf8] sm:$0xff] %vm1299, %v1202
      %1332 = vst.msk [vmem:[%s172 + $0x100] sm:$0xff] %vm1299, %v1203
      %1333 = vst.msk [vmem:[%s172 + $0x108] sm:$0xff] %vm1299, %v1204
      %1334 = vst.msk [vmem:[%s172 + $0x110] sm:$0xff] %vm1299, %v1205
      %1335 = vst.msk [vmem:[%s172 + $0x118] sm:$0xff] %vm1299, %v1206
      %1336 = vst.msk [vmem:[%s172 + $0x120] sm:$0xff] %vm1299, %v1207
      %1337 = vst.msk [vmem:[%s172 + $0x128] sm:$0xff] %vm1299, %v1208
      %1338 = vst.msk [vmem:[%s172 + $0x130] sm:$0xff] %vm1299, %v1209
      %1339 = vst.msk [vmem:[%s172 + $0x138] sm:$0xff] %vm1299, %v1210
      %1340 = vst.msk [vmem:[%s172 + $0x140] sm:$0xff] %vm1299, %v1211
      %1341 = vst.msk [vmem:[%s172 + $0x148] sm:$0xff] %vm1299, %v1212
      %1342 = vst.msk [vmem:[%s172 + $0x150] sm:$0xff] %vm1299, %v1213
      %1343 = vst.msk [vmem:[%s172 + $0x158] sm:$0xff] %vm1299, %v1214
      %1344 = vst.msk [vmem:[%s172 + $0x160] sm:$0xff] %vm1299, %v1215
      %1345 = vst.msk [vmem:[%s172 + $0x168] sm:$0xff] %vm1299, %v1216
      %1346 = vst.msk [vmem:[%s172 + $0x170] sm:$0xff] %vm1299, %v1217
      %1347 = vst.msk [vmem:[%s172 + $0x178] sm:$0xff] %vm1299, %v1218
      %1348 = vst.msk [vmem:[%s172 + $0x180] sm:$0xff] %vm1299, %v1219
      %1349 = vst.msk [vmem:[%s172 + $0x188] sm:$0xff] %vm1299, %v1220
      %1350 = vst.msk [vmem:[%s172 + $0x190] sm:$0xff] %vm1299, %v1221
      %1351 = vst.msk [vmem:[%s172 + $0x198] sm:$0xff] %vm1299, %v1222
      %1352 = vst.msk [vmem:[%s172 + $0x1a0] sm:$0xff] %vm1299, %v1223
      %1353 = vst.msk [vmem:[%s172 + $0x1a8] sm:$0xff] %vm1299, %v1224
      %1354 = vst.msk [vmem:[%s172 + $0x1b0] sm:$0xff] %vm1299, %v1225
      %1355 = vst.msk [vmem:[%s172 + $0x1b8] sm:$0xff] %vm1299, %v1226
      %1356 = vst.msk [vmem:[%s172 + $0x1c0] sm:$0xff] %vm1299, %v1227
      %1357 = vst.msk [vmem:[%s172 + $0x1c8] sm:$0xff] %vm1299, %v1228
      %1358 = vst.msk [vmem:[%s172 + $0x1d0] sm:$0xff] %vm1299, %v1229
      %1359 = vst.msk [vmem:[%s172 + $0x1d8] sm:$0xff] %vm1299, %v1230
      %1360 = vst.msk [vmem:[%s172 + $0x1e0] sm:$0xff] %vm1299, %v1231
      %1361 = vst.msk [vmem:[%s172 + $0x1e8] sm:$0xff] %vm1299, %v1232
      %1362 = vst.msk [vmem:[%s172 + $0x1f0] sm:$0xff] %vm1299, %v1233
      %1363 = vst.msk [vmem:[%s172 + $0x1f8] sm:$0xff] %vm1299, %v1234
      %1364 = vst.msk [vmem:[%s172 + $0x200] sm:$0xff] %vm1299, %v1235
      %1365 = vst.msk [vmem:[%s172 + $0x208] sm:$0xff] %vm1299, %v1236
      %1366 = vst.msk [vmem:[%s172 + $0x210] sm:$0xff] %vm1299, %v1237
      %1367 = vst.msk [vmem:[%s172 + $0x218] sm:$0xff] %vm1299, %v1238
      %1368 = vst.msk [vmem:[%s172 + $0x220] sm:$0xff] %vm1299, %v1239
      %1369 = vst.msk [vmem:[%s172 + $0x228] sm:$0xff] %vm1299, %v1240
      %1370 = vst.msk [vmem:[%s172 + $0x230] sm:$0xff] %vm1299, %v1241
      %1371 = vst.msk [vmem:[%s172 + $0x238] sm:$0xff] %vm1299, %v1242
      %1372 = vst.msk [vmem:[%s172 + $0x240] sm:$0xff] %vm1299, %v1243
      %1373 = vst.msk [vmem:[%s172 + $0x248] sm:$0xff] %vm1299, %v1244
      %1374 = vst.msk [vmem:[%s172 + $0x250] sm:$0xff] %vm1299, %v1245
      %1375 = vst.msk [vmem:[%s172 + $0x258] sm:$0xff] %vm1299, %v1246
      %1376 = vst.msk [vmem:[%s172 + $0x260] sm:$0xff] %vm1299, %v1247
      %1377 = vst.msk [vmem:[%s172 + $0x268] sm:$0xff] %vm1299, %v1248
      %1378 = vst.msk [vmem:[%s172 + $0x270] sm:$0xff] %vm1299, %v1249
      %1379 = vst.msk [vmem:[%s172 + $0x278] sm:$0xff] %vm1299, %v1250
      %1380 = vst.msk [vmem:[%s172 + $0x280] sm:$0xff] %vm1299, %v1251
      %1381 = vst.msk [vmem:[%s172 + $0x288] sm:$0xff] %vm1299, %v1252
      %1382 = vst.msk [vmem:[%s172 + $0x290] sm:$0xff] %vm1299, %v1253
      %1383 = vst.msk [vmem:[%s172 + $0x298] sm:$0xff] %vm1299, %v1254
      %1384 = vst.msk [vmem:[%s172 + $0x2a0] sm:$0xff] %vm1299, %v1255
      %1385 = vst.msk [vmem:[%s172 + $0x2a8] sm:$0xff] %vm1299, %v1256
      %1386 = vst.msk [vmem:[%s172 + $0x2b0] sm:$0xff] %vm1299, %v1257
      %1387 = vst.msk [vmem:[%s172 + $0x2b8] sm:$0xff] %vm1299, %v1258
      %1388 = vst.msk [vmem:[%s172 + $0x2c0] sm:$0xff] %vm1299, %v1259
      %1389 = vst.msk [vmem:[%s172 + $0x2c8] sm:$0xff] %vm1299, %v1260
      %1390 = vst.msk [vmem:[%s172 + $0x2d0] sm:$0xff] %vm1299, %v1261
      %1391 = vst.msk [vmem:[%s172 + $0x2d8] sm:$0xff] %vm1299, %v1262
      %1392 = vst.msk [vmem:[%s172 + $0x2e0] sm:$0xff] %vm1299, %v1263
      %1393 = vst.msk [vmem:[%s172 + $0x2e8] sm:$0xff] %vm1299, %v1264
      %1394 = vst.msk [vmem:[%s172 + $0x2f0] sm:$0xff] %vm1299, %v1265
      %1395 = vst.msk [vmem:[%s172 + $0x2f8] sm:$0xff] %vm1299, %v1266
      %1396 = vst.msk [vmem:[%s172 + $0x300] sm:$0xff] %vm1299, %v1267
      %1397 = vst.msk [vmem:[%s172 + $0x308] sm:$0xff] %vm1299, %v1268
      %1398 = vst.msk [vmem:[%s172 + $0x310] sm:$0xff] %vm1299, %v1269
      %1399 = vst.msk [vmem:[%s172 + $0x318] sm:$0xff] %vm1299, %v1270
      %1400 = vst.msk [vmem:[%s172 + $0x320] sm:$0xff] %vm1299, %v1271
      %1401 = vst.msk [vmem:[%s172 + $0x328] sm:$0xff] %vm1299, %v1272
      %1402 = vst.msk [vmem:[%s172 + $0x330] sm:$0xff] %vm1299, %v1273
      %1403 = vst.msk [vmem:[%s172 + $0x338] sm:$0xff] %vm1299, %v1274
      %1404 = vst.msk [vmem:[%s172 + $0x340] sm:$0xff] %vm1299, %v1275
      %1405 = vst.msk [vmem:[%s172 + $0x348] sm:$0xff] %vm1299, %v1276
      %1406 = vst.msk [vmem:[%s172 + $0x350] sm:$0xff] %vm1299, %v1277
      %1407 = vst.msk [vmem:[%s172 + $0x358] sm:$0xff] %vm1299, %v1278
      %1408 = vst.msk [vmem:[%s172 + $0x360] sm:$0xff] %vm1299, %v1279
      %1409 = vst.msk [vmem:[%s172 + $0x368] sm:$0xff] %vm1299, %v1280
      %1410 = vst.msk [vmem:[%s172 + $0x370] sm:$0xff] %vm1299, %v1281
      %1411 = vst.msk [vmem:[%s172 + $0x378] sm:$0xff] %vm1299, %v1282
      %1412 = vst.msk [vmem:[%s172 + $0x380] sm:$0xff] %vm1299, %v1283
      %1413 = vst.msk [vmem:[%s172 + $0x388] sm:$0xff] %vm1299, %v1284
      %1414 = vst.msk [vmem:[%s172 + $0x390] sm:$0xff] %vm1299, %v1285
      %1415 = vst.msk [vmem:[%s172 + $0x398] sm:$0xff] %vm1299, %v1286
      %1416 = vst.msk [vmem:[%s172 + $0x3a0] sm:$0xff] %vm1299, %v1287
      %1417 = vst.msk [vmem:[%s172 + $0x3a8] sm:$0xff] %vm1299, %v1288
      %1418 = vst.msk [vmem:[%s172 + $0x3b0] sm:$0xff] %vm1299, %v1289
      %1419 = vst.msk [vmem:[%s172 + $0x3b8] sm:$0xff] %vm1299, %v1290
      %1420 = vst.msk [vmem:[%s172 + $0x3c0] sm:$0xff] %vm1299, %v1291
      %1421 = vst.msk [vmem:[%s172 + $0x3c8] sm:$0xff] %vm1299, %v1292
      %1422 = vst.msk [vmem:[%s172 + $0x3d0] sm:$0xff] %vm1299, %v1293
      %1423 = vst.msk [vmem:[%s172 + $0x3d8] sm:$0xff] %vm1299, %v1294
      %1424 = vst.msk [vmem:[%s172 + $0x3e0] sm:$0xff] %vm1299, %v1295
      %1425 = vst.msk [vmem:[%s172 + $0x3e8] sm:$0xff] %vm1299, %v1296
      %1426 = vst.msk [vmem:[%s172 + $0x3f0] sm:$0xff] %vm1299, %v1297
      %1427 = vst.msk [vmem:[%s172 + $0x3f8] sm:$0xff] %vm1299, %v1298
      %s1428 = smul.u32 128, %s14
      %p1429 = scmp.lt.s32.totalorder %s1428, 255
      %s1430 = scalar_select %p1429, %s1428, 255
      %s1431 = smul.addr %s1430, 8
      %s1432 = scalar_lea.vmem %s3, %s1431
      // Predicated region
      $region33: #{forward.18} parent=31 // pred_check
        %p1433 = pneg %p100
      $region34: #{forward.18} parent=31 // pred_check_branch
        %1435 = sbr.rel (%p1433) target = $region36
      $region35: #{forward.18} parent=31 // pred_region
        %s1436 = smul.u32 128, %s14
      $region36: #{forward.18} parent=31 // pred_fallthru
        _
    $region32: #{forward.18} parent=5 // pred_fallthru
      _
    %p1437 = scmp.le.s32.totalorder 2, %s9
    // Predicated region
    $region37: #{forward.18} parent=5 // pred_check
      %p1438 = pneg %p1437
    $region38: #{forward.18} parent=5 // pred_check_branch
      %1440 = sbr.rel (%p1438) target = $region40
    $region39: #{forward.18} parent=5 // pred_region
      %s1441 = ssub.s32 %s9, 2
      // Predicated region
      $region41: #{forward.18} parent=39 // pred_check
        %p1442 = pneg %p106
      $region42: #{forward.18} parent=39 // pred_check_branch
        %1444 = sbr.rel (%p1442) target = $region44
      $region43: #{forward.18} parent=39 // pred_region
        %s1445 = smul.u32 128, %s15
        %p1446 = scmp.lt.s32.totalorder %s1445, 255
        %s1447 = scalar_select %p1446, %s1445, 255
        %s1448 = smul.addr %s1447, 8
        %s1449 = scalar_lea.vmem %s3, %s1448
      $region44: #{forward.18} parent=39 // pred_fallthru
        _
    $region40: #{forward.18} parent=5 // pred_fallthru
      _
  $region6: #{forward.18} parent=0 // loop_footer
    %s13 = sadd.s32 1, %s9
  $region7: #{forward.18} parent=0 // loop_footer_branch
    %8 = sbr.rel target = $region3
  $region8: #{forward.18} parent=0 // loop_exit
    _

// kernel: forward.19
$region0: #{forward.19}
  #allocation0 [shape = 'u32[]', space=smem, size = 0x4, offset = 0x4, fixed_abs, tag = 'smem constant byte address 0x4 - core index']
  #allocation1 [shape = 'u32[72,128]{1,0:T(1,128)}', space=vmem, size = 0x9000, scoped, tag = 'internal scratch']
  %s0 = inlined_call_operand.vmem [shape: bf16[512,72], index: 0, kind: input, shape index: {}]
  %s1 = inlined_call_operand.vmem [shape: bf16[72,16], index: 1, kind: input, shape index: {}]
  %s2 = inlined_call_operand.vmem [shape: f32[1,16], index: 2, kind: input, shape index: {}]
  %s3 = inlined_call_operand.vmem [shape: f32[512,16], index: 3, kind: output, shape index: {}]
  %s4 = sld [smem:[#allocation0]]
  $region22: #{forward.19} parent=0
    _
  %s6 = ssub.s32 1, %s4
  %s7 = scalar_select 0, %s6, %s4
  // Predicated region
  $region2: #{forward.19} parent=0 // pred_check
    _
  $region3: #{forward.19} parent=0 // pred_check_branch
    %9 = sbr.rel (0) target = $region5
  $region4: #{forward.19} parent=0 // pred_region
    _
  $region5: #{forward.19} parent=0 // pred_fallthru
    _
  // Predicated region
  $region6: #{forward.19} parent=0 // pred_check
    _
  $region7: #{forward.19} parent=0 // pred_check_branch
    %11 = sbr.rel (0) target = $region9
  $region8: #{forward.19} parent=0 // pred_region
    _
  $region9: #{forward.19} parent=0 // pred_fallthru
    _
  // Predicated region
  $region10: #{forward.19} parent=0 // pred_check
    _
  $region11: #{forward.19} parent=0 // pred_check_branch
    %13 = sbr.rel (0) target = $region13
  $region12: #{forward.19} parent=0 // pred_region
    _
  $region13: #{forward.19} parent=0 // pred_fallthru
    _
  %v15 = vld [vmem:[%s0] sm:$0xf]
  %v16 = vld [vmem:[%s0 + $0x4] sm:$0xf]
  %v17 = vld [vmem:[%s0 + $0x8] sm:$0xf]
  %v18 = vld [vmem:[%s0 + $0xc] sm:$0xf]
  %v19 = vld [vmem:[%s0 + $0x10] sm:$0xf]
  %v20 = vld [vmem:[%s0 + $0x14] sm:$0xf]
  %v21 = vld [vmem:[%s0 + $0x18] sm:$0xf]
  %v22 = vld [vmem:[%s0 + $0x1c] sm:$0xf]
  %v23 = vld [vmem:[%s0 + $0x20] sm:$0xf]
  %v24 = vld [vmem:[%s0 + $0x24] sm:$0xf]
  %v25 = vld [vmem:[%s0 + $0x28] sm:$0xf]
  %v26 = vld [vmem:[%s0 + $0x2c] sm:$0xf]
  %v27 = vld [vmem:[%s0 + $0x30] sm:$0xf]
  %v28 = vld [vmem:[%s0 + $0x34] sm:$0xf]
  %v29 = vld [vmem:[%s0 + $0x38] sm:$0xf]
  %v30 = vld [vmem:[%s0 + $0x3c] sm:$0xf]
  %v31 = vld [vmem:[%s0 + $0x40] sm:$0xf]
  %v32 = vld [vmem:[%s0 + $0x44] sm:$0xf]
  %v33 = vld [vmem:[%s0 + $0x48] sm:$0xf]
  %v34 = vld [vmem:[%s0 + $0x4c] sm:$0xf]
  %v35 = vld [vmem:[%s0 + $0x50] sm:$0xf]
  %v36 = vld [vmem:[%s0 + $0x54] sm:$0xf]
  %v37 = vld [vmem:[%s0 + $0x58] sm:$0xf]
  %v38 = vld [vmem:[%s0 + $0x5c] sm:$0xf]
  %v39 = vld [vmem:[%s0 + $0x60] sm:$0xf]
  %v40 = vld [vmem:[%s0 + $0x64] sm:$0xf]
  %v41 = vld [vmem:[%s0 + $0x68] sm:$0xf]
  %v42 = vld [vmem:[%s0 + $0x6c] sm:$0xf]
  %v43 = vld [vmem:[%s0 + $0x70] sm:$0xf]
  %v44 = vld [vmem:[%s0 + $0x74] sm:$0xf]
  %v45 = vld [vmem:[%s0 + $0x78] sm:$0xf]
  %v46 = vld [vmem:[%s0 + $0x7c] sm:$0xf]
  %v47 = vld [vmem:[%s0 + $0x80] sm:$0xf]
  %v48 = vld [vmem:[%s0 + $0x84] sm:$0xf]
  %v49 = vld [vmem:[%s0 + $0x88] sm:$0xf]
  %v50 = vld [vmem:[%s0 + $0x8c] sm:$0xf]
  %v51 = vld [vmem:[%s0 + $0x90] sm:$0xf]
  %v52 = vld [vmem:[%s0 + $0x94] sm:$0xf]
  %v53 = vld [vmem:[%s0 + $0x98] sm:$0xf]
  %v54 = vld [vmem:[%s0 + $0x9c] sm:$0xf]
  %v55 = vld [vmem:[%s0 + $0xa0] sm:$0xf]
  %v56 = vld [vmem:[%s0 + $0xa4] sm:$0xf]
  %v57 = vld [vmem:[%s0 + $0xa8] sm:$0xf]
  %v58 = vld [vmem:[%s0 + $0xac] sm:$0xf]
  %v59 = vld [vmem:[%s0 + $0xb0] sm:$0xf]
  %v60 = vld [vmem:[%s0 + $0xb4] sm:$0xf]
  %v61 = vld [vmem:[%s0 + $0xb8] sm:$0xf]
  %v62 = vld [vmem:[%s0 + $0xbc] sm:$0xf]
  %v63 = vld [vmem:[%s0 + $0xc0] sm:$0xf]
  %v64 = vld [vmem:[%s0 + $0xc4] sm:$0xf]
  %v65 = vld [vmem:[%s0 + $0xc8] sm:$0xf]
  %v66 = vld [vmem:[%s0 + $0xcc] sm:$0xf]
  %v67 = vld [vmem:[%s0 + $0xd0] sm:$0xf]
  %v68 = vld [vmem:[%s0 + $0xd4] sm:$0xf]
  %v69 = vld [vmem:[%s0 + $0xd8] sm:$0xf]
  %v70 = vld [vmem:[%s0 + $0xdc] sm:$0xf]
  %v71 = vld [vmem:[%s0 + $0xe0] sm:$0xf]
  %v72 = vld [vmem:[%s0 + $0xe4] sm:$0xf]
  %v73 = vld [vmem:[%s0 + $0xe8] sm:$0xf]
  %v74 = vld [vmem:[%s0 + $0xec] sm:$0xf]
  %v75 = vld [vmem:[%s0 + $0xf0] sm:$0xf]
  %v76 = vld [vmem:[%s0 + $0xf4] sm:$0xf]
  %v77 = vld [vmem:[%s0 + $0xf8] sm:$0xf]
  %v78 = vld [vmem:[%s0 + $0xfc] sm:$0xf]
  %v79 = vld [vmem:[%s1] sm:$0xf]
  %v80 = vld [vmem:[%s1 + $0x4] sm:$0xf]
  %v81 = vld [vmem:[%s1 + $0x8] sm:$0xf]
  %v82 = vld [vmem:[%s1 + $0xc] sm:$0xf]
  %v83 = vld [vmem:[%s1 + $0x10] sm:$0xf]
  %v84 = vld [vmem:[%s1 + $0x14] sm:$0xf]
  %v85 = vld [vmem:[%s1 + $0x18] sm:$0xf]
  %v86 = vld [vmem:[%s1 + $0x1c] sm:$0xf]
  %v87 = vld [vmem:[%s1 + $0x20] sm:$0xf]
  %v88 = vld [vmem:[%s2] sm:$0x1]
  %v90 = vperm.slane %v88, 0
  %v156 = vunpack.c.l.b16 %v15
  %v157 = vunpack.c.l.b16 %v16
  %v158 = vunpack.c.l.b16 %v17
  %v159 = vunpack.c.l.b16 %v18
  %v160 = vunpack.c.l.b16 %v19
  %v161 = vunpack.c.l.b16 %v20
  %v162 = vunpack.c.l.b16 %v21
  %v163 = vunpack.c.l.b16 %v22
  %v164 = vunpack.c.l.b16 %v23
  %v165 = vunpack.c.l.b16 %v24
  %v166 = vunpack.c.l.b16 %v25
  %v167 = vunpack.c.l.b16 %v26
  %v168 = vunpack.c.l.b16 %v27
  %v169 = vunpack.c.l.b16 %v28
  %v170 = vunpack.c.l.b16 %v29
  %v171 = vunpack.c.l.b16 %v30
  %v172 = vunpack.c.l.b16 %v31
  %v173 = vunpack.c.l.b16 %v32
  %v174 = vunpack.c.l.b16 %v33
  %v175 = vunpack.c.l.b16 %v34
  %v176 = vunpack.c.l.b16 %v35
  %v177 = vunpack.c.l.b16 %v36
  %v178 = vunpack.c.l.b16 %v37
  %v179 = vunpack.c.l.b16 %v38
  %v180 = vunpack.c.l.b16 %v39
  %v181 = vunpack.c.l.b16 %v40
  %v182 = vunpack.c.l.b16 %v41
  %v183 = vunpack.c.l.b16 %v42
  %v184 = vunpack.c.l.b16 %v43
  %v185 = vunpack.c.l.b16 %v44
  %v186 = vunpack.c.l.b16 %v45
  %v187 = vunpack.c.l.b16 %v46
  %v188 = vunpack.c.l.b16 %v47
  %v189 = vunpack.c.l.b16 %v48
  %v190 = vunpack.c.l.b16 %v49
  %v191 = vunpack.c.l.b16 %v50
  %v192 = vunpack.c.l.b16 %v51
  %v193 = vunpack.c.l.b16 %v52
  %v194 = vunpack.c.l.b16 %v53
  %v195 = vunpack.c.l.b16 %v54
  %v196 = vunpack.c.l.b16 %v55
  %v197 = vunpack.c.l.b16 %v56
  %v198 = vunpack.c.l.b16 %v57
  %v199 = vunpack.c.l.b16 %v58
  %v200 = vunpack.c.l.b16 %v59
  %v201 = vunpack.c.l.b16 %v60
  %v202 = vunpack.c.l.b16 %v61
  %v203 = vunpack.c.l.b16 %v62
  %v204 = vunpack.c.l.b16 %v63
  %v205 = vunpack.c.l.b16 %v64
  %v206 = vunpack.c.l.b16 %v65
  %v207 = vunpack.c.l.b16 %v66
  %v208 = vunpack.c.l.b16 %v67
  %v209 = vunpack.c.l.b16 %v68
  %v210 = vunpack.c.l.b16 %v69
  %v211 = vunpack.c.l.b16 %v70
  %v212 = vunpack.c.l.b16 %v71
  %v213 = vunpack.c.l.b16 %v72
  %v214 = vunpack.c.l.b16 %v73
  %v215 = vunpack.c.l.b16 %v74
  %v216 = vunpack.c.l.b16 %v75
  %v217 = vunpack.c.l.b16 %v76
  %v218 = vunpack.c.l.b16 %v77
  %v219 = vunpack.c.l.b16 %v78
  %v220 = vpack.c.b16 %v157, %v156
  %v221 = vpack.c.b16 %v159, %v158
  %v222 = vpack.c.b16 %v161, %v160
  %v223 = vpack.c.b16 %v163, %v162
  %v224 = vpack.c.b16 %v165, %v164
  %v225 = vpack.c.b16 %v167, %v166
  %v226 = vpack.c.b16 %v169, %v168
  %v227 = vpack.c.b16 %v171, %v170
  %v228 = vpack.c.b16 %v173, %v172
  %v229 = vpack.c.b16 %v175, %v174
  %v230 = vpack.c.b16 %v177, %v176
  %v231 = vpack.c.b16 %v179, %v178
  %v232 = vpack.c.b16 %v181, %v180
  %v233 = vpack.c.b16 %v183, %v182
  %v234 = vpack.c.b16 %v185, %v184
  %v235 = vpack.c.b16 %v187, %v186
  %v236 = vpack.c.b16 %v189, %v188
  %v237 = vpack.c.b16 %v191, %v190
  %v238 = vpack.c.b16 %v193, %v192
  %v239 = vpack.c.b16 %v195, %v194
  %v240 = vpack.c.b16 %v197, %v196
  %v241 = vpack.c.b16 %v199, %v198
  %v242 = vpack.c.b16 %v201, %v200
  %v243 = vpack.c.b16 %v203, %v202
  %v244 = vpack.c.b16 %v205, %v204
  %v245 = vpack.c.b16 %v207, %v206
  %v246 = vpack.c.b16 %v209, %v208
  %v247 = vpack.c.b16 %v211, %v210
  %v248 = vpack.c.b16 %v213, %v212
  %v249 = vpack.c.b16 %v215, %v214
  %v250 = vpack.c.b16 %v217, %v216
  %v251 = vpack.c.b16 %v219, %v218
  %v261 = vunpack.c.l.b16 %v79
  %v262 = vunpack.c.l.b16 %v80
  %v263 = vunpack.c.l.b16 %v81
  %v264 = vunpack.c.l.b16 %v82
  %v265 = vunpack.c.l.b16 %v83
  %v266 = vunpack.c.l.b16 %v84
  %v267 = vunpack.c.l.b16 %v85
  %v268 = vunpack.c.l.b16 %v86
  %v269 = vunpack.c.l.b16 %v87
  %v270 = vpack.c.b16 %v262, %v261
  %v271 = vpack.c.b16 %v264, %v263
  %v272 = vpack.c.b16 %v266, %v265
  %v273 = vpack.c.b16 %v268, %v267
  %v274 = vpack.c.b16 %v269, %v269
  %vm279 = vcmask 588800
  %v281 = vsel %vm279, %v220, 0
  %v284 = vsel %vm279, %v221, 0
  %v287 = vsel %vm279, %v222, 0
  %v290 = vsel %vm279, %v223, 0
  %v293 = vsel %vm279, %v224, 0
  %v296 = vsel %vm279, %v225, 0
  %v299 = vsel %vm279, %v226, 0
  %v302 = vsel %vm279, %v227, 0
  %v305 = vsel %vm279, %v228, 0
  %v308 = vsel %vm279, %v229, 0
  %v311 = vsel %vm279, %v230, 0
  %v314 = vsel %vm279, %v231, 0
  %v317 = vsel %vm279, %v232, 0
  %v320 = vsel %vm279, %v233, 0
  %v323 = vsel %vm279, %v234, 0
  %v326 = vsel %vm279, %v235, 0
  %v329 = vsel %vm279, %v236, 0
  %v332 = vsel %vm279, %v237, 0
  %v335 = vsel %vm279, %v238, 0
  %v338 = vsel %vm279, %v239, 0
  %v341 = vsel %vm279, %v240, 0
  %v344 = vsel %vm279, %v241, 0
  %v347 = vsel %vm279, %v242, 0
  %v350 = vsel %vm279, %v243, 0
  %v353 = vsel %vm279, %v244, 0
  %v356 = vsel %vm279, %v245, 0
  %v359 = vsel %vm279, %v246, 0
  %v362 = vsel %vm279, %v247, 0
  %v365 = vsel %vm279, %v248, 0
  %v368 = vsel %vm279, %v249, 0
  %v371 = vsel %vm279, %v250, 0
  %v374 = vsel %vm279, %v251, 0
  %vm376 = vcmask 1043456
  %v378 = vsel %vm376, %v274, 0
  %380 = vmatpush.bf16.msra.mxu0 0
  %381 = vmatpush.bf16.msra.mxu0 0
  %382 = vmatpush.bf16.msra.mxu0 0
  %383 = vmatpush.bf16.msra.mxu0 %v378
  %384 = vmatpush.bf16.msra.mxu0 %v273
  %385 = vmatpush.bf16.msra.mxu0 %v272
  %386 = vmatpush.bf16.msra.mxu0 %v271
  %387 = vmatpush.bf16.msra.mxu0 %v270
  %388 = vmatmul.bf16.gmra.mxu0 %v281
  %v389 = vpop.f32.mrf.mxu0
  %v390 = vadd.f32 %v90, %v389
  %v391 = vpop.f32.mrf.mxu0
  %v392 = vadd.f32 %v90, %v391
  %393 = vmatmul.bf16.gmra.mxu0 %v284
  %v394 = vpop.f32.mrf.mxu0
  %v395 = vadd.f32 %v90, %v394
  %v396 = vpop.f32.mrf.mxu0
  %v397 = vadd.f32 %v90, %v396
  %398 = vmatmul.bf16.gmra.mxu0 %v287
  %v399 = vpop.f32.mrf.mxu0
  %v400 = vadd.f32 %v90, %v399
  %v401 = vpop.f32.mrf.mxu0
  %v402 = vadd.f32 %v90, %v401
  %403 = vmatmul.bf16.gmra.mxu0 %v290
  %v404 = vpop.f32.mrf.mxu0
  %v405 = vadd.f32 %v90, %v404
  %v406 = vpop.f32.mrf.mxu0
  %v407 = vadd.f32 %v90, %v406
  %408 = vmatmul.bf16.gmra.mxu0 %v293
  %v409 = vpop.f32.mrf.mxu0
  %v410 = vadd.f32 %v90, %v409
  %v411 = vpop.f32.mrf.mxu0
  %v412 = vadd.f32 %v90, %v411
  %413 = vmatmul.bf16.gmra.mxu0 %v296
  %v414 = vpop.f32.mrf.mxu0
  %v415 = vadd.f32 %v90, %v414
  %v416 = vpop.f32.mrf.mxu0
  %v417 = vadd.f32 %v90, %v416
  %418 = vmatmul.bf16.gmra.mxu0 %v299
  %v419 = vpop.f32.mrf.mxu0
  %v420 = vadd.f32 %v90, %v419
  %v421 = vpop.f32.mrf.mxu0
  %v422 = vadd.f32 %v90, %v421
  %423 = vmatmul.bf16.gmra.mxu0 %v302
  %v424 = vpop.f32.mrf.mxu0
  %v425 = vadd.f32 %v90, %v424
  %v426 = vpop.f32.mrf.mxu0
  %v427 = vadd.f32 %v90, %v426
  %428 = vmatmul.bf16.gmra.mxu0 %v305
  %v429 = vpop.f32.mrf.mxu0
  %v430 = vadd.f32 %v90, %v429
  %v431 = vpop.f32.mrf.mxu0
  %v432 = vadd.f32 %v90, %v431
  %433 = vmatmul.bf16.gmra.mxu0 %v308
  %v434 = vpop.f32.mrf.mxu0
  %v435 = vadd.f32 %v90, %v434
  %v436 = vpop.f32.mrf.mxu0
  %v437 = vadd.f32 %v90, %v436
  %438 = vmatmul.bf16.gmra.mxu0 %v311
  %v439 = vpop.f32.mrf.mxu0
  %v440 = vadd.f32 %v90, %v439
  %v441 = vpop.f32.mrf.mxu0
  %v442 = vadd.f32 %v90, %v441
  %443 = vmatmul.bf16.gmra.mxu0 %v314
  %v444 = vpop.f32.mrf.mxu0
  %v445 = vadd.f32 %v90, %v444
  %v446 = vpop.f32.mrf.mxu0
  %v447 = vadd.f32 %v90, %v446
  %448 = vmatmul.bf16.gmra.mxu0 %v317
  %v449 = vpop.f32.mrf.mxu0
  %v450 = vadd.f32 %v90, %v449
  %v451 = vpop.f32.mrf.mxu0
  %v452 = vadd.f32 %v90, %v451
  %453 = vmatmul.bf16.gmra.mxu0 %v320
  %v454 = vpop.f32.mrf.mxu0
  %v455 = vadd.f32 %v90, %v454
  %v456 = vpop.f32.mrf.mxu0
  %v457 = vadd.f32 %v90, %v456
  %458 = vmatmul.bf16.gmra.mxu0 %v323
  %v459 = vpop.f32.mrf.mxu0
  %v460 = vadd.f32 %v90, %v459
  %v461 = vpop.f32.mrf.mxu0
  %v462 = vadd.f32 %v90, %v461
  %463 = vmatmul.bf16.gmra.mxu0 %v326
  %v464 = vpop.f32.mrf.mxu0
  %v465 = vadd.f32 %v90, %v464
  %v466 = vpop.f32.mrf.mxu0
  %v467 = vadd.f32 %v90, %v466
  %468 = vmatmul.bf16.gmra.mxu0 %v329
  %v469 = vpop.f32.mrf.mxu0
  %v470 = vadd.f32 %v90, %v469
  %v471 = vpop.f32.mrf.mxu0
  %v472 = vadd.f32 %v90, %v471
  %473 = vmatmul.bf16.gmra.mxu0 %v332
  %v474 = vpop.f32.mrf.mxu0
  %v475 = vadd.f32 %v90, %v474
  %v476 = vpop.f32.mrf.mxu0
  %v477 = vadd.f32 %v90, %v476
  %478 = vmatmul.bf16.gmra.mxu0 %v335
  %v479 = vpop.f32.mrf.mxu0
  %v480 = vadd.f32 %v90, %v479
  %v481 = vpop.f32.mrf.mxu0
  %v482 = vadd.f32 %v90, %v481
  %483 = vmatmul.bf16.gmra.mxu0 %v338
  %v484 = vpop.f32.mrf.mxu0
  %v485 = vadd.f32 %v90, %v484
  %v486 = vpop.f32.mrf.mxu0
  %v487 = vadd.f32 %v90, %v486
  %488 = vmatmul.bf16.gmra.mxu0 %v341
  %v489 = vpop.f32.mrf.mxu0
  %v490 = vadd.f32 %v90, %v489
  %v491 = vpop.f32.mrf.mxu0
  %v492 = vadd.f32 %v90, %v491
  %493 = vmatmul.bf16.gmra.mxu0 %v344
  %v494 = vpop.f32.mrf.mxu0
  %v495 = vadd.f32 %v90, %v494
  %v496 = vpop.f32.mrf.mxu0
  %v497 = vadd.f32 %v90, %v496
  %498 = vmatmul.bf16.gmra.mxu0 %v347
  %v499 = vpop.f32.mrf.mxu0
  %v500 = vadd.f32 %v90, %v499
  %v501 = vpop.f32.mrf.mxu0
  %v502 = vadd.f32 %v90, %v501
  %503 = vmatmul.bf16.gmra.mxu0 %v350
  %v504 = vpop.f32.mrf.mxu0
  %v505 = vadd.f32 %v90, %v504
  %v506 = vpop.f32.mrf.mxu0
  %v507 = vadd.f32 %v90, %v506
  %508 = vmatmul.bf16.gmra.mxu0 %v353
  %v509 = vpop.f32.mrf.mxu0
  %v510 = vadd.f32 %v90, %v509
  %v511 = vpop.f32.mrf.mxu0
  %v512 = vadd.f32 %v90, %v511
  %513 = vmatmul.bf16.gmra.mxu0 %v356
  %v514 = vpop.f32.mrf.mxu0
  %v515 = vadd.f32 %v90, %v514
  %v516 = vpop.f32.mrf.mxu0
  %v517 = vadd.f32 %v90, %v516
  %518 = vmatmul.bf16.gmra.mxu0 %v359
  %v519 = vpop.f32.mrf.mxu0
  %v520 = vadd.f32 %v90, %v519
  %v521 = vpop.f32.mrf.mxu0
  %v522 = vadd.f32 %v90, %v521
  %523 = vmatmul.bf16.gmra.mxu0 %v362
  %v524 = vpop.f32.mrf.mxu0
  %v525 = vadd.f32 %v90, %v524
  %v526 = vpop.f32.mrf.mxu0
  %v527 = vadd.f32 %v90, %v526
  %528 = vmatmul.bf16.gmra.mxu0 %v365
  %v529 = vpop.f32.mrf.mxu0
  %v530 = vadd.f32 %v90, %v529
  %v531 = vpop.f32.mrf.mxu0
  %v532 = vadd.f32 %v90, %v531
  %533 = vmatmul.bf16.gmra.mxu0 %v368
  %v534 = vpop.f32.mrf.mxu0
  %v535 = vadd.f32 %v90, %v534
  %v536 = vpop.f32.mrf.mxu0
  %v537 = vadd.f32 %v90, %v536
  %538 = vmatmul.bf16.gmra.mxu0 %v371
  %v539 = vpop.f32.mrf.mxu0
  %v540 = vadd.f32 %v90, %v539
  %v541 = vpop.f32.mrf.mxu0
  %v542 = vadd.f32 %v90, %v541
  %543 = vmatmul.bf16.gmra.mxu0 %v374
  %v544 = vpop.f32.mrf.mxu0
  %v545 = vadd.f32 %v90, %v544
  %v546 = vpop.f32.mrf.mxu0
  %v547 = vadd.f32 %v90, %v546
  %548 = vdwg.mxu0
  %v549 = vmax.f32 %v390, 0.0
  %v550 = vmax.f32 %v392, 0.0
  %v551 = vmax.f32 %v395, 0.0
  %v552 = vmax.f32 %v397, 0.0
  %v553 = vmax.f32 %v400, 0.0
  %v554 = vmax.f32 %v402, 0.0
  %v555 = vmax.f32 %v405, 0.0
  %v556 = vmax.f32 %v407, 0.0
  %v557 = vmax.f32 %v410, 0.0
  %v558 = vmax.f32 %v412, 0.0
  %v559 = vmax.f32 %v415, 0.0
  %v560 = vmax.f32 %v417, 0.0
  %v561 = vmax.f32 %v420, 0.0
  %v562 = vmax.f32 %v422, 0.0
  %v563 = vmax.f32 %v425, 0.0
  %v564 = vmax.f32 %v427, 0.0
  %v565 = vmax.f32 %v430, 0.0
  %v566 = vmax.f32 %v432, 0.0
  %v567 = vmax.f32 %v435, 0.0
  %v568 = vmax.f32 %v437, 0.0
  %v569 = vmax.f32 %v440, 0.0
  %v570 = vmax.f32 %v442, 0.0
  %v571 = vmax.f32 %v445, 0.0
  %v572 = vmax.f32 %v447, 0.0
  %v573 = vmax.f32 %v450, 0.0
  %v574 = vmax.f32 %v452, 0.0
  %v575 = vmax.f32 %v455, 0.0
  %v576 = vmax.f32 %v457, 0.0
  %v577 = vmax.f32 %v460, 0.0
  %v578 = vmax.f32 %v462, 0.0
  %v579 = vmax.f32 %v465, 0.0
  %v580 = vmax.f32 %v467, 0.0
  %v581 = vmax.f32 %v470, 0.0
  %v582 = vmax.f32 %v472, 0.0
  %v583 = vmax.f32 %v475, 0.0
  %v584 = vmax.f32 %v477, 0.0
  %v585 = vmax.f32 %v480, 0.0
  %v586 = vmax.f32 %v482, 0.0
  %v587 = vmax.f32 %v485, 0.0
  %v588 = vmax.f32 %v487, 0.0
  %v589 = vmax.f32 %v490, 0.0
  %v590 = vmax.f32 %v492, 0.0
  %v591 = vmax.f32 %v495, 0.0
  %v592 = vmax.f32 %v497, 0.0
  %v593 = vmax.f32 %v500, 0.0
  %v594 = vmax.f32 %v502, 0.0
  %v595 = vmax.f32 %v505, 0.0
  %v596 = vmax.f32 %v507, 0.0
  %v597 = vmax.f32 %v510, 0.0
  %v598 = vmax.f32 %v512, 0.0
  %v599 = vmax.f32 %v515, 0.0
  %v600 = vmax.f32 %v517, 0.0
  %v601 = vmax.f32 %v520, 0.0
  %v602 = vmax.f32 %v522, 0.0
  %v603 = vmax.f32 %v525, 0.0
  %v604 = vmax.f32 %v527, 0.0
  %v605 = vmax.f32 %v530, 0.0
  %v606 = vmax.f32 %v532, 0.0
  %v607 = vmax.f32 %v535, 0.0
  %v608 = vmax.f32 %v537, 0.0
  %v609 = vmax.f32 %v540, 0.0
  %v610 = vmax.f32 %v542, 0.0
  %v611 = vmax.f32 %v545, 0.0
  %v612 = vmax.f32 %v547, 0.0
  %vm613 = vcmask 130048
  %614 = vst.msk [vmem:[%s3] sm:$0xff] %vm613, %v549
  %615 = vst.msk [vmem:[%s3 + $0x8] sm:$0xff] %vm613, %v550
  %616 = vst.msk [vmem:[%s3 + $0x10] sm:$0xff] %vm613, %v551
  %617 = vst.msk [vmem:[%s3 + $0x18] sm:$0xff] %vm613, %v552
  %618 = vst.msk [vmem:[%s3 + $0x20] sm:$0xff] %vm613, %v553
  %619 = vst.msk [vmem:[%s3 + $0x28] sm:$0xff] %vm613, %v554
  %620 = vst.msk [vmem:[%s3 + $0x30] sm:$0xff] %vm613, %v555
  %621 = vst.msk [vmem:[%s3 + $0x38] sm:$0xff] %vm613, %v556
  %622 = vst.msk [vmem:[%s3 + $0x40] sm:$0xff] %vm613, %v557
  %623 = vst.msk [vmem:[%s3 + $0x48] sm:$0xff] %vm613, %v558
  %624 = vst.msk [vmem:[%s3 + $0x50] sm:$0xff] %vm613, %v559
  %625 = vst.msk [vmem:[%s3 + $0x58] sm:$0xff] %vm613, %v560
  %626 = vst.msk [vmem:[%s3 + $0x60] sm:$0xff] %vm613, %v561
  %627 = vst.msk [vmem:[%s3 + $0x68] sm:$0xff] %vm613, %v562
  %628 = vst.msk [vmem:[%s3 + $0x70] sm:$0xff] %vm613, %v563
  %629 = vst.msk [vmem:[%s3 + $0x78] sm:$0xff] %vm613, %v564
  %630 = vst.msk [vmem:[%s3 + $0x80] sm:$0xff] %vm613, %v565
  %631 = vst.msk [vmem:[%s3 + $0x88] sm:$0xff] %vm613, %v566
  %632 = vst.msk [vmem:[%s3 + $0x90] sm:$0xff] %vm613, %v567
  %633 = vst.msk [vmem:[%s3 + $0x98] sm:$0xff] %vm613, %v568
  %634 = vst.msk [vmem:[%s3 + $0xa0] sm:$0xff] %vm613, %v569
  %635 = vst.msk [vmem:[%s3 + $0xa8] sm:$0xff] %vm613, %v570
  %636 = vst.msk [vmem:[%s3 + $0xb0] sm:$0xff] %vm613, %v571
  %637 = vst.msk [vmem:[%s3 + $0xb8] sm:$0xff] %vm613, %v572
  %638 = vst.msk [vmem:[%s3 + $0xc0] sm:$0xff] %vm613, %v573
  %639 = vst.msk [vmem:[%s3 + $0xc8] sm:$0xff] %vm613, %v574
  %640 = vst.msk [vmem:[%s3 + $0xd0] sm:$0xff] %vm613, %v575
  %641 = vst.msk [vmem:[%s3 + $0xd8] sm:$0xff] %vm613, %v576
  %642 = vst.msk [vmem:[%s3 + $0xe0] sm:$0xff] %vm613, %v577
  %643 = vst.msk [vmem:[%s3 + $0xe8] sm:$0xff] %vm613, %v578
  %644 = vst.msk [vmem:[%s3 + $0xf0] sm:$0xff] %vm613, %v579
  %645 = vst.msk [vmem:[%s3 + $0xf8] sm:$0xff] %vm613, %v580
  %646 = vst.msk [vmem:[%s3 + $0x100] sm:$0xff] %vm613, %v581
  %647 = vst.msk [vmem:[%s3 + $0x108] sm:$0xff] %vm613, %v582
  %648 = vst.msk [vmem:[%s3 + $0x110] sm:$0xff] %vm613, %v583
  %649 = vst.msk [vmem:[%s3 + $0x118] sm:$0xff] %vm613, %v584
  %650 = vst.msk [vmem:[%s3 + $0x120] sm:$0xff] %vm613, %v585
  %651 = vst.msk [vmem:[%s3 + $0x128] sm:$0xff] %vm613, %v586
  %652 = vst.msk [vmem:[%s3 + $0x130] sm:$0xff] %vm613, %v587
  %653 = vst.msk [vmem:[%s3 + $0x138] sm:$0xff] %vm613, %v588
  %654 = vst.msk [vmem:[%s3 + $0x140] sm:$0xff] %vm613, %v589
  %655 = vst.msk [vmem:[%s3 + $0x148] sm:$0xff] %vm613, %v590
  %656 = vst.msk [vmem:[%s3 + $0x150] sm:$0xff] %vm613, %v591
  %657 = vst.msk [vmem:[%s3 + $0x158] sm:$0xff] %vm613, %v592
  %658 = vst.msk [vmem:[%s3 + $0x160] sm:$0xff] %vm613, %v593
  %659 = vst.msk [vmem:[%s3 + $0x168] sm:$0xff] %vm613, %v594
  %660 = vst.msk [vmem:[%s3 + $0x170] sm:$0xff] %vm613, %v595
  %661 = vst.msk [vmem:[%s3 + $0x178] sm:$0xff] %vm613, %v596
  %662 = vst.msk [vmem:[%s3 + $0x180] sm:$0xff] %vm613, %v597
  %663 = vst.msk [vmem:[%s3 + $0x188] sm:$0xff] %vm613, %v598
  %664 = vst.msk [vmem:[%s3 + $0x190] sm:$0xff] %vm613, %v599
  %665 = vst.msk [vmem:[%s3 + $0x198] sm:$0xff] %vm613, %v600
  %666 = vst.msk [vmem:[%s3 + $0x1a0] sm:$0xff] %vm613, %v601
  %667 = vst.msk [vmem:[%s3 + $0x1a8] sm:$0xff] %vm613, %v602
  %668 = vst.msk [vmem:[%s3 + $0x1b0] sm:$0xff] %vm613, %v603
  %669 = vst.msk [vmem:[%s3 + $0x1b8] sm:$0xff] %vm613, %v604
  %670 = vst.msk [vmem:[%s3 + $0x1c0] sm:$0xff] %vm613, %v605
  %671 = vst.msk [vmem:[%s3 + $0x1c8] sm:$0xff] %vm613, %v606
  %672 = vst.msk [vmem:[%s3 + $0x1d0] sm:$0xff] %vm613, %v607
  %673 = vst.msk [vmem:[%s3 + $0x1d8] sm:$0xff] %vm613, %v608
  %674 = vst.msk [vmem:[%s3 + $0x1e0] sm:$0xff] %vm613, %v609
  %675 = vst.msk [vmem:[%s3 + $0x1e8] sm:$0xff] %vm613, %v610
  %676 = vst.msk [vmem:[%s3 + $0x1f0] sm:$0xff] %vm613, %v611
  %677 = vst.msk [vmem:[%s3 + $0x1f8] sm:$0xff] %vm613, %v612
  // Predicated region
  $region14: #{forward.19} parent=0 // pred_check
    _
  $region15: #{forward.19} parent=0 // pred_check_branch
    %679 = sbr.rel (0) target = $region17
  $region16: #{forward.19} parent=0 // pred_region
    _
  $region17: #{forward.19} parent=0 // pred_fallthru
    _
  // Predicated region
  $region18: #{forward.19} parent=0 // pred_check
    _
  $region19: #{forward.19} parent=0 // pred_check_branch
    %681 = sbr.rel (0) target = $region21
  $region20: #{forward.19} parent=0 // pred_region
    _
  $region21: #{forward.19} parent=0 // pred_fallthru
    _

// kernel: forward.20
$region0: #{forward.20}
  #allocation0 [shape = 'u32[]', space=smem, size = 0x4, offset = 0x4, fixed_abs, tag = 'smem constant byte address 0x4 - core index']
  #allocation1 [shape = 'u32[72,128]{1,0:T(1,128)}', space=vmem, size = 0x9000, scoped, tag = 'internal scratch']
  %s0 = inlined_call_operand.vmem [shape: bf16[512,144], index: 0, kind: input, shape index: {}]
  %s1 = inlined_call_operand.vmem [shape: bf16[144,16], index: 1, kind: input, shape index: {}]
  %s2 = inlined_call_operand.vmem [shape: f32[1,16], index: 2, kind: input, shape index: {}]
  %s3 = inlined_call_operand.vmem [shape: f32[512,16], index: 3, kind: output, shape index: {}]
  %s4 = sld [smem:[#allocation0]]
  $region22: #{forward.20} parent=0
    _
  %s6 = ssub.s32 1, %s4
  %s7 = scalar_select 0, %s6, %s4
  // Predicated region
  $region2: #{forward.20} parent=0 // pred_check
    _
  $region3: #{forward.20} parent=0 // pred_check_branch
    %9 = sbr.rel (0) target = $region5
  $region4: #{forward.20} parent=0 // pred_region
    _
  $region5: #{forward.20} parent=0 // pred_fallthru
    _
  // Predicated region
  $region6: #{forward.20} parent=0 // pred_check
    _
  $region7: #{forward.20} parent=0 // pred_check_branch
    %11 = sbr.rel (0) target = $region9
  $region8: #{forward.20} parent=0 // pred_region
    _
  $region9: #{forward.20} parent=0 // pred_fallthru
    _
  // Predicated region
  $region10: #{forward.20} parent=0 // pred_check
    _
  $region11: #{forward.20} parent=0 // pred_check_branch
    %13 = sbr.rel (0) target = $region13
  $region12: #{forward.20} parent=0 // pred_region
    _
  $region13: #{forward.20} parent=0 // pred_fallthru
    _
  %v15 = vld [vmem:[%s0] sm:$0xff]
  %v16 = vld [vmem:[%s0 + $0x8] sm:$0xff]
  %v17 = vld [vmem:[%s0 + $0x10] sm:$0xff]
  %v18 = vld [vmem:[%s0 + $0x18] sm:$0xff]
  %v19 = vld [vmem:[%s0 + $0x20] sm:$0xff]
  %v20 = vld [vmem:[%s0 + $0x28] sm:$0xff]
  %v21 = vld [vmem:[%s0 + $0x30] sm:$0xff]
  %v22 = vld [vmem:[%s0 + $0x38] sm:$0xff]
  %v23 = vld [vmem:[%s0 + $0x40] sm:$0xff]
  %v24 = vld [vmem:[%s0 + $0x48] sm:$0xff]
  %v25 = vld [vmem:[%s0 + $0x50] sm:$0xff]
  %v26 = vld [vmem:[%s0 + $0x58] sm:$0xff]
  %v27 = vld [vmem:[%s0 + $0x60] sm:$0xff]
  %v28 = vld [vmem:[%s0 + $0x68] sm:$0xff]
  %v29 = vld [vmem:[%s0 + $0x70] sm:$0xff]
  %v30 = vld [vmem:[%s0 + $0x78] sm:$0xff]
  %v31 = vld [vmem:[%s0 + $0x80] sm:$0xff]
  %v32 = vld [vmem:[%s0 + $0x88] sm:$0xff]
  %v33 = vld [vmem:[%s0 + $0x90] sm:$0xff]
  %v34 = vld [vmem:[%s0 + $0x98] sm:$0xff]
  %v35 = vld [vmem:[%s0 + $0xa0] sm:$0xff]
  %v36 = vld [vmem:[%s0 + $0xa8] sm:$0xff]
  %v37 = vld [vmem:[%s0 + $0xb0] sm:$0xff]
  %v38 = vld [vmem:[%s0 + $0xb8] sm:$0xff]
  %v39 = vld [vmem:[%s0 + $0xc0] sm:$0xff]
  %v40 = vld [vmem:[%s0 + $0xc8] sm:$0xff]
  %v41 = vld [vmem:[%s0 + $0xd0] sm:$0xff]
  %v42 = vld [vmem:[%s0 + $0xd8] sm:$0xff]
  %v43 = vld [vmem:[%s0 + $0xe0] sm:$0xff]
  %v44 = vld [vmem:[%s0 + $0xe8] sm:$0xff]
  %v45 = vld [vmem:[%s0 + $0xf0] sm:$0xff]
  %v46 = vld [vmem:[%s0 + $0xf8] sm:$0xff]
  %v47 = vld [vmem:[%s0 + $0x100] sm:$0xff]
  %v48 = vld [vmem:[%s0 + $0x108] sm:$0xff]
  %v49 = vld [vmem:[%s0 + $0x110] sm:$0xff]
  %v50 = vld [vmem:[%s0 + $0x118] sm:$0xff]
  %v51 = vld [vmem:[%s0 + $0x120] sm:$0xff]
  %v52 = vld [vmem:[%s0 + $0x128] sm:$0xff]
  %v53 = vld [vmem:[%s0 + $0x130] sm:$0xff]
  %v54 = vld [vmem:[%s0 + $0x138] sm:$0xff]
  %v55 = vld [vmem:[%s0 + $0x140] sm:$0xff]
  %v56 = vld [vmem:[%s0 + $0x148] sm:$0xff]
  %v57 = vld [vmem:[%s0 + $0x150] sm:$0xff]
  %v58 = vld [vmem:[%s0 + $0x158] sm:$0xff]
  %v59 = vld [vmem:[%s0 + $0x160] sm:$0xff]
  %v60 = vld [vmem:[%s0 + $0x168] sm:$0xff]
  %v61 = vld [vmem:[%s0 + $0x170] sm:$0xff]
  %v62 = vld [vmem:[%s0 + $0x178] sm:$0xff]
  %v63 = vld [vmem:[%s0 + $0x180] sm:$0xff]
  %v64 = vld [vmem:[%s0 + $0x188] sm:$0xff]
  %v65 = vld [vmem:[%s0 + $0x190] sm:$0xff]
  %v66 = vld [vmem:[%s0 + $0x198] sm:$0xff]
  %v67 = vld [vmem:[%s0 + $0x1a0] sm:$0xff]
  %v68 = vld [vmem:[%s0 + $0x1a8] sm:$0xff]
  %v69 = vld [vmem:[%s0 + $0x1b0] sm:$0xff]
  %v70 = vld [vmem:[%s0 + $0x1b8] sm:$0xff]
  %v71 = vld [vmem:[%s0 + $0x1c0] sm:$0xff]
  %v72 = vld [vmem:[%s0 + $0x1c8] sm:$0xff]
  %v73 = vld [vmem:[%s0 + $0x1d0] sm:$0xff]
  %v74 = vld [vmem:[%s0 + $0x1d8] sm:$0xff]
  %v75 = vld [vmem:[%s0 + $0x1e0] sm:$0xff]
  %v76 = vld [vmem:[%s0 + $0x1e8] sm:$0xff]
  %v77 = vld [vmem:[%s0 + $0x1f0] sm:$0xff]
  %v78 = vld [vmem:[%s0 + $0x1f8] sm:$0xff]
  %v79 = vld [vmem:[%s1] sm:$0xf]
  %v80 = vld [vmem:[%s1 + $0x4] sm:$0xf]
  %v81 = vld [vmem:[%s1 + $0x8] sm:$0xf]
  %v82 = vld [vmem:[%s1 + $0xc] sm:$0xf]
  %v83 = vld [vmem:[%s1 + $0x10] sm:$0xf]
  %v84 = vld [vmem:[%s1 + $0x14] sm:$0xf]
  %v85 = vld [vmem:[%s1 + $0x18] sm:$0xf]
  %v86 = vld [vmem:[%s1 + $0x1c] sm:$0xf]
  %v87 = vld [vmem:[%s1 + $0x20] sm:$0xf]
  %v88 = vld [vmem:[%s1 + $0x24] sm:$0xf]
  %v89 = vld [vmem:[%s1 + $0x28] sm:$0xf]
  %v90 = vld [vmem:[%s1 + $0x2c] sm:$0xf]
  %v91 = vld [vmem:[%s1 + $0x30] sm:$0xf]
  %v92 = vld [vmem:[%s1 + $0x34] sm:$0xf]
  %v93 = vld [vmem:[%s1 + $0x38] sm:$0xf]
  %v94 = vld [vmem:[%s1 + $0x3c] sm:$0xf]
  %v95 = vld [vmem:[%s1 + $0x40] sm:$0xf]
  %v96 = vld [vmem:[%s1 + $0x44] sm:$0xf]
  %v97 = vld [vmem:[%s2] sm:$0x1]
  %v99 = vperm.slane %v97, 0
  %v165 = vunpack.c.l.b16 %v15
  %v166 = vunpack.c.h.b16 %v15
  %v167 = vunpack.c.l.b16 %v16
  %v168 = vunpack.c.h.b16 %v16
  %v169 = vunpack.c.l.b16 %v17
  %v170 = vunpack.c.h.b16 %v17
  %v171 = vunpack.c.l.b16 %v18
  %v172 = vunpack.c.h.b16 %v18
  %v173 = vunpack.c.l.b16 %v19
  %v174 = vunpack.c.h.b16 %v19
  %v175 = vunpack.c.l.b16 %v20
  %v176 = vunpack.c.h.b16 %v20
  %v177 = vunpack.c.l.b16 %v21
  %v178 = vunpack.c.h.b16 %v21
  %v179 = vunpack.c.l.b16 %v22
  %v180 = vunpack.c.h.b16 %v22
  %v181 = vunpack.c.l.b16 %v23
  %v182 = vunpack.c.h.b16 %v23
  %v183 = vunpack.c.l.b16 %v24
  %v184 = vunpack.c.h.b16 %v24
  %v185 = vunpack.c.l.b16 %v25
  %v186 = vunpack.c.h.b16 %v25
  %v187 = vunpack.c.l.b16 %v26
  %v188 = vunpack.c.h.b16 %v26
  %v189 = vunpack.c.l.b16 %v27
  %v190 = vunpack.c.h.b16 %v27
  %v191 = vunpack.c.l.b16 %v28
  %v192 = vunpack.c.h.b16 %v28
  %v193 = vunpack.c.l.b16 %v29
  %v194 = vunpack.c.h.b16 %v29
  %v195 = vunpack.c.l.b16 %v30
  %v196 = vunpack.c.h.b16 %v30
  %v197 = vunpack.c.l.b16 %v31
  %v198 = vunpack.c.h.b16 %v31
  %v199 = vunpack.c.l.b16 %v32
  %v200 = vunpack.c.h.b16 %v32
  %v201 = vunpack.c.l.b16 %v33
  %v202 = vunpack.c.h.b16 %v33
  %v203 = vunpack.c.l.b16 %v34
  %v204 = vunpack.c.h.b16 %v34
  %v205 = vunpack.c.l.b16 %v35
  %v206 = vunpack.c.h.b16 %v35
  %v207 = vunpack.c.l.b16 %v36
  %v208 = vunpack.c.h.b16 %v36
  %v209 = vunpack.c.l.b16 %v37
  %v210 = vunpack.c.h.b16 %v37
  %v211 = vunpack.c.l.b16 %v38
  %v212 = vunpack.c.h.b16 %v38
  %v213 = vunpack.c.l.b16 %v39
  %v214 = vunpack.c.h.b16 %v39
  %v215 = vunpack.c.l.b16 %v40
  %v216 = vunpack.c.h.b16 %v40
  %v217 = vunpack.c.l.b16 %v41
  %v218 = vunpack.c.h.b16 %v41
  %v219 = vunpack.c.l.b16 %v42
  %v220 = vunpack.c.h.b16 %v42
  %v221 = vunpack.c.l.b16 %v43
  %v222 = vunpack.c.h.b16 %v43
  %v223 = vunpack.c.l.b16 %v44
  %v224 = vunpack.c.h.b16 %v44
  %v225 = vunpack.c.l.b16 %v45
  %v226 = vunpack.c.h.b16 %v45
  %v227 = vunpack.c.l.b16 %v46
  %v228 = vunpack.c.h.b16 %v46
  %v229 = vunpack.c.l.b16 %v47
  %v230 = vunpack.c.h.b16 %v47
  %v231 = vunpack.c.l.b16 %v48
  %v232 = vunpack.c.h.b16 %v48
  %v233 = vunpack.c.l.b16 %v49
  %v234 = vunpack.c.h.b16 %v49
  %v235 = vunpack.c.l.b16 %v50
  %v236 = vunpack.c.h.b16 %v50
  %v237 = vunpack.c.l.b16 %v51
  %v238 = vunpack.c.h.b16 %v51
  %v239 = vunpack.c.l.b16 %v52
  %v240 = vunpack.c.h.b16 %v52
  %v241 = vunpack.c.l.b16 %v53
  %v242 = vunpack.c.h.b16 %v53
  %v243 = vunpack.c.l.b16 %v54
  %v244 = vunpack.c.h.b16 %v54
  %v245 = vunpack.c.l.b16 %v55
  %v246 = vunpack.c.h.b16 %v55
  %v247 = vunpack.c.l.b16 %v56
  %v248 = vunpack.c.h.b16 %v56
  %v249 = vunpack.c.l.b16 %v57
  %v250 = vunpack.c.h.b16 %v57
  %v251 = vunpack.c.l.b16 %v58
  %v252 = vunpack.c.h.b16 %v58
  %v253 = vunpack.c.l.b16 %v59
  %v254 = vunpack.c.h.b16 %v59
  %v255 = vunpack.c.l.b16 %v60
  %v256 = vunpack.c.h.b16 %v60
  %v257 = vunpack.c.l.b16 %v61
  %v258 = vunpack.c.h.b16 %v61
  %v259 = vunpack.c.l.b16 %v62
  %v260 = vunpack.c.h.b16 %v62
  %v261 = vunpack.c.l.b16 %v63
  %v262 = vunpack.c.h.b16 %v63
  %v263 = vunpack.c.l.b16 %v64
  %v264 = vunpack.c.h.b16 %v64
  %v265 = vunpack.c.l.b16 %v65
  %v266 = vunpack.c.h.b16 %v65
  %v267 = vunpack.c.l.b16 %v66
  %v268 = vunpack.c.h.b16 %v66
  %v269 = vunpack.c.l.b16 %v67
  %v270 = vunpack.c.h.b16 %v67
  %v271 = vunpack.c.l.b16 %v68
  %v272 = vunpack.c.h.b16 %v68
  %v273 = vunpack.c.l.b16 %v69
  %v274 = vunpack.c.h.b16 %v69
  %v275 = vunpack.c.l.b16 %v70
  %v276 = vunpack.c.h.b16 %v70
  %v277 = vunpack.c.l.b16 %v71
  %v278 = vunpack.c.h.b16 %v71
  %v279 = vunpack.c.l.b16 %v72
  %v280 = vunpack.c.h.b16 %v72
  %v281 = vunpack.c.l.b16 %v73
  %v282 = vunpack.c.h.b16 %v73
  %v283 = vunpack.c.l.b16 %v74
  %v284 = vunpack.c.h.b16 %v74
  %v285 = vunpack.c.l.b16 %v75
  %v286 = vunpack.c.h.b16 %v75
  %v287 = vunpack.c.l.b16 %v76
  %v288 = vunpack.c.h.b16 %v76
  %v289 = vunpack.c.l.b16 %v77
  %v290 = vunpack.c.h.b16 %v77
  %v291 = vunpack.c.l.b16 %v78
  %v292 = vunpack.c.h.b16 %v78
  %v293 = vpack.c.b16 %v167, %v165
  %v294 = vpack.c.b16 %v168, %v166
  %v295 = vpack.c.b16 %v171, %v169
  %v296 = vpack.c.b16 %v172, %v170
  %v297 = vpack.c.b16 %v175, %v173
  %v298 = vpack.c.b16 %v176, %v174
  %v299 = vpack.c.b16 %v179, %v177
  %v300 = vpack.c.b16 %v180, %v178
  %v301 = vpack.c.b16 %v183, %v181
  %v302 = vpack.c.b16 %v184, %v182
  %v303 = vpack.c.b16 %v187, %v185
  %v304 = vpack.c.b16 %v188, %v186
  %v305 = vpack.c.b16 %v191, %v189
  %v306 = vpack.c.b16 %v192, %v190
  %v307 = vpack.c.b16 %v195, %v193
  %v308 = vpack.c.b16 %v196, %v194
  %v309 = vpack.c.b16 %v199, %v197
  %v310 = vpack.c.b16 %v200, %v198
  %v311 = vpack.c.b16 %v203, %v201
  %v312 = vpack.c.b16 %v204, %v202
  %v313 = vpack.c.b16 %v207, %v205
  %v314 = vpack.c.b16 %v208, %v206
  %v315 = vpack.c.b16 %v211, %v209
  %v316 = vpack.c.b16 %v212, %v210
  %v317 = vpack.c.b16 %v215, %v213
  %v318 = vpack.c.b16 %v216, %v214
  %v319 = vpack.c.b16 %v219, %v217
  %v320 = vpack.c.b16 %v220, %v218
  %v321 = vpack.c.b16 %v223, %v221
  %v322 = vpack.c.b16 %v224, %v222
  %v323 = vpack.c.b16 %v227, %v225
  %v324 = vpack.c.b16 %v228, %v226
  %v325 = vpack.c.b16 %v231, %v229
  %v326 = vpack.c.b16 %v232, %v230
  %v327 = vpack.c.b16 %v235, %v233
  %v328 = vpack.c.b16 %v236, %v234
  %v329 = vpack.c.b16 %v239, %v237
  %v330 = vpack.c.b16 %v240, %v238
  %v331 = vpack.c.b16 %v243, %v241
  %v332 = vpack.c.b16 %v244, %v242
  %v333 = vpack.c.b16 %v247, %v245
  %v334 = vpack.c.b16 %v248, %v246
  %v335 = vpack.c.b16 %v251, %v249
  %v336 = vpack.c.b16 %v252, %v250
  %v337 = vpack.c.b16 %v255, %v253
  %v338 = vpack.c.b16 %v256, %v254
  %v339 = vpack.c.b16 %v259, %v257
  %v340 = vpack.c.b16 %v260, %v258
  %v341 = vpack.c.b16 %v263, %v261
  %v342 = vpack.c.b16 %v264, %v262
  %v343 = vpack.c.b16 %v267, %v265
  %v344 = vpack.c.b16 %v268, %v266
  %v345 = vpack.c.b16 %v271, %v269
  %v346 = vpack.c.b16 %v272, %v270
  %v347 = vpack.c.b16 %v275, %v273
  %v348 = vpack.c.b16 %v276, %v274
  %v349 = vpack.c.b16 %v279, %v277
  %v350 = vpack.c.b16 %v280, %v278
  %v351 = vpack.c.b16 %v283, %v281
  %v352 = vpack.c.b16 %v284, %v282
  %v353 = vpack.c.b16 %v287, %v285
  %v354 = vpack.c.b16 %v288, %v286
  %v355 = vpack.c.b16 %v291, %v289
  %v356 = vpack.c.b16 %v292, %v290
  %v407 = vunpack.c.l.b16 %v79
  %v408 = vunpack.c.l.b16 %v80
  %v409 = vunpack.c.l.b16 %v81
  %v410 = vunpack.c.l.b16 %v82
  %v411 = vunpack.c.l.b16 %v83
  %v412 = vunpack.c.l.b16 %v84
  %v413 = vunpack.c.l.b16 %v85
  %v414 = vunpack.c.l.b16 %v86
  %v415 = vunpack.c.l.b16 %v87
  %v416 = vunpack.c.l.b16 %v88
  %v417 = vunpack.c.l.b16 %v89
  %v418 = vunpack.c.l.b16 %v90
  %v419 = vunpack.c.l.b16 %v91
  %v420 = vunpack.c.l.b16 %v92
  %v421 = vunpack.c.l.b16 %v93
  %v422 = vunpack.c.l.b16 %v94
  %v423 = vunpack.c.l.b16 %v95
  %v424 = vunpack.c.l.b16 %v96
  %v425 = vpack.c.b16 %v408, %v407
  %v426 = vpack.c.b16 %v410, %v409
  %v427 = vpack.c.b16 %v412, %v411
  %v428 = vpack.c.b16 %v414, %v413
  %v429 = vpack.c.b16 %v416, %v415
  %v430 = vpack.c.b16 %v418, %v417
  %v431 = vpack.c.b16 %v420, %v419
  %v432 = vpack.c.b16 %v422, %v421
  %v433 = vpack.c.b16 %v424, %v423
  %vm443 = vcmask 130048
  %v445 = vsel %vm443, %v294, 0
  %v448 = vsel %vm443, %v296, 0
  %v451 = vsel %vm443, %v298, 0
  %v454 = vsel %vm443, %v300, 0
  %v457 = vsel %vm443, %v302, 0
  %v460 = vsel %vm443, %v304, 0
  %v463 = vsel %vm443, %v306, 0
  %v466 = vsel %vm443, %v308, 0
  %v469 = vsel %vm443, %v310, 0
  %v472 = vsel %vm443, %v312, 0
  %v475 = vsel %vm443, %v314, 0
  %v478 = vsel %vm443, %v316, 0
  %v481 = vsel %vm443, %v318, 0
  %v484 = vsel %vm443, %v320, 0
  %v487 = vsel %vm443, %v322, 0
  %v490 = vsel %vm443, %v324, 0
  %v493 = vsel %vm443, %v326, 0
  %v496 = vsel %vm443, %v328, 0
  %v499 = vsel %vm443, %v330, 0
  %v502 = vsel %vm443, %v332, 0
  %v505 = vsel %vm443, %v334, 0
  %v508 = vsel %vm443, %v336, 0
  %v511 = vsel %vm443, %v338, 0
  %v514 = vsel %vm443, %v340, 0
  %v517 = vsel %vm443, %v342, 0
  %v520 = vsel %vm443, %v344, 0
  %v523 = vsel %vm443, %v346, 0
  %v526 = vsel %vm443, %v348, 0
  %v529 = vsel %vm443, %v350, 0
  %v532 = vsel %vm443, %v352, 0
  %v535 = vsel %vm443, %v354, 0
  %v538 = vsel %vm443, %v356, 0
  %540 = vmatpush.bf16.msra.mxu0 %v432
  %541 = vmatpush.bf16.msra.mxu0 %v431
  %542 = vmatpush.bf16.msra.mxu0 %v430
  %543 = vmatpush.bf16.msra.mxu0 %v429
  %544 = vmatpush.bf16.msra.mxu0 %v428
  %545 = vmatpush.bf16.msra.mxu0 %v427
  %546 = vmatpush.bf16.msra.mxu0 %v426
  %547 = vmatpush.bf16.msra.mxu0 %v425
  %548 = vmatmul.bf16.gmra.mxu0 %v293
  %v549 = vpop.f32.mrf.mxu0
  %v550 = vadd.f32 %v99, %v549
  %v551 = vpop.f32.mrf.mxu0
  %v552 = vadd.f32 %v99, %v551
  %553 = vmatmul.bf16.gmra.mxu0 %v295
  %v554 = vpop.f32.mrf.mxu0
  %v555 = vadd.f32 %v99, %v554
  %v556 = vpop.f32.mrf.mxu0
  %v557 = vadd.f32 %v99, %v556
  %558 = vmatmul.bf16.gmra.mxu0 %v297
  %v559 = vpop.f32.mrf.mxu0
  %v560 = vadd.f32 %v99, %v559
  %v561 = vpop.f32.mrf.mxu0
  %v562 = vadd.f32 %v99, %v561
  %563 = vmatmul.bf16.gmra.mxu0 %v299
  %v564 = vpop.f32.mrf.mxu0
  %v565 = vadd.f32 %v99, %v564
  %v566 = vpop.f32.mrf.mxu0
  %v567 = vadd.f32 %v99, %v566
  %568 = vmatmul.bf16.gmra.mxu0 %v301
  %v569 = vpop.f32.mrf.mxu0
  %v570 = vadd.f32 %v99, %v569
  %v571 = vpop.f32.mrf.mxu0
  %v572 = vadd.f32 %v99, %v571
  %573 = vmatmul.bf16.gmra.mxu0 %v303
  %v574 = vpop.f32.mrf.mxu0
  %v575 = vadd.f32 %v99, %v574
  %v576 = vpop.f32.mrf.mxu0
  %v577 = vadd.f32 %v99, %v576
  %578 = vmatmul.bf16.gmra.mxu0 %v305
  %v579 = vpop.f32.mrf.mxu0
  %v580 = vadd.f32 %v99, %v579
  %v581 = vpop.f32.mrf.mxu0
  %v582 = vadd.f32 %v99, %v581
  %583 = vmatmul.bf16.gmra.mxu0 %v307
  %v584 = vpop.f32.mrf.mxu0
  %v585 = vadd.f32 %v99, %v584
  %v586 = vpop.f32.mrf.mxu0
  %v587 = vadd.f32 %v99, %v586
  %588 = vmatmul.bf16.gmra.mxu0 %v309
  %v589 = vpop.f32.mrf.mxu0
  %v590 = vadd.f32 %v99, %v589
  %v591 = vpop.f32.mrf.mxu0
  %v592 = vadd.f32 %v99, %v591
  %593 = vmatmul.bf16.gmra.mxu0 %v311
  %v594 = vpop.f32.mrf.mxu0
  %v595 = vadd.f32 %v99, %v594
  %v596 = vpop.f32.mrf.mxu0
  %v597 = vadd.f32 %v99, %v596
  %598 = vmatmul.bf16.gmra.mxu0 %v313
  %v599 = vpop.f32.mrf.mxu0
  %v600 = vadd.f32 %v99, %v599
  %v601 = vpop.f32.mrf.mxu0
  %v602 = vadd.f32 %v99, %v601
  %603 = vmatmul.bf16.gmra.mxu0 %v315
  %v604 = vpop.f32.mrf.mxu0
  %v605 = vadd.f32 %v99, %v604
  %v606 = vpop.f32.mrf.mxu0
  %v607 = vadd.f32 %v99, %v606
  %608 = vmatmul.bf16.gmra.mxu0 %v317
  %v609 = vpop.f32.mrf.mxu0
  %v610 = vadd.f32 %v99, %v609
  %v611 = vpop.f32.mrf.mxu0
  %v612 = vadd.f32 %v99, %v611
  %613 = vmatmul.bf16.gmra.mxu0 %v319
  %v614 = vpop.f32.mrf.mxu0
  %v615 = vadd.f32 %v99, %v614
  %v616 = vpop.f32.mrf.mxu0
  %v617 = vadd.f32 %v99, %v616
  %618 = vmatmul.bf16.gmra.mxu0 %v321
  %v619 = vpop.f32.mrf.mxu0
  %v620 = vadd.f32 %v99, %v619
  %v621 = vpop.f32.mrf.mxu0
  %v622 = vadd.f32 %v99, %v621
  %623 = vmatmul.bf16.gmra.mxu0 %v323
  %v624 = vpop.f32.mrf.mxu0
  %v625 = vadd.f32 %v99, %v624
  %v626 = vpop.f32.mrf.mxu0
  %v627 = vadd.f32 %v99, %v626
  %628 = vmatmul.bf16.gmra.mxu0 %v325
  %v629 = vpop.f32.mrf.mxu0
  %v630 = vadd.f32 %v99, %v629
  %v631 = vpop.f32.mrf.mxu0
  %v632 = vadd.f32 %v99, %v631
  %633 = vmatmul.bf16.gmra.mxu0 %v327
  %v634 = vpop.f32.mrf.mxu0
  %v635 = vadd.f32 %v99, %v634
  %v636 = vpop.f32.mrf.mxu0
  %v637 = vadd.f32 %v99, %v636
  %638 = vmatmul.bf16.gmra.mxu0 %v329
  %v639 = vpop.f32.mrf.mxu0
  %v640 = vadd.f32 %v99, %v639
  %v641 = vpop.f32.mrf.mxu0
  %v642 = vadd.f32 %v99, %v641
  %643 = vmatmul.bf16.gmra.mxu0 %v331
  %v644 = vpop.f32.mrf.mxu0
  %v645 = vadd.f32 %v99, %v644
  %v646 = vpop.f32.mrf.mxu0
  %v647 = vadd.f32 %v99, %v646
  %648 = vmatmul.bf16.gmra.mxu0 %v333
  %v649 = vpop.f32.mrf.mxu0
  %v650 = vadd.f32 %v99, %v649
  %v651 = vpop.f32.mrf.mxu0
  %v652 = vadd.f32 %v99, %v651
  %653 = vmatmul.bf16.gmra.mxu0 %v335
  %v654 = vpop.f32.mrf.mxu0
  %v655 = vadd.f32 %v99, %v654
  %v656 = vpop.f32.mrf.mxu0
  %v657 = vadd.f32 %v99, %v656
  %658 = vmatmul.bf16.gmra.mxu0 %v337
  %v659 = vpop.f32.mrf.mxu0
  %v660 = vadd.f32 %v99, %v659
  %v661 = vpop.f32.mrf.mxu0
  %v662 = vadd.f32 %v99, %v661
  %663 = vmatmul.bf16.gmra.mxu0 %v339
  %v664 = vpop.f32.mrf.mxu0
  %v665 = vadd.f32 %v99, %v664
  %v666 = vpop.f32.mrf.mxu0
  %v667 = vadd.f32 %v99, %v666
  %668 = vmatmul.bf16.gmra.mxu0 %v341
  %v669 = vpop.f32.mrf.mxu0
  %v670 = vadd.f32 %v99, %v669
  %v671 = vpop.f32.mrf.mxu0
  %v672 = vadd.f32 %v99, %v671
  %673 = vmatmul.bf16.gmra.mxu0 %v343
  %v674 = vpop.f32.mrf.mxu0
  %v675 = vadd.f32 %v99, %v674
  %v676 = vpop.f32.mrf.mxu0
  %v677 = vadd.f32 %v99, %v676
  %678 = vmatmul.bf16.gmra.mxu0 %v345
  %v679 = vpop.f32.mrf.mxu0
  %v680 = vadd.f32 %v99, %v679
  %v681 = vpop.f32.mrf.mxu0
  %v682 = vadd.f32 %v99, %v681
  %683 = vmatmul.bf16.gmra.mxu0 %v347
  %v684 = vpop.f32.mrf.mxu0
  %v685 = vadd.f32 %v99, %v684
  %v686 = vpop.f32.mrf.mxu0
  %v687 = vadd.f32 %v99, %v686
  %688 = vmatmul.bf16.gmra.mxu0 %v349
  %v689 = vpop.f32.mrf.mxu0
  %v690 = vadd.f32 %v99, %v689
  %v691 = vpop.f32.mrf.mxu0
  %v692 = vadd.f32 %v99, %v691
  %693 = vmatmul.bf16.gmra.mxu0 %v351
  %v694 = vpop.f32.mrf.mxu0
  %v695 = vadd.f32 %v99, %v694
  %v696 = vpop.f32.mrf.mxu0
  %v697 = vadd.f32 %v99, %v696
  %698 = vmatmul.bf16.gmra.mxu0 %v353
  %v699 = vpop.f32.mrf.mxu0
  %v700 = vadd.f32 %v99, %v699
  %v701 = vpop.f32.mrf.mxu0
  %v702 = vadd.f32 %v99, %v701
  %703 = vmatmul.bf16.gmra.mxu0 %v355
  %v704 = vpop.f32.mrf.mxu0
  %v705 = vadd.f32 %v99, %v704
  %v706 = vpop.f32.mrf.mxu0
  %v707 = vadd.f32 %v99, %v706
  %708 = vdwg.mxu0
  %709 = vmatpush.bf16.msra.mxu0 0
  %710 = vmatpush.bf16.msra.mxu0 0
  %711 = vmatpush.bf16.msra.mxu0 0
  %712 = vmatpush.bf16.msra.mxu0 0
  %713 = vmatpush.bf16.msra.mxu0 0
  %714 = vmatpush.bf16.msra.mxu0 0
  %715 = vmatpush.bf16.msra.mxu0 0
  %716 = vmatpush.bf16.msra.mxu0 %v433
  %717 = vmatmul.bf16.gmra.mxu0 %v445
  %v718 = vpop.f32.mrf.mxu0
  %v719 = vadd.f32 %v550, %v718
  %v720 = vpop.f32.mrf.mxu0
  %v721 = vadd.f32 %v552, %v720
  %722 = vmatmul.bf16.gmra.mxu0 %v448
  %v723 = vpop.f32.mrf.mxu0
  %v724 = vadd.f32 %v555, %v723
  %v725 = vpop.f32.mrf.mxu0
  %v726 = vadd.f32 %v557, %v725
  %727 = vmatmul.bf16.gmra.mxu0 %v451
  %v728 = vpop.f32.mrf.mxu0
  %v729 = vadd.f32 %v560, %v728
  %v730 = vpop.f32.mrf.mxu0
  %v731 = vadd.f32 %v562, %v730
  %732 = vmatmul.bf16.gmra.mxu0 %v454
  %v733 = vpop.f32.mrf.mxu0
  %v734 = vadd.f32 %v565, %v733
  %v735 = vpop.f32.mrf.mxu0
  %v736 = vadd.f32 %v567, %v735
  %737 = vmatmul.bf16.gmra.mxu0 %v457
  %v738 = vpop.f32.mrf.mxu0
  %v739 = vadd.f32 %v570, %v738
  %v740 = vpop.f32.mrf.mxu0
  %v741 = vadd.f32 %v572, %v740
  %742 = vmatmul.bf16.gmra.mxu0 %v460
  %v743 = vpop.f32.mrf.mxu0
  %v744 = vadd.f32 %v575, %v743
  %v745 = vpop.f32.mrf.mxu0
  %v746 = vadd.f32 %v577, %v745
  %747 = vmatmul.bf16.gmra.mxu0 %v463
  %v748 = vpop.f32.mrf.mxu0
  %v749 = vadd.f32 %v580, %v748
  %v750 = vpop.f32.mrf.mxu0
  %v751 = vadd.f32 %v582, %v750
  %752 = vmatmul.bf16.gmra.mxu0 %v466
  %v753 = vpop.f32.mrf.mxu0
  %v754 = vadd.f32 %v585, %v753
  %v755 = vpop.f32.mrf.mxu0
  %v756 = vadd.f32 %v587, %v755
  %757 = vmatmul.bf16.gmra.mxu0 %v469
  %v758 = vpop.f32.mrf.mxu0
  %v759 = vadd.f32 %v590, %v758
  %v760 = vpop.f32.mrf.mxu0
  %v761 = vadd.f32 %v592, %v760
  %762 = vmatmul.bf16.gmra.mxu0 %v472
  %v763 = vpop.f32.mrf.mxu0
  %v764 = vadd.f32 %v595, %v763
  %v765 = vpop.f32.mrf.mxu0
  %v766 = vadd.f32 %v597, %v765
  %767 = vmatmul.bf16.gmra.mxu0 %v475
  %v768 = vpop.f32.mrf.mxu0
  %v769 = vadd.f32 %v600, %v768
  %v770 = vpop.f32.mrf.mxu0
  %v771 = vadd.f32 %v602, %v770
  %772 = vmatmul.bf16.gmra.mxu0 %v478
  %v773 = vpop.f32.mrf.mxu0
  %v774 = vadd.f32 %v605, %v773
  %v775 = vpop.f32.mrf.mxu0
  %v776 = vadd.f32 %v607, %v775
  %777 = vmatmul.bf16.gmra.mxu0 %v481
  %v778 = vpop.f32.mrf.mxu0
  %v779 = vadd.f32 %v610, %v778
  %v780 = vpop.f32.mrf.mxu0
  %v781 = vadd.f32 %v612, %v780
  %782 = vmatmul.bf16.gmra.mxu0 %v484
  %v783 = vpop.f32.mrf.mxu0
  %v784 = vadd.f32 %v615, %v783
  %v785 = vpop.f32.mrf.mxu0
  %v786 = vadd.f32 %v617, %v785
  %787 = vmatmul.bf16.gmra.mxu0 %v487
  %v788 = vpop.f32.mrf.mxu0
  %v789 = vadd.f32 %v620, %v788
  %v790 = vpop.f32.mrf.mxu0
  %v791 = vadd.f32 %v622, %v790
  %792 = vmatmul.bf16.gmra.mxu0 %v490
  %v793 = vpop.f32.mrf.mxu0
  %v794 = vadd.f32 %v625, %v793
  %v795 = vpop.f32.mrf.mxu0
  %v796 = vadd.f32 %v627, %v795
  %797 = vmatmul.bf16.gmra.mxu0 %v493
  %v798 = vpop.f32.mrf.mxu0
  %v799 = vadd.f32 %v630, %v798
  %v800 = vpop.f32.mrf.mxu0
  %v801 = vadd.f32 %v632, %v800
  %802 = vmatmul.bf16.gmra.mxu0 %v496
  %v803 = vpop.f32.mrf.mxu0
  %v804 = vadd.f32 %v635, %v803
  %v805 = vpop.f32.mrf.mxu0
  %v806 = vadd.f32 %v637, %v805
  %807 = vmatmul.bf16.gmra.mxu0 %v499
  %v808 = vpop.f32.mrf.mxu0
  %v809 = vadd.f32 %v640, %v808
  %v810 = vpop.f32.mrf.mxu0
  %v811 = vadd.f32 %v642, %v810
  %812 = vmatmul.bf16.gmra.mxu0 %v502
  %v813 = vpop.f32.mrf.mxu0
  %v814 = vadd.f32 %v645, %v813
  %v815 = vpop.f32.mrf.mxu0
  %v816 = vadd.f32 %v647, %v815
  %817 = vmatmul.bf16.gmra.mxu0 %v505
  %v818 = vpop.f32.mrf.mxu0
  %v819 = vadd.f32 %v650, %v818
  %v820 = vpop.f32.mrf.mxu0
  %v821 = vadd.f32 %v652, %v820
  %822 = vmatmul.bf16.gmra.mxu0 %v508
  %v823 = vpop.f32.mrf.mxu0
  %v824 = vadd.f32 %v655, %v823
  %v825 = vpop.f32.mrf.mxu0
  %v826 = vadd.f32 %v657, %v825
  %827 = vmatmul.bf16.gmra.mxu0 %v511
  %v828 = vpop.f32.mrf.mxu0
  %v829 = vadd.f32 %v660, %v828
  %v830 = vpop.f32.mrf.mxu0
  %v831 = vadd.f32 %v662, %v830
  %832 = vmatmul.bf16.gmra.mxu0 %v514
  %v833 = vpop.f32.mrf.mxu0
  %v834 = vadd.f32 %v665, %v833
  %v835 = vpop.f32.mrf.mxu0
  %v836 = vadd.f32 %v667, %v835
  %837 = vmatmul.bf16.gmra.mxu0 %v517
  %v838 = vpop.f32.mrf.mxu0
  %v839 = vadd.f32 %v670, %v838
  %v840 = vpop.f32.mrf.mxu0
  %v841 = vadd.f32 %v672, %v840
  %842 = vmatmul.bf16.gmra.mxu0 %v520
  %v843 = vpop.f32.mrf.mxu0
  %v844 = vadd.f32 %v675, %v843
  %v845 = vpop.f32.mrf.mxu0
  %v846 = vadd.f32 %v677, %v845
  %847 = vmatmul.bf16.gmra.mxu0 %v523
  %v848 = vpop.f32.mrf.mxu0
  %v849 = vadd.f32 %v680, %v848
  %v850 = vpop.f32.mrf.mxu0
  %v851 = vadd.f32 %v682, %v850
  %852 = vmatmul.bf16.gmra.mxu0 %v526
  %v853 = vpop.f32.mrf.mxu0
  %v854 = vadd.f32 %v685, %v853
  %v855 = vpop.f32.mrf.mxu0
  %v856 = vadd.f32 %v687, %v855
  %857 = vmatmul.bf16.gmra.mxu0 %v529
  %v858 = vpop.f32.mrf.mxu0
  %v859 = vadd.f32 %v690, %v858
  %v860 = vpop.f32.mrf.mxu0
  %v861 = vadd.f32 %v692, %v860
  %862 = vmatmul.bf16.gmra.mxu0 %v532
  %v863 = vpop.f32.mrf.mxu0
  %v864 = vadd.f32 %v695, %v863
  %v865 = vpop.f32.mrf.mxu0
  %v866 = vadd.f32 %v697, %v865
  %867 = vmatmul.bf16.gmra.mxu0 %v535
  %v868 = vpop.f32.mrf.mxu0
  %v869 = vadd.f32 %v700, %v868
  %v870 = vpop.f32.mrf.mxu0
  %v871 = vadd.f32 %v702, %v870
  %872 = vmatmul.bf16.gmra.mxu0 %v538
  %v873 = vpop.f32.mrf.mxu0
  %v874 = vadd.f32 %v705, %v873
  %v875 = vpop.f32.mrf.mxu0
  %v876 = vadd.f32 %v707, %v875
  %877 = vdwg.mxu0
  %v878 = vmax.f32 %v719, 0.0
  %v879 = vmax.f32 %v721, 0.0
  %v880 = vmax.f32 %v724, 0.0
  %v881 = vmax.f32 %v726, 0.0
  %v882 = vmax.f32 %v729, 0.0
  %v883 = vmax.f32 %v731, 0.0
  %v884 = vmax.f32 %v734, 0.0
  %v885 = vmax.f32 %v736, 0.0
  %v886 = vmax.f32 %v739, 0.0
  %v887 = vmax.f32 %v741, 0.0
  %v888 = vmax.f32 %v744, 0.0
  %v889 = vmax.f32 %v746, 0.0
  %v890 = vmax.f32 %v749, 0.0
  %v891 = vmax.f32 %v751, 0.0
  %v892 = vmax.f32 %v754, 0.0
  %v893 = vmax.f32 %v756, 0.0
  %v894 = vmax.f32 %v759, 0.0
  %v895 = vmax.f32 %v761, 0.0
  %v896 = vmax.f32 %v764, 0.0
  %v897 = vmax.f32 %v766, 0.0
  %v898 = vmax.f32 %v769, 0.0
  %v899 = vmax.f32 %v771, 0.0
  %v900 = vmax.f32 %v774, 0.0
  %v901 = vmax.f32 %v776, 0.0
  %v902 = vmax.f32 %v779, 0.0
  %v903 = vmax.f32 %v781, 0.0
  %v904 = vmax.f32 %v784, 0.0
  %v905 = vmax.f32 %v786, 0.0
  %v906 = vmax.f32 %v789, 0.0
  %v907 = vmax.f32 %v791, 0.0
  %v908 = vmax.f32 %v794, 0.0
  %v909 = vmax.f32 %v796, 0.0
  %v910 = vmax.f32 %v799, 0.0
  %v911 = vmax.f32 %v801, 0.0
  %v912 = vmax.f32 %v804, 0.0
  %v913 = vmax.f32 %v806, 0.0
  %v914 = vmax.f32 %v809, 0.0
  %v915 = vmax.f32 %v811, 0.0
  %v916 = vmax.f32 %v814, 0.0
  %v917 = vmax.f32 %v816, 0.0
  %v918 = vmax.f32 %v819, 0.0
  %v919 = vmax.f32 %v821, 0.0
  %v920 = vmax.f32 %v824, 0.0
  %v921 = vmax.f32 %v826, 0.0
  %v922 = vmax.f32 %v829, 0.0
  %v923 = vmax.f32 %v831, 0.0
  %v924 = vmax.f32 %v834, 0.0
  %v925 = vmax.f32 %v836, 0.0
  %v926 = vmax.f32 %v839, 0.0
  %v927 = vmax.f32 %v841, 0.0
  %v928 = vmax.f32 %v844, 0.0
  %v929 = vmax.f32 %v846, 0.0
  %v930 = vmax.f32 %v849, 0.0
  %v931 = vmax.f32 %v851, 0.0
  %v932 = vmax.f32 %v854, 0.0
  %v933 = vmax.f32 %v856, 0.0
  %v934 = vmax.f32 %v859, 0.0
  %v935 = vmax.f32 %v861, 0.0
  %v936 = vmax.f32 %v864, 0.0
  %v937 = vmax.f32 %v866, 0.0
  %v938 = vmax.f32 %v869, 0.0
  %v939 = vmax.f32 %v871, 0.0
  %v940 = vmax.f32 %v874, 0.0
  %v941 = vmax.f32 %v876, 0.0
  %942 = vst.msk [vmem:[%s3] sm:$0xff] %vm443, %v878
  %943 = vst.msk [vmem:[%s3 + $0x8] sm:$0xff] %vm443, %v879
  %944 = vst.msk [vmem:[%s3 + $0x10] sm:$0xff] %vm443, %v880
  %945 = vst.msk [vmem:[%s3 + $0x18] sm:$0xff] %vm443, %v881
  %946 = vst.msk [vmem:[%s3 + $0x20] sm:$0xff] %vm443, %v882
  %947 = vst.msk [vmem:[%s3 + $0x28] sm:$0xff] %vm443, %v883
  %948 = vst.msk [vmem:[%s3 + $0x30] sm:$0xff] %vm443, %v884
  %949 = vst.msk [vmem:[%s3 + $0x38] sm:$0xff] %vm443, %v885
  %950 = vst.msk [vmem:[%s3 + $0x40] sm:$0xff] %vm443, %v886
  %951 = vst.msk [vmem:[%s3 + $0x48] sm:$0xff] %vm443, %v887
  %952 = vst.msk [vmem:[%s3 + $0x50] sm:$0xff] %vm443, %v888
  %953 = vst.msk [vmem:[%s3 + $0x58] sm:$0xff] %vm443, %v889
  %954 = vst.msk [vmem:[%s3 + $0x60] sm:$0xff] %vm443, %v890
  %955 = vst.msk [vmem:[%s3 + $0x68] sm:$0xff] %vm443, %v891
  %956 = vst.msk [vmem:[%s3 + $0x70] sm:$0xff] %vm443, %v892
  %957 = vst.msk [vmem:[%s3 + $0x78] sm:$0xff] %vm443, %v893
  %958 = vst.msk [vmem:[%s3 + $0x80] sm:$0xff] %vm443, %v894
  %959 = vst.msk [vmem:[%s3 + $0x88] sm:$0xff] %vm443, %v895
  %960 = vst.msk [vmem:[%s3 + $0x90] sm:$0xff] %vm443, %v896
  %961 = vst.msk [vmem:[%s3 + $0x98] sm:$0xff] %vm443, %v897
  %962 = vst.msk [vmem:[%s3 + $0xa0] sm:$0xff] %vm443, %v898
  %963 = vst.msk [vmem:[%s3 + $0xa8] sm:$0xff] %vm443, %v899
  %964 = vst.msk [vmem:[%s3 + $0xb0] sm:$0xff] %vm443, %v900
  %965 = vst.msk [vmem:[%s3 + $0xb8] sm:$0xff] %vm443, %v901
  %966 = vst.msk [vmem:[%s3 + $0xc0] sm:$0xff] %vm443, %v902
  %967 = vst.msk [vmem:[%s3 + $0xc8] sm:$0xff] %vm443, %v903
  %968 = vst.msk [vmem:[%s3 + $0xd0] sm:$0xff] %vm443, %v904
  %969 = vst.msk [vmem:[%s3 + $0xd8] sm:$0xff] %vm443, %v905
  %970 = vst.msk [vmem:[%s3 + $0xe0] sm:$0xff] %vm443, %v906
  %971 = vst.msk [vmem:[%s3 + $0xe8] sm:$0xff] %vm443, %v907
  %972 = vst.msk [vmem:[%s3 + $0xf0] sm:$0xff] %vm443, %v908
  %973 = vst.msk [vmem:[%s3 + $0xf8] sm:$0xff] %vm443, %v909
  %974 = vst.msk [vmem:[%s3 + $0x100] sm:$0xff] %vm443, %v910
  %975 = vst.msk [vmem:[%s3 + $0x108] sm:$0xff] %vm443, %v911
  %976 = vst.msk [vmem:[%s3 + $0x110] sm:$0xff] %vm443, %v912
  %977 = vst.msk [vmem:[%s3 + $0x118] sm:$0xff] %vm443, %v913
  %978 = vst.msk [vmem:[%s3 + $0x120] sm:$0xff] %vm443, %v914
  %979 = vst.msk [vmem:[%s3 + $0x128] sm:$0xff] %vm443, %v915
  %980 = vst.msk [vmem:[%s3 + $0x130] sm:$0xff] %vm443, %v916
  %981 = vst.msk [vmem:[%s3 + $0x138] sm:$0xff] %vm443, %v917
  %982 = vst.msk [vmem:[%s3 + $0x140] sm:$0xff] %vm443, %v918
  %983 = vst.msk [vmem:[%s3 + $0x148] sm:$0xff] %vm443, %v919
  %984 = vst.msk [vmem:[%s3 + $0x150] sm:$0xff] %vm443, %v920
  %985 = vst.msk [vmem:[%s3 + $0x158] sm:$0xff] %vm443, %v921
  %986 = vst.msk [vmem:[%s3 + $0x160] sm:$0xff] %vm443, %v922
  %987 = vst.msk [vmem:[%s3 + $0x168] sm:$0xff] %vm443, %v923
  %988 = vst.msk [vmem:[%s3 + $0x170] sm:$0xff] %vm443, %v924
  %989 = vst.msk [vmem:[%s3 + $0x178] sm:$0xff] %vm443, %v925
  %990 = vst.msk [vmem:[%s3 + $0x180] sm:$0xff] %vm443, %v926
  %991 = vst.msk [vmem:[%s3 + $0x188] sm:$0xff] %vm443, %v927
  %992 = vst.msk [vmem:[%s3 + $0x190] sm:$0xff] %vm443, %v928
  %993 = vst.msk [vmem:[%s3 + $0x198] sm:$0xff] %vm443, %v929
  %994 = vst.msk [vmem:[%s3 + $0x1a0] sm:$0xff] %vm443, %v930
  %995 = vst.msk [vmem:[%s3 + $0x1a8] sm:$0xff] %vm443, %v931
  %996 = vst.msk [vmem:[%s3 + $0x1b0] sm:$0xff] %vm443, %v932
  %997 = vst.msk [vmem:[%s3 + $0x1b8] sm:$0xff] %vm443, %v933
  %998 = vst.msk [vmem:[%s3 + $0x1c0] sm:$0xff] %vm443, %v934
  %999 = vst.msk [vmem:[%s3 + $0x1c8] sm:$0xff] %vm443, %v935
  %1000 = vst.msk [vmem:[%s3 + $0x1d0] sm:$0xff] %vm443, %v936
  %1001 = vst.msk [vmem:[%s3 + $0x1d8] sm:$0xff] %vm443, %v937
  %1002 = vst.msk [vmem:[%s3 + $0x1e0] sm:$0xff] %vm443, %v938
  %1003 = vst.msk [vmem:[%s3 + $0x1e8] sm:$0xff] %vm443, %v939
  %1004 = vst.msk [vmem:[%s3 + $0x1f0] sm:$0xff] %vm443, %v940
  %1005 = vst.msk [vmem:[%s3 + $0x1f8] sm:$0xff] %vm443, %v941
  // Predicated region
  $region14: #{forward.20} parent=0 // pred_check
    _
  $region15: #{forward.20} parent=0 // pred_check_branch
    %1007 = sbr.rel (0) target = $region17
  $region16: #{forward.20} parent=0 // pred_region
    _
  $region17: #{forward.20} parent=0 // pred_fallthru
    _
  // Predicated region
  $region18: #{forward.20} parent=0 // pred_check
    _
  $region19: #{forward.20} parent=0 // pred_check_branch
    %1009 = sbr.rel (0) target = $region21
  $region20: #{forward.20} parent=0 // pred_region
    _
  $region21: #{forward.20} parent=0 // pred_fallthru
    _

// kernel: forward.21
$region0: #{forward.21}
  #allocation0 [shape = 'u32[]', space=smem, size = 0x4, offset = 0x4, fixed_abs, tag = 'smem constant byte address 0x4 - core index']
  #allocation1 [shape = 'u32[72,128]{1,0:T(1,128)}', space=vmem, size = 0x9000, scoped, tag = 'internal scratch']
  %s0 = inlined_call_operand.vmem [shape: bf16[512,144], index: 0, kind: input, shape index: {}]
  %s1 = inlined_call_operand.vmem [shape: bf16[144,16], index: 1, kind: input, shape index: {}]
  %s2 = inlined_call_operand.vmem [shape: f32[1,16], index: 2, kind: input, shape index: {}]
  %s3 = inlined_call_operand.vmem [shape: f32[512,16], index: 3, kind: input, shape index: {}]
  %s4 = inlined_call_operand.vmem [shape: f32[512,16], index: 4, kind: output, shape index: {}]
  %s5 = sld [smem:[#allocation0]]
  $region26: #{forward.21} parent=0
    _
  %s7 = ssub.s32 1, %s5
  %s8 = scalar_select 0, %s7, %s5
  // Predicated region
  $region2: #{forward.21} parent=0 // pred_check
    _
  $region3: #{forward.21} parent=0 // pred_check_branch
    %10 = sbr.rel (0) target = $region5
  $region4: #{forward.21} parent=0 // pred_region
    _
  $region5: #{forward.21} parent=0 // pred_fallthru
    _
  // Predicated region
  $region6: #{forward.21} parent=0 // pred_check
    _
  $region7: #{forward.21} parent=0 // pred_check_branch
    %12 = sbr.rel (0) target = $region9
  $region8: #{forward.21} parent=0 // pred_region
    _
  $region9: #{forward.21} parent=0 // pred_fallthru
    _
  // Predicated region
  $region10: #{forward.21} parent=0 // pred_check
    _
  $region11: #{forward.21} parent=0 // pred_check_branch
    %14 = sbr.rel (0) target = $region13
  $region12: #{forward.21} parent=0 // pred_region
    _
  $region13: #{forward.21} parent=0 // pred_fallthru
    _
  // Predicated region
  $region14: #{forward.21} parent=0 // pred_check
    _
  $region15: #{forward.21} parent=0 // pred_check_branch
    %16 = sbr.rel (0) target = $region17
  $region16: #{forward.21} parent=0 // pred_region
    _
  $region17: #{forward.21} parent=0 // pred_fallthru
    _
  %v18 = vld [vmem:[%s0] sm:$0xff]
  %v19 = vld [vmem:[%s0 + $0x8] sm:$0xff]
  %v20 = vld [vmem:[%s0 + $0x10] sm:$0xff]
  %v21 = vld [vmem:[%s0 + $0x18] sm:$0xff]
  %v22 = vld [vmem:[%s0 + $0x20] sm:$0xff]
  %v23 = vld [vmem:[%s0 + $0x28] sm:$0xff]
  %v24 = vld [vmem:[%s0 + $0x30] sm:$0xff]
  %v25 = vld [vmem:[%s0 + $0x38] sm:$0xff]
  %v26 = vld [vmem:[%s0 + $0x40] sm:$0xff]
  %v27 = vld [vmem:[%s0 + $0x48] sm:$0xff]
  %v28 = vld [vmem:[%s0 + $0x50] sm:$0xff]
  %v29 = vld [vmem:[%s0 + $0x58] sm:$0xff]
  %v30 = vld [vmem:[%s0 + $0x60] sm:$0xff]
  %v31 = vld [vmem:[%s0 + $0x68] sm:$0xff]
  %v32 = vld [vmem:[%s0 + $0x70] sm:$0xff]
  %v33 = vld [vmem:[%s0 + $0x78] sm:$0xff]
  %v34 = vld [vmem:[%s0 + $0x80] sm:$0xff]
  %v35 = vld [vmem:[%s0 + $0x88] sm:$0xff]
  %v36 = vld [vmem:[%s0 + $0x90] sm:$0xff]
  %v37 = vld [vmem:[%s0 + $0x98] sm:$0xff]
  %v38 = vld [vmem:[%s0 + $0xa0] sm:$0xff]
  %v39 = vld [vmem:[%s0 + $0xa8] sm:$0xff]
  %v40 = vld [vmem:[%s0 + $0xb0] sm:$0xff]
  %v41 = vld [vmem:[%s0 + $0xb8] sm:$0xff]
  %v42 = vld [vmem:[%s0 + $0xc0] sm:$0xff]
  %v43 = vld [vmem:[%s0 + $0xc8] sm:$0xff]
  %v44 = vld [vmem:[%s0 + $0xd0] sm:$0xff]
  %v45 = vld [vmem:[%s0 + $0xd8] sm:$0xff]
  %v46 = vld [vmem:[%s0 + $0xe0] sm:$0xff]
  %v47 = vld [vmem:[%s0 + $0xe8] sm:$0xff]
  %v48 = vld [vmem:[%s0 + $0xf0] sm:$0xff]
  %v49 = vld [vmem:[%s0 + $0xf8] sm:$0xff]
  %v50 = vld [vmem:[%s0 + $0x100] sm:$0xff]
  %v51 = vld [vmem:[%s0 + $0x108] sm:$0xff]
  %v52 = vld [vmem:[%s0 + $0x110] sm:$0xff]
  %v53 = vld [vmem:[%s0 + $0x118] sm:$0xff]
  %v54 = vld [vmem:[%s0 + $0x120] sm:$0xff]
  %v55 = vld [vmem:[%s0 + $0x128] sm:$0xff]
  %v56 = vld [vmem:[%s0 + $0x130] sm:$0xff]
  %v57 = vld [vmem:[%s0 + $0x138] sm:$0xff]
  %v58 = vld [vmem:[%s0 + $0x140] sm:$0xff]
  %v59 = vld [vmem:[%s0 + $0x148] sm:$0xff]
  %v60 = vld [vmem:[%s0 + $0x150] sm:$0xff]
  %v61 = vld [vmem:[%s0 + $0x158] sm:$0xff]
  %v62 = vld [vmem:[%s0 + $0x160] sm:$0xff]
  %v63 = vld [vmem:[%s0 + $0x168] sm:$0xff]
  %v64 = vld [vmem:[%s0 + $0x170] sm:$0xff]
  %v65 = vld [vmem:[%s0 + $0x178] sm:$0xff]
  %v66 = vld [vmem:[%s0 + $0x180] sm:$0xff]
  %v67 = vld [vmem:[%s0 + $0x188] sm:$0xff]
  %v68 = vld [vmem:[%s0 + $0x190] sm:$0xff]
  %v69 = vld [vmem:[%s0 + $0x198] sm:$0xff]
  %v70 = vld [vmem:[%s0 + $0x1a0] sm:$0xff]
  %v71 = vld [vmem:[%s0 + $0x1a8] sm:$0xff]
  %v72 = vld [vmem:[%s0 + $0x1b0] sm:$0xff]
  %v73 = vld [vmem:[%s0 + $0x1b8] sm:$0xff]
  %v74 = vld [vmem:[%s0 + $0x1c0] sm:$0xff]
  %v75 = vld [vmem:[%s0 + $0x1c8] sm:$0xff]
  %v76 = vld [vmem:[%s0 + $0x1d0] sm:$0xff]
  %v77 = vld [vmem:[%s0 + $0x1d8] sm:$0xff]
  %v78 = vld [vmem:[%s0 + $0x1e0] sm:$0xff]
  %v79 = vld [vmem:[%s0 + $0x1e8] sm:$0xff]
  %v80 = vld [vmem:[%s0 + $0x1f0] sm:$0xff]
  %v81 = vld [vmem:[%s0 + $0x1f8] sm:$0xff]
  %v82 = vld [vmem:[%s1] sm:$0xf]
  %v83 = vld [vmem:[%s1 + $0x4] sm:$0xf]
  %v84 = vld [vmem:[%s1 + $0x8] sm:$0xf]
  %v85 = vld [vmem:[%s1 + $0xc] sm:$0xf]
  %v86 = vld [vmem:[%s1 + $0x10] sm:$0xf]
  %v87 = vld [vmem:[%s1 + $0x14] sm:$0xf]
  %v88 = vld [vmem:[%s1 + $0x18] sm:$0xf]
  %v89 = vld [vmem:[%s1 + $0x1c] sm:$0xf]
  %v90 = vld [vmem:[%s1 + $0x20] sm:$0xf]
  %v91 = vld [vmem:[%s1 + $0x24] sm:$0xf]
  %v92 = vld [vmem:[%s1 + $0x28] sm:$0xf]
  %v93 = vld [vmem:[%s1 + $0x2c] sm:$0xf]
  %v94 = vld [vmem:[%s1 + $0x30] sm:$0xf]
  %v95 = vld [vmem:[%s1 + $0x34] sm:$0xf]
  %v96 = vld [vmem:[%s1 + $0x38] sm:$0xf]
  %v97 = vld [vmem:[%s1 + $0x3c] sm:$0xf]
  %v98 = vld [vmem:[%s1 + $0x40] sm:$0xf]
  %v99 = vld [vmem:[%s1 + $0x44] sm:$0xf]
  %v100 = vld [vmem:[%s2] sm:$0x1]
  %v102 = vperm.slane %v100, 0
  %v168 = vunpack.c.l.b16 %v18
  %v169 = vunpack.c.h.b16 %v18
  %v170 = vunpack.c.l.b16 %v19
  %v171 = vunpack.c.h.b16 %v19
  %v172 = vunpack.c.l.b16 %v20
  %v173 = vunpack.c.h.b16 %v20
  %v174 = vunpack.c.l.b16 %v21
  %v175 = vunpack.c.h.b16 %v21
  %v176 = vunpack.c.l.b16 %v22
  %v177 = vunpack.c.h.b16 %v22
  %v178 = vunpack.c.l.b16 %v23
  %v179 = vunpack.c.h.b16 %v23
  %v180 = vunpack.c.l.b16 %v24
  %v181 = vunpack.c.h.b16 %v24
  %v182 = vunpack.c.l.b16 %v25
  %v183 = vunpack.c.h.b16 %v25
  %v184 = vunpack.c.l.b16 %v26
  %v185 = vunpack.c.h.b16 %v26
  %v186 = vunpack.c.l.b16 %v27
  %v187 = vunpack.c.h.b16 %v27
  %v188 = vunpack.c.l.b16 %v28
  %v189 = vunpack.c.h.b16 %v28
  %v190 = vunpack.c.l.b16 %v29
  %v191 = vunpack.c.h.b16 %v29
  %v192 = vunpack.c.l.b16 %v30
  %v193 = vunpack.c.h.b16 %v30
  %v194 = vunpack.c.l.b16 %v31
  %v195 = vunpack.c.h.b16 %v31
  %v196 = vunpack.c.l.b16 %v32
  %v197 = vunpack.c.h.b16 %v32
  %v198 = vunpack.c.l.b16 %v33
  %v199 = vunpack.c.h.b16 %v33
  %v200 = vunpack.c.l.b16 %v34
  %v201 = vunpack.c.h.b16 %v34
  %v202 = vunpack.c.l.b16 %v35
  %v203 = vunpack.c.h.b16 %v35
  %v204 = vunpack.c.l.b16 %v36
  %v205 = vunpack.c.h.b16 %v36
  %v206 = vunpack.c.l.b16 %v37
  %v207 = vunpack.c.h.b16 %v37
  %v208 = vunpack.c.l.b16 %v38
  %v209 = vunpack.c.h.b16 %v38
  %v210 = vunpack.c.l.b16 %v39
  %v211 = vunpack.c.h.b16 %v39
  %v212 = vunpack.c.l.b16 %v40
  %v213 = vunpack.c.h.b16 %v40
  %v214 = vunpack.c.l.b16 %v41
  %v215 = vunpack.c.h.b16 %v41
  %v216 = vunpack.c.l.b16 %v42
  %v217 = vunpack.c.h.b16 %v42
  %v218 = vunpack.c.l.b16 %v43
  %v219 = vunpack.c.h.b16 %v43
  %v220 = vunpack.c.l.b16 %v44
  %v221 = vunpack.c.h.b16 %v44
  %v222 = vunpack.c.l.b16 %v45
  %v223 = vunpack.c.h.b16 %v45
  %v224 = vunpack.c.l.b16 %v46
  %v225 = vunpack.c.h.b16 %v46
  %v226 = vunpack.c.l.b16 %v47
  %v227 = vunpack.c.h.b16 %v47
  %v228 = vunpack.c.l.b16 %v48
  %v229 = vunpack.c.h.b16 %v48
  %v230 = vunpack.c.l.b16 %v49
  %v231 = vunpack.c.h.b16 %v49
  %v232 = vunpack.c.l.b16 %v50
  %v233 = vunpack.c.h.b16 %v50
  %v234 = vunpack.c.l.b16 %v51
  %v235 = vunpack.c.h.b16 %v51
  %v236 = vunpack.c.l.b16 %v52
  %v237 = vunpack.c.h.b16 %v52
  %v238 = vunpack.c.l.b16 %v53
  %v239 = vunpack.c.h.b16 %v53
  %v240 = vunpack.c.l.b16 %v54
  %v241 = vunpack.c.h.b16 %v54
  %v242 = vunpack.c.l.b16 %v55
  %v243 = vunpack.c.h.b16 %v55
  %v244 = vunpack.c.l.b16 %v56
  %v245 = vunpack.c.h.b16 %v56
  %v246 = vunpack.c.l.b16 %v57
  %v247 = vunpack.c.h.b16 %v57
  %v248 = vunpack.c.l.b16 %v58
  %v249 = vunpack.c.h.b16 %v58
  %v250 = vunpack.c.l.b16 %v59
  %v251 = vunpack.c.h.b16 %v59
  %v252 = vunpack.c.l.b16 %v60
  %v253 = vunpack.c.h.b16 %v60
  %v254 = vunpack.c.l.b16 %v61
  %v255 = vunpack.c.h.b16 %v61
  %v256 = vunpack.c.l.b16 %v62
  %v257 = vunpack.c.h.b16 %v62
  %v258 = vunpack.c.l.b16 %v63
  %v259 = vunpack.c.h.b16 %v63
  %v260 = vunpack.c.l.b16 %v64
  %v261 = vunpack.c.h.b16 %v64
  %v262 = vunpack.c.l.b16 %v65
  %v263 = vunpack.c.h.b16 %v65
  %v264 = vunpack.c.l.b16 %v66
  %v265 = vunpack.c.h.b16 %v66
  %v266 = vunpack.c.l.b16 %v67
  %v267 = vunpack.c.h.b16 %v67
  %v268 = vunpack.c.l.b16 %v68
  %v269 = vunpack.c.h.b16 %v68
  %v270 = vunpack.c.l.b16 %v69
  %v271 = vunpack.c.h.b16 %v69
  %v272 = vunpack.c.l.b16 %v70
  %v273 = vunpack.c.h.b16 %v70
  %v274 = vunpack.c.l.b16 %v71
  %v275 = vunpack.c.h.b16 %v71
  %v276 = vunpack.c.l.b16 %v72
  %v277 = vunpack.c.h.b16 %v72
  %v278 = vunpack.c.l.b16 %v73
  %v279 = vunpack.c.h.b16 %v73
  %v280 = vunpack.c.l.b16 %v74
  %v281 = vunpack.c.h.b16 %v74
  %v282 = vunpack.c.l.b16 %v75
  %v283 = vunpack.c.h.b16 %v75
  %v284 = vunpack.c.l.b16 %v76
  %v285 = vunpack.c.h.b16 %v76
  %v286 = vunpack.c.l.b16 %v77
  %v287 = vunpack.c.h.b16 %v77
  %v288 = vunpack.c.l.b16 %v78
  %v289 = vunpack.c.h.b16 %v78
  %v290 = vunpack.c.l.b16 %v79
  %v291 = vunpack.c.h.b16 %v79
  %v292 = vunpack.c.l.b16 %v80
  %v293 = vunpack.c.h.b16 %v80
  %v294 = vunpack.c.l.b16 %v81
  %v295 = vunpack.c.h.b16 %v81
  %v296 = vpack.c.b16 %v170, %v168
  %v297 = vpack.c.b16 %v171, %v169
  %v298 = vpack.c.b16 %v174, %v172
  %v299 = vpack.c.b16 %v175, %v173
  %v300 = vpack.c.b16 %v178, %v176
  %v301 = vpack.c.b16 %v179, %v177
  %v302 = vpack.c.b16 %v182, %v180
  %v303 = vpack.c.b16 %v183, %v181
  %v304 = vpack.c.b16 %v186, %v184
  %v305 = vpack.c.b16 %v187, %v185
  %v306 = vpack.c.b16 %v190, %v188
  %v307 = vpack.c.b16 %v191, %v189
  %v308 = vpack.c.b16 %v194, %v192
  %v309 = vpack.c.b16 %v195, %v193
  %v310 = vpack.c.b16 %v198, %v196
  %v311 = vpack.c.b16 %v199, %v197
  %v312 = vpack.c.b16 %v202, %v200
  %v313 = vpack.c.b16 %v203, %v201
  %v314 = vpack.c.b16 %v206, %v204
  %v315 = vpack.c.b16 %v207, %v205
  %v316 = vpack.c.b16 %v210, %v208
  %v317 = vpack.c.b16 %v211, %v209
  %v318 = vpack.c.b16 %v214, %v212
  %v319 = vpack.c.b16 %v215, %v213
  %v320 = vpack.c.b16 %v218, %v216
  %v321 = vpack.c.b16 %v219, %v217
  %v322 = vpack.c.b16 %v222, %v220
  %v323 = vpack.c.b16 %v223, %v221
  %v324 = vpack.c.b16 %v226, %v224
  %v325 = vpack.c.b16 %v227, %v225
  %v326 = vpack.c.b16 %v230, %v228
  %v327 = vpack.c.b16 %v231, %v229
  %v328 = vpack.c.b16 %v234, %v232
  %v329 = vpack.c.b16 %v235, %v233
  %v330 = vpack.c.b16 %v238, %v236
  %v331 = vpack.c.b16 %v239, %v237
  %v332 = vpack.c.b16 %v242, %v240
  %v333 = vpack.c.b16 %v243, %v241
  %v334 = vpack.c.b16 %v246, %v244
  %v335 = vpack.c.b16 %v247, %v245
  %v336 = vpack.c.b16 %v250, %v248
  %v337 = vpack.c.b16 %v251, %v249
  %v338 = vpack.c.b16 %v254, %v252
  %v339 = vpack.c.b16 %v255, %v253
  %v340 = vpack.c.b16 %v258, %v256
  %v341 = vpack.c.b16 %v259, %v257
  %v342 = vpack.c.b16 %v262, %v260
  %v343 = vpack.c.b16 %v263, %v261
  %v344 = vpack.c.b16 %v266, %v264
  %v345 = vpack.c.b16 %v267, %v265
  %v346 = vpack.c.b16 %v270, %v268
  %v347 = vpack.c.b16 %v271, %v269
  %v348 = vpack.c.b16 %v274, %v272
  %v349 = vpack.c.b16 %v275, %v273
  %v350 = vpack.c.b16 %v278, %v276
  %v351 = vpack.c.b16 %v279, %v277
  %v352 = vpack.c.b16 %v282, %v280
  %v353 = vpack.c.b16 %v283, %v281
  %v354 = vpack.c.b16 %v286, %v284
  %v355 = vpack.c.b16 %v287, %v285
  %v356 = vpack.c.b16 %v290, %v288
  %v357 = vpack.c.b16 %v291, %v289
  %v358 = vpack.c.b16 %v294, %v292
  %v359 = vpack.c.b16 %v295, %v293
  %v410 = vunpack.c.l.b16 %v82
  %v411 = vunpack.c.l.b16 %v83
  %v412 = vunpack.c.l.b16 %v84
  %v413 = vunpack.c.l.b16 %v85
  %v414 = vunpack.c.l.b16 %v86
  %v415 = vunpack.c.l.b16 %v87
  %v416 = vunpack.c.l.b16 %v88
  %v417 = vunpack.c.l.b16 %v89
  %v418 = vunpack.c.l.b16 %v90
  %v419 = vunpack.c.l.b16 %v91
  %v420 = vunpack.c.l.b16 %v92
  %v421 = vunpack.c.l.b16 %v93
  %v422 = vunpack.c.l.b16 %v94
  %v423 = vunpack.c.l.b16 %v95
  %v424 = vunpack.c.l.b16 %v96
  %v425 = vunpack.c.l.b16 %v97
  %v426 = vunpack.c.l.b16 %v98
  %v427 = vunpack.c.l.b16 %v99
  %v428 = vpack.c.b16 %v411, %v410
  %v429 = vpack.c.b16 %v413, %v412
  %v430 = vpack.c.b16 %v415, %v414
  %v431 = vpack.c.b16 %v417, %v416
  %v432 = vpack.c.b16 %v419, %v418
  %v433 = vpack.c.b16 %v421, %v420
  %v434 = vpack.c.b16 %v423, %v422
  %v435 = vpack.c.b16 %v425, %v424
  %v436 = vpack.c.b16 %v427, %v426
  %vm446 = vcmask 130048
  %v448 = vsel %vm446, %v297, 0
  %v451 = vsel %vm446, %v299, 0
  %v454 = vsel %vm446, %v301, 0
  %v457 = vsel %vm446, %v303, 0
  %v460 = vsel %vm446, %v305, 0
  %v463 = vsel %vm446, %v307, 0
  %v466 = vsel %vm446, %v309, 0
  %v469 = vsel %vm446, %v311, 0
  %v472 = vsel %vm446, %v313, 0
  %v475 = vsel %vm446, %v315, 0
  %v478 = vsel %vm446, %v317, 0
  %v481 = vsel %vm446, %v319, 0
  %v484 = vsel %vm446, %v321, 0
  %v487 = vsel %vm446, %v323, 0
  %v490 = vsel %vm446, %v325, 0
  %v493 = vsel %vm446, %v327, 0
  %v496 = vsel %vm446, %v329, 0
  %v499 = vsel %vm446, %v331, 0
  %v502 = vsel %vm446, %v333, 0
  %v505 = vsel %vm446, %v335, 0
  %v508 = vsel %vm446, %v337, 0
  %v511 = vsel %vm446, %v339, 0
  %v514 = vsel %vm446, %v341, 0
  %v517 = vsel %vm446, %v343, 0
  %v520 = vsel %vm446, %v345, 0
  %v523 = vsel %vm446, %v347, 0
  %v526 = vsel %vm446, %v349, 0
  %v529 = vsel %vm446, %v351, 0
  %v532 = vsel %vm446, %v353, 0
  %v535 = vsel %vm446, %v355, 0
  %v538 = vsel %vm446, %v357, 0
  %v541 = vsel %vm446, %v359, 0
  %543 = vmatpush.bf16.msra.mxu0 %v435
  %544 = vmatpush.bf16.msra.mxu0 %v434
  %545 = vmatpush.bf16.msra.mxu0 %v433
  %546 = vmatpush.bf16.msra.mxu0 %v432
  %547 = vmatpush.bf16.msra.mxu0 %v431
  %548 = vmatpush.bf16.msra.mxu0 %v430
  %549 = vmatpush.bf16.msra.mxu0 %v429
  %550 = vmatpush.bf16.msra.mxu0 %v428
  %551 = vmatmul.bf16.gmra.mxu0 %v296
  %v552 = vpop.f32.mrf.mxu0
  %v553 = vadd.f32 %v102, %v552
  %v554 = vpop.f32.mrf.mxu0
  %v555 = vadd.f32 %v102, %v554
  %556 = vmatmul.bf16.gmra.mxu0 %v298
  %v557 = vpop.f32.mrf.mxu0
  %v558 = vadd.f32 %v102, %v557
  %v559 = vpop.f32.mrf.mxu0
  %v560 = vadd.f32 %v102, %v559
  %561 = vmatmul.bf16.gmra.mxu0 %v300
  %v562 = vpop.f32.mrf.mxu0
  %v563 = vadd.f32 %v102, %v562
  %v564 = vpop.f32.mrf.mxu0
  %v565 = vadd.f32 %v102, %v564
  %566 = vmatmul.bf16.gmra.mxu0 %v302
  %v567 = vpop.f32.mrf.mxu0
  %v568 = vadd.f32 %v102, %v567
  %v569 = vpop.f32.mrf.mxu0
  %v570 = vadd.f32 %v102, %v569
  %571 = vmatmul.bf16.gmra.mxu0 %v304
  %v572 = vpop.f32.mrf.mxu0
  %v573 = vadd.f32 %v102, %v572
  %v574 = vpop.f32.mrf.mxu0
  %v575 = vadd.f32 %v102, %v574
  %576 = vmatmul.bf16.gmra.mxu0 %v306
  %v577 = vpop.f32.mrf.mxu0
  %v578 = vadd.f32 %v102, %v577
  %v579 = vpop.f32.mrf.mxu0
  %v580 = vadd.f32 %v102, %v579
  %581 = vmatmul.bf16.gmra.mxu0 %v308
  %v582 = vpop.f32.mrf.mxu0
  %v583 = vadd.f32 %v102, %v582
  %v584 = vpop.f32.mrf.mxu0
  %v585 = vadd.f32 %v102, %v584
  %586 = vmatmul.bf16.gmra.mxu0 %v310
  %v587 = vpop.f32.mrf.mxu0
  %v588 = vadd.f32 %v102, %v587
  %v589 = vpop.f32.mrf.mxu0
  %v590 = vadd.f32 %v102, %v589
  %591 = vmatmul.bf16.gmra.mxu0 %v312
  %v592 = vpop.f32.mrf.mxu0
  %v593 = vadd.f32 %v102, %v592
  %v594 = vpop.f32.mrf.mxu0
  %v595 = vadd.f32 %v102, %v594
  %596 = vmatmul.bf16.gmra.mxu0 %v314
  %v597 = vpop.f32.mrf.mxu0
  %v598 = vadd.f32 %v102, %v597
  %v599 = vpop.f32.mrf.mxu0
  %v600 = vadd.f32 %v102, %v599
  %601 = vmatmul.bf16.gmra.mxu0 %v316
  %v602 = vpop.f32.mrf.mxu0
  %v603 = vadd.f32 %v102, %v602
  %v604 = vpop.f32.mrf.mxu0
  %v605 = vadd.f32 %v102, %v604
  %606 = vmatmul.bf16.gmra.mxu0 %v318
  %v607 = vpop.f32.mrf.mxu0
  %v608 = vadd.f32 %v102, %v607
  %v609 = vpop.f32.mrf.mxu0
  %v610 = vadd.f32 %v102, %v609
  %611 = vmatmul.bf16.gmra.mxu0 %v320
  %v612 = vpop.f32.mrf.mxu0
  %v613 = vadd.f32 %v102, %v612
  %v614 = vpop.f32.mrf.mxu0
  %v615 = vadd.f32 %v102, %v614
  %616 = vmatmul.bf16.gmra.mxu0 %v322
  %v617 = vpop.f32.mrf.mxu0
  %v618 = vadd.f32 %v102, %v617
  %v619 = vpop.f32.mrf.mxu0
  %v620 = vadd.f32 %v102, %v619
  %621 = vmatmul.bf16.gmra.mxu0 %v324
  %v622 = vpop.f32.mrf.mxu0
  %v623 = vadd.f32 %v102, %v622
  %v624 = vpop.f32.mrf.mxu0
  %v625 = vadd.f32 %v102, %v624
  %626 = vmatmul.bf16.gmra.mxu0 %v326
  %v627 = vpop.f32.mrf.mxu0
  %v628 = vadd.f32 %v102, %v627
  %v629 = vpop.f32.mrf.mxu0
  %v630 = vadd.f32 %v102, %v629
  %631 = vmatmul.bf16.gmra.mxu0 %v328
  %v632 = vpop.f32.mrf.mxu0
  %v633 = vadd.f32 %v102, %v632
  %v634 = vpop.f32.mrf.mxu0
  %v635 = vadd.f32 %v102, %v634
  %636 = vmatmul.bf16.gmra.mxu0 %v330
  %v637 = vpop.f32.mrf.mxu0
  %v638 = vadd.f32 %v102, %v637
  %v639 = vpop.f32.mrf.mxu0
  %v640 = vadd.f32 %v102, %v639
  %641 = vmatmul.bf16.gmra.mxu0 %v332
  %v642 = vpop.f32.mrf.mxu0
  %v643 = vadd.f32 %v102, %v642
  %v644 = vpop.f32.mrf.mxu0
  %v645 = vadd.f32 %v102, %v644
  %646 = vmatmul.bf16.gmra.mxu0 %v334
  %v647 = vpop.f32.mrf.mxu0
  %v648 = vadd.f32 %v102, %v647
  %v649 = vpop.f32.mrf.mxu0
  %v650 = vadd.f32 %v102, %v649
  %651 = vmatmul.bf16.gmra.mxu0 %v336
  %v652 = vpop.f32.mrf.mxu0
  %v653 = vadd.f32 %v102, %v652
  %v654 = vpop.f32.mrf.mxu0
  %v655 = vadd.f32 %v102, %v654
  %656 = vmatmul.bf16.gmra.mxu0 %v338
  %v657 = vpop.f32.mrf.mxu0
  %v658 = vadd.f32 %v102, %v657
  %v659 = vpop.f32.mrf.mxu0
  %v660 = vadd.f32 %v102, %v659
  %661 = vmatmul.bf16.gmra.mxu0 %v340
  %v662 = vpop.f32.mrf.mxu0
  %v663 = vadd.f32 %v102, %v662
  %v664 = vpop.f32.mrf.mxu0
  %v665 = vadd.f32 %v102, %v664
  %666 = vmatmul.bf16.gmra.mxu0 %v342
  %v667 = vpop.f32.mrf.mxu0
  %v668 = vadd.f32 %v102, %v667
  %v669 = vpop.f32.mrf.mxu0
  %v670 = vadd.f32 %v102, %v669
  %671 = vmatmul.bf16.gmra.mxu0 %v344
  %v672 = vpop.f32.mrf.mxu0
  %v673 = vadd.f32 %v102, %v672
  %v674 = vpop.f32.mrf.mxu0
  %v675 = vadd.f32 %v102, %v674
  %676 = vmatmul.bf16.gmra.mxu0 %v346
  %v677 = vpop.f32.mrf.mxu0
  %v678 = vadd.f32 %v102, %v677
  %v679 = vpop.f32.mrf.mxu0
  %v680 = vadd.f32 %v102, %v679
  %681 = vmatmul.bf16.gmra.mxu0 %v348
  %v682 = vpop.f32.mrf.mxu0
  %v683 = vadd.f32 %v102, %v682
  %v684 = vpop.f32.mrf.mxu0
  %v685 = vadd.f32 %v102, %v684
  %686 = vmatmul.bf16.gmra.mxu0 %v350
  %v687 = vpop.f32.mrf.mxu0
  %v688 = vadd.f32 %v102, %v687
  %v689 = vpop.f32.mrf.mxu0
  %v690 = vadd.f32 %v102, %v689
  %691 = vmatmul.bf16.gmra.mxu0 %v352
  %v692 = vpop.f32.mrf.mxu0
  %v693 = vadd.f32 %v102, %v692
  %v694 = vpop.f32.mrf.mxu0
  %v695 = vadd.f32 %v102, %v694
  %696 = vmatmul.bf16.gmra.mxu0 %v354
  %v697 = vpop.f32.mrf.mxu0
  %v698 = vadd.f32 %v102, %v697
  %v699 = vpop.f32.mrf.mxu0
  %v700 = vadd.f32 %v102, %v699
  %701 = vmatmul.bf16.gmra.mxu0 %v356
  %v702 = vpop.f32.mrf.mxu0
  %v703 = vadd.f32 %v102, %v702
  %v704 = vpop.f32.mrf.mxu0
  %v705 = vadd.f32 %v102, %v704
  %706 = vmatmul.bf16.gmra.mxu0 %v358
  %v707 = vpop.f32.mrf.mxu0
  %v708 = vadd.f32 %v102, %v707
  %v709 = vpop.f32.mrf.mxu0
  %v710 = vadd.f32 %v102, %v709
  %711 = vdwg.mxu0
  %712 = vmatpush.bf16.msra.mxu0 0
  %713 = vmatpush.bf16.msra.mxu0 0
  %714 = vmatpush.bf16.msra.mxu0 0
  %715 = vmatpush.bf16.msra.mxu0 0
  %716 = vmatpush.bf16.msra.mxu0 0
  %717 = vmatpush.bf16.msra.mxu0 0
  %718 = vmatpush.bf16.msra.mxu0 0
  %719 = vmatpush.bf16.msra.mxu0 %v436
  %720 = vmatmul.bf16.gmra.mxu0 %v448
  %v721 = vpop.f32.mrf.mxu0
  %v722 = vadd.f32 %v553, %v721
  %v723 = vpop.f32.mrf.mxu0
  %v724 = vadd.f32 %v555, %v723
  %725 = vmatmul.bf16.gmra.mxu0 %v451
  %v726 = vpop.f32.mrf.mxu0
  %v727 = vadd.f32 %v558, %v726
  %v728 = vpop.f32.mrf.mxu0
  %v729 = vadd.f32 %v560, %v728
  %730 = vmatmul.bf16.gmra.mxu0 %v454
  %v731 = vpop.f32.mrf.mxu0
  %v732 = vadd.f32 %v563, %v731
  %v733 = vpop.f32.mrf.mxu0
  %v734 = vadd.f32 %v565, %v733
  %735 = vmatmul.bf16.gmra.mxu0 %v457
  %v736 = vpop.f32.mrf.mxu0
  %v737 = vadd.f32 %v568, %v736
  %v738 = vpop.f32.mrf.mxu0
  %v739 = vadd.f32 %v570, %v738
  %740 = vmatmul.bf16.gmra.mxu0 %v460
  %v741 = vpop.f32.mrf.mxu0
  %v742 = vadd.f32 %v573, %v741
  %v743 = vpop.f32.mrf.mxu0
  %v744 = vadd.f32 %v575, %v743
  %745 = vmatmul.bf16.gmra.mxu0 %v463
  %v746 = vpop.f32.mrf.mxu0
  %v747 = vadd.f32 %v578, %v746
  %v748 = vpop.f32.mrf.mxu0
  %v749 = vadd.f32 %v580, %v748
  %750 = vmatmul.bf16.gmra.mxu0 %v466
  %v751 = vpop.f32.mrf.mxu0
  %v752 = vadd.f32 %v583, %v751
  %v753 = vpop.f32.mrf.mxu0
  %v754 = vadd.f32 %v585, %v753
  %755 = vmatmul.bf16.gmra.mxu0 %v469
  %v756 = vpop.f32.mrf.mxu0
  %v757 = vadd.f32 %v588, %v756
  %v758 = vpop.f32.mrf.mxu0
  %v759 = vadd.f32 %v590, %v758
  %760 = vmatmul.bf16.gmra.mxu0 %v472
  %v761 = vpop.f32.mrf.mxu0
  %v762 = vadd.f32 %v593, %v761
  %v763 = vpop.f32.mrf.mxu0
  %v764 = vadd.f32 %v595, %v763
  %765 = vmatmul.bf16.gmra.mxu0 %v475
  %v766 = vpop.f32.mrf.mxu0
  %v767 = vadd.f32 %v598, %v766
  %v768 = vpop.f32.mrf.mxu0
  %v769 = vadd.f32 %v600, %v768
  %770 = vmatmul.bf16.gmra.mxu0 %v478
  %v771 = vpop.f32.mrf.mxu0
  %v772 = vadd.f32 %v603, %v771
  %v773 = vpop.f32.mrf.mxu0
  %v774 = vadd.f32 %v605, %v773
  %775 = vmatmul.bf16.gmra.mxu0 %v481
  %v776 = vpop.f32.mrf.mxu0
  %v777 = vadd.f32 %v608, %v776
  %v778 = vpop.f32.mrf.mxu0
  %v779 = vadd.f32 %v610, %v778
  %780 = vmatmul.bf16.gmra.mxu0 %v484
  %v781 = vpop.f32.mrf.mxu0
  %v782 = vadd.f32 %v613, %v781
  %v783 = vpop.f32.mrf.mxu0
  %v784 = vadd.f32 %v615, %v783
  %785 = vmatmul.bf16.gmra.mxu0 %v487
  %v786 = vpop.f32.mrf.mxu0
  %v787 = vadd.f32 %v618, %v786
  %v788 = vpop.f32.mrf.mxu0
  %v789 = vadd.f32 %v620, %v788
  %790 = vmatmul.bf16.gmra.mxu0 %v490
  %v791 = vpop.f32.mrf.mxu0
  %v792 = vadd.f32 %v623, %v791
  %v793 = vpop.f32.mrf.mxu0
  %v794 = vadd.f32 %v625, %v793
  %795 = vmatmul.bf16.gmra.mxu0 %v493
  %v796 = vpop.f32.mrf.mxu0
  %v797 = vadd.f32 %v628, %v796
  %v798 = vpop.f32.mrf.mxu0
  %v799 = vadd.f32 %v630, %v798
  %800 = vmatmul.bf16.gmra.mxu0 %v496
  %v801 = vpop.f32.mrf.mxu0
  %v802 = vadd.f32 %v633, %v801
  %v803 = vpop.f32.mrf.mxu0
  %v804 = vadd.f32 %v635, %v803
  %805 = vmatmul.bf16.gmra.mxu0 %v499
  %v806 = vpop.f32.mrf.mxu0
  %v807 = vadd.f32 %v638, %v806
  %v808 = vpop.f32.mrf.mxu0
  %v809 = vadd.f32 %v640, %v808
  %810 = vmatmul.bf16.gmra.mxu0 %v502
  %v811 = vpop.f32.mrf.mxu0
  %v812 = vadd.f32 %v643, %v811
  %v813 = vpop.f32.mrf.mxu0
  %v814 = vadd.f32 %v645, %v813
  %815 = vmatmul.bf16.gmra.mxu0 %v505
  %v816 = vpop.f32.mrf.mxu0
  %v817 = vadd.f32 %v648, %v816
  %v818 = vpop.f32.mrf.mxu0
  %v819 = vadd.f32 %v650, %v818
  %820 = vmatmul.bf16.gmra.mxu0 %v508
  %v821 = vpop.f32.mrf.mxu0
  %v822 = vadd.f32 %v653, %v821
  %v823 = vpop.f32.mrf.mxu0
  %v824 = vadd.f32 %v655, %v823
  %825 = vmatmul.bf16.gmra.mxu0 %v511
  %v826 = vpop.f32.mrf.mxu0
  %v827 = vadd.f32 %v658, %v826
  %v828 = vpop.f32.mrf.mxu0
  %v829 = vadd.f32 %v660, %v828
  %830 = vmatmul.bf16.gmra.mxu0 %v514
  %v831 = vpop.f32.mrf.mxu0
  %v832 = vadd.f32 %v663, %v831
  %v833 = vpop.f32.mrf.mxu0
  %v834 = vadd.f32 %v665, %v833
  %835 = vmatmul.bf16.gmra.mxu0 %v517
  %v836 = vpop.f32.mrf.mxu0
  %v837 = vadd.f32 %v668, %v836
  %v838 = vpop.f32.mrf.mxu0
  %v839 = vadd.f32 %v670, %v838
  %840 = vmatmul.bf16.gmra.mxu0 %v520
  %v841 = vpop.f32.mrf.mxu0
  %v842 = vadd.f32 %v673, %v841
  %v843 = vpop.f32.mrf.mxu0
  %v844 = vadd.f32 %v675, %v843
  %845 = vmatmul.bf16.gmra.mxu0 %v523
  %v846 = vpop.f32.mrf.mxu0
  %v847 = vadd.f32 %v678, %v846
  %v848 = vpop.f32.mrf.mxu0
  %v849 = vadd.f32 %v680, %v848
  %850 = vmatmul.bf16.gmra.mxu0 %v526
  %v851 = vpop.f32.mrf.mxu0
  %v852 = vadd.f32 %v683, %v851
  %v853 = vpop.f32.mrf.mxu0
  %v854 = vadd.f32 %v685, %v853
  %855 = vmatmul.bf16.gmra.mxu0 %v529
  %v856 = vpop.f32.mrf.mxu0
  %v857 = vadd.f32 %v688, %v856
  %v858 = vpop.f32.mrf.mxu0
  %v859 = vadd.f32 %v690, %v858
  %860 = vmatmul.bf16.gmra.mxu0 %v532
  %v861 = vpop.f32.mrf.mxu0
  %v862 = vadd.f32 %v693, %v861
  %v863 = vpop.f32.mrf.mxu0
  %v864 = vadd.f32 %v695, %v863
  %865 = vmatmul.bf16.gmra.mxu0 %v535
  %v866 = vpop.f32.mrf.mxu0
  %v867 = vadd.f32 %v698, %v866
  %v868 = vpop.f32.mrf.mxu0
  %v869 = vadd.f32 %v700, %v868
  %870 = vmatmul.bf16.gmra.mxu0 %v538
  %v871 = vpop.f32.mrf.mxu0
  %v872 = vadd.f32 %v703, %v871
  %v873 = vpop.f32.mrf.mxu0
  %v874 = vadd.f32 %v705, %v873
  %875 = vmatmul.bf16.gmra.mxu0 %v541
  %v876 = vpop.f32.mrf.mxu0
  %v877 = vadd.f32 %v708, %v876
  %v878 = vpop.f32.mrf.mxu0
  %v879 = vadd.f32 %v710, %v878
  %880 = vdwg.mxu0
  %v881 = vld [vmem:[%s3] sm:$0xff]
  %v882 = vld [vmem:[%s3 + $0x8] sm:$0xff]
  %v883 = vld [vmem:[%s3 + $0x10] sm:$0xff]
  %v884 = vld [vmem:[%s3 + $0x18] sm:$0xff]
  %v885 = vld [vmem:[%s3 + $0x20] sm:$0xff]
  %v886 = vld [vmem:[%s3 + $0x28] sm:$0xff]
  %v887 = vld [vmem:[%s3 + $0x30] sm:$0xff]
  %v888 = vld [vmem:[%s3 + $0x38] sm:$0xff]
  %v889 = vld [vmem:[%s3 + $0x40] sm:$0xff]
  %v890 = vld [vmem:[%s3 + $0x48] sm:$0xff]
  %v891 = vld [vmem:[%s3 + $0x50] sm:$0xff]
  %v892 = vld [vmem:[%s3 + $0x58] sm:$0xff]
  %v893 = vld [vmem:[%s3 + $0x60] sm:$0xff]
  %v894 = vld [vmem:[%s3 + $0x68] sm:$0xff]
  %v895 = vld [vmem:[%s3 + $0x70] sm:$0xff]
  %v896 = vld [vmem:[%s3 + $0x78] sm:$0xff]
  %v897 = vld [vmem:[%s3 + $0x80] sm:$0xff]
  %v898 = vld [vmem:[%s3 + $0x88] sm:$0xff]
  %v899 = vld [vmem:[%s3 + $0x90] sm:$0xff]
  %v900 = vld [vmem:[%s3 + $0x98] sm:$0xff]
  %v901 = vld [vmem:[%s3 + $0xa0] sm:$0xff]
  %v902 = vld [vmem:[%s3 + $0xa8] sm:$0xff]
  %v903 = vld [vmem:[%s3 + $0xb0] sm:$0xff]
  %v904 = vld [vmem:[%s3 + $0xb8] sm:$0xff]
  %v905 = vld [vmem:[%s3 + $0xc0] sm:$0xff]
  %v906 = vld [vmem:[%s3 + $0xc8] sm:$0xff]
  %v907 = vld [vmem:[%s3 + $0xd0] sm:$0xff]
  %v908 = vld [vmem:[%s3 + $0xd8] sm:$0xff]
  %v909 = vld [vmem:[%s3 + $0xe0] sm:$0xff]
  %v910 = vld [vmem:[%s3 + $0xe8] sm:$0xff]
  %v911 = vld [vmem:[%s3 + $0xf0] sm:$0xff]
  %v912 = vld [vmem:[%s3 + $0xf8] sm:$0xff]
  %v913 = vld [vmem:[%s3 + $0x100] sm:$0xff]
  %v914 = vld [vmem:[%s3 + $0x108] sm:$0xff]
  %v915 = vld [vmem:[%s3 + $0x110] sm:$0xff]
  %v916 = vld [vmem:[%s3 + $0x118] sm:$0xff]
  %v917 = vld [vmem:[%s3 + $0x120] sm:$0xff]
  %v918 = vld [vmem:[%s3 + $0x128] sm:$0xff]
  %v919 = vld [vmem:[%s3 + $0x130] sm:$0xff]
  %v920 = vld [vmem:[%s3 + $0x138] sm:$0xff]
  %v921 = vld [vmem:[%s3 + $0x140] sm:$0xff]
  %v922 = vld [vmem:[%s3 + $0x148] sm:$0xff]
  %v923 = vld [vmem:[%s3 + $0x150] sm:$0xff]
  %v924 = vld [vmem:[%s3 + $0x158] sm:$0xff]
  %v925 = vld [vmem:[%s3 + $0x160] sm:$0xff]
  %v926 = vld [vmem:[%s3 + $0x168] sm:$0xff]
  %v927 = vld [vmem:[%s3 + $0x170] sm:$0xff]
  %v928 = vld [vmem:[%s3 + $0x178] sm:$0xff]
  %v929 = vld [vmem:[%s3 + $0x180] sm:$0xff]
  %v930 = vld [vmem:[%s3 + $0x188] sm:$0xff]
  %v931 = vld [vmem:[%s3 + $0x190] sm:$0xff]
  %v932 = vld [vmem:[%s3 + $0x198] sm:$0xff]
  %v933 = vld [vmem:[%s3 + $0x1a0] sm:$0xff]
  %v934 = vld [vmem:[%s3 + $0x1a8] sm:$0xff]
  %v935 = vld [vmem:[%s3 + $0x1b0] sm:$0xff]
  %v936 = vld [vmem:[%s3 + $0x1b8] sm:$0xff]
  %v937 = vld [vmem:[%s3 + $0x1c0] sm:$0xff]
  %v938 = vld [vmem:[%s3 + $0x1c8] sm:$0xff]
  %v939 = vld [vmem:[%s3 + $0x1d0] sm:$0xff]
  %v940 = vld [vmem:[%s3 + $0x1d8] sm:$0xff]
  %v941 = vld [vmem:[%s3 + $0x1e0] sm:$0xff]
  %v942 = vld [vmem:[%s3 + $0x1e8] sm:$0xff]
  %v943 = vld [vmem:[%s3 + $0x1f0] sm:$0xff]
  %v944 = vld [vmem:[%s3 + $0x1f8] sm:$0xff]
  %v945 = vadd.f32 %v722, %v881
  %v946 = vadd.f32 %v724, %v882
  %v947 = vadd.f32 %v727, %v883
  %v948 = vadd.f32 %v729, %v884
  %v949 = vadd.f32 %v732, %v885
  %v950 = vadd.f32 %v734, %v886
  %v951 = vadd.f32 %v737, %v887
  %v952 = vadd.f32 %v739, %v888
  %v953 = vadd.f32 %v742, %v889
  %v954 = vadd.f32 %v744, %v890
  %v955 = vadd.f32 %v747, %v891
  %v956 = vadd.f32 %v749, %v892
  %v957 = vadd.f32 %v752, %v893
  %v958 = vadd.f32 %v754, %v894
  %v959 = vadd.f32 %v757, %v895
  %v960 = vadd.f32 %v759, %v896
  %v961 = vadd.f32 %v762, %v897
  %v962 = vadd.f32 %v764, %v898
  %v963 = vadd.f32 %v767, %v899
  %v964 = vadd.f32 %v769, %v900
  %v965 = vadd.f32 %v772, %v901
  %v966 = vadd.f32 %v774, %v902
  %v967 = vadd.f32 %v777, %v903
  %v968 = vadd.f32 %v779, %v904
  %v969 = vadd.f32 %v782, %v905
  %v970 = vadd.f32 %v784, %v906
  %v971 = vadd.f32 %v787, %v907
  %v972 = vadd.f32 %v789, %v908
  %v973 = vadd.f32 %v792, %v909
  %v974 = vadd.f32 %v794, %v910
  %v975 = vadd.f32 %v797, %v911
  %v976 = vadd.f32 %v799, %v912
  %v977 = vadd.f32 %v802, %v913
  %v978 = vadd.f32 %v804, %v914
  %v979 = vadd.f32 %v807, %v915
  %v980 = vadd.f32 %v809, %v916
  %v981 = vadd.f32 %v812, %v917
  %v982 = vadd.f32 %v814, %v918
  %v983 = vadd.f32 %v817, %v919
  %v984 = vadd.f32 %v819, %v920
  %v985 = vadd.f32 %v822, %v921
  %v986 = vadd.f32 %v824, %v922
  %v987 = vadd.f32 %v827, %v923
  %v988 = vadd.f32 %v829, %v924
  %v989 = vadd.f32 %v832, %v925
  %v990 = vadd.f32 %v834, %v926
  %v991 = vadd.f32 %v837, %v927
  %v992 = vadd.f32 %v839, %v928
  %v993 = vadd.f32 %v842, %v929
  %v994 = vadd.f32 %v844, %v930
  %v995 = vadd.f32 %v847, %v931
  %v996 = vadd.f32 %v849, %v932
  %v997 = vadd.f32 %v852, %v933
  %v998 = vadd.f32 %v854, %v934
  %v999 = vadd.f32 %v857, %v935
  %v1000 = vadd.f32 %v859, %v936
  %v1001 = vadd.f32 %v862, %v937
  %v1002 = vadd.f32 %v864, %v938
  %v1003 = vadd.f32 %v867, %v939
  %v1004 = vadd.f32 %v869, %v940
  %v1005 = vadd.f32 %v872, %v941
  %v1006 = vadd.f32 %v874, %v942
  %v1007 = vadd.f32 %v877, %v943
  %v1008 = vadd.f32 %v879, %v944
  %v1009 = vmax.f32 %v945, 0.0
  %v1010 = vmax.f32 %v946, 0.0
  %v1011 = vmax.f32 %v947, 0.0
  %v1012 = vmax.f32 %v948, 0.0
  %v1013 = vmax.f32 %v949, 0.0
  %v1014 = vmax.f32 %v950, 0.0
  %v1015 = vmax.f32 %v951, 0.0
  %v1016 = vmax.f32 %v952, 0.0
  %v1017 = vmax.f32 %v953, 0.0
  %v1018 = vmax.f32 %v954, 0.0
  %v1019 = vmax.f32 %v955, 0.0
  %v1020 = vmax.f32 %v956, 0.0
  %v1021 = vmax.f32 %v957, 0.0
  %v1022 = vmax.f32 %v958, 0.0
  %v1023 = vmax.f32 %v959, 0.0
  %v1024 = vmax.f32 %v960, 0.0
  %v1025 = vmax.f32 %v961, 0.0
  %v1026 = vmax.f32 %v962, 0.0
  %v1027 = vmax.f32 %v963, 0.0
  %v1028 = vmax.f32 %v964, 0.0
  %v1029 = vmax.f32 %v965, 0.0
  %v1030 = vmax.f32 %v966, 0.0
  %v1031 = vmax.f32 %v967, 0.0
  %v1032 = vmax.f32 %v968, 0.0
  %v1033 = vmax.f32 %v969, 0.0
  %v1034 = vmax.f32 %v970, 0.0
  %v1035 = vmax.f32 %v971, 0.0
  %v1036 = vmax.f32 %v972, 0.0
  %v1037 = vmax.f32 %v973, 0.0
  %v1038 = vmax.f32 %v974, 0.0
  %v1039 = vmax.f32 %v975, 0.0
  %v1040 = vmax.f32 %v976, 0.0
  %v1041 = vmax.f32 %v977, 0.0
  %v1042 = vmax.f32 %v978, 0.0
  %v1043 = vmax.f32 %v979, 0.0
  %v1044 = vmax.f32 %v980, 0.0
  %v1045 = vmax.f32 %v981, 0.0
  %v1046 = vmax.f32 %v982, 0.0
  %v1047 = vmax.f32 %v983, 0.0
  %v1048 = vmax.f32 %v984, 0.0
  %v1049 = vmax.f32 %v985, 0.0
  %v1050 = vmax.f32 %v986, 0.0
  %v1051 = vmax.f32 %v987, 0.0
  %v1052 = vmax.f32 %v988, 0.0
  %v1053 = vmax.f32 %v989, 0.0
  %v1054 = vmax.f32 %v990, 0.0
  %v1055 = vmax.f32 %v991, 0.0
  %v1056 = vmax.f32 %v992, 0.0
  %v1057 = vmax.f32 %v993, 0.0
  %v1058 = vmax.f32 %v994, 0.0
  %v1059 = vmax.f32 %v995, 0.0
  %v1060 = vmax.f32 %v996, 0.0
  %v1061 = vmax.f32 %v997, 0.0
  %v1062 = vmax.f32 %v998, 0.0
  %v1063 = vmax.f32 %v999, 0.0
  %v1064 = vmax.f32 %v1000, 0.0
  %v1065 = vmax.f32 %v1001, 0.0
  %v1066 = vmax.f32 %v1002, 0.0
  %v1067 = vmax.f32 %v1003, 0.0
  %v1068 = vmax.f32 %v1004, 0.0
  %v1069 = vmax.f32 %v1005, 0.0
  %v1070 = vmax.f32 %v1006, 0.0
  %v1071 = vmax.f32 %v1007, 0.0
  %v1072 = vmax.f32 %v1008, 0.0
  %1073 = vst.msk [vmem:[%s4] sm:$0xff] %vm446, %v1009
  %1074 = vst.msk [vmem:[%s4 + $0x8] sm:$0xff] %vm446, %v1010
  %1075 = vst.msk [vmem:[%s4 + $0x10] sm:$0xff] %vm446, %v1011
  %1076 = vst.msk [vmem:[%s4 + $0x18] sm:$0xff] %vm446, %v1012
  %1077 = vst.msk [vmem:[%s4 + $0x20] sm:$0xff] %vm446, %v1013
  %1078 = vst.msk [vmem:[%s4 + $0x28] sm:$0xff] %vm446, %v1014
  %1079 = vst.msk [vmem:[%s4 + $0x30] sm:$0xff] %vm446, %v1015
  %1080 = vst.msk [vmem:[%s4 + $0x38] sm:$0xff] %vm446, %v1016
  %1081 = vst.msk [vmem:[%s4 + $0x40] sm:$0xff] %vm446, %v1017
  %1082 = vst.msk [vmem:[%s4 + $0x48] sm:$0xff] %vm446, %v1018
  %1083 = vst.msk [vmem:[%s4 + $0x50] sm:$0xff] %vm446, %v1019
  %1084 = vst.msk [vmem:[%s4 + $0x58] sm:$0xff] %vm446, %v1020
  %1085 = vst.msk [vmem:[%s4 + $0x60] sm:$0xff] %vm446, %v1021
  %1086 = vst.msk [vmem:[%s4 + $0x68] sm:$0xff] %vm446, %v1022
  %1087 = vst.msk [vmem:[%s4 + $0x70] sm:$0xff] %vm446, %v1023
  %1088 = vst.msk [vmem:[%s4 + $0x78] sm:$0xff] %vm446, %v1024
  %1089 = vst.msk [vmem:[%s4 + $0x80] sm:$0xff] %vm446, %v1025
  %1090 = vst.msk [vmem:[%s4 + $0x88] sm:$0xff] %vm446, %v1026
  %1091 = vst.msk [vmem:[%s4 + $0x90] sm:$0xff] %vm446, %v1027
  %1092 = vst.msk [vmem:[%s4 + $0x98] sm:$0xff] %vm446, %v1028
  %1093 = vst.msk [vmem:[%s4 + $0xa0] sm:$0xff] %vm446, %v1029
  %1094 = vst.msk [vmem:[%s4 + $0xa8] sm:$0xff] %vm446, %v1030
  %1095 = vst.msk [vmem:[%s4 + $0xb0] sm:$0xff] %vm446, %v1031
  %1096 = vst.msk [vmem:[%s4 + $0xb8] sm:$0xff] %vm446, %v1032
  %1097 = vst.msk [vmem:[%s4 + $0xc0] sm:$0xff] %vm446, %v1033
  %1098 = vst.msk [vmem:[%s4 + $0xc8] sm:$0xff] %vm446, %v1034
  %1099 = vst.msk [vmem:[%s4 + $0xd0] sm:$0xff] %vm446, %v1035
  %1100 = vst.msk [vmem:[%s4 + $0xd8] sm:$0xff] %vm446, %v1036
  %1101 = vst.msk [vmem:[%s4 + $0xe0] sm:$0xff] %vm446, %v1037
  %1102 = vst.msk [vmem:[%s4 + $0xe8] sm:$0xff] %vm446, %v1038
  %1103 = vst.msk [vmem:[%s4 + $0xf0] sm:$0xff] %vm446, %v1039
  %1104 = vst.msk [vmem:[%s4 + $0xf8] sm:$0xff] %vm446, %v1040
  %1105 = vst.msk [vmem:[%s4 + $0x100] sm:$0xff] %vm446, %v1041
  %1106 = vst.msk [vmem:[%s4 + $0x108] sm:$0xff] %vm446, %v1042
  %1107 = vst.msk [vmem:[%s4 + $0x110] sm:$0xff] %vm446, %v1043
  %1108 = vst.msk [vmem:[%s4 + $0x118] sm:$0xff] %vm446, %v1044
  %1109 = vst.msk [vmem:[%s4 + $0x120] sm:$0xff] %vm446, %v1045
  %1110 = vst.msk [vmem:[%s4 + $0x128] sm:$0xff] %vm446, %v1046
  %1111 = vst.msk [vmem:[%s4 + $0x130] sm:$0xff] %vm446, %v1047
  %1112 = vst.msk [vmem:[%s4 + $0x138] sm:$0xff] %vm446, %v1048
  %1113 = vst.msk [vmem:[%s4 + $0x140] sm:$0xff] %vm446, %v1049
  %1114 = vst.msk [vmem:[%s4 + $0x148] sm:$0xff] %vm446, %v1050
  %1115 = vst.msk [vmem:[%s4 + $0x150] sm:$0xff] %vm446, %v1051
  %1116 = vst.msk [vmem:[%s4 + $0x158] sm:$0xff] %vm446, %v1052
  %1117 = vst.msk [vmem:[%s4 + $0x160] sm:$0xff] %vm446, %v1053
  %1118 = vst.msk [vmem:[%s4 + $0x168] sm:$0xff] %vm446, %v1054
  %1119 = vst.msk [vmem:[%s4 + $0x170] sm:$0xff] %vm446, %v1055
  %1120 = vst.msk [vmem:[%s4 + $0x178] sm:$0xff] %vm446, %v1056
  %1121 = vst.msk [vmem:[%s4 + $0x180] sm:$0xff] %vm446, %v1057
  %1122 = vst.msk [vmem:[%s4 + $0x188] sm:$0xff] %vm446, %v1058
  %1123 = vst.msk [vmem:[%s4 + $0x190] sm:$0xff] %vm446, %v1059
  %1124 = vst.msk [vmem:[%s4 + $0x198] sm:$0xff] %vm446, %v1060
  %1125 = vst.msk [vmem:[%s4 + $0x1a0] sm:$0xff] %vm446, %v1061
  %1126 = vst.msk [vmem:[%s4 + $0x1a8] sm:$0xff] %vm446, %v1062
  %1127 = vst.msk [vmem:[%s4 + $0x1b0] sm:$0xff] %vm446, %v1063
  %1128 = vst.msk [vmem:[%s4 + $0x1b8] sm:$0xff] %vm446, %v1064
  %1129 = vst.msk [vmem:[%s4 + $0x1c0] sm:$0xff] %vm446, %v1065
  %1130 = vst.msk [vmem:[%s4 + $0x1c8] sm:$0xff] %vm446, %v1066
  %1131 = vst.msk [vmem:[%s4 + $0x1d0] sm:$0xff] %vm446, %v1067
  %1132 = vst.msk [vmem:[%s4 + $0x1d8] sm:$0xff] %vm446, %v1068
  %1133 = vst.msk [vmem:[%s4 + $0x1e0] sm:$0xff] %vm446, %v1069
  %1134 = vst.msk [vmem:[%s4 + $0x1e8] sm:$0xff] %vm446, %v1070
  %1135 = vst.msk [vmem:[%s4 + $0x1f0] sm:$0xff] %vm446, %v1071
  %1136 = vst.msk [vmem:[%s4 + $0x1f8] sm:$0xff] %vm446, %v1072
  // Predicated region
  $region18: #{forward.21} parent=0 // pred_check
    _
  $region19: #{forward.21} parent=0 // pred_check_branch
    %1138 = sbr.rel (0) target = $region21
  $region20: #{forward.21} parent=0 // pred_region
    _
  $region21: #{forward.21} parent=0 // pred_fallthru
    _
  // Predicated region
  $region22: #{forward.21} parent=0 // pred_check
    _
  $region23: #{forward.21} parent=0 // pred_check_branch
    %1140 = sbr.rel (0) target = $region25
  $region24: #{forward.21} parent=0 // pred_region
    _
  $region25: #{forward.21} parent=0 // pred_fallthru
    _

// kernel: forward.24
$region0: #{forward.24}
  #allocation0 [shape = 'u32[]', space=smem, size = 0x4, offset = 0x4, fixed_abs, tag = 'smem constant byte address 0x4 - core index']
  #allocation1 [shape = 'u32[72,128]{1,0:T(1,128)}', space=vmem, size = 0x9000, scoped, tag = 'internal scratch']
  %s0 = inlined_call_operand.vmem [shape: bf16[128,144], index: 0, kind: input, shape index: {}]
  %s1 = inlined_call_operand.vmem [shape: bf16[144,32], index: 1, kind: input, shape index: {}]
  %s2 = inlined_call_operand.vmem [shape: f32[1,32], index: 2, kind: input, shape index: {}]
  %s3 = inlined_call_operand.vmem [shape: bf16[144,32], index: 3, kind: input, shape index: {}]
  %s4 = inlined_call_operand.vmem [shape: f32[1,32], index: 4, kind: input, shape index: {}]
  %s5 = inlined_call_operand.vmem [shape: f32[128,32], index: 5, kind: output, shape index: {0}]
  %s6 = inlined_call_operand.vmem [shape: f32[128,32], index: 6, kind: output, shape index: {1}]
  %7 = xla_tuple %s5, %s6
  %s8 = sld [smem:[#allocation0]]
  $region38: #{forward.24} parent=0
    _
  %s10 = ssub.s32 1, %s8
  %s11 = scalar_select 0, %s10, %s8
  // Predicated region
  $region2: #{forward.24} parent=0 // pred_check
    _
  $region3: #{forward.24} parent=0 // pred_check_branch
    %13 = sbr.rel (0) target = $region5
  $region4: #{forward.24} parent=0 // pred_region
    _
  $region5: #{forward.24} parent=0 // pred_fallthru
    _
  // Predicated region
  $region6: #{forward.24} parent=0 // pred_check
    _
  $region7: #{forward.24} parent=0 // pred_check_branch
    %15 = sbr.rel (0) target = $region9
  $region8: #{forward.24} parent=0 // pred_region
    _
  $region9: #{forward.24} parent=0 // pred_fallthru
    _
  // Predicated region
  $region10: #{forward.24} parent=0 // pred_check
    _
  $region11: #{forward.24} parent=0 // pred_check_branch
    %17 = sbr.rel (0) target = $region13
  $region12: #{forward.24} parent=0 // pred_region
    _
  $region13: #{forward.24} parent=0 // pred_fallthru
    _
  // Predicated region
  $region14: #{forward.24} parent=0 // pred_check
    _
  $region15: #{forward.24} parent=0 // pred_check_branch
    %19 = sbr.rel (0) target = $region17
  $region16: #{forward.24} parent=0 // pred_region
    _
  $region17: #{forward.24} parent=0 // pred_fallthru
    _
  // Predicated region
  $region18: #{forward.24} parent=0 // pred_check
    _
  $region19: #{forward.24} parent=0 // pred_check_branch
    %21 = sbr.rel (0) target = $region21
  $region20: #{forward.24} parent=0 // pred_region
    _
  $region21: #{forward.24} parent=0 // pred_fallthru
    _
  %v23 = vld [vmem:[%s0] sm:$0xff]
  %v24 = vld [vmem:[%s0 + $0x8] sm:$0xff]
  %v25 = vld [vmem:[%s0 + $0x10] sm:$0xff]
  %v26 = vld [vmem:[%s0 + $0x18] sm:$0xff]
  %v27 = vld [vmem:[%s0 + $0x20] sm:$0xff]
  %v28 = vld [vmem:[%s0 + $0x28] sm:$0xff]
  %v29 = vld [vmem:[%s0 + $0x30] sm:$0xff]
  %v30 = vld [vmem:[%s0 + $0x38] sm:$0xff]
  %v31 = vld [vmem:[%s0 + $0x40] sm:$0xff]
  %v32 = vld [vmem:[%s0 + $0x48] sm:$0xff]
  %v33 = vld [vmem:[%s0 + $0x50] sm:$0xff]
  %v34 = vld [vmem:[%s0 + $0x58] sm:$0xff]
  %v35 = vld [vmem:[%s0 + $0x60] sm:$0xff]
  %v36 = vld [vmem:[%s0 + $0x68] sm:$0xff]
  %v37 = vld [vmem:[%s0 + $0x70] sm:$0xff]
  %v38 = vld [vmem:[%s0 + $0x78] sm:$0xff]
  %v39 = vld [vmem:[%s1] sm:$0xf]
  %v40 = vld [vmem:[%s1 + $0x4] sm:$0xf]
  %v41 = vld [vmem:[%s1 + $0x8] sm:$0xf]
  %v42 = vld [vmem:[%s1 + $0xc] sm:$0xf]
  %v43 = vld [vmem:[%s1 + $0x10] sm:$0xf]
  %v44 = vld [vmem:[%s1 + $0x14] sm:$0xf]
  %v45 = vld [vmem:[%s1 + $0x18] sm:$0xf]
  %v46 = vld [vmem:[%s1 + $0x1c] sm:$0xf]
  %v47 = vld [vmem:[%s1 + $0x20] sm:$0xf]
  %v48 = vld [vmem:[%s1 + $0x24] sm:$0xf]
  %v49 = vld [vmem:[%s1 + $0x28] sm:$0xf]
  %v50 = vld [vmem:[%s1 + $0x2c] sm:$0xf]
  %v51 = vld [vmem:[%s1 + $0x30] sm:$0xf]
  %v52 = vld [vmem:[%s1 + $0x34] sm:$0xf]
  %v53 = vld [vmem:[%s1 + $0x38] sm:$0xf]
  %v54 = vld [vmem:[%s1 + $0x3c] sm:$0xf]
  %v55 = vld [vmem:[%s1 + $0x40] sm:$0xf]
  %v56 = vld [vmem:[%s1 + $0x44] sm:$0xf]
  %v57 = vld [vmem:[%s2] sm:$0x1]
  %v59 = vperm.slane %v57, 0
  %v77 = vunpack.c.l.b16 %v23
  %v78 = vunpack.c.h.b16 %v23
  %v79 = vunpack.c.l.b16 %v24
  %v80 = vunpack.c.h.b16 %v24
  %v81 = vunpack.c.l.b16 %v25
  %v82 = vunpack.c.h.b16 %v25
  %v83 = vunpack.c.l.b16 %v26
  %v84 = vunpack.c.h.b16 %v26
  %v85 = vunpack.c.l.b16 %v27
  %v86 = vunpack.c.h.b16 %v27
  %v87 = vunpack.c.l.b16 %v28
  %v88 = vunpack.c.h.b16 %v28
  %v89 = vunpack.c.l.b16 %v29
  %v90 = vunpack.c.h.b16 %v29
  %v91 = vunpack.c.l.b16 %v30
  %v92 = vunpack.c.h.b16 %v30
  %v93 = vunpack.c.l.b16 %v31
  %v94 = vunpack.c.h.b16 %v31
  %v95 = vunpack.c.l.b16 %v32
  %v96 = vunpack.c.h.b16 %v32
  %v97 = vunpack.c.l.b16 %v33
  %v98 = vunpack.c.h.b16 %v33
  %v99 = vunpack.c.l.b16 %v34
  %v100 = vunpack.c.h.b16 %v34
  %v101 = vunpack.c.l.b16 %v35
  %v102 = vunpack.c.h.b16 %v35
  %v103 = vunpack.c.l.b16 %v36
  %v104 = vunpack.c.h.b16 %v36
  %v105 = vunpack.c.l.b16 %v37
  %v106 = vunpack.c.h.b16 %v37
  %v107 = vunpack.c.l.b16 %v38
  %v108 = vunpack.c.h.b16 %v38
  %v109 = vpack.c.b16 %v79, %v77
  %v110 = vpack.c.b16 %v80, %v78
  %v111 = vpack.c.b16 %v83, %v81
  %v112 = vpack.c.b16 %v84, %v82
  %v113 = vpack.c.b16 %v87, %v85
  %v114 = vpack.c.b16 %v88, %v86
  %v115 = vpack.c.b16 %v91, %v89
  %v116 = vpack.c.b16 %v92, %v90
  %v117 = vpack.c.b16 %v95, %v93
  %v118 = vpack.c.b16 %v96, %v94
  %v119 = vpack.c.b16 %v99, %v97
  %v120 = vpack.c.b16 %v100, %v98
  %v121 = vpack.c.b16 %v103, %v101
  %v122 = vpack.c.b16 %v104, %v102
  %v123 = vpack.c.b16 %v107, %v105
  %v124 = vpack.c.b16 %v108, %v106
  %v151 = vunpack.c.l.b16 %v39
  %v152 = vunpack.c.l.b16 %v40
  %v153 = vunpack.c.l.b16 %v41
  %v154 = vunpack.c.l.b16 %v42
  %v155 = vunpack.c.l.b16 %v43
  %v156 = vunpack.c.l.b16 %v44
  %v157 = vunpack.c.l.b16 %v45
  %v158 = vunpack.c.l.b16 %v46
  %v159 = vunpack.c.l.b16 %v47
  %v160 = vunpack.c.l.b16 %v48
  %v161 = vunpack.c.l.b16 %v49
  %v162 = vunpack.c.l.b16 %v50
  %v163 = vunpack.c.l.b16 %v51
  %v164 = vunpack.c.l.b16 %v52
  %v165 = vunpack.c.l.b16 %v53
  %v166 = vunpack.c.l.b16 %v54
  %v167 = vunpack.c.l.b16 %v55
  %v168 = vunpack.c.l.b16 %v56
  %v169 = vpack.c.b16 %v152, %v151
  %v170 = vpack.c.b16 %v154, %v153
  %v171 = vpack.c.b16 %v156, %v155
  %v172 = vpack.c.b16 %v158, %v157
  %v173 = vpack.c.b16 %v160, %v159
  %v174 = vpack.c.b16 %v162, %v161
  %v175 = vpack.c.b16 %v164, %v163
  %v176 = vpack.c.b16 %v166, %v165
  %v177 = vpack.c.b16 %v168, %v167
  %vm187 = vcmask 130048
  %v189 = vsel %vm187, %v110, 0
  %v192 = vsel %vm187, %v112, 0
  %v195 = vsel %vm187, %v114, 0
  %v198 = vsel %vm187, %v116, 0
  %v201 = vsel %vm187, %v118, 0
  %v204 = vsel %vm187, %v120, 0
  %v207 = vsel %vm187, %v122, 0
  %v210 = vsel %vm187, %v124, 0
  %212 = vmatpush.bf16.msra.mxu0 %v176
  %213 = vmatpush.bf16.msra.mxu0 %v175
  %214 = vmatpush.bf16.msra.mxu0 %v174
  %215 = vmatpush.bf16.msra.mxu0 %v173
  %216 = vmatpush.bf16.msra.mxu0 %v172
  %217 = vmatpush.bf16.msra.mxu0 %v171
  %218 = vmatpush.bf16.msra.mxu0 %v170
  %219 = vmatpush.bf16.msra.mxu0 %v169
  %220 = vmatmul.bf16.gmra.mxu0 %v109
  %v221 = vpop.f32.mrf.mxu0
  %v222 = vadd.f32 %v59, %v221
  %v223 = vpop.f32.mrf.mxu0
  %v224 = vadd.f32 %v59, %v223
  %225 = vmatmul.bf16.gmra.mxu0 %v111
  %v226 = vpop.f32.mrf.mxu0
  %v227 = vadd.f32 %v59, %v226
  %v228 = vpop.f32.mrf.mxu0
  %v229 = vadd.f32 %v59, %v228
  %230 = vmatmul.bf16.gmra.mxu0 %v113
  %v231 = vpop.f32.mrf.mxu0
  %v232 = vadd.f32 %v59, %v231
  %v233 = vpop.f32.mrf.mxu0
  %v234 = vadd.f32 %v59, %v233
  %235 = vmatmul.bf16.gmra.mxu0 %v115
  %v236 = vpop.f32.mrf.mxu0
  %v237 = vadd.f32 %v59, %v236
  %v238 = vpop.f32.mrf.mxu0
  %v239 = vadd.f32 %v59, %v238
  %240 = vmatmul.bf16.gmra.mxu0 %v117
  %v241 = vpop.f32.mrf.mxu0
  %v242 = vadd.f32 %v59, %v241
  %v243 = vpop.f32.mrf.mxu0
  %v244 = vadd.f32 %v59, %v243
  %245 = vmatmul.bf16.gmra.mxu0 %v119
  %v246 = vpop.f32.mrf.mxu0
  %v247 = vadd.f32 %v59, %v246
  %v248 = vpop.f32.mrf.mxu0
  %v249 = vadd.f32 %v59, %v248
  %250 = vmatmul.bf16.gmra.mxu0 %v121
  %v251 = vpop.f32.mrf.mxu0
  %v252 = vadd.f32 %v59, %v251
  %v253 = vpop.f32.mrf.mxu0
  %v254 = vadd.f32 %v59, %v253
  %255 = vmatmul.bf16.gmra.mxu0 %v123
  %v256 = vpop.f32.mrf.mxu0
  %v257 = vadd.f32 %v59, %v256
  %v258 = vpop.f32.mrf.mxu0
  %v259 = vadd.f32 %v59, %v258
  %260 = vdwg.mxu0
  %261 = vmatpush.bf16.msra.mxu0 0
  %262 = vmatpush.bf16.msra.mxu0 0
  %263 = vmatpush.bf16.msra.mxu0 0
  %264 = vmatpush.bf16.msra.mxu0 0
  %265 = vmatpush.bf16.msra.mxu0 0
  %266 = vmatpush.bf16.msra.mxu0 0
  %267 = vmatpush.bf16.msra.mxu0 0
  %268 = vmatpush.bf16.msra.mxu0 %v177
  %269 = vmatmul.bf16.gmra.mxu0 %v189
  %v270 = vpop.f32.mrf.mxu0
  %v271 = vadd.f32 %v222, %v270
  %v272 = vpop.f32.mrf.mxu0
  %v273 = vadd.f32 %v224, %v272
  %274 = vmatmul.bf16.gmra.mxu0 %v192
  %v275 = vpop.f32.mrf.mxu0
  %v276 = vadd.f32 %v227, %v275
  %v277 = vpop.f32.mrf.mxu0
  %v278 = vadd.f32 %v229, %v277
  %279 = vmatmul.bf16.gmra.mxu0 %v195
  %v280 = vpop.f32.mrf.mxu0
  %v281 = vadd.f32 %v232, %v280
  %v282 = vpop.f32.mrf.mxu0
  %v283 = vadd.f32 %v234, %v282
  %284 = vmatmul.bf16.gmra.mxu0 %v198
  %v285 = vpop.f32.mrf.mxu0
  %v286 = vadd.f32 %v237, %v285
  %v287 = vpop.f32.mrf.mxu0
  %v288 = vadd.f32 %v239, %v287
  %289 = vmatmul.bf16.gmra.mxu0 %v201
  %v290 = vpop.f32.mrf.mxu0
  %v291 = vadd.f32 %v242, %v290
  %v292 = vpop.f32.mrf.mxu0
  %v293 = vadd.f32 %v244, %v292
  %294 = vmatmul.bf16.gmra.mxu0 %v204
  %v295 = vpop.f32.mrf.mxu0
  %v296 = vadd.f32 %v247, %v295
  %v297 = vpop.f32.mrf.mxu0
  %v298 = vadd.f32 %v249, %v297
  %299 = vmatmul.bf16.gmra.mxu0 %v207
  %v300 = vpop.f32.mrf.mxu0
  %v301 = vadd.f32 %v252, %v300
  %v302 = vpop.f32.mrf.mxu0
  %v303 = vadd.f32 %v254, %v302
  %304 = vmatmul.bf16.gmra.mxu0 %v210
  %v305 = vpop.f32.mrf.mxu0
  %v306 = vadd.f32 %v257, %v305
  %v307 = vpop.f32.mrf.mxu0
  %v308 = vadd.f32 %v259, %v307
  %309 = vdwg.mxu0
  %v310 = vmax.f32 %v271, 0.0
  %v311 = vmax.f32 %v273, 0.0
  %v312 = vmax.f32 %v276, 0.0
  %v313 = vmax.f32 %v278, 0.0
  %v314 = vmax.f32 %v281, 0.0
  %v315 = vmax.f32 %v283, 0.0
  %v316 = vmax.f32 %v286, 0.0
  %v317 = vmax.f32 %v288, 0.0
  %v318 = vmax.f32 %v291, 0.0
  %v319 = vmax.f32 %v293, 0.0
  %v320 = vmax.f32 %v296, 0.0
  %v321 = vmax.f32 %v298, 0.0
  %v322 = vmax.f32 %v301, 0.0
  %v323 = vmax.f32 %v303, 0.0
  %v324 = vmax.f32 %v306, 0.0
  %v325 = vmax.f32 %v308, 0.0
  %vm326 = vcmask 261120
  %327 = vst.msk [vmem:[%s5] sm:$0xff] %vm326, %v310
  %328 = vst.msk [vmem:[%s5 + $0x8] sm:$0xff] %vm326, %v311
  %329 = vst.msk [vmem:[%s5 + $0x10] sm:$0xff] %vm326, %v312
  %330 = vst.msk [vmem:[%s5 + $0x18] sm:$0xff] %vm326, %v313
  %331 = vst.msk [vmem:[%s5 + $0x20] sm:$0xff] %vm326, %v314
  %332 = vst.msk [vmem:[%s5 + $0x28] sm:$0xff] %vm326, %v315
  %333 = vst.msk [vmem:[%s5 + $0x30] sm:$0xff] %vm326, %v316
  %334 = vst.msk [vmem:[%s5 + $0x38] sm:$0xff] %vm326, %v317
  %335 = vst.msk [vmem:[%s5 + $0x40] sm:$0xff] %vm326, %v318
  %336 = vst.msk [vmem:[%s5 + $0x48] sm:$0xff] %vm326, %v319
  %337 = vst.msk [vmem:[%s5 + $0x50] sm:$0xff] %vm326, %v320
  %338 = vst.msk [vmem:[%s5 + $0x58] sm:$0xff] %vm326, %v321
  %339 = vst.msk [vmem:[%s5 + $0x60] sm:$0xff] %vm326, %v322
  %340 = vst.msk [vmem:[%s5 + $0x68] sm:$0xff] %vm326, %v323
  %341 = vst.msk [vmem:[%s5 + $0x70] sm:$0xff] %vm326, %v324
  %342 = vst.msk [vmem:[%s5 + $0x78] sm:$0xff] %vm326, %v325
  %v343 = vld [vmem:[%s3] sm:$0xf]
  %v344 = vld [vmem:[%s3 + $0x4] sm:$0xf]
  %v345 = vld [vmem:[%s3 + $0x8] sm:$0xf]
  %v346 = vld [vmem:[%s3 + $0xc] sm:$0xf]
  %v347 = vld [vmem:[%s3 + $0x10] sm:$0xf]
  %v348 = vld [vmem:[%s3 + $0x14] sm:$0xf]
  %v349 = vld [vmem:[%s3 + $0x18] sm:$0xf]
  %v350 = vld [vmem:[%s3 + $0x1c] sm:$0xf]
  %v351 = vld [vmem:[%s3 + $0x20] sm:$0xf]
  %v352 = vld [vmem:[%s3 + $0x24] sm:$0xf]
  %v353 = vld [vmem:[%s3 + $0x28] sm:$0xf]
  %v354 = vld [vmem:[%s3 + $0x2c] sm:$0xf]
  %v355 = vld [vmem:[%s3 + $0x30] sm:$0xf]
  %v356 = vld [vmem:[%s3 + $0x34] sm:$0xf]
  %v357 = vld [vmem:[%s3 + $0x38] sm:$0xf]
  %v358 = vld [vmem:[%s3 + $0x3c] sm:$0xf]
  %v359 = vld [vmem:[%s3 + $0x40] sm:$0xf]
  %v360 = vld [vmem:[%s3 + $0x44] sm:$0xf]
  %v361 = vld [vmem:[%s4] sm:$0x1]
  %v363 = vperm.slane %v361, 0
  %v383 = vunpack.c.l.b16 %v343
  %v384 = vunpack.c.l.b16 %v344
  %v385 = vunpack.c.l.b16 %v345
  %v386 = vunpack.c.l.b16 %v346
  %v387 = vunpack.c.l.b16 %v347
  %v388 = vunpack.c.l.b16 %v348
  %v389 = vunpack.c.l.b16 %v349
  %v390 = vunpack.c.l.b16 %v350
  %v391 = vunpack.c.l.b16 %v351
  %v392 = vunpack.c.l.b16 %v352
  %v393 = vunpack.c.l.b16 %v353
  %v394 = vunpack.c.l.b16 %v354
  %v395 = vunpack.c.l.b16 %v355
  %v396 = vunpack.c.l.b16 %v356
  %v397 = vunpack.c.l.b16 %v357
  %v398 = vunpack.c.l.b16 %v358
  %v399 = vunpack.c.l.b16 %v359
  %v400 = vunpack.c.l.b16 %v360
  %v401 = vpack.c.b16 %v384, %v383
  %v402 = vpack.c.b16 %v386, %v385
  %v403 = vpack.c.b16 %v388, %v387
  %v404 = vpack.c.b16 %v390, %v389
  %v405 = vpack.c.b16 %v392, %v391
  %v406 = vpack.c.b16 %v394, %v393
  %v407 = vpack.c.b16 %v396, %v395
  %v408 = vpack.c.b16 %v398, %v397
  %v409 = vpack.c.b16 %v400, %v399
  %419 = vmatpush.bf16.msra.mxu0 %v408
  %420 = vmatpush.bf16.msra.mxu0 %v407
  %421 = vmatpush.bf16.msra.mxu0 %v406
  %422 = vmatpush.bf16.msra.mxu0 %v405
  %423 = vmatpush.bf16.msra.mxu0 %v404
  %424 = vmatpush.bf16.msra.mxu0 %v403
  %425 = vmatpush.bf16.msra.mxu0 %v402
  %426 = vmatpush.bf16.msra.mxu0 %v401
  %427 = vmatmul.bf16.gmra.mxu0 %v109
  %v428 = vpop.f32.mrf.mxu0
  %v429 = vadd.f32 %v363, %v428
  %v430 = vpop.f32.mrf.mxu0
  %v431 = vadd.f32 %v363, %v430
  %432 = vmatmul.bf16.gmra.mxu0 %v111
  %v433 = vpop.f32.mrf.mxu0
  %v434 = vadd.f32 %v363, %v433
  %v435 = vpop.f32.mrf.mxu0
  %v436 = vadd.f32 %v363, %v435
  %437 = vmatmul.bf16.gmra.mxu0 %v113
  %v438 = vpop.f32.mrf.mxu0
  %v439 = vadd.f32 %v363, %v438
  %v440 = vpop.f32.mrf.mxu0
  %v441 = vadd.f32 %v363, %v440
  %442 = vmatmul.bf16.gmra.mxu0 %v115
  %v443 = vpop.f32.mrf.mxu0
  %v444 = vadd.f32 %v363, %v443
  %v445 = vpop.f32.mrf.mxu0
  %v446 = vadd.f32 %v363, %v445
  %447 = vmatmul.bf16.gmra.mxu0 %v117
  %v448 = vpop.f32.mrf.mxu0
  %v449 = vadd.f32 %v363, %v448
  %v450 = vpop.f32.mrf.mxu0
  %v451 = vadd.f32 %v363, %v450
  %452 = vmatmul.bf16.gmra.mxu0 %v119
  %v453 = vpop.f32.mrf.mxu0
  %v454 = vadd.f32 %v363, %v453
  %v455 = vpop.f32.mrf.mxu0
  %v456 = vadd.f32 %v363, %v455
  %457 = vmatmul.bf16.gmra.mxu0 %v121
  %v458 = vpop.f32.mrf.mxu0
  %v459 = vadd.f32 %v363, %v458
  %v460 = vpop.f32.mrf.mxu0
  %v461 = vadd.f32 %v363, %v460
  %462 = vmatmul.bf16.gmra.mxu0 %v123
  %v463 = vpop.f32.mrf.mxu0
  %v464 = vadd.f32 %v363, %v463
  %v465 = vpop.f32.mrf.mxu0
  %v466 = vadd.f32 %v363, %v465
  %467 = vdwg.mxu0
  %468 = vmatpush.bf16.msra.mxu0 0
  %469 = vmatpush.bf16.msra.mxu0 0
  %470 = vmatpush.bf16.msra.mxu0 0
  %471 = vmatpush.bf16.msra.mxu0 0
  %472 = vmatpush.bf16.msra.mxu0 0
  %473 = vmatpush.bf16.msra.mxu0 0
  %474 = vmatpush.bf16.msra.mxu0 0
  %475 = vmatpush.bf16.msra.mxu0 %v409
  %476 = vmatmul.bf16.gmra.mxu0 %v189
  %v477 = vpop.f32.mrf.mxu0
  %v478 = vadd.f32 %v429, %v477
  %v479 = vpop.f32.mrf.mxu0
  %v480 = vadd.f32 %v431, %v479
  %481 = vmatmul.bf16.gmra.mxu0 %v192
  %v482 = vpop.f32.mrf.mxu0
  %v483 = vadd.f32 %v434, %v482
  %v484 = vpop.f32.mrf.mxu0
  %v485 = vadd.f32 %v436, %v484
  %486 = vmatmul.bf16.gmra.mxu0 %v195
  %v487 = vpop.f32.mrf.mxu0
  %v488 = vadd.f32 %v439, %v487
  %v489 = vpop.f32.mrf.mxu0
  %v490 = vadd.f32 %v441, %v489
  %491 = vmatmul.bf16.gmra.mxu0 %v198
  %v492 = vpop.f32.mrf.mxu0
  %v493 = vadd.f32 %v444, %v492
  %v494 = vpop.f32.mrf.mxu0
  %v495 = vadd.f32 %v446, %v494
  %496 = vmatmul.bf16.gmra.mxu0 %v201
  %v497 = vpop.f32.mrf.mxu0
  %v498 = vadd.f32 %v449, %v497
  %v499 = vpop.f32.mrf.mxu0
  %v500 = vadd.f32 %v451, %v499
  %501 = vmatmul.bf16.gmra.mxu0 %v204
  %v502 = vpop.f32.mrf.mxu0
  %v503 = vadd.f32 %v454, %v502
  %v504 = vpop.f32.mrf.mxu0
  %v505 = vadd.f32 %v456, %v504
  %506 = vmatmul.bf16.gmra.mxu0 %v207
  %v507 = vpop.f32.mrf.mxu0
  %v508 = vadd.f32 %v459, %v507
  %v509 = vpop.f32.mrf.mxu0
  %v510 = vadd.f32 %v461, %v509
  %511 = vmatmul.bf16.gmra.mxu0 %v210
  %v512 = vpop.f32.mrf.mxu0
  %v513 = vadd.f32 %v464, %v512
  %v514 = vpop.f32.mrf.mxu0
  %v515 = vadd.f32 %v466, %v514
  %516 = vdwg.mxu0
  %517 = vst.msk [vmem:[%s6] sm:$0xff] %vm326, %v478
  %518 = vst.msk [vmem:[%s6 + $0x8] sm:$0xff] %vm326, %v480
  %519 = vst.msk [vmem:[%s6 + $0x10] sm:$0xff] %vm326, %v483
  %520 = vst.msk [vmem:[%s6 + $0x18] sm:$0xff] %vm326, %v485
  %521 = vst.msk [vmem:[%s6 + $0x20] sm:$0xff] %vm326, %v488
  %522 = vst.msk [vmem:[%s6 + $0x28] sm:$0xff] %vm326, %v490
  %523 = vst.msk [vmem:[%s6 + $0x30] sm:$0xff] %vm326, %v493
  %524 = vst.msk [vmem:[%s6 + $0x38] sm:$0xff] %vm326, %v495
  %525 = vst.msk [vmem:[%s6 + $0x40] sm:$0xff] %vm326, %v498
  %526 = vst.msk [vmem:[%s6 + $0x48] sm:$0xff] %vm326, %v500
  %527 = vst.msk [vmem:[%s6 + $0x50] sm:$0xff] %vm326, %v503
  %528 = vst.msk [vmem:[%s6 + $0x58] sm:$0xff] %vm326, %v505
  %529 = vst.msk [vmem:[%s6 + $0x60] sm:$0xff] %vm326, %v508
  %530 = vst.msk [vmem:[%s6 + $0x68] sm:$0xff] %vm326, %v510
  %531 = vst.msk [vmem:[%s6 + $0x70] sm:$0xff] %vm326, %v513
  %532 = vst.msk [vmem:[%s6 + $0x78] sm:$0xff] %vm326, %v515
  // Predicated region
  $region22: #{forward.24} parent=0 // pred_check
    _
  $region23: #{forward.24} parent=0 // pred_check_branch
    %534 = sbr.rel (0) target = $region25
  $region24: #{forward.24} parent=0 // pred_region
    _
  $region25: #{forward.24} parent=0 // pred_fallthru
    _
  // Predicated region
  $region26: #{forward.24} parent=0 // pred_check
    _
  $region27: #{forward.24} parent=0 // pred_check_branch
    %536 = sbr.rel (0) target = $region29
  $region28: #{forward.24} parent=0 // pred_region
    _
  $region29: #{forward.24} parent=0 // pred_fallthru
    _
  // Predicated region
  $region30: #{forward.24} parent=0 // pred_check
    _
  $region31: #{forward.24} parent=0 // pred_check_branch
    %538 = sbr.rel (0) target = $region33
  $region32: #{forward.24} parent=0 // pred_region
    _
  $region33: #{forward.24} parent=0 // pred_fallthru
    _
  // Predicated region
  $region34: #{forward.24} parent=0 // pred_check
    _
  $region35: #{forward.24} parent=0 // pred_check_branch
    %540 = sbr.rel (0) target = $region37
  $region36: #{forward.24} parent=0 // pred_region
    _
  $region37: #{forward.24} parent=0 // pred_fallthru
    _

// kernel: forward.26
$region0: #{forward.26}
  #allocation0 [shape = 'u32[]', space=smem, size = 0x4, offset = 0x4, fixed_abs, tag = 'smem constant byte address 0x4 - core index']
  #allocation1 [shape = 'u32[72,128]{1,0:T(1,128)}', space=vmem, size = 0x9000, scoped, tag = 'internal scratch']
  %s0 = inlined_call_operand.vmem [shape: bf16[128,288], index: 0, kind: input, shape index: {}]
  %s1 = inlined_call_operand.vmem [shape: bf16[288,32], index: 1, kind: input, shape index: {}]
  %s2 = inlined_call_operand.vmem [shape: f32[1,32], index: 2, kind: input, shape index: {}]
  %s3 = inlined_call_operand.vmem [shape: f32[128,32], index: 3, kind: output, shape index: {}]
  %s4 = sld [smem:[#allocation0]]
  $region22: #{forward.26} parent=0
    _
  %s6 = ssub.s32 1, %s4
  %s7 = scalar_select 0, %s6, %s4
  // Predicated region
  $region2: #{forward.26} parent=0 // pred_check
    _
  $region3: #{forward.26} parent=0 // pred_check_branch
    %9 = sbr.rel (0) target = $region5
  $region4: #{forward.26} parent=0 // pred_region
    _
  $region5: #{forward.26} parent=0 // pred_fallthru
    _
  // Predicated region
  $region6: #{forward.26} parent=0 // pred_check
    _
  $region7: #{forward.26} parent=0 // pred_check_branch
    %11 = sbr.rel (0) target = $region9
  $region8: #{forward.26} parent=0 // pred_region
    _
  $region9: #{forward.26} parent=0 // pred_fallthru
    _
  // Predicated region
  $region10: #{forward.26} parent=0 // pred_check
    _
  $region11: #{forward.26} parent=0 // pred_check_branch
    %13 = sbr.rel (0) target = $region13
  $region12: #{forward.26} parent=0 // pred_region
    _
  $region13: #{forward.26} parent=0 // pred_fallthru
    _
  %v15 = vld [vmem:[%s0] sm:$0xff]
  %v16 = vld [vmem:[%s0 + $0x8] sm:$0xf]
  %v17 = vld [vmem:[%s0 + $0xc] sm:$0xff]
  %v18 = vld [vmem:[%s0 + $0x14] sm:$0xf]
  %v19 = vld [vmem:[%s0 + $0x18] sm:$0xff]
  %v20 = vld [vmem:[%s0 + $0x20] sm:$0xf]
  %v21 = vld [vmem:[%s0 + $0x24] sm:$0xff]
  %v22 = vld [vmem:[%s0 + $0x2c] sm:$0xf]
  %v23 = vld [vmem:[%s0 + $0x30] sm:$0xff]
  %v24 = vld [vmem:[%s0 + $0x38] sm:$0xf]
  %v25 = vld [vmem:[%s0 + $0x3c] sm:$0xff]
  %v26 = vld [vmem:[%s0 + $0x44] sm:$0xf]
  %v27 = vld [vmem:[%s0 + $0x48] sm:$0xff]
  %v28 = vld [vmem:[%s0 + $0x50] sm:$0xf]
  %v29 = vld [vmem:[%s0 + $0x54] sm:$0xff]
  %v30 = vld [vmem:[%s0 + $0x5c] sm:$0xf]
  %v31 = vld [vmem:[%s0 + $0x60] sm:$0xff]
  %v32 = vld [vmem:[%s0 + $0x68] sm:$0xf]
  %v33 = vld [vmem:[%s0 + $0x6c] sm:$0xff]
  %v34 = vld [vmem:[%s0 + $0x74] sm:$0xf]
  %v35 = vld [vmem:[%s0 + $0x78] sm:$0xff]
  %v36 = vld [vmem:[%s0 + $0x80] sm:$0xf]
  %v37 = vld [vmem:[%s0 + $0x84] sm:$0xff]
  %v38 = vld [vmem:[%s0 + $0x8c] sm:$0xf]
  %v39 = vld [vmem:[%s0 + $0x90] sm:$0xff]
  %v40 = vld [vmem:[%s0 + $0x98] sm:$0xf]
  %v41 = vld [vmem:[%s0 + $0x9c] sm:$0xff]
  %v42 = vld [vmem:[%s0 + $0xa4] sm:$0xf]
  %v43 = vld [vmem:[%s0 + $0xa8] sm:$0xff]
  %v44 = vld [vmem:[%s0 + $0xb0] sm:$0xf]
  %v45 = vld [vmem:[%s0 + $0xb4] sm:$0xff]
  %v46 = vld [vmem:[%s0 + $0xbc] sm:$0xf]
  %v47 = vld [vmem:[%s1] sm:$0xf]
  %v48 = vld [vmem:[%s1 + $0x4] sm:$0xf]
  %v49 = vld [vmem:[%s1 + $0x8] sm:$0xf]
  %v50 = vld [vmem:[%s1 + $0xc] sm:$0xf]
  %v51 = vld [vmem:[%s1 + $0x10] sm:$0xf]
  %v52 = vld [vmem:[%s1 + $0x14] sm:$0xf]
  %v53 = vld [vmem:[%s1 + $0x18] sm:$0xf]
  %v54 = vld [vmem:[%s1 + $0x1c] sm:$0xf]
  %v55 = vld [vmem:[%s1 + $0x20] sm:$0xf]
  %v56 = vld [vmem:[%s1 + $0x24] sm:$0xf]
  %v57 = vld [vmem:[%s1 + $0x28] sm:$0xf]
  %v58 = vld [vmem:[%s1 + $0x2c] sm:$0xf]
  %v59 = vld [vmem:[%s1 + $0x30] sm:$0xf]
  %v60 = vld [vmem:[%s1 + $0x34] sm:$0xf]
  %v61 = vld [vmem:[%s1 + $0x38] sm:$0xf]
  %v62 = vld [vmem:[%s1 + $0x3c] sm:$0xf]
  %v63 = vld [vmem:[%s1 + $0x40] sm:$0xf]
  %v64 = vld [vmem:[%s1 + $0x44] sm:$0xf]
  %v65 = vld [vmem:[%s1 + $0x48] sm:$0xf]
  %v66 = vld [vmem:[%s1 + $0x4c] sm:$0xf]
  %v67 = vld [vmem:[%s1 + $0x50] sm:$0xf]
  %v68 = vld [vmem:[%s1 + $0x54] sm:$0xf]
  %v69 = vld [vmem:[%s1 + $0x58] sm:$0xf]
  %v70 = vld [vmem:[%s1 + $0x5c] sm:$0xf]
  %v71 = vld [vmem:[%s1 + $0x60] sm:$0xf]
  %v72 = vld [vmem:[%s1 + $0x64] sm:$0xf]
  %v73 = vld [vmem:[%s1 + $0x68] sm:$0xf]
  %v74 = vld [vmem:[%s1 + $0x6c] sm:$0xf]
  %v75 = vld [vmem:[%s1 + $0x70] sm:$0xf]
  %v76 = vld [vmem:[%s1 + $0x74] sm:$0xf]
  %v77 = vld [vmem:[%s1 + $0x78] sm:$0xf]
  %v78 = vld [vmem:[%s1 + $0x7c] sm:$0xf]
  %v79 = vld [vmem:[%s1 + $0x80] sm:$0xf]
  %v80 = vld [vmem:[%s1 + $0x84] sm:$0xf]
  %v81 = vld [vmem:[%s1 + $0x88] sm:$0xf]
  %v82 = vld [vmem:[%s1 + $0x8c] sm:$0xf]
  %v83 = vld [vmem:[%s2] sm:$0x1]
  %v85 = vperm.slane %v83, 0
  %v119 = vunpack.c.l.b16 %v15
  %v120 = vunpack.c.h.b16 %v15
  %v121 = vunpack.c.l.b16 %v16
  %v122 = vunpack.c.l.b16 %v17
  %v123 = vunpack.c.h.b16 %v17
  %v124 = vunpack.c.l.b16 %v18
  %v125 = vunpack.c.l.b16 %v19
  %v126 = vunpack.c.h.b16 %v19
  %v127 = vunpack.c.l.b16 %v20
  %v128 = vunpack.c.l.b16 %v21
  %v129 = vunpack.c.h.b16 %v21
  %v130 = vunpack.c.l.b16 %v22
  %v131 = vunpack.c.l.b16 %v23
  %v132 = vunpack.c.h.b16 %v23
  %v133 = vunpack.c.l.b16 %v24
  %v134 = vunpack.c.l.b16 %v25
  %v135 = vunpack.c.h.b16 %v25
  %v136 = vunpack.c.l.b16 %v26
  %v137 = vunpack.c.l.b16 %v27
  %v138 = vunpack.c.h.b16 %v27
  %v139 = vunpack.c.l.b16 %v28
  %v140 = vunpack.c.l.b16 %v29
  %v141 = vunpack.c.h.b16 %v29
  %v142 = vunpack.c.l.b16 %v30
  %v143 = vunpack.c.l.b16 %v31
  %v144 = vunpack.c.h.b16 %v31
  %v145 = vunpack.c.l.b16 %v32
  %v146 = vunpack.c.l.b16 %v33
  %v147 = vunpack.c.h.b16 %v33
  %v148 = vunpack.c.l.b16 %v34
  %v149 = vunpack.c.l.b16 %v35
  %v150 = vunpack.c.h.b16 %v35
  %v151 = vunpack.c.l.b16 %v36
  %v152 = vunpack.c.l.b16 %v37
  %v153 = vunpack.c.h.b16 %v37
  %v154 = vunpack.c.l.b16 %v38
  %v155 = vunpack.c.l.b16 %v39
  %v156 = vunpack.c.h.b16 %v39
  %v157 = vunpack.c.l.b16 %v40
  %v158 = vunpack.c.l.b16 %v41
  %v159 = vunpack.c.h.b16 %v41
  %v160 = vunpack.c.l.b16 %v42
  %v161 = vunpack.c.l.b16 %v43
  %v162 = vunpack.c.h.b16 %v43
  %v163 = vunpack.c.l.b16 %v44
  %v164 = vunpack.c.l.b16 %v45
  %v165 = vunpack.c.h.b16 %v45
  %v166 = vunpack.c.l.b16 %v46
  %v167 = vpack.c.b16 %v122, %v119
  %v168 = vpack.c.b16 %v123, %v120
  %v169 = vpack.c.b16 %v124, %v121
  %v170 = vpack.c.b16 %v128, %v125
  %v171 = vpack.c.b16 %v129, %v126
  %v172 = vpack.c.b16 %v130, %v127
  %v173 = vpack.c.b16 %v134, %v131
  %v174 = vpack.c.b16 %v135, %v132
  %v175 = vpack.c.b16 %v136, %v133
  %v176 = vpack.c.b16 %v140, %v137
  %v177 = vpack.c.b16 %v141, %v138
  %v178 = vpack.c.b16 %v142, %v139
  %v179 = vpack.c.b16 %v146, %v143
  %v180 = vpack.c.b16 %v147, %v144
  %v181 = vpack.c.b16 %v148, %v145
  %v182 = vpack.c.b16 %v152, %v149
  %v183 = vpack.c.b16 %v153, %v150
  %v184 = vpack.c.b16 %v154, %v151
  %v185 = vpack.c.b16 %v158, %v155
  %v186 = vpack.c.b16 %v159, %v156
  %v187 = vpack.c.b16 %v160, %v157
  %v188 = vpack.c.b16 %v164, %v161
  %v189 = vpack.c.b16 %v165, %v162
  %v190 = vpack.c.b16 %v166, %v163
  %v243 = vunpack.c.l.b16 %v47
  %v244 = vunpack.c.l.b16 %v48
  %v245 = vunpack.c.l.b16 %v49
  %v246 = vunpack.c.l.b16 %v50
  %v247 = vunpack.c.l.b16 %v51
  %v248 = vunpack.c.l.b16 %v52
  %v249 = vunpack.c.l.b16 %v53
  %v250 = vunpack.c.l.b16 %v54
  %v251 = vunpack.c.l.b16 %v55
  %v252 = vunpack.c.l.b16 %v56
  %v253 = vunpack.c.l.b16 %v57
  %v254 = vunpack.c.l.b16 %v58
  %v255 = vunpack.c.l.b16 %v59
  %v256 = vunpack.c.l.b16 %v60
  %v257 = vunpack.c.l.b16 %v61
  %v258 = vunpack.c.l.b16 %v62
  %v259 = vunpack.c.l.b16 %v63
  %v260 = vunpack.c.l.b16 %v64
  %v261 = vunpack.c.l.b16 %v65
  %v262 = vunpack.c.l.b16 %v66
  %v263 = vunpack.c.l.b16 %v67
  %v264 = vunpack.c.l.b16 %v68
  %v265 = vunpack.c.l.b16 %v69
  %v266 = vunpack.c.l.b16 %v70
  %v267 = vunpack.c.l.b16 %v71
  %v268 = vunpack.c.l.b16 %v72
  %v269 = vunpack.c.l.b16 %v73
  %v270 = vunpack.c.l.b16 %v74
  %v271 = vunpack.c.l.b16 %v75
  %v272 = vunpack.c.l.b16 %v76
  %v273 = vunpack.c.l.b16 %v77
  %v274 = vunpack.c.l.b16 %v78
  %v275 = vunpack.c.l.b16 %v79
  %v276 = vunpack.c.l.b16 %v80
  %v277 = vunpack.c.l.b16 %v81
  %v278 = vunpack.c.l.b16 %v82
  %v279 = vpack.c.b16 %v244, %v243
  %v280 = vpack.c.b16 %v246, %v245
  %v281 = vpack.c.b16 %v248, %v247
  %v282 = vpack.c.b16 %v250, %v249
  %v283 = vpack.c.b16 %v252, %v251
  %v284 = vpack.c.b16 %v254, %v253
  %v285 = vpack.c.b16 %v256, %v255
  %v286 = vpack.c.b16 %v258, %v257
  %v287 = vpack.c.b16 %v260, %v259
  %v288 = vpack.c.b16 %v262, %v261
  %v289 = vpack.c.b16 %v264, %v263
  %v290 = vpack.c.b16 %v266, %v265
  %v291 = vpack.c.b16 %v268, %v267
  %v292 = vpack.c.b16 %v270, %v269
  %v293 = vpack.c.b16 %v272, %v271
  %v294 = vpack.c.b16 %v274, %v273
  %v295 = vpack.c.b16 %v276, %v275
  %v296 = vpack.c.b16 %v278, %v277
  %vm315 = vcmask 261120
  %v317 = vsel %vm315, %v169, 0
  %v320 = vsel %vm315, %v172, 0
  %v323 = vsel %vm315, %v175, 0
  %v326 = vsel %vm315, %v178, 0
  %v329 = vsel %vm315, %v181, 0
  %v332 = vsel %vm315, %v184, 0
  %v335 = vsel %vm315, %v187, 0
  %v338 = vsel %vm315, %v190, 0
  %340 = vmatpush.bf16.msra.mxu0 %v286
  %341 = vmatpush.bf16.msra.mxu0 %v285
  %342 = vmatpush.bf16.msra.mxu0 %v284
  %343 = vmatpush.bf16.msra.mxu0 %v283
  %344 = vmatpush.bf16.msra.mxu0 %v282
  %345 = vmatpush.bf16.msra.mxu0 %v281
  %346 = vmatpush.bf16.msra.mxu0 %v280
  %347 = vmatpush.bf16.msra.mxu0 %v279
  %348 = vmatmul.bf16.gmra.mxu0 %v167
  %v349 = vpop.f32.mrf.mxu0
  %v350 = vadd.f32 %v85, %v349
  %v351 = vpop.f32.mrf.mxu0
  %v352 = vadd.f32 %v85, %v351
  %353 = vmatmul.bf16.gmra.mxu0 %v170
  %v354 = vpop.f32.mrf.mxu0
  %v355 = vadd.f32 %v85, %v354
  %v356 = vpop.f32.mrf.mxu0
  %v357 = vadd.f32 %v85, %v356
  %358 = vmatmul.bf16.gmra.mxu0 %v173
  %v359 = vpop.f32.mrf.mxu0
  %v360 = vadd.f32 %v85, %v359
  %v361 = vpop.f32.mrf.mxu0
  %v362 = vadd.f32 %v85, %v361
  %363 = vmatmul.bf16.gmra.mxu0 %v176
  %v364 = vpop.f32.mrf.mxu0
  %v365 = vadd.f32 %v85, %v364
  %v366 = vpop.f32.mrf.mxu0
  %v367 = vadd.f32 %v85, %v366
  %368 = vmatmul.bf16.gmra.mxu0 %v179
  %v369 = vpop.f32.mrf.mxu0
  %v370 = vadd.f32 %v85, %v369
  %v371 = vpop.f32.mrf.mxu0
  %v372 = vadd.f32 %v85, %v371
  %373 = vmatmul.bf16.gmra.mxu0 %v182
  %v374 = vpop.f32.mrf.mxu0
  %v375 = vadd.f32 %v85, %v374
  %v376 = vpop.f32.mrf.mxu0
  %v377 = vadd.f32 %v85, %v376
  %378 = vmatmul.bf16.gmra.mxu0 %v185
  %v379 = vpop.f32.mrf.mxu0
  %v380 = vadd.f32 %v85, %v379
  %v381 = vpop.f32.mrf.mxu0
  %v382 = vadd.f32 %v85, %v381
  %383 = vmatmul.bf16.gmra.mxu0 %v188
  %v384 = vpop.f32.mrf.mxu0
  %v385 = vadd.f32 %v85, %v384
  %v386 = vpop.f32.mrf.mxu0
  %v387 = vadd.f32 %v85, %v386
  %388 = vdwg.mxu0
  %389 = vmatpush.bf16.msra.mxu0 %v294
  %390 = vmatpush.bf16.msra.mxu0 %v293
  %391 = vmatpush.bf16.msra.mxu0 %v292
  %392 = vmatpush.bf16.msra.mxu0 %v291
  %393 = vmatpush.bf16.msra.mxu0 %v290
  %394 = vmatpush.bf16.msra.mxu0 %v289
  %395 = vmatpush.bf16.msra.mxu0 %v288
  %396 = vmatpush.bf16.msra.mxu0 %v287
  %397 = vmatmul.bf16.gmra.mxu0 %v168
  %v398 = vpop.f32.mrf.mxu0
  %v399 = vadd.f32 %v350, %v398
  %v400 = vpop.f32.mrf.mxu0
  %v401 = vadd.f32 %v352, %v400
  %402 = vmatmul.bf16.gmra.mxu0 %v171
  %v403 = vpop.f32.mrf.mxu0
  %v404 = vadd.f32 %v355, %v403
  %v405 = vpop.f32.mrf.mxu0
  %v406 = vadd.f32 %v357, %v405
  %407 = vmatmul.bf16.gmra.mxu0 %v174
  %v408 = vpop.f32.mrf.mxu0
  %v409 = vadd.f32 %v360, %v408
  %v410 = vpop.f32.mrf.mxu0
  %v411 = vadd.f32 %v362, %v410
  %412 = vmatmul.bf16.gmra.mxu0 %v177
  %v413 = vpop.f32.mrf.mxu0
  %v414 = vadd.f32 %v365, %v413
  %v415 = vpop.f32.mrf.mxu0
  %v416 = vadd.f32 %v367, %v415
  %417 = vmatmul.bf16.gmra.mxu0 %v180
  %v418 = vpop.f32.mrf.mxu0
  %v419 = vadd.f32 %v370, %v418
  %v420 = vpop.f32.mrf.mxu0
  %v421 = vadd.f32 %v372, %v420
  %422 = vmatmul.bf16.gmra.mxu0 %v183
  %v423 = vpop.f32.mrf.mxu0
  %v424 = vadd.f32 %v375, %v423
  %v425 = vpop.f32.mrf.mxu0
  %v426 = vadd.f32 %v377, %v425
  %427 = vmatmul.bf16.gmra.mxu0 %v186
  %v428 = vpop.f32.mrf.mxu0
  %v429 = vadd.f32 %v380, %v428
  %v430 = vpop.f32.mrf.mxu0
  %v431 = vadd.f32 %v382, %v430
  %432 = vmatmul.bf16.gmra.mxu0 %v189
  %v433 = vpop.f32.mrf.mxu0
  %v434 = vadd.f32 %v385, %v433
  %v435 = vpop.f32.mrf.mxu0
  %v436 = vadd.f32 %v387, %v435
  %437 = vdwg.mxu0
  %438 = vmatpush.bf16.msra.mxu0 0
  %439 = vmatpush.bf16.msra.mxu0 0
  %440 = vmatpush.bf16.msra.mxu0 0
  %441 = vmatpush.bf16.msra.mxu0 0
  %442 = vmatpush.bf16.msra.mxu0 0
  %443 = vmatpush.bf16.msra.mxu0 0
  %444 = vmatpush.bf16.msra.mxu0 %v296
  %445 = vmatpush.bf16.msra.mxu0 %v295
  %446 = vmatmul.bf16.gmra.mxu0 %v317
  %v447 = vpop.f32.mrf.mxu0
  %v448 = vadd.f32 %v399, %v447
  %v449 = vpop.f32.mrf.mxu0
  %v450 = vadd.f32 %v401, %v449
  %451 = vmatmul.bf16.gmra.mxu0 %v320
  %v452 = vpop.f32.mrf.mxu0
  %v453 = vadd.f32 %v404, %v452
  %v454 = vpop.f32.mrf.mxu0
  %v455 = vadd.f32 %v406, %v454
  %456 = vmatmul.bf16.gmra.mxu0 %v323
  %v457 = vpop.f32.mrf.mxu0
  %v458 = vadd.f32 %v409, %v457
  %v459 = vpop.f32.mrf.mxu0
  %v460 = vadd.f32 %v411, %v459
  %461 = vmatmul.bf16.gmra.mxu0 %v326
  %v462 = vpop.f32.mrf.mxu0
  %v463 = vadd.f32 %v414, %v462
  %v464 = vpop.f32.mrf.mxu0
  %v465 = vadd.f32 %v416, %v464
  %466 = vmatmul.bf16.gmra.mxu0 %v329
  %v467 = vpop.f32.mrf.mxu0
  %v468 = vadd.f32 %v419, %v467
  %v469 = vpop.f32.mrf.mxu0
  %v470 = vadd.f32 %v421, %v469
  %471 = vmatmul.bf16.gmra.mxu0 %v332
  %v472 = vpop.f32.mrf.mxu0
  %v473 = vadd.f32 %v424, %v472
  %v474 = vpop.f32.mrf.mxu0
  %v475 = vadd.f32 %v426, %v474
  %476 = vmatmul.bf16.gmra.mxu0 %v335
  %v477 = vpop.f32.mrf.mxu0
  %v478 = vadd.f32 %v429, %v477
  %v479 = vpop.f32.mrf.mxu0
  %v480 = vadd.f32 %v431, %v479
  %481 = vmatmul.bf16.gmra.mxu0 %v338
  %v482 = vpop.f32.mrf.mxu0
  %v483 = vadd.f32 %v434, %v482
  %v484 = vpop.f32.mrf.mxu0
  %v485 = vadd.f32 %v436, %v484
  %486 = vdwg.mxu0
  %v487 = vmax.f32 %v448, 0.0
  %v488 = vmax.f32 %v450, 0.0
  %v489 = vmax.f32 %v453, 0.0
  %v490 = vmax.f32 %v455, 0.0
  %v491 = vmax.f32 %v458, 0.0
  %v492 = vmax.f32 %v460, 0.0
  %v493 = vmax.f32 %v463, 0.0
  %v494 = vmax.f32 %v465, 0.0
  %v495 = vmax.f32 %v468, 0.0
  %v496 = vmax.f32 %v470, 0.0
  %v497 = vmax.f32 %v473, 0.0
  %v498 = vmax.f32 %v475, 0.0
  %v499 = vmax.f32 %v478, 0.0
  %v500 = vmax.f32 %v480, 0.0
  %v501 = vmax.f32 %v483, 0.0
  %v502 = vmax.f32 %v485, 0.0
  %503 = vst.msk [vmem:[%s3] sm:$0xff] %vm315, %v487
  %504 = vst.msk [vmem:[%s3 + $0x8] sm:$0xff] %vm315, %v488
  %505 = vst.msk [vmem:[%s3 + $0x10] sm:$0xff] %vm315, %v489
  %506 = vst.msk [vmem:[%s3 + $0x18] sm:$0xff] %vm315, %v490
  %507 = vst.msk [vmem:[%s3 + $0x20] sm:$0xff] %vm315, %v491
  %508 = vst.msk [vmem:[%s3 + $0x28] sm:$0xff] %vm315, %v492
  %509 = vst.msk [vmem:[%s3 + $0x30] sm:$0xff] %vm315, %v493
  %510 = vst.msk [vmem:[%s3 + $0x38] sm:$0xff] %vm315, %v494
  %511 = vst.msk [vmem:[%s3 + $0x40] sm:$0xff] %vm315, %v495
  %512 = vst.msk [vmem:[%s3 + $0x48] sm:$0xff] %vm315, %v496
  %513 = vst.msk [vmem:[%s3 + $0x50] sm:$0xff] %vm315, %v497
  %514 = vst.msk [vmem:[%s3 + $0x58] sm:$0xff] %vm315, %v498
  %515 = vst.msk [vmem:[%s3 + $0x60] sm:$0xff] %vm315, %v499
  %516 = vst.msk [vmem:[%s3 + $0x68] sm:$0xff] %vm315, %v500
  %517 = vst.msk [vmem:[%s3 + $0x70] sm:$0xff] %vm315, %v501
  %518 = vst.msk [vmem:[%s3 + $0x78] sm:$0xff] %vm315, %v502
  // Predicated region
  $region14: #{forward.26} parent=0 // pred_check
    _
  $region15: #{forward.26} parent=0 // pred_check_branch
    %520 = sbr.rel (0) target = $region17
  $region16: #{forward.26} parent=0 // pred_region
    _
  $region17: #{forward.26} parent=0 // pred_fallthru
    _
  // Predicated region
  $region18: #{forward.26} parent=0 // pred_check
    _
  $region19: #{forward.26} parent=0 // pred_check_branch
    %522 = sbr.rel (0) target = $region21
  $region20: #{forward.26} parent=0 // pred_region
    _
  $region21: #{forward.26} parent=0 // pred_fallthru
    _

// kernel: forward.25
$region0: #{forward.25}
  #allocation0 [shape = 'u32[]', space=smem, size = 0x4, offset = 0x4, fixed_abs, tag = 'smem constant byte address 0x4 - core index']
  #allocation1 [shape = 'u32[72,128]{1,0:T(1,128)}', space=vmem, size = 0x9000, scoped, tag = 'internal scratch']
  %s0 = inlined_call_operand.vmem [shape: bf16[128,288], index: 0, kind: input, shape index: {}]
  %s1 = inlined_call_operand.vmem [shape: bf16[288,32], index: 1, kind: input, shape index: {}]
  %s2 = inlined_call_operand.vmem [shape: f32[1,32], index: 2, kind: input, shape index: {}]
  %s3 = inlined_call_operand.vmem [shape: f32[128,32], index: 3, kind: input, shape index: {}]
  %s4 = inlined_call_operand.vmem [shape: f32[128,32], index: 4, kind: output, shape index: {}]
  %s5 = sld [smem:[#allocation0]]
  $region26: #{forward.25} parent=0
    _
  %s7 = ssub.s32 1, %s5
  %s8 = scalar_select 0, %s7, %s5
  // Predicated region
  $region2: #{forward.25} parent=0 // pred_check
    _
  $region3: #{forward.25} parent=0 // pred_check_branch
    %10 = sbr.rel (0) target = $region5
  $region4: #{forward.25} parent=0 // pred_region
    _
  $region5: #{forward.25} parent=0 // pred_fallthru
    _
  // Predicated region
  $region6: #{forward.25} parent=0 // pred_check
    _
  $region7: #{forward.25} parent=0 // pred_check_branch
    %12 = sbr.rel (0) target = $region9
  $region8: #{forward.25} parent=0 // pred_region
    _
  $region9: #{forward.25} parent=0 // pred_fallthru
    _
  // Predicated region
  $region10: #{forward.25} parent=0 // pred_check
    _
  $region11: #{forward.25} parent=0 // pred_check_branch
    %14 = sbr.rel (0) target = $region13
  $region12: #{forward.25} parent=0 // pred_region
    _
  $region13: #{forward.25} parent=0 // pred_fallthru
    _
  // Predicated region
  $region14: #{forward.25} parent=0 // pred_check
    _
  $region15: #{forward.25} parent=0 // pred_check_branch
    %16 = sbr.rel (0) target = $region17
  $region16: #{forward.25} parent=0 // pred_region
    _
  $region17: #{forward.25} parent=0 // pred_fallthru
    _
  %v18 = vld [vmem:[%s0] sm:$0xff]
  %v19 = vld [vmem:[%s0 + $0x8] sm:$0xf]
  %v20 = vld [vmem:[%s0 + $0xc] sm:$0xff]
  %v21 = vld [vmem:[%s0 + $0x14] sm:$0xf]
  %v22 = vld [vmem:[%s0 + $0x18] sm:$0xff]
  %v23 = vld [vmem:[%s0 + $0x20] sm:$0xf]
  %v24 = vld [vmem:[%s0 + $0x24] sm:$0xff]
  %v25 = vld [vmem:[%s0 + $0x2c] sm:$0xf]
  %v26 = vld [vmem:[%s0 + $0x30] sm:$0xff]
  %v27 = vld [vmem:[%s0 + $0x38] sm:$0xf]
  %v28 = vld [vmem:[%s0 + $0x3c] sm:$0xff]
  %v29 = vld [vmem:[%s0 + $0x44] sm:$0xf]
  %v30 = vld [vmem:[%s0 + $0x48] sm:$0xff]
  %v31 = vld [vmem:[%s0 + $0x50] sm:$0xf]
  %v32 = vld [vmem:[%s0 + $0x54] sm:$0xff]
  %v33 = vld [vmem:[%s0 + $0x5c] sm:$0xf]
  %v34 = vld [vmem:[%s0 + $0x60] sm:$0xff]
  %v35 = vld [vmem:[%s0 + $0x68] sm:$0xf]
  %v36 = vld [vmem:[%s0 + $0x6c] sm:$0xff]
  %v37 = vld [vmem:[%s0 + $0x74] sm:$0xf]
  %v38 = vld [vmem:[%s0 + $0x78] sm:$0xff]
  %v39 = vld [vmem:[%s0 + $0x80] sm:$0xf]
  %v40 = vld [vmem:[%s0 + $0x84] sm:$0xff]
  %v41 = vld [vmem:[%s0 + $0x8c] sm:$0xf]
  %v42 = vld [vmem:[%s0 + $0x90] sm:$0xff]
  %v43 = vld [vmem:[%s0 + $0x98] sm:$0xf]
  %v44 = vld [vmem:[%s0 + $0x9c] sm:$0xff]
  %v45 = vld [vmem:[%s0 + $0xa4] sm:$0xf]
  %v46 = vld [vmem:[%s0 + $0xa8] sm:$0xff]
  %v47 = vld [vmem:[%s0 + $0xb0] sm:$0xf]
  %v48 = vld [vmem:[%s0 + $0xb4] sm:$0xff]
  %v49 = vld [vmem:[%s0 + $0xbc] sm:$0xf]
  %v50 = vld [vmem:[%s1] sm:$0xf]
  %v51 = vld [vmem:[%s1 + $0x4] sm:$0xf]
  %v52 = vld [vmem:[%s1 + $0x8] sm:$0xf]
  %v53 = vld [vmem:[%s1 + $0xc] sm:$0xf]
  %v54 = vld [vmem:[%s1 + $0x10] sm:$0xf]
  %v55 = vld [vmem:[%s1 + $0x14] sm:$0xf]
  %v56 = vld [vmem:[%s1 + $0x18] sm:$0xf]
  %v57 = vld [vmem:[%s1 + $0x1c] sm:$0xf]
  %v58 = vld [vmem:[%s1 + $0x20] sm:$0xf]
  %v59 = vld [vmem:[%s1 + $0x24] sm:$0xf]
  %v60 = vld [vmem:[%s1 + $0x28] sm:$0xf]
  %v61 = vld [vmem:[%s1 + $0x2c] sm:$0xf]
  %v62 = vld [vmem:[%s1 + $0x30] sm:$0xf]
  %v63 = vld [vmem:[%s1 + $0x34] sm:$0xf]
  %v64 = vld [vmem:[%s1 + $0x38] sm:$0xf]
  %v65 = vld [vmem:[%s1 + $0x3c] sm:$0xf]
  %v66 = vld [vmem:[%s1 + $0x40] sm:$0xf]
  %v67 = vld [vmem:[%s1 + $0x44] sm:$0xf]
  %v68 = vld [vmem:[%s1 + $0x48] sm:$0xf]
  %v69 = vld [vmem:[%s1 + $0x4c] sm:$0xf]
  %v70 = vld [vmem:[%s1 + $0x50] sm:$0xf]
  %v71 = vld [vmem:[%s1 + $0x54] sm:$0xf]
  %v72 = vld [vmem:[%s1 + $0x58] sm:$0xf]
  %v73 = vld [vmem:[%s1 + $0x5c] sm:$0xf]
  %v74 = vld [vmem:[%s1 + $0x60] sm:$0xf]
  %v75 = vld [vmem:[%s1 + $0x64] sm:$0xf]
  %v76 = vld [vmem:[%s1 + $0x68] sm:$0xf]
  %v77 = vld [vmem:[%s1 + $0x6c] sm:$0xf]
  %v78 = vld [vmem:[%s1 + $0x70] sm:$0xf]
  %v79 = vld [vmem:[%s1 + $0x74] sm:$0xf]
  %v80 = vld [vmem:[%s1 + $0x78] sm:$0xf]
  %v81 = vld [vmem:[%s1 + $0x7c] sm:$0xf]
  %v82 = vld [vmem:[%s1 + $0x80] sm:$0xf]
  %v83 = vld [vmem:[%s1 + $0x84] sm:$0xf]
  %v84 = vld [vmem:[%s1 + $0x88] sm:$0xf]
  %v85 = vld [vmem:[%s1 + $0x8c] sm:$0xf]
  %v86 = vld [vmem:[%s2] sm:$0x1]
  %v88 = vperm.slane %v86, 0
  %v122 = vunpack.c.l.b16 %v18
  %v123 = vunpack.c.h.b16 %v18
  %v124 = vunpack.c.l.b16 %v19
  %v125 = vunpack.c.l.b16 %v20
  %v126 = vunpack.c.h.b16 %v20
  %v127 = vunpack.c.l.b16 %v21
  %v128 = vunpack.c.l.b16 %v22
  %v129 = vunpack.c.h.b16 %v22
  %v130 = vunpack.c.l.b16 %v23
  %v131 = vunpack.c.l.b16 %v24
  %v132 = vunpack.c.h.b16 %v24
  %v133 = vunpack.c.l.b16 %v25
  %v134 = vunpack.c.l.b16 %v26
  %v135 = vunpack.c.h.b16 %v26
  %v136 = vunpack.c.l.b16 %v27
  %v137 = vunpack.c.l.b16 %v28
  %v138 = vunpack.c.h.b16 %v28
  %v139 = vunpack.c.l.b16 %v29
  %v140 = vunpack.c.l.b16 %v30
  %v141 = vunpack.c.h.b16 %v30
  %v142 = vunpack.c.l.b16 %v31
  %v143 = vunpack.c.l.b16 %v32
  %v144 = vunpack.c.h.b16 %v32
  %v145 = vunpack.c.l.b16 %v33
  %v146 = vunpack.c.l.b16 %v34
  %v147 = vunpack.c.h.b16 %v34
  %v148 = vunpack.c.l.b16 %v35
  %v149 = vunpack.c.l.b16 %v36
  %v150 = vunpack.c.h.b16 %v36
  %v151 = vunpack.c.l.b16 %v37
  %v152 = vunpack.c.l.b16 %v38
  %v153 = vunpack.c.h.b16 %v38
  %v154 = vunpack.c.l.b16 %v39
  %v155 = vunpack.c.l.b16 %v40
  %v156 = vunpack.c.h.b16 %v40
  %v157 = vunpack.c.l.b16 %v41
  %v158 = vunpack.c.l.b16 %v42
  %v159 = vunpack.c.h.b16 %v42
  %v160 = vunpack.c.l.b16 %v43
  %v161 = vunpack.c.l.b16 %v44
  %v162 = vunpack.c.h.b16 %v44
  %v163 = vunpack.c.l.b16 %v45
  %v164 = vunpack.c.l.b16 %v46
  %v165 = vunpack.c.h.b16 %v46
  %v166 = vunpack.c.l.b16 %v47
  %v167 = vunpack.c.l.b16 %v48
  %v168 = vunpack.c.h.b16 %v48
  %v169 = vunpack.c.l.b16 %v49
  %v170 = vpack.c.b16 %v125, %v122
  %v171 = vpack.c.b16 %v126, %v123
  %v172 = vpack.c.b16 %v127, %v124
  %v173 = vpack.c.b16 %v131, %v128
  %v174 = vpack.c.b16 %v132, %v129
  %v175 = vpack.c.b16 %v133, %v130
  %v176 = vpack.c.b16 %v137, %v134
  %v177 = vpack.c.b16 %v138, %v135
  %v178 = vpack.c.b16 %v139, %v136
  %v179 = vpack.c.b16 %v143, %v140
  %v180 = vpack.c.b16 %v144, %v141
  %v181 = vpack.c.b16 %v145, %v142
  %v182 = vpack.c.b16 %v149, %v146
  %v183 = vpack.c.b16 %v150, %v147
  %v184 = vpack.c.b16 %v151, %v148
  %v185 = vpack.c.b16 %v155, %v152
  %v186 = vpack.c.b16 %v156, %v153
  %v187 = vpack.c.b16 %v157, %v154
  %v188 = vpack.c.b16 %v161, %v158
  %v189 = vpack.c.b16 %v162, %v159
  %v190 = vpack.c.b16 %v163, %v160
  %v191 = vpack.c.b16 %v167, %v164
  %v192 = vpack.c.b16 %v168, %v165
  %v193 = vpack.c.b16 %v169, %v166
  %v246 = vunpack.c.l.b16 %v50
  %v247 = vunpack.c.l.b16 %v51
  %v248 = vunpack.c.l.b16 %v52
  %v249 = vunpack.c.l.b16 %v53
  %v250 = vunpack.c.l.b16 %v54
  %v251 = vunpack.c.l.b16 %v55
  %v252 = vunpack.c.l.b16 %v56
  %v253 = vunpack.c.l.b16 %v57
  %v254 = vunpack.c.l.b16 %v58
  %v255 = vunpack.c.l.b16 %v59
  %v256 = vunpack.c.l.b16 %v60
  %v257 = vunpack.c.l.b16 %v61
  %v258 = vunpack.c.l.b16 %v62
  %v259 = vunpack.c.l.b16 %v63
  %v260 = vunpack.c.l.b16 %v64
  %v261 = vunpack.c.l.b16 %v65
  %v262 = vunpack.c.l.b16 %v66
  %v263 = vunpack.c.l.b16 %v67
  %v264 = vunpack.c.l.b16 %v68
  %v265 = vunpack.c.l.b16 %v69
  %v266 = vunpack.c.l.b16 %v70
  %v267 = vunpack.c.l.b16 %v71
  %v268 = vunpack.c.l.b16 %v72
  %v269 = vunpack.c.l.b16 %v73
  %v270 = vunpack.c.l.b16 %v74
  %v271 = vunpack.c.l.b16 %v75
  %v272 = vunpack.c.l.b16 %v76
  %v273 = vunpack.c.l.b16 %v77
  %v274 = vunpack.c.l.b16 %v78
  %v275 = vunpack.c.l.b16 %v79
  %v276 = vunpack.c.l.b16 %v80
  %v277 = vunpack.c.l.b16 %v81
  %v278 = vunpack.c.l.b16 %v82
  %v279 = vunpack.c.l.b16 %v83
  %v280 = vunpack.c.l.b16 %v84
  %v281 = vunpack.c.l.b16 %v85
  %v282 = vpack.c.b16 %v247, %v246
  %v283 = vpack.c.b16 %v249, %v248
  %v284 = vpack.c.b16 %v251, %v250
  %v285 = vpack.c.b16 %v253, %v252
  %v286 = vpack.c.b16 %v255, %v254
  %v287 = vpack.c.b16 %v257, %v256
  %v288 = vpack.c.b16 %v259, %v258
  %v289 = vpack.c.b16 %v261, %v260
  %v290 = vpack.c.b16 %v263, %v262
  %v291 = vpack.c.b16 %v265, %v264
  %v292 = vpack.c.b16 %v267, %v266
  %v293 = vpack.c.b16 %v269, %v268
  %v294 = vpack.c.b16 %v271, %v270
  %v295 = vpack.c.b16 %v273, %v272
  %v296 = vpack.c.b16 %v275, %v274
  %v297 = vpack.c.b16 %v277, %v276
  %v298 = vpack.c.b16 %v279, %v278
  %v299 = vpack.c.b16 %v281, %v280
  %vm318 = vcmask 261120
  %v320 = vsel %vm318, %v172, 0
  %v323 = vsel %vm318, %v175, 0
  %v326 = vsel %vm318, %v178, 0
  %v329 = vsel %vm318, %v181, 0
  %v332 = vsel %vm318, %v184, 0
  %v335 = vsel %vm318, %v187, 0
  %v338 = vsel %vm318, %v190, 0
  %v341 = vsel %vm318, %v193, 0
  %343 = vmatpush.bf16.msra.mxu0 %v289
  %344 = vmatpush.bf16.msra.mxu0 %v288
  %345 = vmatpush.bf16.msra.mxu0 %v287
  %346 = vmatpush.bf16.msra.mxu0 %v286
  %347 = vmatpush.bf16.msra.mxu0 %v285
  %348 = vmatpush.bf16.msra.mxu0 %v284
  %349 = vmatpush.bf16.msra.mxu0 %v283
  %350 = vmatpush.bf16.msra.mxu0 %v282
  %351 = vmatmul.bf16.gmra.mxu0 %v170
  %v352 = vpop.f32.mrf.mxu0
  %v353 = vadd.f32 %v88, %v352
  %v354 = vpop.f32.mrf.mxu0
  %v355 = vadd.f32 %v88, %v354
  %356 = vmatmul.bf16.gmra.mxu0 %v173
  %v357 = vpop.f32.mrf.mxu0
  %v358 = vadd.f32 %v88, %v357
  %v359 = vpop.f32.mrf.mxu0
  %v360 = vadd.f32 %v88, %v359
  %361 = vmatmul.bf16.gmra.mxu0 %v176
  %v362 = vpop.f32.mrf.mxu0
  %v363 = vadd.f32 %v88, %v362
  %v364 = vpop.f32.mrf.mxu0
  %v365 = vadd.f32 %v88, %v364
  %366 = vmatmul.bf16.gmra.mxu0 %v179
  %v367 = vpop.f32.mrf.mxu0
  %v368 = vadd.f32 %v88, %v367
  %v369 = vpop.f32.mrf.mxu0
  %v370 = vadd.f32 %v88, %v369
  %371 = vmatmul.bf16.gmra.mxu0 %v182
  %v372 = vpop.f32.mrf.mxu0
  %v373 = vadd.f32 %v88, %v372
  %v374 = vpop.f32.mrf.mxu0
  %v375 = vadd.f32 %v88, %v374
  %376 = vmatmul.bf16.gmra.mxu0 %v185
  %v377 = vpop.f32.mrf.mxu0
  %v378 = vadd.f32 %v88, %v377
  %v379 = vpop.f32.mrf.mxu0
  %v380 = vadd.f32 %v88, %v379
  %381 = vmatmul.bf16.gmra.mxu0 %v188
  %v382 = vpop.f32.mrf.mxu0
  %v383 = vadd.f32 %v88, %v382
  %v384 = vpop.f32.mrf.mxu0
  %v385 = vadd.f32 %v88, %v384
  %386 = vmatmul.bf16.gmra.mxu0 %v191
  %v387 = vpop.f32.mrf.mxu0
  %v388 = vadd.f32 %v88, %v387
  %v389 = vpop.f32.mrf.mxu0
  %v390 = vadd.f32 %v88, %v389
  %391 = vdwg.mxu0
  %392 = vmatpush.bf16.msra.mxu0 %v297
  %393 = vmatpush.bf16.msra.mxu0 %v296
  %394 = vmatpush.bf16.msra.mxu0 %v295
  %395 = vmatpush.bf16.msra.mxu0 %v294
  %396 = vmatpush.bf16.msra.mxu0 %v293
  %397 = vmatpush.bf16.msra.mxu0 %v292
  %398 = vmatpush.bf16.msra.mxu0 %v291
  %399 = vmatpush.bf16.msra.mxu0 %v290
  %400 = vmatmul.bf16.gmra.mxu0 %v171
  %v401 = vpop.f32.mrf.mxu0
  %v402 = vadd.f32 %v353, %v401
  %v403 = vpop.f32.mrf.mxu0
  %v404 = vadd.f32 %v355, %v403
  %405 = vmatmul.bf16.gmra.mxu0 %v174
  %v406 = vpop.f32.mrf.mxu0
  %v407 = vadd.f32 %v358, %v406
  %v408 = vpop.f32.mrf.mxu0
  %v409 = vadd.f32 %v360, %v408
  %410 = vmatmul.bf16.gmra.mxu0 %v177
  %v411 = vpop.f32.mrf.mxu0
  %v412 = vadd.f32 %v363, %v411
  %v413 = vpop.f32.mrf.mxu0
  %v414 = vadd.f32 %v365, %v413
  %415 = vmatmul.bf16.gmra.mxu0 %v180
  %v416 = vpop.f32.mrf.mxu0
  %v417 = vadd.f32 %v368, %v416
  %v418 = vpop.f32.mrf.mxu0
  %v419 = vadd.f32 %v370, %v418
  %420 = vmatmul.bf16.gmra.mxu0 %v183
  %v421 = vpop.f32.mrf.mxu0
  %v422 = vadd.f32 %v373, %v421
  %v423 = vpop.f32.mrf.mxu0
  %v424 = vadd.f32 %v375, %v423
  %425 = vmatmul.bf16.gmra.mxu0 %v186
  %v426 = vpop.f32.mrf.mxu0
  %v427 = vadd.f32 %v378, %v426
  %v428 = vpop.f32.mrf.mxu0
  %v429 = vadd.f32 %v380, %v428
  %430 = vmatmul.bf16.gmra.mxu0 %v189
  %v431 = vpop.f32.mrf.mxu0
  %v432 = vadd.f32 %v383, %v431
  %v433 = vpop.f32.mrf.mxu0
  %v434 = vadd.f32 %v385, %v433
  %435 = vmatmul.bf16.gmra.mxu0 %v192
  %v436 = vpop.f32.mrf.mxu0
  %v437 = vadd.f32 %v388, %v436
  %v438 = vpop.f32.mrf.mxu0
  %v439 = vadd.f32 %v390, %v438
  %440 = vdwg.mxu0
  %441 = vmatpush.bf16.msra.mxu0 0
  %442 = vmatpush.bf16.msra.mxu0 0
  %443 = vmatpush.bf16.msra.mxu0 0
  %444 = vmatpush.bf16.msra.mxu0 0
  %445 = vmatpush.bf16.msra.mxu0 0
  %446 = vmatpush.bf16.msra.mxu0 0
  %447 = vmatpush.bf16.msra.mxu0 %v299
  %448 = vmatpush.bf16.msra.mxu0 %v298
  %449 = vmatmul.bf16.gmra.mxu0 %v320
  %v450 = vpop.f32.mrf.mxu0
  %v451 = vadd.f32 %v402, %v450
  %v452 = vpop.f32.mrf.mxu0
  %v453 = vadd.f32 %v404, %v452
  %454 = vmatmul.bf16.gmra.mxu0 %v323
  %v455 = vpop.f32.mrf.mxu0
  %v456 = vadd.f32 %v407, %v455
  %v457 = vpop.f32.mrf.mxu0
  %v458 = vadd.f32 %v409, %v457
  %459 = vmatmul.bf16.gmra.mxu0 %v326
  %v460 = vpop.f32.mrf.mxu0
  %v461 = vadd.f32 %v412, %v460
  %v462 = vpop.f32.mrf.mxu0
  %v463 = vadd.f32 %v414, %v462
  %464 = vmatmul.bf16.gmra.mxu0 %v329
  %v465 = vpop.f32.mrf.mxu0
  %v466 = vadd.f32 %v417, %v465
  %v467 = vpop.f32.mrf.mxu0
  %v468 = vadd.f32 %v419, %v467
  %469 = vmatmul.bf16.gmra.mxu0 %v332
  %v470 = vpop.f32.mrf.mxu0
  %v471 = vadd.f32 %v422, %v470
  %v472 = vpop.f32.mrf.mxu0
  %v473 = vadd.f32 %v424, %v472
  %474 = vmatmul.bf16.gmra.mxu0 %v335
  %v475 = vpop.f32.mrf.mxu0
  %v476 = vadd.f32 %v427, %v475
  %v477 = vpop.f32.mrf.mxu0
  %v478 = vadd.f32 %v429, %v477
  %479 = vmatmul.bf16.gmra.mxu0 %v338
  %v480 = vpop.f32.mrf.mxu0
  %v481 = vadd.f32 %v432, %v480
  %v482 = vpop.f32.mrf.mxu0
  %v483 = vadd.f32 %v434, %v482
  %484 = vmatmul.bf16.gmra.mxu0 %v341
  %v485 = vpop.f32.mrf.mxu0
  %v486 = vadd.f32 %v437, %v485
  %v487 = vpop.f32.mrf.mxu0
  %v488 = vadd.f32 %v439, %v487
  %489 = vdwg.mxu0
  %v490 = vld [vmem:[%s3] sm:$0xff]
  %v491 = vld [vmem:[%s3 + $0x8] sm:$0xff]
  %v492 = vld [vmem:[%s3 + $0x10] sm:$0xff]
  %v493 = vld [vmem:[%s3 + $0x18] sm:$0xff]
  %v494 = vld [vmem:[%s3 + $0x20] sm:$0xff]
  %v495 = vld [vmem:[%s3 + $0x28] sm:$0xff]
  %v496 = vld [vmem:[%s3 + $0x30] sm:$0xff]
  %v497 = vld [vmem:[%s3 + $0x38] sm:$0xff]
  %v498 = vld [vmem:[%s3 + $0x40] sm:$0xff]
  %v499 = vld [vmem:[%s3 + $0x48] sm:$0xff]
  %v500 = vld [vmem:[%s3 + $0x50] sm:$0xff]
  %v501 = vld [vmem:[%s3 + $0x58] sm:$0xff]
  %v502 = vld [vmem:[%s3 + $0x60] sm:$0xff]
  %v503 = vld [vmem:[%s3 + $0x68] sm:$0xff]
  %v504 = vld [vmem:[%s3 + $0x70] sm:$0xff]
  %v505 = vld [vmem:[%s3 + $0x78] sm:$0xff]
  %v506 = vadd.f32 %v451, %v490
  %v507 = vadd.f32 %v453, %v491
  %v508 = vadd.f32 %v456, %v492
  %v509 = vadd.f32 %v458, %v493
  %v510 = vadd.f32 %v461, %v494
  %v511 = vadd.f32 %v463, %v495
  %v512 = vadd.f32 %v466, %v496
  %v513 = vadd.f32 %v468, %v497
  %v514 = vadd.f32 %v471, %v498
  %v515 = vadd.f32 %v473, %v499
  %v516 = vadd.f32 %v476, %v500
  %v517 = vadd.f32 %v478, %v501
  %v518 = vadd.f32 %v481, %v502
  %v519 = vadd.f32 %v483, %v503
  %v520 = vadd.f32 %v486, %v504
  %v521 = vadd.f32 %v488, %v505
  %v522 = vmax.f32 %v506, 0.0
  %v523 = vmax.f32 %v507, 0.0
  %v524 = vmax.f32 %v508, 0.0
  %v525 = vmax.f32 %v509, 0.0
  %v526 = vmax.f32 %v510, 0.0
  %v527 = vmax.f32 %v511, 0.0
  %v528 = vmax.f32 %v512, 0.0
  %v529 = vmax.f32 %v513, 0.0
  %v530 = vmax.f32 %v514, 0.0
  %v531 = vmax.f32 %v515, 0.0
  %v532 = vmax.f32 %v516, 0.0
  %v533 = vmax.f32 %v517, 0.0
  %v534 = vmax.f32 %v518, 0.0
  %v535 = vmax.f32 %v519, 0.0
  %v536 = vmax.f32 %v520, 0.0
  %v537 = vmax.f32 %v521, 0.0
  %538 = vst.msk [vmem:[%s4] sm:$0xff] %vm318, %v522
  %539 = vst.msk [vmem:[%s4 + $0x8] sm:$0xff] %vm318, %v523
  %540 = vst.msk [vmem:[%s4 + $0x10] sm:$0xff] %vm318, %v524
  %541 = vst.msk [vmem:[%s4 + $0x18] sm:$0xff] %vm318, %v525
  %542 = vst.msk [vmem:[%s4 + $0x20] sm:$0xff] %vm318, %v526
  %543 = vst.msk [vmem:[%s4 + $0x28] sm:$0xff] %vm318, %v527
  %544 = vst.msk [vmem:[%s4 + $0x30] sm:$0xff] %vm318, %v528
  %545 = vst.msk [vmem:[%s4 + $0x38] sm:$0xff] %vm318, %v529
  %546 = vst.msk [vmem:[%s4 + $0x40] sm:$0xff] %vm318, %v530
  %547 = vst.msk [vmem:[%s4 + $0x48] sm:$0xff] %vm318, %v531
  %548 = vst.msk [vmem:[%s4 + $0x50] sm:$0xff] %vm318, %v532
  %549 = vst.msk [vmem:[%s4 + $0x58] sm:$0xff] %vm318, %v533
  %550 = vst.msk [vmem:[%s4 + $0x60] sm:$0xff] %vm318, %v534
  %551 = vst.msk [vmem:[%s4 + $0x68] sm:$0xff] %vm318, %v535
  %552 = vst.msk [vmem:[%s4 + $0x70] sm:$0xff] %vm318, %v536
  %553 = vst.msk [vmem:[%s4 + $0x78] sm:$0xff] %vm318, %v537
  // Predicated region
  $region18: #{forward.25} parent=0 // pred_check
    _
  $region19: #{forward.25} parent=0 // pred_check_branch
    %555 = sbr.rel (0) target = $region21
  $region20: #{forward.25} parent=0 // pred_region
    _
  $region21: #{forward.25} parent=0 // pred_fallthru
    _
  // Predicated region
  $region22: #{forward.25} parent=0 // pred_check
    _
  $region23: #{forward.25} parent=0 // pred_check_branch
    %557 = sbr.rel (0) target = $region25
  $region24: #{forward.25} parent=0 // pred_region
    _
  $region25: #{forward.25} parent=0 // pred_fallthru
    _

// kernel: forward.28
$region0: #{forward.28}
  #allocation0 [shape = 'u32[]', space=smem, size = 0x4, offset = 0x4, fixed_abs, tag = 'smem constant byte address 0x4 - core index']
  #allocation1 [shape = 'u32[72,128]{1,0:T(1,128)}', space=vmem, size = 0x9000, scoped, tag = 'internal scratch']
  %s0 = inlined_call_operand.vmem [shape: bf16[32,288], index: 0, kind: input, shape index: {}]
  %s1 = inlined_call_operand.vmem [shape: bf16[288,64], index: 1, kind: input, shape index: {}]
  %s2 = inlined_call_operand.vmem [shape: f32[1,64], index: 2, kind: input, shape index: {}]
  %s3 = inlined_call_operand.vmem [shape: bf16[288,64], index: 3, kind: input, shape index: {}]
  %s4 = inlined_call_operand.vmem [shape: f32[1,64], index: 4, kind: input, shape index: {}]
  %s5 = inlined_call_operand.vmem [shape: f32[32,64], index: 5, kind: output, shape index: {0}]
  %s6 = inlined_call_operand.vmem [shape: f32[32,64], index: 6, kind: output, shape index: {1}]
  %7 = xla_tuple %s5, %s6
  %s8 = sld [smem:[#allocation0]]
  $region38: #{forward.28} parent=0
    _
  %s10 = ssub.s32 1, %s8
  %s11 = scalar_select 0, %s10, %s8
  // Predicated region
  $region2: #{forward.28} parent=0 // pred_check
    _
  $region3: #{forward.28} parent=0 // pred_check_branch
    %13 = sbr.rel (0) target = $region5
  $region4: #{forward.28} parent=0 // pred_region
    _
  $region5: #{forward.28} parent=0 // pred_fallthru
    _
  // Predicated region
  $region6: #{forward.28} parent=0 // pred_check
    _
  $region7: #{forward.28} parent=0 // pred_check_branch
    %15 = sbr.rel (0) target = $region9
  $region8: #{forward.28} parent=0 // pred_region
    _
  $region9: #{forward.28} parent=0 // pred_fallthru
    _
  // Predicated region
  $region10: #{forward.28} parent=0 // pred_check
    _
  $region11: #{forward.28} parent=0 // pred_check_branch
    %17 = sbr.rel (0) target = $region13
  $region12: #{forward.28} parent=0 // pred_region
    _
  $region13: #{forward.28} parent=0 // pred_fallthru
    _
  // Predicated region
  $region14: #{forward.28} parent=0 // pred_check
    _
  $region15: #{forward.28} parent=0 // pred_check_branch
    %19 = sbr.rel (0) target = $region17
  $region16: #{forward.28} parent=0 // pred_region
    _
  $region17: #{forward.28} parent=0 // pred_fallthru
    _
  // Predicated region
  $region18: #{forward.28} parent=0 // pred_check
    _
  $region19: #{forward.28} parent=0 // pred_check_branch
    %21 = sbr.rel (0) target = $region21
  $region20: #{forward.28} parent=0 // pred_region
    _
  $region21: #{forward.28} parent=0 // pred_fallthru
    _
  %v23 = vld [vmem:[%s0] sm:$0xff]
  %v24 = vld [vmem:[%s0 + $0x8] sm:$0xf]
  %v25 = vld [vmem:[%s0 + $0xc] sm:$0xff]
  %v26 = vld [vmem:[%s0 + $0x14] sm:$0xf]
  %v27 = vld [vmem:[%s0 + $0x18] sm:$0xff]
  %v28 = vld [vmem:[%s0 + $0x20] sm:$0xf]
  %v29 = vld [vmem:[%s0 + $0x24] sm:$0xff]
  %v30 = vld [vmem:[%s0 + $0x2c] sm:$0xf]
  %v31 = vld [vmem:[%s1] sm:$0xf]
  %v32 = vld [vmem:[%s1 + $0x4] sm:$0xf]
  %v33 = vld [vmem:[%s1 + $0x8] sm:$0xf]
  %v34 = vld [vmem:[%s1 + $0xc] sm:$0xf]
  %v35 = vld [vmem:[%s1 + $0x10] sm:$0xf]
  %v36 = vld [vmem:[%s1 + $0x14] sm:$0xf]
  %v37 = vld [vmem:[%s1 + $0x18] sm:$0xf]
  %v38 = vld [vmem:[%s1 + $0x1c] sm:$0xf]
  %v39 = vld [vmem:[%s1 + $0x20] sm:$0xf]
  %v40 = vld [vmem:[%s1 + $0x24] sm:$0xf]
  %v41 = vld [vmem:[%s1 + $0x28] sm:$0xf]
  %v42 = vld [vmem:[%s1 + $0x2c] sm:$0xf]
  %v43 = vld [vmem:[%s1 + $0x30] sm:$0xf]
  %v44 = vld [vmem:[%s1 + $0x34] sm:$0xf]
  %v45 = vld [vmem:[%s1 + $0x38] sm:$0xf]
  %v46 = vld [vmem:[%s1 + $0x3c] sm:$0xf]
  %v47 = vld [vmem:[%s1 + $0x40] sm:$0xf]
  %v48 = vld [vmem:[%s1 + $0x44] sm:$0xf]
  %v49 = vld [vmem:[%s1 + $0x48] sm:$0xf]
  %v50 = vld [vmem:[%s1 + $0x4c] sm:$0xf]
  %v51 = vld [vmem:[%s1 + $0x50] sm:$0xf]
  %v52 = vld [vmem:[%s1 + $0x54] sm:$0xf]
  %v53 = vld [vmem:[%s1 + $0x58] sm:$0xf]
  %v54 = vld [vmem:[%s1 + $0x5c] sm:$0xf]
  %v55 = vld [vmem:[%s1 + $0x60] sm:$0xf]
  %v56 = vld [vmem:[%s1 + $0x64] sm:$0xf]
  %v57 = vld [vmem:[%s1 + $0x68] sm:$0xf]
  %v58 = vld [vmem:[%s1 + $0x6c] sm:$0xf]
  %v59 = vld [vmem:[%s1 + $0x70] sm:$0xf]
  %v60 = vld [vmem:[%s1 + $0x74] sm:$0xf]
  %v61 = vld [vmem:[%s1 + $0x78] sm:$0xf]
  %v62 = vld [vmem:[%s1 + $0x7c] sm:$0xf]
  %v63 = vld [vmem:[%s1 + $0x80] sm:$0xf]
  %v64 = vld [vmem:[%s1 + $0x84] sm:$0xf]
  %v65 = vld [vmem:[%s1 + $0x88] sm:$0xf]
  %v66 = vld [vmem:[%s1 + $0x8c] sm:$0xf]
  %v67 = vld [vmem:[%s2] sm:$0x1]
  %v69 = vperm.slane %v67, 0
  %v79 = vunpack.c.l.b16 %v23
  %v80 = vunpack.c.h.b16 %v23
  %v81 = vunpack.c.l.b16 %v24
  %v82 = vunpack.c.l.b16 %v25
  %v83 = vunpack.c.h.b16 %v25
  %v84 = vunpack.c.l.b16 %v26
  %v85 = vunpack.c.l.b16 %v27
  %v86 = vunpack.c.h.b16 %v27
  %v87 = vunpack.c.l.b16 %v28
  %v88 = vunpack.c.l.b16 %v29
  %v89 = vunpack.c.h.b16 %v29
  %v90 = vunpack.c.l.b16 %v30
  %v91 = vpack.c.b16 %v82, %v79
  %v92 = vpack.c.b16 %v83, %v80
  %v93 = vpack.c.b16 %v84, %v81
  %v94 = vpack.c.b16 %v88, %v85
  %v95 = vpack.c.b16 %v89, %v86
  %v96 = vpack.c.b16 %v90, %v87
  %v137 = vunpack.c.l.b16 %v31
  %v138 = vunpack.c.l.b16 %v32
  %v139 = vunpack.c.l.b16 %v33
  %v140 = vunpack.c.l.b16 %v34
  %v141 = vunpack.c.l.b16 %v35
  %v142 = vunpack.c.l.b16 %v36
  %v143 = vunpack.c.l.b16 %v37
  %v144 = vunpack.c.l.b16 %v38
  %v145 = vunpack.c.l.b16 %v39
  %v146 = vunpack.c.l.b16 %v40
  %v147 = vunpack.c.l.b16 %v41
  %v148 = vunpack.c.l.b16 %v42
  %v149 = vunpack.c.l.b16 %v43
  %v150 = vunpack.c.l.b16 %v44
  %v151 = vunpack.c.l.b16 %v45
  %v152 = vunpack.c.l.b16 %v46
  %v153 = vunpack.c.l.b16 %v47
  %v154 = vunpack.c.l.b16 %v48
  %v155 = vunpack.c.l.b16 %v49
  %v156 = vunpack.c.l.b16 %v50
  %v157 = vunpack.c.l.b16 %v51
  %v158 = vunpack.c.l.b16 %v52
  %v159 = vunpack.c.l.b16 %v53
  %v160 = vunpack.c.l.b16 %v54
  %v161 = vunpack.c.l.b16 %v55
  %v162 = vunpack.c.l.b16 %v56
  %v163 = vunpack.c.l.b16 %v57
  %v164 = vunpack.c.l.b16 %v58
  %v165 = vunpack.c.l.b16 %v59
  %v166 = vunpack.c.l.b16 %v60
  %v167 = vunpack.c.l.b16 %v61
  %v168 = vunpack.c.l.b16 %v62
  %v169 = vunpack.c.l.b16 %v63
  %v170 = vunpack.c.l.b16 %v64
  %v171 = vunpack.c.l.b16 %v65
  %v172 = vunpack.c.l.b16 %v66
  %v173 = vpack.c.b16 %v138, %v137
  %v174 = vpack.c.b16 %v140, %v139
  %v175 = vpack.c.b16 %v142, %v141
  %v176 = vpack.c.b16 %v144, %v143
  %v177 = vpack.c.b16 %v146, %v145
  %v178 = vpack.c.b16 %v148, %v147
  %v179 = vpack.c.b16 %v150, %v149
  %v180 = vpack.c.b16 %v152, %v151
  %v181 = vpack.c.b16 %v154, %v153
  %v182 = vpack.c.b16 %v156, %v155
  %v183 = vpack.c.b16 %v158, %v157
  %v184 = vpack.c.b16 %v160, %v159
  %v185 = vpack.c.b16 %v162, %v161
  %v186 = vpack.c.b16 %v164, %v163
  %v187 = vpack.c.b16 %v166, %v165
  %v188 = vpack.c.b16 %v168, %v167
  %v189 = vpack.c.b16 %v170, %v169
  %v190 = vpack.c.b16 %v172, %v171
  %vm209 = vcmask 261120
  %v211 = vsel %vm209, %v93, 0
  %v214 = vsel %vm209, %v96, 0
  %216 = vmatpush.bf16.msra.mxu0 %v180
  %217 = vmatpush.bf16.msra.mxu0 %v179
  %218 = vmatpush.bf16.msra.mxu0 %v178
  %219 = vmatpush.bf16.msra.mxu0 %v177
  %220 = vmatpush.bf16.msra.mxu0 %v176
  %221 = vmatpush.bf16.msra.mxu0 %v175
  %222 = vmatpush.bf16.msra.mxu0 %v174
  %223 = vmatpush.bf16.msra.mxu0 %v173
  %224 = vmatmul.bf16.gmra.mxu0 %v91
  %v225 = vpop.f32.mrf.mxu0
  %v226 = vadd.f32 %v69, %v225
  %v227 = vpop.f32.mrf.mxu0
  %v228 = vadd.f32 %v69, %v227
  %229 = vmatmul.bf16.gmra.mxu0 %v94
  %v230 = vpop.f32.mrf.mxu0
  %v231 = vadd.f32 %v69, %v230
  %v232 = vpop.f32.mrf.mxu0
  %v233 = vadd.f32 %v69, %v232
  %234 = vdwg.mxu0
  %235 = vmatpush.bf16.msra.mxu0 %v188
  %236 = vmatpush.bf16.msra.mxu0 %v187
  %237 = vmatpush.bf16.msra.mxu0 %v186
  %238 = vmatpush.bf16.msra.mxu0 %v185
  %239 = vmatpush.bf16.msra.mxu0 %v184
  %240 = vmatpush.bf16.msra.mxu0 %v183
  %241 = vmatpush.bf16.msra.mxu0 %v182
  %242 = vmatpush.bf16.msra.mxu0 %v181
  %243 = vmatmul.bf16.gmra.mxu0 %v92
  %v244 = vpop.f32.mrf.mxu0
  %v245 = vadd.f32 %v226, %v244
  %v246 = vpop.f32.mrf.mxu0
  %v247 = vadd.f32 %v228, %v246
  %248 = vmatmul.bf16.gmra.mxu0 %v95
  %v249 = vpop.f32.mrf.mxu0
  %v250 = vadd.f32 %v231, %v249
  %v251 = vpop.f32.mrf.mxu0
  %v252 = vadd.f32 %v233, %v251
  %253 = vdwg.mxu0
  %254 = vmatpush.bf16.msra.mxu0 0
  %255 = vmatpush.bf16.msra.mxu0 0
  %256 = vmatpush.bf16.msra.mxu0 0
  %257 = vmatpush.bf16.msra.mxu0 0
  %258 = vmatpush.bf16.msra.mxu0 0
  %259 = vmatpush.bf16.msra.mxu0 0
  %260 = vmatpush.bf16.msra.mxu0 %v190
  %261 = vmatpush.bf16.msra.mxu0 %v189
  %262 = vmatmul.bf16.gmra.mxu0 %v211
  %v263 = vpop.f32.mrf.mxu0
  %v264 = vadd.f32 %v245, %v263
  %v265 = vpop.f32.mrf.mxu0
  %v266 = vadd.f32 %v247, %v265
  %267 = vmatmul.bf16.gmra.mxu0 %v214
  %v268 = vpop.f32.mrf.mxu0
  %v269 = vadd.f32 %v250, %v268
  %v270 = vpop.f32.mrf.mxu0
  %v271 = vadd.f32 %v252, %v270
  %272 = vdwg.mxu0
  %v273 = vmax.f32 %v264, 0.0
  %v274 = vmax.f32 %v266, 0.0
  %v275 = vmax.f32 %v269, 0.0
  %v276 = vmax.f32 %v271, 0.0
  %vm277 = vcmask 523264
  %278 = vst.msk [vmem:[%s5] sm:$0xff] %vm277, %v273
  %279 = vst.msk [vmem:[%s5 + $0x8] sm:$0xff] %vm277, %v274
  %280 = vst.msk [vmem:[%s5 + $0x10] sm:$0xff] %vm277, %v275
  %281 = vst.msk [vmem:[%s5 + $0x18] sm:$0xff] %vm277, %v276
  %v282 = vld [vmem:[%s3] sm:$0xf]
  %v283 = vld [vmem:[%s3 + $0x4] sm:$0xf]
  %v284 = vld [vmem:[%s3 + $0x8] sm:$0xf]
  %v285 = vld [vmem:[%s3 + $0xc] sm:$0xf]
  %v286 = vld [vmem:[%s3 + $0x10] sm:$0xf]
  %v287 = vld [vmem:[%s3 + $0x14] sm:$0xf]
  %v288 = vld [vmem:[%s3 + $0x18] sm:$0xf]
  %v289 = vld [vmem:[%s3 + $0x1c] sm:$0xf]
  %v290 = vld [vmem:[%s3 + $0x20] sm:$0xf]
  %v291 = vld [vmem:[%s3 + $0x24] sm:$0xf]
  %v292 = vld [vmem:[%s3 + $0x28] sm:$0xf]
  %v293 = vld [vmem:[%s3 + $0x2c] sm:$0xf]
  %v294 = vld [vmem:[%s3 + $0x30] sm:$0xf]
  %v295 = vld [vmem:[%s3 + $0x34] sm:$0xf]
  %v296 = vld [vmem:[%s3 + $0x38] sm:$0xf]
  %v297 = vld [vmem:[%s3 + $0x3c] sm:$0xf]
  %v298 = vld [vmem:[%s3 + $0x40] sm:$0xf]
  %v299 = vld [vmem:[%s3 + $0x44] sm:$0xf]
  %v300 = vld [vmem:[%s3 + $0x48] sm:$0xf]
  %v301 = vld [vmem:[%s3 + $0x4c] sm:$0xf]
  %v302 = vld [vmem:[%s3 + $0x50] sm:$0xf]
  %v303 = vld [vmem:[%s3 + $0x54] sm:$0xf]
  %v304 = vld [vmem:[%s3 + $0x58] sm:$0xf]
  %v305 = vld [vmem:[%s3 + $0x5c] sm:$0xf]
  %v306 = vld [vmem:[%s3 + $0x60] sm:$0xf]
  %v307 = vld [vmem:[%s3 + $0x64] sm:$0xf]
  %v308 = vld [vmem:[%s3 + $0x68] sm:$0xf]
  %v309 = vld [vmem:[%s3 + $0x6c] sm:$0xf]
  %v310 = vld [vmem:[%s3 + $0x70] sm:$0xf]
  %v311 = vld [vmem:[%s3 + $0x74] sm:$0xf]
  %v312 = vld [vmem:[%s3 + $0x78] sm:$0xf]
  %v313 = vld [vmem:[%s3 + $0x7c] sm:$0xf]
  %v314 = vld [vmem:[%s3 + $0x80] sm:$0xf]
  %v315 = vld [vmem:[%s3 + $0x84] sm:$0xf]
  %v316 = vld [vmem:[%s3 + $0x88] sm:$0xf]
  %v317 = vld [vmem:[%s3 + $0x8c] sm:$0xf]
  %v318 = vld [vmem:[%s4] sm:$0x1]
  %v320 = vperm.slane %v318, 0
  %v358 = vunpack.c.l.b16 %v282
  %v359 = vunpack.c.l.b16 %v283
  %v360 = vunpack.c.l.b16 %v284
  %v361 = vunpack.c.l.b16 %v285
  %v362 = vunpack.c.l.b16 %v286
  %v363 = vunpack.c.l.b16 %v287
  %v364 = vunpack.c.l.b16 %v288
  %v365 = vunpack.c.l.b16 %v289
  %v366 = vunpack.c.l.b16 %v290
  %v367 = vunpack.c.l.b16 %v291
  %v368 = vunpack.c.l.b16 %v292
  %v369 = vunpack.c.l.b16 %v293
  %v370 = vunpack.c.l.b16 %v294
  %v371 = vunpack.c.l.b16 %v295
  %v372 = vunpack.c.l.b16 %v296
  %v373 = vunpack.c.l.b16 %v297
  %v374 = vunpack.c.l.b16 %v298
  %v375 = vunpack.c.l.b16 %v299
  %v376 = vunpack.c.l.b16 %v300
  %v377 = vunpack.c.l.b16 %v301
  %v378 = vunpack.c.l.b16 %v302
  %v379 = vunpack.c.l.b16 %v303
  %v380 = vunpack.c.l.b16 %v304
  %v381 = vunpack.c.l.b16 %v305
  %v382 = vunpack.c.l.b16 %v306
  %v383 = vunpack.c.l.b16 %v307
  %v384 = vunpack.c.l.b16 %v308
  %v385 = vunpack.c.l.b16 %v309
  %v386 = vunpack.c.l.b16 %v310
  %v387 = vunpack.c.l.b16 %v311
  %v388 = vunpack.c.l.b16 %v312
  %v389 = vunpack.c.l.b16 %v313
  %v390 = vunpack.c.l.b16 %v314
  %v391 = vunpack.c.l.b16 %v315
  %v392 = vunpack.c.l.b16 %v316
  %v393 = vunpack.c.l.b16 %v317
  %v394 = vpack.c.b16 %v359, %v358
  %v395 = vpack.c.b16 %v361, %v360
  %v396 = vpack.c.b16 %v363, %v362
  %v397 = vpack.c.b16 %v365, %v364
  %v398 = vpack.c.b16 %v367, %v366
  %v399 = vpack.c.b16 %v369, %v368
  %v400 = vpack.c.b16 %v371, %v370
  %v401 = vpack.c.b16 %v373, %v372
  %v402 = vpack.c.b16 %v375, %v374
  %v403 = vpack.c.b16 %v377, %v376
  %v404 = vpack.c.b16 %v379, %v378
  %v405 = vpack.c.b16 %v381, %v380
  %v406 = vpack.c.b16 %v383, %v382
  %v407 = vpack.c.b16 %v385, %v384
  %v408 = vpack.c.b16 %v387, %v386
  %v409 = vpack.c.b16 %v389, %v388
  %v410 = vpack.c.b16 %v391, %v390
  %v411 = vpack.c.b16 %v393, %v392
  %430 = vmatpush.bf16.msra.mxu0 %v401
  %431 = vmatpush.bf16.msra.mxu0 %v400
  %432 = vmatpush.bf16.msra.mxu0 %v399
  %433 = vmatpush.bf16.msra.mxu0 %v398
  %434 = vmatpush.bf16.msra.mxu0 %v397
  %435 = vmatpush.bf16.msra.mxu0 %v396
  %436 = vmatpush.bf16.msra.mxu0 %v395
  %437 = vmatpush.bf16.msra.mxu0 %v394
  %438 = vmatmul.bf16.gmra.mxu0 %v91
  %v439 = vpop.f32.mrf.mxu0
  %v440 = vadd.f32 %v320, %v439
  %v441 = vpop.f32.mrf.mxu0
  %v442 = vadd.f32 %v320, %v441
  %443 = vmatmul.bf16.gmra.mxu0 %v94
  %v444 = vpop.f32.mrf.mxu0
  %v445 = vadd.f32 %v320, %v444
  %v446 = vpop.f32.mrf.mxu0
  %v447 = vadd.f32 %v320, %v446
  %448 = vdwg.mxu0
  %449 = vmatpush.bf16.msra.mxu0 %v409
  %450 = vmatpush.bf16.msra.mxu0 %v408
  %451 = vmatpush.bf16.msra.mxu0 %v407
  %452 = vmatpush.bf16.msra.mxu0 %v406
  %453 = vmatpush.bf16.msra.mxu0 %v405
  %454 = vmatpush.bf16.msra.mxu0 %v404
  %455 = vmatpush.bf16.msra.mxu0 %v403
  %456 = vmatpush.bf16.msra.mxu0 %v402
  %457 = vmatmul.bf16.gmra.mxu0 %v92
  %v458 = vpop.f32.mrf.mxu0
  %v459 = vadd.f32 %v440, %v458
  %v460 = vpop.f32.mrf.mxu0
  %v461 = vadd.f32 %v442, %v460
  %462 = vmatmul.bf16.gmra.mxu0 %v95
  %v463 = vpop.f32.mrf.mxu0
  %v464 = vadd.f32 %v445, %v463
  %v465 = vpop.f32.mrf.mxu0
  %v466 = vadd.f32 %v447, %v465
  %467 = vdwg.mxu0
  %468 = vmatpush.bf16.msra.mxu0 0
  %469 = vmatpush.bf16.msra.mxu0 0
  %470 = vmatpush.bf16.msra.mxu0 0
  %471 = vmatpush.bf16.msra.mxu0 0
  %472 = vmatpush.bf16.msra.mxu0 0
  %473 = vmatpush.bf16.msra.mxu0 0
  %474 = vmatpush.bf16.msra.mxu0 %v411
  %475 = vmatpush.bf16.msra.mxu0 %v410
  %476 = vmatmul.bf16.gmra.mxu0 %v211
  %v477 = vpop.f32.mrf.mxu0
  %v478 = vadd.f32 %v459, %v477
  %v479 = vpop.f32.mrf.mxu0
  %v480 = vadd.f32 %v461, %v479
  %481 = vmatmul.bf16.gmra.mxu0 %v214
  %v482 = vpop.f32.mrf.mxu0
  %v483 = vadd.f32 %v464, %v482
  %v484 = vpop.f32.mrf.mxu0
  %v485 = vadd.f32 %v466, %v484
  %486 = vdwg.mxu0
  %487 = vst.msk [vmem:[%s6] sm:$0xff] %vm277, %v478
  %488 = vst.msk [vmem:[%s6 + $0x8] sm:$0xff] %vm277, %v480
  %489 = vst.msk [vmem:[%s6 + $0x10] sm:$0xff] %vm277, %v483
  %490 = vst.msk [vmem:[%s6 + $0x18] sm:$0xff] %vm277, %v485
  // Predicated region
  $region22: #{forward.28} parent=0 // pred_check
    _
  $region23: #{forward.28} parent=0 // pred_check_branch
    %492 = sbr.rel (0) target = $region25
  $region24: #{forward.28} parent=0 // pred_region
    _
  $region25: #{forward.28} parent=0 // pred_fallthru
    _
  // Predicated region
  $region26: #{forward.28} parent=0 // pred_check
    _
  $region27: #{forward.28} parent=0 // pred_check_branch
    %494 = sbr.rel (0) target = $region29
  $region28: #{forward.28} parent=0 // pred_region
    _
  $region29: #{forward.28} parent=0 // pred_fallthru
    _
  // Predicated region
  $region30: #{forward.28} parent=0 // pred_check
    _
  $region31: #{forward.28} parent=0 // pred_check_branch
    %496 = sbr.rel (0) target = $region33
  $region32: #{forward.28} parent=0 // pred_region
    _
  $region33: #{forward.28} parent=0 // pred_fallthru
    _
  // Predicated region
  $region34: #{forward.28} parent=0 // pred_check
    _
  $region35: #{forward.28} parent=0 // pred_check_branch
    %498 = sbr.rel (0) target = $region37
  $region36: #{forward.28} parent=0 // pred_region
    _
  $region37: #{forward.28} parent=0 // pred_fallthru
    _

// kernel: forward.29
$region0: #{forward.29}
  #allocation0 [shape = 'u32[]', space=smem, size = 0x4, offset = 0x4, fixed_abs, tag = 'smem constant byte address 0x4 - core index']
  #allocation1 [shape = 'u32[72,128]{1,0:T(1,128)}', space=vmem, size = 0x9000, scoped, tag = 'internal scratch']
  %s0 = inlined_call_operand.vmem [shape: bf16[32,576], index: 0, kind: input, shape index: {}]
  %s1 = inlined_call_operand.vmem [shape: bf16[576,64], index: 1, kind: input, shape index: {}]
  %s2 = inlined_call_operand.vmem [shape: f32[1,64], index: 2, kind: input, shape index: {}]
  %s3 = inlined_call_operand.vmem [shape: f32[32,64], index: 3, kind: input, shape index: {}]
  %s4 = inlined_call_operand.vmem [shape: f32[32,64], index: 4, kind: output, shape index: {}]
  %s5 = sld [smem:[#allocation0]]
  $region26: #{forward.29} parent=0
    _
  %s7 = ssub.s32 1, %s5
  %s8 = scalar_select 0, %s7, %s5
  // Predicated region
  $region2: #{forward.29} parent=0 // pred_check
    _
  $region3: #{forward.29} parent=0 // pred_check_branch
    %10 = sbr.rel (0) target = $region5
  $region4: #{forward.29} parent=0 // pred_region
    _
  $region5: #{forward.29} parent=0 // pred_fallthru
    _
  // Predicated region
  $region6: #{forward.29} parent=0 // pred_check
    _
  $region7: #{forward.29} parent=0 // pred_check_branch
    %12 = sbr.rel (0) target = $region9
  $region8: #{forward.29} parent=0 // pred_region
    _
  $region9: #{forward.29} parent=0 // pred_fallthru
    _
  // Predicated region
  $region10: #{forward.29} parent=0 // pred_check
    _
  $region11: #{forward.29} parent=0 // pred_check_branch
    %14 = sbr.rel (0) target = $region13
  $region12: #{forward.29} parent=0 // pred_region
    _
  $region13: #{forward.29} parent=0 // pred_fallthru
    _
  // Predicated region
  $region14: #{forward.29} parent=0 // pred_check
    _
  $region15: #{forward.29} parent=0 // pred_check_branch
    %16 = sbr.rel (0) target = $region17
  $region16: #{forward.29} parent=0 // pred_region
    _
  $region17: #{forward.29} parent=0 // pred_fallthru
    _
  %v18 = vld [vmem:[%s0] sm:$0xff]
  %v19 = vld [vmem:[%s0 + $0x8] sm:$0xff]
  %v20 = vld [vmem:[%s0 + $0x10] sm:$0xf]
  %v21 = vld [vmem:[%s0 + $0x14] sm:$0xff]
  %v22 = vld [vmem:[%s0 + $0x1c] sm:$0xff]
  %v23 = vld [vmem:[%s0 + $0x24] sm:$0xf]
  %v24 = vld [vmem:[%s0 + $0x28] sm:$0xff]
  %v25 = vld [vmem:[%s0 + $0x30] sm:$0xff]
  %v26 = vld [vmem:[%s0 + $0x38] sm:$0xf]
  %v27 = vld [vmem:[%s0 + $0x3c] sm:$0xff]
  %v28 = vld [vmem:[%s0 + $0x44] sm:$0xff]
  %v29 = vld [vmem:[%s0 + $0x4c] sm:$0xf]
  %v30 = vld [vmem:[%s1] sm:$0xf]
  %v31 = vld [vmem:[%s1 + $0x4] sm:$0xf]
  %v32 = vld [vmem:[%s1 + $0x8] sm:$0xf]
  %v33 = vld [vmem:[%s1 + $0xc] sm:$0xf]
  %v34 = vld [vmem:[%s1 + $0x10] sm:$0xf]
  %v35 = vld [vmem:[%s1 + $0x14] sm:$0xf]
  %v36 = vld [vmem:[%s1 + $0x18] sm:$0xf]
  %v37 = vld [vmem:[%s1 + $0x1c] sm:$0xf]
  %v38 = vld [vmem:[%s1 + $0x20] sm:$0xf]
  %v39 = vld [vmem:[%s1 + $0x24] sm:$0xf]
  %v40 = vld [vmem:[%s1 + $0x28] sm:$0xf]
  %v41 = vld [vmem:[%s1 + $0x2c] sm:$0xf]
  %v42 = vld [vmem:[%s1 + $0x30] sm:$0xf]
  %v43 = vld [vmem:[%s1 + $0x34] sm:$0xf]
  %v44 = vld [vmem:[%s1 + $0x38] sm:$0xf]
  %v45 = vld [vmem:[%s1 + $0x3c] sm:$0xf]
  %v46 = vld [vmem:[%s1 + $0x40] sm:$0xf]
  %v47 = vld [vmem:[%s1 + $0x44] sm:$0xf]
  %v48 = vld [vmem:[%s1 + $0x48] sm:$0xf]
  %v49 = vld [vmem:[%s1 + $0x4c] sm:$0xf]
  %v50 = vld [vmem:[%s1 + $0x50] sm:$0xf]
  %v51 = vld [vmem:[%s1 + $0x54] sm:$0xf]
  %v52 = vld [vmem:[%s1 + $0x58] sm:$0xf]
  %v53 = vld [vmem:[%s1 + $0x5c] sm:$0xf]
  %v54 = vld [vmem:[%s1 + $0x60] sm:$0xf]
  %v55 = vld [vmem:[%s1 + $0x64] sm:$0xf]
  %v56 = vld [vmem:[%s1 + $0x68] sm:$0xf]
  %v57 = vld [vmem:[%s1 + $0x6c] sm:$0xf]
  %v58 = vld [vmem:[%s1 + $0x70] sm:$0xf]
  %v59 = vld [vmem:[%s1 + $0x74] sm:$0xf]
  %v60 = vld [vmem:[%s1 + $0x78] sm:$0xf]
  %v61 = vld [vmem:[%s1 + $0x7c] sm:$0xf]
  %v62 = vld [vmem:[%s1 + $0x80] sm:$0xf]
  %v63 = vld [vmem:[%s1 + $0x84] sm:$0xf]
  %v64 = vld [vmem:[%s1 + $0x88] sm:$0xf]
  %v65 = vld [vmem:[%s1 + $0x8c] sm:$0xf]
  %v66 = vld [vmem:[%s1 + $0x90] sm:$0xf]
  %v67 = vld [vmem:[%s1 + $0x94] sm:$0xf]
  %v68 = vld [vmem:[%s1 + $0x98] sm:$0xf]
  %v69 = vld [vmem:[%s1 + $0x9c] sm:$0xf]
  %v70 = vld [vmem:[%s1 + $0xa0] sm:$0xf]
  %v71 = vld [vmem:[%s1 + $0xa4] sm:$0xf]
  %v72 = vld [vmem:[%s1 + $0xa8] sm:$0xf]
  %v73 = vld [vmem:[%s1 + $0xac] sm:$0xf]
  %v74 = vld [vmem:[%s1 + $0xb0] sm:$0xf]
  %v75 = vld [vmem:[%s1 + $0xb4] sm:$0xf]
  %v76 = vld [vmem:[%s1 + $0xb8] sm:$0xf]
  %v77 = vld [vmem:[%s1 + $0xbc] sm:$0xf]
  %v78 = vld [vmem:[%s1 + $0xc0] sm:$0xf]
  %v79 = vld [vmem:[%s1 + $0xc4] sm:$0xf]
  %v80 = vld [vmem:[%s1 + $0xc8] sm:$0xf]
  %v81 = vld [vmem:[%s1 + $0xcc] sm:$0xf]
  %v82 = vld [vmem:[%s1 + $0xd0] sm:$0xf]
  %v83 = vld [vmem:[%s1 + $0xd4] sm:$0xf]
  %v84 = vld [vmem:[%s1 + $0xd8] sm:$0xf]
  %v85 = vld [vmem:[%s1 + $0xdc] sm:$0xf]
  %v86 = vld [vmem:[%s1 + $0xe0] sm:$0xf]
  %v87 = vld [vmem:[%s1 + $0xe4] sm:$0xf]
  %v88 = vld [vmem:[%s1 + $0xe8] sm:$0xf]
  %v89 = vld [vmem:[%s1 + $0xec] sm:$0xf]
  %v90 = vld [vmem:[%s1 + $0xf0] sm:$0xf]
  %v91 = vld [vmem:[%s1 + $0xf4] sm:$0xf]
  %v92 = vld [vmem:[%s1 + $0xf8] sm:$0xf]
  %v93 = vld [vmem:[%s1 + $0xfc] sm:$0xf]
  %v94 = vld [vmem:[%s1 + $0x100] sm:$0xf]
  %v95 = vld [vmem:[%s1 + $0x104] sm:$0xf]
  %v96 = vld [vmem:[%s1 + $0x108] sm:$0xf]
  %v97 = vld [vmem:[%s1 + $0x10c] sm:$0xf]
  %v98 = vld [vmem:[%s1 + $0x110] sm:$0xf]
  %v99 = vld [vmem:[%s1 + $0x114] sm:$0xf]
  %v100 = vld [vmem:[%s1 + $0x118] sm:$0xf]
  %v101 = vld [vmem:[%s1 + $0x11c] sm:$0xf]
  %v102 = vld [vmem:[%s2] sm:$0x1]
  %v104 = vperm.slane %v102, 0
  %v118 = vunpack.c.l.b16 %v18
  %v119 = vunpack.c.h.b16 %v18
  %v120 = vunpack.c.l.b16 %v19
  %v121 = vunpack.c.h.b16 %v19
  %v122 = vunpack.c.l.b16 %v20
  %v123 = vunpack.c.l.b16 %v21
  %v124 = vunpack.c.h.b16 %v21
  %v125 = vunpack.c.l.b16 %v22
  %v126 = vunpack.c.h.b16 %v22
  %v127 = vunpack.c.l.b16 %v23
  %v128 = vunpack.c.l.b16 %v24
  %v129 = vunpack.c.h.b16 %v24
  %v130 = vunpack.c.l.b16 %v25
  %v131 = vunpack.c.h.b16 %v25
  %v132 = vunpack.c.l.b16 %v26
  %v133 = vunpack.c.l.b16 %v27
  %v134 = vunpack.c.h.b16 %v27
  %v135 = vunpack.c.l.b16 %v28
  %v136 = vunpack.c.h.b16 %v28
  %v137 = vunpack.c.l.b16 %v29
  %v138 = vpack.c.b16 %v123, %v118
  %v139 = vpack.c.b16 %v124, %v119
  %v140 = vpack.c.b16 %v125, %v120
  %v141 = vpack.c.b16 %v126, %v121
  %v142 = vpack.c.b16 %v127, %v122
  %v143 = vpack.c.b16 %v133, %v128
  %v144 = vpack.c.b16 %v134, %v129
  %v145 = vpack.c.b16 %v135, %v130
  %v146 = vpack.c.b16 %v136, %v131
  %v147 = vpack.c.b16 %v137, %v132
  %v228 = vunpack.c.l.b16 %v30
  %v229 = vunpack.c.l.b16 %v31
  %v230 = vunpack.c.l.b16 %v32
  %v231 = vunpack.c.l.b16 %v33
  %v232 = vunpack.c.l.b16 %v34
  %v233 = vunpack.c.l.b16 %v35
  %v234 = vunpack.c.l.b16 %v36
  %v235 = vunpack.c.l.b16 %v37
  %v236 = vunpack.c.l.b16 %v38
  %v237 = vunpack.c.l.b16 %v39
  %v238 = vunpack.c.l.b16 %v40
  %v239 = vunpack.c.l.b16 %v41
  %v240 = vunpack.c.l.b16 %v42
  %v241 = vunpack.c.l.b16 %v43
  %v242 = vunpack.c.l.b16 %v44
  %v243 = vunpack.c.l.b16 %v45
  %v244 = vunpack.c.l.b16 %v46
  %v245 = vunpack.c.l.b16 %v47
  %v246 = vunpack.c.l.b16 %v48
  %v247 = vunpack.c.l.b16 %v49
  %v248 = vunpack.c.l.b16 %v50
  %v249 = vunpack.c.l.b16 %v51
  %v250 = vunpack.c.l.b16 %v52
  %v251 = vunpack.c.l.b16 %v53
  %v252 = vunpack.c.l.b16 %v54
  %v253 = vunpack.c.l.b16 %v55
  %v254 = vunpack.c.l.b16 %v56
  %v255 = vunpack.c.l.b16 %v57
  %v256 = vunpack.c.l.b16 %v58
  %v257 = vunpack.c.l.b16 %v59
  %v258 = vunpack.c.l.b16 %v60
  %v259 = vunpack.c.l.b16 %v61
  %v260 = vunpack.c.l.b16 %v62
  %v261 = vunpack.c.l.b16 %v63
  %v262 = vunpack.c.l.b16 %v64
  %v263 = vunpack.c.l.b16 %v65
  %v264 = vunpack.c.l.b16 %v66
  %v265 = vunpack.c.l.b16 %v67
  %v266 = vunpack.c.l.b16 %v68
  %v267 = vunpack.c.l.b16 %v69
  %v268 = vunpack.c.l.b16 %v70
  %v269 = vunpack.c.l.b16 %v71
  %v270 = vunpack.c.l.b16 %v72
  %v271 = vunpack.c.l.b16 %v73
  %v272 = vunpack.c.l.b16 %v74
  %v273 = vunpack.c.l.b16 %v75
  %v274 = vunpack.c.l.b16 %v76
  %v275 = vunpack.c.l.b16 %v77
  %v276 = vunpack.c.l.b16 %v78
  %v277 = vunpack.c.l.b16 %v79
  %v278 = vunpack.c.l.b16 %v80
  %v279 = vunpack.c.l.b16 %v81
  %v280 = vunpack.c.l.b16 %v82
  %v281 = vunpack.c.l.b16 %v83
  %v282 = vunpack.c.l.b16 %v84
  %v283 = vunpack.c.l.b16 %v85
  %v284 = vunpack.c.l.b16 %v86
  %v285 = vunpack.c.l.b16 %v87
  %v286 = vunpack.c.l.b16 %v88
  %v287 = vunpack.c.l.b16 %v89
  %v288 = vunpack.c.l.b16 %v90
  %v289 = vunpack.c.l.b16 %v91
  %v290 = vunpack.c.l.b16 %v92
  %v291 = vunpack.c.l.b16 %v93
  %v292 = vunpack.c.l.b16 %v94
  %v293 = vunpack.c.l.b16 %v95
  %v294 = vunpack.c.l.b16 %v96
  %v295 = vunpack.c.l.b16 %v97
  %v296 = vunpack.c.l.b16 %v98
  %v297 = vunpack.c.l.b16 %v99
  %v298 = vunpack.c.l.b16 %v100
  %v299 = vunpack.c.l.b16 %v101
  %v300 = vpack.c.b16 %v229, %v228
  %v301 = vpack.c.b16 %v231, %v230
  %v302 = vpack.c.b16 %v233, %v232
  %v303 = vpack.c.b16 %v235, %v234
  %v304 = vpack.c.b16 %v237, %v236
  %v305 = vpack.c.b16 %v239, %v238
  %v306 = vpack.c.b16 %v241, %v240
  %v307 = vpack.c.b16 %v243, %v242
  %v308 = vpack.c.b16 %v245, %v244
  %v309 = vpack.c.b16 %v247, %v246
  %v310 = vpack.c.b16 %v249, %v248
  %v311 = vpack.c.b16 %v251, %v250
  %v312 = vpack.c.b16 %v253, %v252
  %v313 = vpack.c.b16 %v255, %v254
  %v314 = vpack.c.b16 %v257, %v256
  %v315 = vpack.c.b16 %v259, %v258
  %v316 = vpack.c.b16 %v261, %v260
  %v317 = vpack.c.b16 %v263, %v262
  %v318 = vpack.c.b16 %v265, %v264
  %v319 = vpack.c.b16 %v267, %v266
  %v320 = vpack.c.b16 %v269, %v268
  %v321 = vpack.c.b16 %v271, %v270
  %v322 = vpack.c.b16 %v273, %v272
  %v323 = vpack.c.b16 %v275, %v274
  %v324 = vpack.c.b16 %v277, %v276
  %v325 = vpack.c.b16 %v279, %v278
  %v326 = vpack.c.b16 %v281, %v280
  %v327 = vpack.c.b16 %v283, %v282
  %v328 = vpack.c.b16 %v285, %v284
  %v329 = vpack.c.b16 %v287, %v286
  %v330 = vpack.c.b16 %v289, %v288
  %v331 = vpack.c.b16 %v291, %v290
  %v332 = vpack.c.b16 %v293, %v292
  %v333 = vpack.c.b16 %v295, %v294
  %v334 = vpack.c.b16 %v297, %v296
  %v335 = vpack.c.b16 %v299, %v298
  %vm372 = vcmask 523264
  %v374 = vsel %vm372, %v142, 0
  %v377 = vsel %vm372, %v147, 0
  %379 = vmatpush.bf16.msra.mxu0 %v307
  %380 = vmatpush.bf16.msra.mxu0 %v306
  %381 = vmatpush.bf16.msra.mxu0 %v305
  %382 = vmatpush.bf16.msra.mxu0 %v304
  %383 = vmatpush.bf16.msra.mxu0 %v303
  %384 = vmatpush.bf16.msra.mxu0 %v302
  %385 = vmatpush.bf16.msra.mxu0 %v301
  %386 = vmatpush.bf16.msra.mxu0 %v300
  %387 = vmatmul.bf16.gmra.mxu0 %v138
  %v388 = vpop.f32.mrf.mxu0
  %v389 = vadd.f32 %v104, %v388
  %v390 = vpop.f32.mrf.mxu0
  %v391 = vadd.f32 %v104, %v390
  %392 = vmatmul.bf16.gmra.mxu0 %v143
  %v393 = vpop.f32.mrf.mxu0
  %v394 = vadd.f32 %v104, %v393
  %v395 = vpop.f32.mrf.mxu0
  %v396 = vadd.f32 %v104, %v395
  %397 = vdwg.mxu0
  %398 = vmatpush.bf16.msra.mxu0 %v315
  %399 = vmatpush.bf16.msra.mxu0 %v314
  %400 = vmatpush.bf16.msra.mxu0 %v313
  %401 = vmatpush.bf16.msra.mxu0 %v312
  %402 = vmatpush.bf16.msra.mxu0 %v311
  %403 = vmatpush.bf16.msra.mxu0 %v310
  %404 = vmatpush.bf16.msra.mxu0 %v309
  %405 = vmatpush.bf16.msra.mxu0 %v308
  %406 = vmatmul.bf16.gmra.mxu0 %v139
  %v407 = vpop.f32.mrf.mxu0
  %v408 = vadd.f32 %v389, %v407
  %v409 = vpop.f32.mrf.mxu0
  %v410 = vadd.f32 %v391, %v409
  %411 = vmatmul.bf16.gmra.mxu0 %v144
  %v412 = vpop.f32.mrf.mxu0
  %v413 = vadd.f32 %v394, %v412
  %v414 = vpop.f32.mrf.mxu0
  %v415 = vadd.f32 %v396, %v414
  %416 = vdwg.mxu0
  %417 = vmatpush.bf16.msra.mxu0 %v323
  %418 = vmatpush.bf16.msra.mxu0 %v322
  %419 = vmatpush.bf16.msra.mxu0 %v321
  %420 = vmatpush.bf16.msra.mxu0 %v320
  %421 = vmatpush.bf16.msra.mxu0 %v319
  %422 = vmatpush.bf16.msra.mxu0 %v318
  %423 = vmatpush.bf16.msra.mxu0 %v317
  %424 = vmatpush.bf16.msra.mxu0 %v316
  %425 = vmatmul.bf16.gmra.mxu0 %v140
  %v426 = vpop.f32.mrf.mxu0
  %v427 = vadd.f32 %v408, %v426
  %v428 = vpop.f32.mrf.mxu0
  %v429 = vadd.f32 %v410, %v428
  %430 = vmatmul.bf16.gmra.mxu0 %v145
  %v431 = vpop.f32.mrf.mxu0
  %v432 = vadd.f32 %v413, %v431
  %v433 = vpop.f32.mrf.mxu0
  %v434 = vadd.f32 %v415, %v433
  %435 = vdwg.mxu0
  %436 = vmatpush.bf16.msra.mxu0 %v331
  %437 = vmatpush.bf16.msra.mxu0 %v330
  %438 = vmatpush.bf16.msra.mxu0 %v329
  %439 = vmatpush.bf16.msra.mxu0 %v328
  %440 = vmatpush.bf16.msra.mxu0 %v327
  %441 = vmatpush.bf16.msra.mxu0 %v326
  %442 = vmatpush.bf16.msra.mxu0 %v325
  %443 = vmatpush.bf16.msra.mxu0 %v324
  %444 = vmatmul.bf16.gmra.mxu0 %v141
  %v445 = vpop.f32.mrf.mxu0
  %v446 = vadd.f32 %v427, %v445
  %v447 = vpop.f32.mrf.mxu0
  %v448 = vadd.f32 %v429, %v447
  %449 = vmatmul.bf16.gmra.mxu0 %v146
  %v450 = vpop.f32.mrf.mxu0
  %v451 = vadd.f32 %v432, %v450
  %v452 = vpop.f32.mrf.mxu0
  %v453 = vadd.f32 %v434, %v452
  %454 = vdwg.mxu0
  %455 = vmatpush.bf16.msra.mxu0 0
  %456 = vmatpush.bf16.msra.mxu0 0
  %457 = vmatpush.bf16.msra.mxu0 0
  %458 = vmatpush.bf16.msra.mxu0 0
  %459 = vmatpush.bf16.msra.mxu0 %v335
  %460 = vmatpush.bf16.msra.mxu0 %v334
  %461 = vmatpush.bf16.msra.mxu0 %v333
  %462 = vmatpush.bf16.msra.mxu0 %v332
  %463 = vmatmul.bf16.gmra.mxu0 %v374
  %v464 = vpop.f32.mrf.mxu0
  %v465 = vadd.f32 %v446, %v464
  %v466 = vpop.f32.mrf.mxu0
  %v467 = vadd.f32 %v448, %v466
  %468 = vmatmul.bf16.gmra.mxu0 %v377
  %v469 = vpop.f32.mrf.mxu0
  %v470 = vadd.f32 %v451, %v469
  %v471 = vpop.f32.mrf.mxu0
  %v472 = vadd.f32 %v453, %v471
  %473 = vdwg.mxu0
  %v474 = vld [vmem:[%s3] sm:$0xff]
  %v475 = vld [vmem:[%s3 + $0x8] sm:$0xff]
  %v476 = vld [vmem:[%s3 + $0x10] sm:$0xff]
  %v477 = vld [vmem:[%s3 + $0x18] sm:$0xff]
  %v478 = vadd.f32 %v465, %v474
  %v479 = vadd.f32 %v467, %v475
  %v480 = vadd.f32 %v470, %v476
  %v481 = vadd.f32 %v472, %v477
  %v482 = vmax.f32 %v478, 0.0
  %v483 = vmax.f32 %v479, 0.0
  %v484 = vmax.f32 %v480, 0.0
  %v485 = vmax.f32 %v481, 0.0
  %486 = vst.msk [vmem:[%s4] sm:$0xff] %vm372, %v482
  %487 = vst.msk [vmem:[%s4 + $0x8] sm:$0xff] %vm372, %v483
  %488 = vst.msk [vmem:[%s4 + $0x10] sm:$0xff] %vm372, %v484
  %489 = vst.msk [vmem:[%s4 + $0x18] sm:$0xff] %vm372, %v485
  // Predicated region
  $region18: #{forward.29} parent=0 // pred_check
    _
  $region19: #{forward.29} parent=0 // pred_check_branch
    %491 = sbr.rel (0) target = $region21
  $region20: #{forward.29} parent=0 // pred_region
    _
  $region21: #{forward.29} parent=0 // pred_fallthru
    _
  // Predicated region
  $region22: #{forward.29} parent=0 // pred_check
    _
  $region23: #{forward.29} parent=0 // pred_check_branch
    %493 = sbr.rel (0) target = $region25
  $region24: #{forward.29} parent=0 // pred_region
    _
  $region25: #{forward.29} parent=0 // pred_fallthru
    _

// kernel: forward.30
$region0: #{forward.30}
  #allocation0 [shape = 'u32[]', space=smem, size = 0x4, offset = 0x4, fixed_abs, tag = 'smem constant byte address 0x4 - core index']
  #allocation1 [shape = 'u32[72,128]{1,0:T(1,128)}', space=vmem, size = 0x9000, scoped, tag = 'internal scratch']
  %s0 = inlined_call_operand.vmem [shape: bf16[32,576], index: 0, kind: input, shape index: {}]
  %s1 = inlined_call_operand.vmem [shape: bf16[576,64], index: 1, kind: input, shape index: {}]
  %s2 = inlined_call_operand.vmem [shape: f32[1,64], index: 2, kind: input, shape index: {}]
  %s3 = inlined_call_operand.vmem [shape: f32[32,64], index: 3, kind: output, shape index: {}]
  %s4 = sld [smem:[#allocation0]]
  $region22: #{forward.30} parent=0
    _
  %s6 = ssub.s32 1, %s4
  %s7 = scalar_select 0, %s6, %s4
  // Predicated region
  $region2: #{forward.30} parent=0 // pred_check
    _
  $region3: #{forward.30} parent=0 // pred_check_branch
    %9 = sbr.rel (0) target = $region5
  $region4: #{forward.30} parent=0 // pred_region
    _
  $region5: #{forward.30} parent=0 // pred_fallthru
    _
  // Predicated region
  $region6: #{forward.30} parent=0 // pred_check
    _
  $region7: #{forward.30} parent=0 // pred_check_branch
    %11 = sbr.rel (0) target = $region9
  $region8: #{forward.30} parent=0 // pred_region
    _
  $region9: #{forward.30} parent=0 // pred_fallthru
    _
  // Predicated region
  $region10: #{forward.30} parent=0 // pred_check
    _
  $region11: #{forward.30} parent=0 // pred_check_branch
    %13 = sbr.rel (0) target = $region13
  $region12: #{forward.30} parent=0 // pred_region
    _
  $region13: #{forward.30} parent=0 // pred_fallthru
    _
  %v15 = vld [vmem:[%s0] sm:$0xff]
  %v16 = vld [vmem:[%s0 + $0x8] sm:$0xff]
  %v17 = vld [vmem:[%s0 + $0x10] sm:$0xf]
  %v18 = vld [vmem:[%s0 + $0x14] sm:$0xff]
  %v19 = vld [vmem:[%s0 + $0x1c] sm:$0xff]
  %v20 = vld [vmem:[%s0 + $0x24] sm:$0xf]
  %v21 = vld [vmem:[%s0 + $0x28] sm:$0xff]
  %v22 = vld [vmem:[%s0 + $0x30] sm:$0xff]
  %v23 = vld [vmem:[%s0 + $0x38] sm:$0xf]
  %v24 = vld [vmem:[%s0 + $0x3c] sm:$0xff]
  %v25 = vld [vmem:[%s0 + $0x44] sm:$0xff]
  %v26 = vld [vmem:[%s0 + $0x4c] sm:$0xf]
  %v27 = vld [vmem:[%s1] sm:$0xf]
  %v28 = vld [vmem:[%s1 + $0x4] sm:$0xf]
  %v29 = vld [vmem:[%s1 + $0x8] sm:$0xf]
  %v30 = vld [vmem:[%s1 + $0xc] sm:$0xf]
  %v31 = vld [vmem:[%s1 + $0x10] sm:$0xf]
  %v32 = vld [vmem:[%s1 + $0x14] sm:$0xf]
  %v33 = vld [vmem:[%s1 + $0x18] sm:$0xf]
  %v34 = vld [vmem:[%s1 + $0x1c] sm:$0xf]
  %v35 = vld [vmem:[%s1 + $0x20] sm:$0xf]
  %v36 = vld [vmem:[%s1 + $0x24] sm:$0xf]
  %v37 = vld [vmem:[%s1 + $0x28] sm:$0xf]
  %v38 = vld [vmem:[%s1 + $0x2c] sm:$0xf]
  %v39 = vld [vmem:[%s1 + $0x30] sm:$0xf]
  %v40 = vld [vmem:[%s1 + $0x34] sm:$0xf]
  %v41 = vld [vmem:[%s1 + $0x38] sm:$0xf]
  %v42 = vld [vmem:[%s1 + $0x3c] sm:$0xf]
  %v43 = vld [vmem:[%s1 + $0x40] sm:$0xf]
  %v44 = vld [vmem:[%s1 + $0x44] sm:$0xf]
  %v45 = vld [vmem:[%s1 + $0x48] sm:$0xf]
  %v46 = vld [vmem:[%s1 + $0x4c] sm:$0xf]
  %v47 = vld [vmem:[%s1 + $0x50] sm:$0xf]
  %v48 = vld [vmem:[%s1 + $0x54] sm:$0xf]
  %v49 = vld [vmem:[%s1 + $0x58] sm:$0xf]
  %v50 = vld [vmem:[%s1 + $0x5c] sm:$0xf]
  %v51 = vld [vmem:[%s1 + $0x60] sm:$0xf]
  %v52 = vld [vmem:[%s1 + $0x64] sm:$0xf]
  %v53 = vld [vmem:[%s1 + $0x68] sm:$0xf]
  %v54 = vld [vmem:[%s1 + $0x6c] sm:$0xf]
  %v55 = vld [vmem:[%s1 + $0x70] sm:$0xf]
  %v56 = vld [vmem:[%s1 + $0x74] sm:$0xf]
  %v57 = vld [vmem:[%s1 + $0x78] sm:$0xf]
  %v58 = vld [vmem:[%s1 + $0x7c] sm:$0xf]
  %v59 = vld [vmem:[%s1 + $0x80] sm:$0xf]
  %v60 = vld [vmem:[%s1 + $0x84] sm:$0xf]
  %v61 = vld [vmem:[%s1 + $0x88] sm:$0xf]
  %v62 = vld [vmem:[%s1 + $0x8c] sm:$0xf]
  %v63 = vld [vmem:[%s1 + $0x90] sm:$0xf]
  %v64 = vld [vmem:[%s1 + $0x94] sm:$0xf]
  %v65 = vld [vmem:[%s1 + $0x98] sm:$0xf]
  %v66 = vld [vmem:[%s1 + $0x9c] sm:$0xf]
  %v67 = vld [vmem:[%s1 + $0xa0] sm:$0xf]
  %v68 = vld [vmem:[%s1 + $0xa4] sm:$0xf]
  %v69 = vld [vmem:[%s1 + $0xa8] sm:$0xf]
  %v70 = vld [vmem:[%s1 + $0xac] sm:$0xf]
  %v71 = vld [vmem:[%s1 + $0xb0] sm:$0xf]
  %v72 = vld [vmem:[%s1 + $0xb4] sm:$0xf]
  %v73 = vld [vmem:[%s1 + $0xb8] sm:$0xf]
  %v74 = vld [vmem:[%s1 + $0xbc] sm:$0xf]
  %v75 = vld [vmem:[%s1 + $0xc0] sm:$0xf]
  %v76 = vld [vmem:[%s1 + $0xc4] sm:$0xf]
  %v77 = vld [vmem:[%s1 + $0xc8] sm:$0xf]
  %v78 = vld [vmem:[%s1 + $0xcc] sm:$0xf]
  %v79 = vld [vmem:[%s1 + $0xd0] sm:$0xf]
  %v80 = vld [vmem:[%s1 + $0xd4] sm:$0xf]
  %v81 = vld [vmem:[%s1 + $0xd8] sm:$0xf]
  %v82 = vld [vmem:[%s1 + $0xdc] sm:$0xf]
  %v83 = vld [vmem:[%s1 + $0xe0] sm:$0xf]
  %v84 = vld [vmem:[%s1 + $0xe4] sm:$0xf]
  %v85 = vld [vmem:[%s1 + $0xe8] sm:$0xf]
  %v86 = vld [vmem:[%s1 + $0xec] sm:$0xf]
  %v87 = vld [vmem:[%s1 + $0xf0] sm:$0xf]
  %v88 = vld [vmem:[%s1 + $0xf4] sm:$0xf]
  %v89 = vld [vmem:[%s1 + $0xf8] sm:$0xf]
  %v90 = vld [vmem:[%s1 + $0xfc] sm:$0xf]
  %v91 = vld [vmem:[%s1 + $0x100] sm:$0xf]
  %v92 = vld [vmem:[%s1 + $0x104] sm:$0xf]
  %v93 = vld [vmem:[%s1 + $0x108] sm:$0xf]
  %v94 = vld [vmem:[%s1 + $0x10c] sm:$0xf]
  %v95 = vld [vmem:[%s1 + $0x110] sm:$0xf]
  %v96 = vld [vmem:[%s1 + $0x114] sm:$0xf]
  %v97 = vld [vmem:[%s1 + $0x118] sm:$0xf]
  %v98 = vld [vmem:[%s1 + $0x11c] sm:$0xf]
  %v99 = vld [vmem:[%s2] sm:$0x1]
  %v101 = vperm.slane %v99, 0
  %v115 = vunpack.c.l.b16 %v15
  %v116 = vunpack.c.h.b16 %v15
  %v117 = vunpack.c.l.b16 %v16
  %v118 = vunpack.c.h.b16 %v16
  %v119 = vunpack.c.l.b16 %v17
  %v120 = vunpack.c.l.b16 %v18
  %v121 = vunpack.c.h.b16 %v18
  %v122 = vunpack.c.l.b16 %v19
  %v123 = vunpack.c.h.b16 %v19
  %v124 = vunpack.c.l.b16 %v20
  %v125 = vunpack.c.l.b16 %v21
  %v126 = vunpack.c.h.b16 %v21
  %v127 = vunpack.c.l.b16 %v22
  %v128 = vunpack.c.h.b16 %v22
  %v129 = vunpack.c.l.b16 %v23
  %v130 = vunpack.c.l.b16 %v24
  %v131 = vunpack.c.h.b16 %v24
  %v132 = vunpack.c.l.b16 %v25
  %v133 = vunpack.c.h.b16 %v25
  %v134 = vunpack.c.l.b16 %v26
  %v135 = vpack.c.b16 %v120, %v115
  %v136 = vpack.c.b16 %v121, %v116
  %v137 = vpack.c.b16 %v122, %v117
  %v138 = vpack.c.b16 %v123, %v118
  %v139 = vpack.c.b16 %v124, %v119
  %v140 = vpack.c.b16 %v130, %v125
  %v141 = vpack.c.b16 %v131, %v126
  %v142 = vpack.c.b16 %v132, %v127
  %v143 = vpack.c.b16 %v133, %v128
  %v144 = vpack.c.b16 %v134, %v129
  %v225 = vunpack.c.l.b16 %v27
  %v226 = vunpack.c.l.b16 %v28
  %v227 = vunpack.c.l.b16 %v29
  %v228 = vunpack.c.l.b16 %v30
  %v229 = vunpack.c.l.b16 %v31
  %v230 = vunpack.c.l.b16 %v32
  %v231 = vunpack.c.l.b16 %v33
  %v232 = vunpack.c.l.b16 %v34
  %v233 = vunpack.c.l.b16 %v35
  %v234 = vunpack.c.l.b16 %v36
  %v235 = vunpack.c.l.b16 %v37
  %v236 = vunpack.c.l.b16 %v38
  %v237 = vunpack.c.l.b16 %v39
  %v238 = vunpack.c.l.b16 %v40
  %v239 = vunpack.c.l.b16 %v41
  %v240 = vunpack.c.l.b16 %v42
  %v241 = vunpack.c.l.b16 %v43
  %v242 = vunpack.c.l.b16 %v44
  %v243 = vunpack.c.l.b16 %v45
  %v244 = vunpack.c.l.b16 %v46
  %v245 = vunpack.c.l.b16 %v47
  %v246 = vunpack.c.l.b16 %v48
  %v247 = vunpack.c.l.b16 %v49
  %v248 = vunpack.c.l.b16 %v50
  %v249 = vunpack.c.l.b16 %v51
  %v250 = vunpack.c.l.b16 %v52
  %v251 = vunpack.c.l.b16 %v53
  %v252 = vunpack.c.l.b16 %v54
  %v253 = vunpack.c.l.b16 %v55
  %v254 = vunpack.c.l.b16 %v56
  %v255 = vunpack.c.l.b16 %v57
  %v256 = vunpack.c.l.b16 %v58
  %v257 = vunpack.c.l.b16 %v59
  %v258 = vunpack.c.l.b16 %v60
  %v259 = vunpack.c.l.b16 %v61
  %v260 = vunpack.c.l.b16 %v62
  %v261 = vunpack.c.l.b16 %v63
  %v262 = vunpack.c.l.b16 %v64
  %v263 = vunpack.c.l.b16 %v65
  %v264 = vunpack.c.l.b16 %v66
  %v265 = vunpack.c.l.b16 %v67
  %v266 = vunpack.c.l.b16 %v68
  %v267 = vunpack.c.l.b16 %v69
  %v268 = vunpack.c.l.b16 %v70
  %v269 = vunpack.c.l.b16 %v71
  %v270 = vunpack.c.l.b16 %v72
  %v271 = vunpack.c.l.b16 %v73
  %v272 = vunpack.c.l.b16 %v74
  %v273 = vunpack.c.l.b16 %v75
  %v274 = vunpack.c.l.b16 %v76
  %v275 = vunpack.c.l.b16 %v77
  %v276 = vunpack.c.l.b16 %v78
  %v277 = vunpack.c.l.b16 %v79
  %v278 = vunpack.c.l.b16 %v80
  %v279 = vunpack.c.l.b16 %v81
  %v280 = vunpack.c.l.b16 %v82
  %v281 = vunpack.c.l.b16 %v83
  %v282 = vunpack.c.l.b16 %v84
  %v283 = vunpack.c.l.b16 %v85
  %v284 = vunpack.c.l.b16 %v86
  %v285 = vunpack.c.l.b16 %v87
  %v286 = vunpack.c.l.b16 %v88
  %v287 = vunpack.c.l.b16 %v89
  %v288 = vunpack.c.l.b16 %v90
  %v289 = vunpack.c.l.b16 %v91
  %v290 = vunpack.c.l.b16 %v92
  %v291 = vunpack.c.l.b16 %v93
  %v292 = vunpack.c.l.b16 %v94
  %v293 = vunpack.c.l.b16 %v95
  %v294 = vunpack.c.l.b16 %v96
  %v295 = vunpack.c.l.b16 %v97
  %v296 = vunpack.c.l.b16 %v98
  %v297 = vpack.c.b16 %v226, %v225
  %v298 = vpack.c.b16 %v228, %v227
  %v299 = vpack.c.b16 %v230, %v229
  %v300 = vpack.c.b16 %v232, %v231
  %v301 = vpack.c.b16 %v234, %v233
  %v302 = vpack.c.b16 %v236, %v235
  %v303 = vpack.c.b16 %v238, %v237
  %v304 = vpack.c.b16 %v240, %v239
  %v305 = vpack.c.b16 %v242, %v241
  %v306 = vpack.c.b16 %v244, %v243
  %v307 = vpack.c.b16 %v246, %v245
  %v308 = vpack.c.b16 %v248, %v247
  %v309 = vpack.c.b16 %v250, %v249
  %v310 = vpack.c.b16 %v252, %v251
  %v311 = vpack.c.b16 %v254, %v253
  %v312 = vpack.c.b16 %v256, %v255
  %v313 = vpack.c.b16 %v258, %v257
  %v314 = vpack.c.b16 %v260, %v259
  %v315 = vpack.c.b16 %v262, %v261
  %v316 = vpack.c.b16 %v264, %v263
  %v317 = vpack.c.b16 %v266, %v265
  %v318 = vpack.c.b16 %v268, %v267
  %v319 = vpack.c.b16 %v270, %v269
  %v320 = vpack.c.b16 %v272, %v271
  %v321 = vpack.c.b16 %v274, %v273
  %v322 = vpack.c.b16 %v276, %v275
  %v323 = vpack.c.b16 %v278, %v277
  %v324 = vpack.c.b16 %v280, %v279
  %v325 = vpack.c.b16 %v282, %v281
  %v326 = vpack.c.b16 %v284, %v283
  %v327 = vpack.c.b16 %v286, %v285
  %v328 = vpack.c.b16 %v288, %v287
  %v329 = vpack.c.b16 %v290, %v289
  %v330 = vpack.c.b16 %v292, %v291
  %v331 = vpack.c.b16 %v294, %v293
  %v332 = vpack.c.b16 %v296, %v295
  %vm369 = vcmask 523264
  %v371 = vsel %vm369, %v139, 0
  %v374 = vsel %vm369, %v144, 0
  %376 = vmatpush.bf16.msra.mxu0 %v304
  %377 = vmatpush.bf16.msra.mxu0 %v303
  %378 = vmatpush.bf16.msra.mxu0 %v302
  %379 = vmatpush.bf16.msra.mxu0 %v301
  %380 = vmatpush.bf16.msra.mxu0 %v300
  %381 = vmatpush.bf16.msra.mxu0 %v299
  %382 = vmatpush.bf16.msra.mxu0 %v298
  %383 = vmatpush.bf16.msra.mxu0 %v297
  %384 = vmatmul.bf16.gmra.mxu0 %v135
  %v385 = vpop.f32.mrf.mxu0
  %v386 = vadd.f32 %v101, %v385
  %v387 = vpop.f32.mrf.mxu0
  %v388 = vadd.f32 %v101, %v387
  %389 = vmatmul.bf16.gmra.mxu0 %v140
  %v390 = vpop.f32.mrf.mxu0
  %v391 = vadd.f32 %v101, %v390
  %v392 = vpop.f32.mrf.mxu0
  %v393 = vadd.f32 %v101, %v392
  %394 = vdwg.mxu0
  %395 = vmatpush.bf16.msra.mxu0 %v312
  %396 = vmatpush.bf16.msra.mxu0 %v311
  %397 = vmatpush.bf16.msra.mxu0 %v310
  %398 = vmatpush.bf16.msra.mxu0 %v309
  %399 = vmatpush.bf16.msra.mxu0 %v308
  %400 = vmatpush.bf16.msra.mxu0 %v307
  %401 = vmatpush.bf16.msra.mxu0 %v306
  %402 = vmatpush.bf16.msra.mxu0 %v305
  %403 = vmatmul.bf16.gmra.mxu0 %v136
  %v404 = vpop.f32.mrf.mxu0
  %v405 = vadd.f32 %v386, %v404
  %v406 = vpop.f32.mrf.mxu0
  %v407 = vadd.f32 %v388, %v406
  %408 = vmatmul.bf16.gmra.mxu0 %v141
  %v409 = vpop.f32.mrf.mxu0
  %v410 = vadd.f32 %v391, %v409
  %v411 = vpop.f32.mrf.mxu0
  %v412 = vadd.f32 %v393, %v411
  %413 = vdwg.mxu0
  %414 = vmatpush.bf16.msra.mxu0 %v320
  %415 = vmatpush.bf16.msra.mxu0 %v319
  %416 = vmatpush.bf16.msra.mxu0 %v318
  %417 = vmatpush.bf16.msra.mxu0 %v317
  %418 = vmatpush.bf16.msra.mxu0 %v316
  %419 = vmatpush.bf16.msra.mxu0 %v315
  %420 = vmatpush.bf16.msra.mxu0 %v314
  %421 = vmatpush.bf16.msra.mxu0 %v313
  %422 = vmatmul.bf16.gmra.mxu0 %v137
  %v423 = vpop.f32.mrf.mxu0
  %v424 = vadd.f32 %v405, %v423
  %v425 = vpop.f32.mrf.mxu0
  %v426 = vadd.f32 %v407, %v425
  %427 = vmatmul.bf16.gmra.mxu0 %v142
  %v428 = vpop.f32.mrf.mxu0
  %v429 = vadd.f32 %v410, %v428
  %v430 = vpop.f32.mrf.mxu0
  %v431 = vadd.f32 %v412, %v430
  %432 = vdwg.mxu0
  %433 = vmatpush.bf16.msra.mxu0 %v328
  %434 = vmatpush.bf16.msra.mxu0 %v327
  %435 = vmatpush.bf16.msra.mxu0 %v326
  %436 = vmatpush.bf16.msra.mxu0 %v325
  %437 = vmatpush.bf16.msra.mxu0 %v324
  %438 = vmatpush.bf16.msra.mxu0 %v323
  %439 = vmatpush.bf16.msra.mxu0 %v322
  %440 = vmatpush.bf16.msra.mxu0 %v321
  %441 = vmatmul.bf16.gmra.mxu0 %v138
  %v442 = vpop.f32.mrf.mxu0
  %v443 = vadd.f32 %v424, %v442
  %v444 = vpop.f32.mrf.mxu0
  %v445 = vadd.f32 %v426, %v444
  %446 = vmatmul.bf16.gmra.mxu0 %v143
  %v447 = vpop.f32.mrf.mxu0
  %v448 = vadd.f32 %v429, %v447
  %v449 = vpop.f32.mrf.mxu0
  %v450 = vadd.f32 %v431, %v449
  %451 = vdwg.mxu0
  %452 = vmatpush.bf16.msra.mxu0 0
  %453 = vmatpush.bf16.msra.mxu0 0
  %454 = vmatpush.bf16.msra.mxu0 0
  %455 = vmatpush.bf16.msra.mxu0 0
  %456 = vmatpush.bf16.msra.mxu0 %v332
  %457 = vmatpush.bf16.msra.mxu0 %v331
  %458 = vmatpush.bf16.msra.mxu0 %v330
  %459 = vmatpush.bf16.msra.mxu0 %v329
  %460 = vmatmul.bf16.gmra.mxu0 %v371
  %v461 = vpop.f32.mrf.mxu0
  %v462 = vadd.f32 %v443, %v461
  %v463 = vpop.f32.mrf.mxu0
  %v464 = vadd.f32 %v445, %v463
  %465 = vmatmul.bf16.gmra.mxu0 %v374
  %v466 = vpop.f32.mrf.mxu0
  %v467 = vadd.f32 %v448, %v466
  %v468 = vpop.f32.mrf.mxu0
  %v469 = vadd.f32 %v450, %v468
  %470 = vdwg.mxu0
  %v471 = vmax.f32 %v462, 0.0
  %v472 = vmax.f32 %v464, 0.0
  %v473 = vmax.f32 %v467, 0.0
  %v474 = vmax.f32 %v469, 0.0
  %475 = vst.msk [vmem:[%s3] sm:$0xff] %vm369, %v471
  %476 = vst.msk [vmem:[%s3 + $0x8] sm:$0xff] %vm369, %v472
  %477 = vst.msk [vmem:[%s3 + $0x10] sm:$0xff] %vm369, %v473
  %478 = vst.msk [vmem:[%s3 + $0x18] sm:$0xff] %vm369, %v474
  // Predicated region
  $region14: #{forward.30} parent=0 // pred_check
    _
  $region15: #{forward.30} parent=0 // pred_check_branch
    %480 = sbr.rel (0) target = $region17
  $region16: #{forward.30} parent=0 // pred_region
    _
  $region17: #{forward.30} parent=0 // pred_fallthru
    _
  // Predicated region
  $region18: #{forward.30} parent=0 // pred_check
    _
  $region19: #{forward.30} parent=0 // pred_check_branch
    %482 = sbr.rel (0) target = $region21
  $region20: #{forward.30} parent=0 // pred_region
    _
  $region21: #{forward.30} parent=0 // pred_fallthru
    _

// kernel: forward.32
$region0: #{forward.32}
  #allocation0 [shape = 'u32[]', space=smem, size = 0x4, offset = 0x4, fixed_abs, tag = 'smem constant byte address 0x4 - core index']
  #allocation1 [shape = 'u32[72,128]{1,0:T(1,128)}', space=vmem, size = 0x9000, scoped, tag = 'internal scratch']
  %s0 = inlined_call_operand.vmem [shape: bf16[8,576], index: 0, kind: input, shape index: {}]
  %s1 = inlined_call_operand.vmem [shape: bf16[576,128], index: 1, kind: input, shape index: {}]
  %s2 = inlined_call_operand.vmem [shape: f32[1,128], index: 2, kind: input, shape index: {}]
  %s3 = inlined_call_operand.vmem [shape: bf16[576,128], index: 3, kind: input, shape index: {}]
  %s4 = inlined_call_operand.vmem [shape: f32[1,128], index: 4, kind: input, shape index: {}]
  %s5 = inlined_call_operand.vmem [shape: f32[8,128], index: 5, kind: output, shape index: {0}]
  %s6 = inlined_call_operand.vmem [shape: f32[8,128], index: 6, kind: output, shape index: {1}]
  %7 = xla_tuple %s5, %s6
  %s8 = sld [smem:[#allocation0]]
  $region38: #{forward.32} parent=0
    _
  %s10 = ssub.s32 1, %s8
  %s11 = scalar_select 0, %s10, %s8
  // Predicated region
  $region2: #{forward.32} parent=0 // pred_check
    _
  $region3: #{forward.32} parent=0 // pred_check_branch
    %13 = sbr.rel (0) target = $region5
  $region4: #{forward.32} parent=0 // pred_region
    _
  $region5: #{forward.32} parent=0 // pred_fallthru
    _
  // Predicated region
  $region6: #{forward.32} parent=0 // pred_check
    _
  $region7: #{forward.32} parent=0 // pred_check_branch
    %15 = sbr.rel (0) target = $region9
  $region8: #{forward.32} parent=0 // pred_region
    _
  $region9: #{forward.32} parent=0 // pred_fallthru
    _
  // Predicated region
  $region10: #{forward.32} parent=0 // pred_check
    _
  $region11: #{forward.32} parent=0 // pred_check_branch
    %17 = sbr.rel (0) target = $region13
  $region12: #{forward.32} parent=0 // pred_region
    _
  $region13: #{forward.32} parent=0 // pred_fallthru
    _
  // Predicated region
  $region14: #{forward.32} parent=0 // pred_check
    _
  $region15: #{forward.32} parent=0 // pred_check_branch
    %19 = sbr.rel (0) target = $region17
  $region16: #{forward.32} parent=0 // pred_region
    _
  $region17: #{forward.32} parent=0 // pred_fallthru
    _
  // Predicated region
  $region18: #{forward.32} parent=0 // pred_check
    _
  $region19: #{forward.32} parent=0 // pred_check_branch
    %21 = sbr.rel (0) target = $region21
  $region20: #{forward.32} parent=0 // pred_region
    _
  $region21: #{forward.32} parent=0 // pred_fallthru
    _
  %v23 = vld [vmem:[%s0] sm:$0xff]
  %v24 = vld [vmem:[%s0 + $0x8] sm:$0xff]
  %v25 = vld [vmem:[%s0 + $0x10] sm:$0xf]
  %v26 = vld [vmem:[%s1] sm:$0xf]
  %v27 = vld [vmem:[%s1 + $0x4] sm:$0xf]
  %v28 = vld [vmem:[%s1 + $0x8] sm:$0xf]
  %v29 = vld [vmem:[%s1 + $0xc] sm:$0xf]
  %v30 = vld [vmem:[%s1 + $0x10] sm:$0xf]
  %v31 = vld [vmem:[%s1 + $0x14] sm:$0xf]
  %v32 = vld [vmem:[%s1 + $0x18] sm:$0xf]
  %v33 = vld [vmem:[%s1 + $0x1c] sm:$0xf]
  %v34 = vld [vmem:[%s1 + $0x20] sm:$0xf]
  %v35 = vld [vmem:[%s1 + $0x24] sm:$0xf]
  %v36 = vld [vmem:[%s1 + $0x28] sm:$0xf]
  %v37 = vld [vmem:[%s1 + $0x2c] sm:$0xf]
  %v38 = vld [vmem:[%s1 + $0x30] sm:$0xf]
  %v39 = vld [vmem:[%s1 + $0x34] sm:$0xf]
  %v40 = vld [vmem:[%s1 + $0x38] sm:$0xf]
  %v41 = vld [vmem:[%s1 + $0x3c] sm:$0xf]
  %v42 = vld [vmem:[%s1 + $0x40] sm:$0xf]
  %v43 = vld [vmem:[%s1 + $0x44] sm:$0xf]
  %v44 = vld [vmem:[%s1 + $0x48] sm:$0xf]
  %v45 = vld [vmem:[%s1 + $0x4c] sm:$0xf]
  %v46 = vld [vmem:[%s1 + $0x50] sm:$0xf]
  %v47 = vld [vmem:[%s1 + $0x54] sm:$0xf]
  %v48 = vld [vmem:[%s1 + $0x58] sm:$0xf]
  %v49 = vld [vmem:[%s1 + $0x5c] sm:$0xf]
  %v50 = vld [vmem:[%s1 + $0x60] sm:$0xf]
  %v51 = vld [vmem:[%s1 + $0x64] sm:$0xf]
  %v52 = vld [vmem:[%s1 + $0x68] sm:$0xf]
  %v53 = vld [vmem:[%s1 + $0x6c] sm:$0xf]
  %v54 = vld [vmem:[%s1 + $0x70] sm:$0xf]
  %v55 = vld [vmem:[%s1 + $0x74] sm:$0xf]
  %v56 = vld [vmem:[%s1 + $0x78] sm:$0xf]
  %v57 = vld [vmem:[%s1 + $0x7c] sm:$0xf]
  %v58 = vld [vmem:[%s1 + $0x80] sm:$0xf]
  %v59 = vld [vmem:[%s1 + $0x84] sm:$0xf]
  %v60 = vld [vmem:[%s1 + $0x88] sm:$0xf]
  %v61 = vld [vmem:[%s1 + $0x8c] sm:$0xf]
  %v62 = vld [vmem:[%s1 + $0x90] sm:$0xf]
  %v63 = vld [vmem:[%s1 + $0x94] sm:$0xf]
  %v64 = vld [vmem:[%s1 + $0x98] sm:$0xf]
  %v65 = vld [vmem:[%s1 + $0x9c] sm:$0xf]
  %v66 = vld [vmem:[%s1 + $0xa0] sm:$0xf]
  %v67 = vld [vmem:[%s1 + $0xa4] sm:$0xf]
  %v68 = vld [vmem:[%s1 + $0xa8] sm:$0xf]
  %v69 = vld [vmem:[%s1 + $0xac] sm:$0xf]
  %v70 = vld [vmem:[%s1 + $0xb0] sm:$0xf]
  %v71 = vld [vmem:[%s1 + $0xb4] sm:$0xf]
  %v72 = vld [vmem:[%s1 + $0xb8] sm:$0xf]
  %v73 = vld [vmem:[%s1 + $0xbc] sm:$0xf]
  %v74 = vld [vmem:[%s1 + $0xc0] sm:$0xf]
  %v75 = vld [vmem:[%s1 + $0xc4] sm:$0xf]
  %v76 = vld [vmem:[%s1 + $0xc8] sm:$0xf]
  %v77 = vld [vmem:[%s1 + $0xcc] sm:$0xf]
  %v78 = vld [vmem:[%s1 + $0xd0] sm:$0xf]
  %v79 = vld [vmem:[%s1 + $0xd4] sm:$0xf]
  %v80 = vld [vmem:[%s1 + $0xd8] sm:$0xf]
  %v81 = vld [vmem:[%s1 + $0xdc] sm:$0xf]
  %v82 = vld [vmem:[%s1 + $0xe0] sm:$0xf]
  %v83 = vld [vmem:[%s1 + $0xe4] sm:$0xf]
  %v84 = vld [vmem:[%s1 + $0xe8] sm:$0xf]
  %v85 = vld [vmem:[%s1 + $0xec] sm:$0xf]
  %v86 = vld [vmem:[%s1 + $0xf0] sm:$0xf]
  %v87 = vld [vmem:[%s1 + $0xf4] sm:$0xf]
  %v88 = vld [vmem:[%s1 + $0xf8] sm:$0xf]
  %v89 = vld [vmem:[%s1 + $0xfc] sm:$0xf]
  %v90 = vld [vmem:[%s1 + $0x100] sm:$0xf]
  %v91 = vld [vmem:[%s1 + $0x104] sm:$0xf]
  %v92 = vld [vmem:[%s1 + $0x108] sm:$0xf]
  %v93 = vld [vmem:[%s1 + $0x10c] sm:$0xf]
  %v94 = vld [vmem:[%s1 + $0x110] sm:$0xf]
  %v95 = vld [vmem:[%s1 + $0x114] sm:$0xf]
  %v96 = vld [vmem:[%s1 + $0x118] sm:$0xf]
  %v97 = vld [vmem:[%s1 + $0x11c] sm:$0xf]
  %v98 = vld [vmem:[%s2] sm:$0x1]
  %v100 = vperm.slane %v98, 0
  %v105 = vunpack.c.l.b16 %v23
  %v106 = vunpack.c.h.b16 %v23
  %v107 = vunpack.c.l.b16 %v24
  %v108 = vunpack.c.h.b16 %v24
  %v109 = vunpack.c.l.b16 %v25
  %v110 = vpack.c.b16 %v105, %v105
  %v111 = vpack.c.b16 %v106, %v106
  %v112 = vpack.c.b16 %v107, %v107
  %v113 = vpack.c.b16 %v108, %v108
  %v114 = vpack.c.b16 %v109, %v109
  %v191 = vunpack.c.l.b16 %v26
  %v192 = vunpack.c.l.b16 %v27
  %v193 = vunpack.c.l.b16 %v28
  %v194 = vunpack.c.l.b16 %v29
  %v195 = vunpack.c.l.b16 %v30
  %v196 = vunpack.c.l.b16 %v31
  %v197 = vunpack.c.l.b16 %v32
  %v198 = vunpack.c.l.b16 %v33
  %v199 = vunpack.c.l.b16 %v34
  %v200 = vunpack.c.l.b16 %v35
  %v201 = vunpack.c.l.b16 %v36
  %v202 = vunpack.c.l.b16 %v37
  %v203 = vunpack.c.l.b16 %v38
  %v204 = vunpack.c.l.b16 %v39
  %v205 = vunpack.c.l.b16 %v40
  %v206 = vunpack.c.l.b16 %v41
  %v207 = vunpack.c.l.b16 %v42
  %v208 = vunpack.c.l.b16 %v43
  %v209 = vunpack.c.l.b16 %v44
  %v210 = vunpack.c.l.b16 %v45
  %v211 = vunpack.c.l.b16 %v46
  %v212 = vunpack.c.l.b16 %v47
  %v213 = vunpack.c.l.b16 %v48
  %v214 = vunpack.c.l.b16 %v49
  %v215 = vunpack.c.l.b16 %v50
  %v216 = vunpack.c.l.b16 %v51
  %v217 = vunpack.c.l.b16 %v52
  %v218 = vunpack.c.l.b16 %v53
  %v219 = vunpack.c.l.b16 %v54
  %v220 = vunpack.c.l.b16 %v55
  %v221 = vunpack.c.l.b16 %v56
  %v222 = vunpack.c.l.b16 %v57
  %v223 = vunpack.c.l.b16 %v58
  %v224 = vunpack.c.l.b16 %v59
  %v225 = vunpack.c.l.b16 %v60
  %v226 = vunpack.c.l.b16 %v61
  %v227 = vunpack.c.l.b16 %v62
  %v228 = vunpack.c.l.b16 %v63
  %v229 = vunpack.c.l.b16 %v64
  %v230 = vunpack.c.l.b16 %v65
  %v231 = vunpack.c.l.b16 %v66
  %v232 = vunpack.c.l.b16 %v67
  %v233 = vunpack.c.l.b16 %v68
  %v234 = vunpack.c.l.b16 %v69
  %v235 = vunpack.c.l.b16 %v70
  %v236 = vunpack.c.l.b16 %v71
  %v237 = vunpack.c.l.b16 %v72
  %v238 = vunpack.c.l.b16 %v73
  %v239 = vunpack.c.l.b16 %v74
  %v240 = vunpack.c.l.b16 %v75
  %v241 = vunpack.c.l.b16 %v76
  %v242 = vunpack.c.l.b16 %v77
  %v243 = vunpack.c.l.b16 %v78
  %v244 = vunpack.c.l.b16 %v79
  %v245 = vunpack.c.l.b16 %v80
  %v246 = vunpack.c.l.b16 %v81
  %v247 = vunpack.c.l.b16 %v82
  %v248 = vunpack.c.l.b16 %v83
  %v249 = vunpack.c.l.b16 %v84
  %v250 = vunpack.c.l.b16 %v85
  %v251 = vunpack.c.l.b16 %v86
  %v252 = vunpack.c.l.b16 %v87
  %v253 = vunpack.c.l.b16 %v88
  %v254 = vunpack.c.l.b16 %v89
  %v255 = vunpack.c.l.b16 %v90
  %v256 = vunpack.c.l.b16 %v91
  %v257 = vunpack.c.l.b16 %v92
  %v258 = vunpack.c.l.b16 %v93
  %v259 = vunpack.c.l.b16 %v94
  %v260 = vunpack.c.l.b16 %v95
  %v261 = vunpack.c.l.b16 %v96
  %v262 = vunpack.c.l.b16 %v97
  %v263 = vpack.c.b16 %v192, %v191
  %v264 = vpack.c.b16 %v194, %v193
  %v265 = vpack.c.b16 %v196, %v195
  %v266 = vpack.c.b16 %v198, %v197
  %v267 = vpack.c.b16 %v200, %v199
  %v268 = vpack.c.b16 %v202, %v201
  %v269 = vpack.c.b16 %v204, %v203
  %v270 = vpack.c.b16 %v206, %v205
  %v271 = vpack.c.b16 %v208, %v207
  %v272 = vpack.c.b16 %v210, %v209
  %v273 = vpack.c.b16 %v212, %v211
  %v274 = vpack.c.b16 %v214, %v213
  %v275 = vpack.c.b16 %v216, %v215
  %v276 = vpack.c.b16 %v218, %v217
  %v277 = vpack.c.b16 %v220, %v219
  %v278 = vpack.c.b16 %v222, %v221
  %v279 = vpack.c.b16 %v224, %v223
  %v280 = vpack.c.b16 %v226, %v225
  %v281 = vpack.c.b16 %v228, %v227
  %v282 = vpack.c.b16 %v230, %v229
  %v283 = vpack.c.b16 %v232, %v231
  %v284 = vpack.c.b16 %v234, %v233
  %v285 = vpack.c.b16 %v236, %v235
  %v286 = vpack.c.b16 %v238, %v237
  %v287 = vpack.c.b16 %v240, %v239
  %v288 = vpack.c.b16 %v242, %v241
  %v289 = vpack.c.b16 %v244, %v243
  %v290 = vpack.c.b16 %v246, %v245
  %v291 = vpack.c.b16 %v248, %v247
  %v292 = vpack.c.b16 %v250, %v249
  %v293 = vpack.c.b16 %v252, %v251
  %v294 = vpack.c.b16 %v254, %v253
  %v295 = vpack.c.b16 %v256, %v255
  %v296 = vpack.c.b16 %v258, %v257
  %v297 = vpack.c.b16 %v260, %v259
  %v298 = vpack.c.b16 %v262, %v261
  %vm335 = vcmask 523264
  %v337 = vsel %vm335, %v114, 0
  %339 = vmatpush.bf16.msra.mxu0 %v270
  %340 = vmatpush.bf16.msra.mxu0 %v269
  %341 = vmatpush.bf16.msra.mxu0 %v268
  %342 = vmatpush.bf16.msra.mxu0 %v267
  %343 = vmatpush.bf16.msra.mxu0 %v266
  %344 = vmatpush.bf16.msra.mxu0 %v265
  %345 = vmatpush.bf16.msra.mxu0 %v264
  %346 = vmatpush.bf16.msra.mxu0 %v263
  %347 = vmatmul.bf16.gmra.mxu0 %v110
  %v348 = vpop.f32.mrf.mxu0
  %v349 = vadd.f32 %v100, %v348
  %v350 = vpop.f32.mrf.mxu0
  %351 = vdwg.mxu0
  %352 = vmatpush.bf16.msra.mxu0 %v278
  %353 = vmatpush.bf16.msra.mxu0 %v277
  %354 = vmatpush.bf16.msra.mxu0 %v276
  %355 = vmatpush.bf16.msra.mxu0 %v275
  %356 = vmatpush.bf16.msra.mxu0 %v274
  %357 = vmatpush.bf16.msra.mxu0 %v273
  %358 = vmatpush.bf16.msra.mxu0 %v272
  %359 = vmatpush.bf16.msra.mxu0 %v271
  %360 = vmatmul.bf16.gmra.mxu0 %v111
  %v361 = vpop.f32.mrf.mxu0
  %v362 = vadd.f32 %v349, %v361
  %v363 = vpop.f32.mrf.mxu0
  %364 = vdwg.mxu0
  %365 = vmatpush.bf16.msra.mxu0 %v286
  %366 = vmatpush.bf16.msra.mxu0 %v285
  %367 = vmatpush.bf16.msra.mxu0 %v284
  %368 = vmatpush.bf16.msra.mxu0 %v283
  %369 = vmatpush.bf16.msra.mxu0 %v282
  %370 = vmatpush.bf16.msra.mxu0 %v281
  %371 = vmatpush.bf16.msra.mxu0 %v280
  %372 = vmatpush.bf16.msra.mxu0 %v279
  %373 = vmatmul.bf16.gmra.mxu0 %v112
  %v374 = vpop.f32.mrf.mxu0
  %v375 = vadd.f32 %v362, %v374
  %v376 = vpop.f32.mrf.mxu0
  %377 = vdwg.mxu0
  %378 = vmatpush.bf16.msra.mxu0 %v294
  %379 = vmatpush.bf16.msra.mxu0 %v293
  %380 = vmatpush.bf16.msra.mxu0 %v292
  %381 = vmatpush.bf16.msra.mxu0 %v291
  %382 = vmatpush.bf16.msra.mxu0 %v290
  %383 = vmatpush.bf16.msra.mxu0 %v289
  %384 = vmatpush.bf16.msra.mxu0 %v288
  %385 = vmatpush.bf16.msra.mxu0 %v287
  %386 = vmatmul.bf16.gmra.mxu0 %v113
  %v387 = vpop.f32.mrf.mxu0
  %v388 = vadd.f32 %v375, %v387
  %v389 = vpop.f32.mrf.mxu0
  %390 = vdwg.mxu0
  %391 = vmatpush.bf16.msra.mxu0 0
  %392 = vmatpush.bf16.msra.mxu0 0
  %393 = vmatpush.bf16.msra.mxu0 0
  %394 = vmatpush.bf16.msra.mxu0 0
  %395 = vmatpush.bf16.msra.mxu0 %v298
  %396 = vmatpush.bf16.msra.mxu0 %v297
  %397 = vmatpush.bf16.msra.mxu0 %v296
  %398 = vmatpush.bf16.msra.mxu0 %v295
  %399 = vmatmul.bf16.gmra.mxu0 %v337
  %v400 = vpop.f32.mrf.mxu0
  %v401 = vadd.f32 %v388, %v400
  %v402 = vpop.f32.mrf.mxu0
  %403 = vdwg.mxu0
  %v404 = vmax.f32 %v401, 0.0
  %405 = vst [vmem:[%s5] sm:$0xff] %v404
  %v406 = vld [vmem:[%s3] sm:$0xf]
  %v407 = vld [vmem:[%s3 + $0x4] sm:$0xf]
  %v408 = vld [vmem:[%s3 + $0x8] sm:$0xf]
  %v409 = vld [vmem:[%s3 + $0xc] sm:$0xf]
  %v410 = vld [vmem:[%s3 + $0x10] sm:$0xf]
  %v411 = vld [vmem:[%s3 + $0x14] sm:$0xf]
  %v412 = vld [vmem:[%s3 + $0x18] sm:$0xf]
  %v413 = vld [vmem:[%s3 + $0x1c] sm:$0xf]
  %v414 = vld [vmem:[%s3 + $0x20] sm:$0xf]
  %v415 = vld [vmem:[%s3 + $0x24] sm:$0xf]
  %v416 = vld [vmem:[%s3 + $0x28] sm:$0xf]
  %v417 = vld [vmem:[%s3 + $0x2c] sm:$0xf]
  %v418 = vld [vmem:[%s3 + $0x30] sm:$0xf]
  %v419 = vld [vmem:[%s3 + $0x34] sm:$0xf]
  %v420 = vld [vmem:[%s3 + $0x38] sm:$0xf]
  %v421 = vld [vmem:[%s3 + $0x3c] sm:$0xf]
  %v422 = vld [vmem:[%s3 + $0x40] sm:$0xf]
  %v423 = vld [vmem:[%s3 + $0x44] sm:$0xf]
  %v424 = vld [vmem:[%s3 + $0x48] sm:$0xf]
  %v425 = vld [vmem:[%s3 + $0x4c] sm:$0xf]
  %v426 = vld [vmem:[%s3 + $0x50] sm:$0xf]
  %v427 = vld [vmem:[%s3 + $0x54] sm:$0xf]
  %v428 = vld [vmem:[%s3 + $0x58] sm:$0xf]
  %v429 = vld [vmem:[%s3 + $0x5c] sm:$0xf]
  %v430 = vld [vmem:[%s3 + $0x60] sm:$0xf]
  %v431 = vld [vmem:[%s3 + $0x64] sm:$0xf]
  %v432 = vld [vmem:[%s3 + $0x68] sm:$0xf]
  %v433 = vld [vmem:[%s3 + $0x6c] sm:$0xf]
  %v434 = vld [vmem:[%s3 + $0x70] sm:$0xf]
  %v435 = vld [vmem:[%s3 + $0x74] sm:$0xf]
  %v436 = vld [vmem:[%s3 + $0x78] sm:$0xf]
  %v437 = vld [vmem:[%s3 + $0x7c] sm:$0xf]
  %v438 = vld [vmem:[%s3 + $0x80] sm:$0xf]
  %v439 = vld [vmem:[%s3 + $0x84] sm:$0xf]
  %v440 = vld [vmem:[%s3 + $0x88] sm:$0xf]
  %v441 = vld [vmem:[%s3 + $0x8c] sm:$0xf]
  %v442 = vld [vmem:[%s3 + $0x90] sm:$0xf]
  %v443 = vld [vmem:[%s3 + $0x94] sm:$0xf]
  %v444 = vld [vmem:[%s3 + $0x98] sm:$0xf]
  %v445 = vld [vmem:[%s3 + $0x9c] sm:$0xf]
  %v446 = vld [vmem:[%s3 + $0xa0] sm:$0xf]
  %v447 = vld [vmem:[%s3 + $0xa4] sm:$0xf]
  %v448 = vld [vmem:[%s3 + $0xa8] sm:$0xf]
  %v449 = vld [vmem:[%s3 + $0xac] sm:$0xf]
  %v450 = vld [vmem:[%s3 + $0xb0] sm:$0xf]
  %v451 = vld [vmem:[%s3 + $0xb4] sm:$0xf]
  %v452 = vld [vmem:[%s3 + $0xb8] sm:$0xf]
  %v453 = vld [vmem:[%s3 + $0xbc] sm:$0xf]
  %v454 = vld [vmem:[%s3 + $0xc0] sm:$0xf]
  %v455 = vld [vmem:[%s3 + $0xc4] sm:$0xf]
  %v456 = vld [vmem:[%s3 + $0xc8] sm:$0xf]
  %v457 = vld [vmem:[%s3 + $0xcc] sm:$0xf]
  %v458 = vld [vmem:[%s3 + $0xd0] sm:$0xf]
  %v459 = vld [vmem:[%s3 + $0xd4] sm:$0xf]
  %v460 = vld [vmem:[%s3 + $0xd8] sm:$0xf]
  %v461 = vld [vmem:[%s3 + $0xdc] sm:$0xf]
  %v462 = vld [vmem:[%s3 + $0xe0] sm:$0xf]
  %v463 = vld [vmem:[%s3 + $0xe4] sm:$0xf]
  %v464 = vld [vmem:[%s3 + $0xe8] sm:$0xf]
  %v465 = vld [vmem:[%s3 + $0xec] sm:$0xf]
  %v466 = vld [vmem:[%s3 + $0xf0] sm:$0xf]
  %v467 = vld [vmem:[%s3 + $0xf4] sm:$0xf]
  %v468 = vld [vmem:[%s3 + $0xf8] sm:$0xf]
  %v469 = vld [vmem:[%s3 + $0xfc] sm:$0xf]
  %v470 = vld [vmem:[%s3 + $0x100] sm:$0xf]
  %v471 = vld [vmem:[%s3 + $0x104] sm:$0xf]
  %v472 = vld [vmem:[%s3 + $0x108] sm:$0xf]
  %v473 = vld [vmem:[%s3 + $0x10c] sm:$0xf]
  %v474 = vld [vmem:[%s3 + $0x110] sm:$0xf]
  %v475 = vld [vmem:[%s3 + $0x114] sm:$0xf]
  %v476 = vld [vmem:[%s3 + $0x118] sm:$0xf]
  %v477 = vld [vmem:[%s3 + $0x11c] sm:$0xf]
  %v478 = vld [vmem:[%s4] sm:$0x1]
  %v480 = vperm.slane %v478, 0
  %v554 = vunpack.c.l.b16 %v406
  %v555 = vunpack.c.l.b16 %v407
  %v556 = vunpack.c.l.b16 %v408
  %v557 = vunpack.c.l.b16 %v409
  %v558 = vunpack.c.l.b16 %v410
  %v559 = vunpack.c.l.b16 %v411
  %v560 = vunpack.c.l.b16 %v412
  %v561 = vunpack.c.l.b16 %v413
  %v562 = vunpack.c.l.b16 %v414
  %v563 = vunpack.c.l.b16 %v415
  %v564 = vunpack.c.l.b16 %v416
  %v565 = vunpack.c.l.b16 %v417
  %v566 = vunpack.c.l.b16 %v418
  %v567 = vunpack.c.l.b16 %v419
  %v568 = vunpack.c.l.b16 %v420
  %v569 = vunpack.c.l.b16 %v421
  %v570 = vunpack.c.l.b16 %v422
  %v571 = vunpack.c.l.b16 %v423
  %v572 = vunpack.c.l.b16 %v424
  %v573 = vunpack.c.l.b16 %v425
  %v574 = vunpack.c.l.b16 %v426
  %v575 = vunpack.c.l.b16 %v427
  %v576 = vunpack.c.l.b16 %v428
  %v577 = vunpack.c.l.b16 %v429
  %v578 = vunpack.c.l.b16 %v430
  %v579 = vunpack.c.l.b16 %v431
  %v580 = vunpack.c.l.b16 %v432
  %v581 = vunpack.c.l.b16 %v433
  %v582 = vunpack.c.l.b16 %v434
  %v583 = vunpack.c.l.b16 %v435
  %v584 = vunpack.c.l.b16 %v436
  %v585 = vunpack.c.l.b16 %v437
  %v586 = vunpack.c.l.b16 %v438
  %v587 = vunpack.c.l.b16 %v439
  %v588 = vunpack.c.l.b16 %v440
  %v589 = vunpack.c.l.b16 %v441
  %v590 = vunpack.c.l.b16 %v442
  %v591 = vunpack.c.l.b16 %v443
  %v592 = vunpack.c.l.b16 %v444
  %v593 = vunpack.c.l.b16 %v445
  %v594 = vunpack.c.l.b16 %v446
  %v595 = vunpack.c.l.b16 %v447
  %v596 = vunpack.c.l.b16 %v448
  %v597 = vunpack.c.l.b16 %v449
  %v598 = vunpack.c.l.b16 %v450
  %v599 = vunpack.c.l.b16 %v451
  %v600 = vunpack.c.l.b16 %v452
  %v601 = vunpack.c.l.b16 %v453
  %v602 = vunpack.c.l.b16 %v454
  %v603 = vunpack.c.l.b16 %v455
  %v604 = vunpack.c.l.b16 %v456
  %v605 = vunpack.c.l.b16 %v457
  %v606 = vunpack.c.l.b16 %v458
  %v607 = vunpack.c.l.b16 %v459
  %v608 = vunpack.c.l.b16 %v460
  %v609 = vunpack.c.l.b16 %v461
  %v610 = vunpack.c.l.b16 %v462
  %v611 = vunpack.c.l.b16 %v463
  %v612 = vunpack.c.l.b16 %v464
  %v613 = vunpack.c.l.b16 %v465
  %v614 = vunpack.c.l.b16 %v466
  %v615 = vunpack.c.l.b16 %v467
  %v616 = vunpack.c.l.b16 %v468
  %v617 = vunpack.c.l.b16 %v469
  %v618 = vunpack.c.l.b16 %v470
  %v619 = vunpack.c.l.b16 %v471
  %v620 = vunpack.c.l.b16 %v472
  %v621 = vunpack.c.l.b16 %v473
  %v622 = vunpack.c.l.b16 %v474
  %v623 = vunpack.c.l.b16 %v475
  %v624 = vunpack.c.l.b16 %v476
  %v625 = vunpack.c.l.b16 %v477
  %v626 = vpack.c.b16 %v555, %v554
  %v627 = vpack.c.b16 %v557, %v556
  %v628 = vpack.c.b16 %v559, %v558
  %v629 = vpack.c.b16 %v561, %v560
  %v630 = vpack.c.b16 %v563, %v562
  %v631 = vpack.c.b16 %v565, %v564
  %v632 = vpack.c.b16 %v567, %v566
  %v633 = vpack.c.b16 %v569, %v568
  %v634 = vpack.c.b16 %v571, %v570
  %v635 = vpack.c.b16 %v573, %v572
  %v636 = vpack.c.b16 %v575, %v574
  %v637 = vpack.c.b16 %v577, %v576
  %v638 = vpack.c.b16 %v579, %v578
  %v639 = vpack.c.b16 %v581, %v580
  %v640 = vpack.c.b16 %v583, %v582
  %v641 = vpack.c.b16 %v585, %v584
  %v642 = vpack.c.b16 %v587, %v586
  %v643 = vpack.c.b16 %v589, %v588
  %v644 = vpack.c.b16 %v591, %v590
  %v645 = vpack.c.b16 %v593, %v592
  %v646 = vpack.c.b16 %v595, %v594
  %v647 = vpack.c.b16 %v597, %v596
  %v648 = vpack.c.b16 %v599, %v598
  %v649 = vpack.c.b16 %v601, %v600
  %v650 = vpack.c.b16 %v603, %v602
  %v651 = vpack.c.b16 %v605, %v604
  %v652 = vpack.c.b16 %v607, %v606
  %v653 = vpack.c.b16 %v609, %v608
  %v654 = vpack.c.b16 %v611, %v610
  %v655 = vpack.c.b16 %v613, %v612
  %v656 = vpack.c.b16 %v615, %v614
  %v657 = vpack.c.b16 %v617, %v616
  %v658 = vpack.c.b16 %v619, %v618
  %v659 = vpack.c.b16 %v621, %v620
  %v660 = vpack.c.b16 %v623, %v622
  %v661 = vpack.c.b16 %v625, %v624
  %698 = vmatpush.bf16.msra.mxu0 %v633
  %699 = vmatpush.bf16.msra.mxu0 %v632
  %700 = vmatpush.bf16.msra.mxu0 %v631
  %701 = vmatpush.bf16.msra.mxu0 %v630
  %702 = vmatpush.bf16.msra.mxu0 %v629
  %703 = vmatpush.bf16.msra.mxu0 %v628
  %704 = vmatpush.bf16.msra.mxu0 %v627
  %705 = vmatpush.bf16.msra.mxu0 %v626
  %706 = vmatmul.bf16.gmra.mxu0 %v110
  %v707 = vpop.f32.mrf.mxu0
  %v708 = vadd.f32 %v480, %v707
  %v709 = vpop.f32.mrf.mxu0
  %710 = vdwg.mxu0
  %711 = vmatpush.bf16.msra.mxu0 %v641
  %712 = vmatpush.bf16.msra.mxu0 %v640
  %713 = vmatpush.bf16.msra.mxu0 %v639
  %714 = vmatpush.bf16.msra.mxu0 %v638
  %715 = vmatpush.bf16.msra.mxu0 %v637
  %716 = vmatpush.bf16.msra.mxu0 %v636
  %717 = vmatpush.bf16.msra.mxu0 %v635
  %718 = vmatpush.bf16.msra.mxu0 %v634
  %719 = vmatmul.bf16.gmra.mxu0 %v111
  %v720 = vpop.f32.mrf.mxu0
  %v721 = vadd.f32 %v708, %v720
  %v722 = vpop.f32.mrf.mxu0
  %723 = vdwg.mxu0
  %724 = vmatpush.bf16.msra.mxu0 %v649
  %725 = vmatpush.bf16.msra.mxu0 %v648
  %726 = vmatpush.bf16.msra.mxu0 %v647
  %727 = vmatpush.bf16.msra.mxu0 %v646
  %728 = vmatpush.bf16.msra.mxu0 %v645
  %729 = vmatpush.bf16.msra.mxu0 %v644
  %730 = vmatpush.bf16.msra.mxu0 %v643
  %731 = vmatpush.bf16.msra.mxu0 %v642
  %732 = vmatmul.bf16.gmra.mxu0 %v112
  %v733 = vpop.f32.mrf.mxu0
  %v734 = vadd.f32 %v721, %v733
  %v735 = vpop.f32.mrf.mxu0
  %736 = vdwg.mxu0
  %737 = vmatpush.bf16.msra.mxu0 %v657
  %738 = vmatpush.bf16.msra.mxu0 %v656
  %739 = vmatpush.bf16.msra.mxu0 %v655
  %740 = vmatpush.bf16.msra.mxu0 %v654
  %741 = vmatpush.bf16.msra.mxu0 %v653
  %742 = vmatpush.bf16.msra.mxu0 %v652
  %743 = vmatpush.bf16.msra.mxu0 %v651
  %744 = vmatpush.bf16.msra.mxu0 %v650
  %745 = vmatmul.bf16.gmra.mxu0 %v113
  %v746 = vpop.f32.mrf.mxu0
  %v747 = vadd.f32 %v734, %v746
  %v748 = vpop.f32.mrf.mxu0
  %749 = vdwg.mxu0
  %750 = vmatpush.bf16.msra.mxu0 0
  %751 = vmatpush.bf16.msra.mxu0 0
  %752 = vmatpush.bf16.msra.mxu0 0
  %753 = vmatpush.bf16.msra.mxu0 0
  %754 = vmatpush.bf16.msra.mxu0 %v661
  %755 = vmatpush.bf16.msra.mxu0 %v660
  %756 = vmatpush.bf16.msra.mxu0 %v659
  %757 = vmatpush.bf16.msra.mxu0 %v658
  %758 = vmatmul.bf16.gmra.mxu0 %v337
  %v759 = vpop.f32.mrf.mxu0
  %v760 = vadd.f32 %v747, %v759
  %v761 = vpop.f32.mrf.mxu0
  %762 = vdwg.mxu0
  %763 = vst [vmem:[%s6] sm:$0xff] %v760
  // Predicated region
  $region22: #{forward.32} parent=0 // pred_check
    _
  $region23: #{forward.32} parent=0 // pred_check_branch
    %765 = sbr.rel (0) target = $region25
  $region24: #{forward.32} parent=0 // pred_region
    _
  $region25: #{forward.32} parent=0 // pred_fallthru
    _
  // Predicated region
  $region26: #{forward.32} parent=0 // pred_check
    _
  $region27: #{forward.32} parent=0 // pred_check_branch
    %767 = sbr.rel (0) target = $region29
  $region28: #{forward.32} parent=0 // pred_region
    _
  $region29: #{forward.32} parent=0 // pred_fallthru
    _
  // Predicated region
  $region30: #{forward.32} parent=0 // pred_check
    _
  $region31: #{forward.32} parent=0 // pred_check_branch
    %769 = sbr.rel (0) target = $region33
  $region32: #{forward.32} parent=0 // pred_region
    _
  $region33: #{forward.32} parent=0 // pred_fallthru
    _
  // Predicated region
  $region34: #{forward.32} parent=0 // pred_check
    _
  $region35: #{forward.32} parent=0 // pred_check_branch
    %771 = sbr.rel (0) target = $region37
  $region36: #{forward.32} parent=0 // pred_region
    _
  $region37: #{forward.32} parent=0 // pred_fallthru
    _

// kernel: forward.33
$region0: #{forward.33}
  #allocation0 [shape = 'u32[]', space=smem, size = 0x4, offset = 0x4, fixed_abs, tag = 'smem constant byte address 0x4 - core index']
  #allocation1 [shape = 'u32[72,128]{1,0:T(1,128)}', space=vmem, size = 0x9000, scoped, tag = 'internal scratch']
  %s0 = inlined_call_operand.vmem [shape: bf16[8,1152], index: 0, kind: input, shape index: {}]
  %s1 = inlined_call_operand.vmem [shape: bf16[1152,128], index: 1, kind: input, shape index: {}]
  %s2 = inlined_call_operand.vmem [shape: f32[1,128], index: 2, kind: input, shape index: {}]
  %s3 = inlined_call_operand.vmem [shape: f32[8,128], index: 3, kind: input, shape index: {}]
  %s4 = inlined_call_operand.vmem [shape: f32[8,128], index: 4, kind: output, shape index: {}]
  %s5 = sld [smem:[#allocation0]]
  $region26: #{forward.33} parent=0
    _
  %s7 = ssub.s32 1, %s5
  %s8 = scalar_select 0, %s7, %s5
  // Predicated region
  $region2: #{forward.33} parent=0 // pred_check
    _
  $region3: #{forward.33} parent=0 // pred_check_branch
    %10 = sbr.rel (0) target = $region5
  $region4: #{forward.33} parent=0 // pred_region
    _
  $region5: #{forward.33} parent=0 // pred_fallthru
    _
  // Predicated region
  $region6: #{forward.33} parent=0 // pred_check
    _
  $region7: #{forward.33} parent=0 // pred_check_branch
    %12 = sbr.rel (0) target = $region9
  $region8: #{forward.33} parent=0 // pred_region
    _
  $region9: #{forward.33} parent=0 // pred_fallthru
    _
  // Predicated region
  $region10: #{forward.33} parent=0 // pred_check
    _
  $region11: #{forward.33} parent=0 // pred_check_branch
    %14 = sbr.rel (0) target = $region13
  $region12: #{forward.33} parent=0 // pred_region
    _
  $region13: #{forward.33} parent=0 // pred_fallthru
    _
  // Predicated region
  $region14: #{forward.33} parent=0 // pred_check
    _
  $region15: #{forward.33} parent=0 // pred_check_branch
    %16 = sbr.rel (0) target = $region17
  $region16: #{forward.33} parent=0 // pred_region
    _
  $region17: #{forward.33} parent=0 // pred_fallthru
    _
  %v17 = vld [vmem:[%s0] sm:$0xff]
  %v18 = vld [vmem:[%s0 + $0x8] sm:$0xff]
  %v19 = vld [vmem:[%s0 + $0x10] sm:$0xff]
  %v20 = vld [vmem:[%s0 + $0x18] sm:$0xff]
  %v21 = vld [vmem:[%s0 + $0x20] sm:$0xf]
  %v22 = vld [vmem:[%s1] sm:$0xf]
  %v23 = vld [vmem:[%s1 + $0x4] sm:$0xf]
  %v24 = vld [vmem:[%s1 + $0x8] sm:$0xf]
  %v25 = vld [vmem:[%s1 + $0xc] sm:$0xf]
  %v26 = vld [vmem:[%s1 + $0x10] sm:$0xf]
  %v27 = vld [vmem:[%s1 + $0x14] sm:$0xf]
  %v28 = vld [vmem:[%s1 + $0x18] sm:$0xf]
  %v29 = vld [vmem:[%s1 + $0x1c] sm:$0xf]
  %v30 = vld [vmem:[%s1 + $0x20] sm:$0xf]
  %v31 = vld [vmem:[%s1 + $0x24] sm:$0xf]
  %v32 = vld [vmem:[%s1 + $0x28] sm:$0xf]
  %v33 = vld [vmem:[%s1 + $0x2c] sm:$0xf]
  %v34 = vld [vmem:[%s1 + $0x30] sm:$0xf]
  %v35 = vld [vmem:[%s1 + $0x34] sm:$0xf]
  %v36 = vld [vmem:[%s1 + $0x38] sm:$0xf]
  %v37 = vld [vmem:[%s1 + $0x3c] sm:$0xf]
  %v38 = vld [vmem:[%s1 + $0x40] sm:$0xf]
  %v39 = vld [vmem:[%s1 + $0x44] sm:$0xf]
  %v40 = vld [vmem:[%s1 + $0x48] sm:$0xf]
  %v41 = vld [vmem:[%s1 + $0x4c] sm:$0xf]
  %v42 = vld [vmem:[%s1 + $0x50] sm:$0xf]
  %v43 = vld [vmem:[%s1 + $0x54] sm:$0xf]
  %v44 = vld [vmem:[%s1 + $0x58] sm:$0xf]
  %v45 = vld [vmem:[%s1 + $0x5c] sm:$0xf]
  %v46 = vld [vmem:[%s1 + $0x60] sm:$0xf]
  %v47 = vld [vmem:[%s1 + $0x64] sm:$0xf]
  %v48 = vld [vmem:[%s1 + $0x68] sm:$0xf]
  %v49 = vld [vmem:[%s1 + $0x6c] sm:$0xf]
  %v50 = vld [vmem:[%s1 + $0x70] sm:$0xf]
  %v51 = vld [vmem:[%s1 + $0x74] sm:$0xf]
  %v52 = vld [vmem:[%s1 + $0x78] sm:$0xf]
  %v53 = vld [vmem:[%s1 + $0x7c] sm:$0xf]
  %v54 = vld [vmem:[%s1 + $0x80] sm:$0xf]
  %v55 = vld [vmem:[%s1 + $0x84] sm:$0xf]
  %v56 = vld [vmem:[%s1 + $0x88] sm:$0xf]
  %v57 = vld [vmem:[%s1 + $0x8c] sm:$0xf]
  %v58 = vld [vmem:[%s1 + $0x90] sm:$0xf]
  %v59 = vld [vmem:[%s1 + $0x94] sm:$0xf]
  %v60 = vld [vmem:[%s1 + $0x98] sm:$0xf]
  %v61 = vld [vmem:[%s1 + $0x9c] sm:$0xf]
  %v62 = vld [vmem:[%s1 + $0xa0] sm:$0xf]
  %v63 = vld [vmem:[%s1 + $0xa4] sm:$0xf]
  %v64 = vld [vmem:[%s1 + $0xa8] sm:$0xf]
  %v65 = vld [vmem:[%s1 + $0xac] sm:$0xf]
  %v66 = vld [vmem:[%s1 + $0xb0] sm:$0xf]
  %v67 = vld [vmem:[%s1 + $0xb4] sm:$0xf]
  %v68 = vld [vmem:[%s1 + $0xb8] sm:$0xf]
  %v69 = vld [vmem:[%s1 + $0xbc] sm:$0xf]
  %v70 = vld [vmem:[%s1 + $0xc0] sm:$0xf]
  %v71 = vld [vmem:[%s1 + $0xc4] sm:$0xf]
  %v72 = vld [vmem:[%s1 + $0xc8] sm:$0xf]
  %v73 = vld [vmem:[%s1 + $0xcc] sm:$0xf]
  %v74 = vld [vmem:[%s1 + $0xd0] sm:$0xf]
  %v75 = vld [vmem:[%s1 + $0xd4] sm:$0xf]
  %v76 = vld [vmem:[%s1 + $0xd8] sm:$0xf]
  %v77 = vld [vmem:[%s1 + $0xdc] sm:$0xf]
  %v78 = vld [vmem:[%s1 + $0xe0] sm:$0xf]
  %v79 = vld [vmem:[%s1 + $0xe4] sm:$0xf]
  %v80 = vld [vmem:[%s1 + $0xe8] sm:$0xf]
  %v81 = vld [vmem:[%s1 + $0xec] sm:$0xf]
  %v82 = vld [vmem:[%s1 + $0xf0] sm:$0xf]
  %v83 = vld [vmem:[%s1 + $0xf4] sm:$0xf]
  %v84 = vld [vmem:[%s1 + $0xf8] sm:$0xf]
  %v85 = vld [vmem:[%s1 + $0xfc] sm:$0xf]
  %v86 = vld [vmem:[%s1 + $0x100] sm:$0xf]
  %v87 = vld [vmem:[%s1 + $0x104] sm:$0xf]
  %v88 = vld [vmem:[%s1 + $0x108] sm:$0xf]
  %v89 = vld [vmem:[%s1 + $0x10c] sm:$0xf]
  %v90 = vld [vmem:[%s1 + $0x110] sm:$0xf]
  %v91 = vld [vmem:[%s1 + $0x114] sm:$0xf]
  %v92 = vld [vmem:[%s1 + $0x118] sm:$0xf]
  %v93 = vld [vmem:[%s1 + $0x11c] sm:$0xf]
  %v94 = vld [vmem:[%s1 + $0x120] sm:$0xf]
  %v95 = vld [vmem:[%s1 + $0x124] sm:$0xf]
  %v96 = vld [vmem:[%s1 + $0x128] sm:$0xf]
  %v97 = vld [vmem:[%s1 + $0x12c] sm:$0xf]
  %v98 = vld [vmem:[%s1 + $0x130] sm:$0xf]
  %v99 = vld [vmem:[%s1 + $0x134] sm:$0xf]
  %v100 = vld [vmem:[%s1 + $0x138] sm:$0xf]
  %v101 = vld [vmem:[%s1 + $0x13c] sm:$0xf]
  %v102 = vld [vmem:[%s1 + $0x140] sm:$0xf]
  %v103 = vld [vmem:[%s1 + $0x144] sm:$0xf]
  %v104 = vld [vmem:[%s1 + $0x148] sm:$0xf]
  %v105 = vld [vmem:[%s1 + $0x14c] sm:$0xf]
  %v106 = vld [vmem:[%s1 + $0x150] sm:$0xf]
  %v107 = vld [vmem:[%s1 + $0x154] sm:$0xf]
  %v108 = vld [vmem:[%s1 + $0x158] sm:$0xf]
  %v109 = vld [vmem:[%s1 + $0x15c] sm:$0xf]
  %v110 = vld [vmem:[%s1 + $0x160] sm:$0xf]
  %v111 = vld [vmem:[%s1 + $0x164] sm:$0xf]
  %v112 = vld [vmem:[%s1 + $0x168] sm:$0xf]
  %v113 = vld [vmem:[%s1 + $0x16c] sm:$0xf]
  %v114 = vld [vmem:[%s1 + $0x170] sm:$0xf]
  %v115 = vld [vmem:[%s1 + $0x174] sm:$0xf]
  %v116 = vld [vmem:[%s1 + $0x178] sm:$0xf]
  %v117 = vld [vmem:[%s1 + $0x17c] sm:$0xf]
  %v118 = vld [vmem:[%s1 + $0x180] sm:$0xf]
  %v119 = vld [vmem:[%s1 + $0x184] sm:$0xf]
  %v120 = vld [vmem:[%s1 + $0x188] sm:$0xf]
  %v121 = vld [vmem:[%s1 + $0x18c] sm:$0xf]
  %v122 = vld [vmem:[%s1 + $0x190] sm:$0xf]
  %v123 = vld [vmem:[%s1 + $0x194] sm:$0xf]
  %v124 = vld [vmem:[%s1 + $0x198] sm:$0xf]
  %v125 = vld [vmem:[%s1 + $0x19c] sm:$0xf]
  %v126 = vld [vmem:[%s1 + $0x1a0] sm:$0xf]
  %v127 = vld [vmem:[%s1 + $0x1a4] sm:$0xf]
  %v128 = vld [vmem:[%s1 + $0x1a8] sm:$0xf]
  %v129 = vld [vmem:[%s1 + $0x1ac] sm:$0xf]
  %v130 = vld [vmem:[%s1 + $0x1b0] sm:$0xf]
  %v131 = vld [vmem:[%s1 + $0x1b4] sm:$0xf]
  %v132 = vld [vmem:[%s1 + $0x1b8] sm:$0xf]
  %v133 = vld [vmem:[%s1 + $0x1bc] sm:$0xf]
  %v134 = vld [vmem:[%s1 + $0x1c0] sm:$0xf]
  %v135 = vld [vmem:[%s1 + $0x1c4] sm:$0xf]
  %v136 = vld [vmem:[%s1 + $0x1c8] sm:$0xf]
  %v137 = vld [vmem:[%s1 + $0x1cc] sm:$0xf]
  %v138 = vld [vmem:[%s1 + $0x1d0] sm:$0xf]
  %v139 = vld [vmem:[%s1 + $0x1d4] sm:$0xf]
  %v140 = vld [vmem:[%s1 + $0x1d8] sm:$0xf]
  %v141 = vld [vmem:[%s1 + $0x1dc] sm:$0xf]
  %v142 = vld [vmem:[%s1 + $0x1e0] sm:$0xf]
  %v143 = vld [vmem:[%s1 + $0x1e4] sm:$0xf]
  %v144 = vld [vmem:[%s1 + $0x1e8] sm:$0xf]
  %v145 = vld [vmem:[%s1 + $0x1ec] sm:$0xf]
  %v146 = vld [vmem:[%s1 + $0x1f0] sm:$0xf]
  %v147 = vld [vmem:[%s1 + $0x1f4] sm:$0xf]
  %v148 = vld [vmem:[%s1 + $0x1f8] sm:$0xf]
  %v149 = vld [vmem:[%s1 + $0x1fc] sm:$0xf]
  %v150 = vld [vmem:[%s1 + $0x200] sm:$0xf]
  %v151 = vld [vmem:[%s1 + $0x204] sm:$0xf]
  %v152 = vld [vmem:[%s1 + $0x208] sm:$0xf]
  %v153 = vld [vmem:[%s1 + $0x20c] sm:$0xf]
  %v154 = vld [vmem:[%s1 + $0x210] sm:$0xf]
  %v155 = vld [vmem:[%s1 + $0x214] sm:$0xf]
  %v156 = vld [vmem:[%s1 + $0x218] sm:$0xf]
  %v157 = vld [vmem:[%s1 + $0x21c] sm:$0xf]
  %v158 = vld [vmem:[%s1 + $0x220] sm:$0xf]
  %v159 = vld [vmem:[%s1 + $0x224] sm:$0xf]
  %v160 = vld [vmem:[%s1 + $0x228] sm:$0xf]
  %v161 = vld [vmem:[%s1 + $0x22c] sm:$0xf]
  %v162 = vld [vmem:[%s1 + $0x230] sm:$0xf]
  %v163 = vld [vmem:[%s1 + $0x234] sm:$0xf]
  %v164 = vld [vmem:[%s1 + $0x238] sm:$0xf]
  %v165 = vld [vmem:[%s1 + $0x23c] sm:$0xf]
  %v166 = vld [vmem:[%s2] sm:$0x1]
  %v168 = vperm.slane %v166, 0
  %v175 = vunpack.c.l.b16 %v17
  %v176 = vunpack.c.h.b16 %v17
  %v177 = vunpack.c.l.b16 %v18
  %v178 = vunpack.c.h.b16 %v18
  %v179 = vunpack.c.l.b16 %v19
  %v180 = vunpack.c.h.b16 %v19
  %v181 = vunpack.c.l.b16 %v20
  %v182 = vunpack.c.h.b16 %v20
  %v183 = vunpack.c.l.b16 %v21
  %v184 = vpack.c.b16 %v175, %v175
  %v185 = vpack.c.b16 %v176, %v176
  %v186 = vpack.c.b16 %v177, %v177
  %v187 = vpack.c.b16 %v178, %v178
  %v188 = vpack.c.b16 %v179, %v179
  %v189 = vpack.c.b16 %v180, %v180
  %v190 = vpack.c.b16 %v181, %v181
  %v191 = vpack.c.b16 %v182, %v182
  %v192 = vpack.c.b16 %v183, %v183
  %v346 = vunpack.c.l.b16 %v22
  %v347 = vunpack.c.l.b16 %v23
  %v348 = vunpack.c.l.b16 %v24
  %v349 = vunpack.c.l.b16 %v25
  %v350 = vunpack.c.l.b16 %v26
  %v351 = vunpack.c.l.b16 %v27
  %v352 = vunpack.c.l.b16 %v28
  %v353 = vunpack.c.l.b16 %v29
  %v354 = vunpack.c.l.b16 %v30
  %v355 = vunpack.c.l.b16 %v31
  %v356 = vunpack.c.l.b16 %v32
  %v357 = vunpack.c.l.b16 %v33
  %v358 = vunpack.c.l.b16 %v34
  %v359 = vunpack.c.l.b16 %v35
  %v360 = vunpack.c.l.b16 %v36
  %v361 = vunpack.c.l.b16 %v37
  %v362 = vunpack.c.l.b16 %v38
  %v363 = vunpack.c.l.b16 %v39
  %v364 = vunpack.c.l.b16 %v40
  %v365 = vunpack.c.l.b16 %v41
  %v366 = vunpack.c.l.b16 %v42
  %v367 = vunpack.c.l.b16 %v43
  %v368 = vunpack.c.l.b16 %v44
  %v369 = vunpack.c.l.b16 %v45
  %v370 = vunpack.c.l.b16 %v46
  %v371 = vunpack.c.l.b16 %v47
  %v372 = vunpack.c.l.b16 %v48
  %v373 = vunpack.c.l.b16 %v49
  %v374 = vunpack.c.l.b16 %v50
  %v375 = vunpack.c.l.b16 %v51
  %v376 = vunpack.c.l.b16 %v52
  %v377 = vunpack.c.l.b16 %v53
  %v378 = vunpack.c.l.b16 %v54
  %v379 = vunpack.c.l.b16 %v55
  %v380 = vunpack.c.l.b16 %v56
  %v381 = vunpack.c.l.b16 %v57
  %v382 = vunpack.c.l.b16 %v58
  %v383 = vunpack.c.l.b16 %v59
  %v384 = vunpack.c.l.b16 %v60
  %v385 = vunpack.c.l.b16 %v61
  %v386 = vunpack.c.l.b16 %v62
  %v387 = vunpack.c.l.b16 %v63
  %v388 = vunpack.c.l.b16 %v64
  %v389 = vunpack.c.l.b16 %v65
  %v390 = vunpack.c.l.b16 %v66
  %v391 = vunpack.c.l.b16 %v67
  %v392 = vunpack.c.l.b16 %v68
  %v393 = vunpack.c.l.b16 %v69
  %v394 = vunpack.c.l.b16 %v70
  %v395 = vunpack.c.l.b16 %v71
  %v396 = vunpack.c.l.b16 %v72
  %v397 = vunpack.c.l.b16 %v73
  %v398 = vunpack.c.l.b16 %v74
  %v399 = vunpack.c.l.b16 %v75
  %v400 = vunpack.c.l.b16 %v76
  %v401 = vunpack.c.l.b16 %v77
  %v402 = vunpack.c.l.b16 %v78
  %v403 = vunpack.c.l.b16 %v79
  %v404 = vunpack.c.l.b16 %v80
  %v405 = vunpack.c.l.b16 %v81
  %v406 = vunpack.c.l.b16 %v82
  %v407 = vunpack.c.l.b16 %v83
  %v408 = vunpack.c.l.b16 %v84
  %v409 = vunpack.c.l.b16 %v85
  %v410 = vunpack.c.l.b16 %v86
  %v411 = vunpack.c.l.b16 %v87
  %v412 = vunpack.c.l.b16 %v88
  %v413 = vunpack.c.l.b16 %v89
  %v414 = vunpack.c.l.b16 %v90
  %v415 = vunpack.c.l.b16 %v91
  %v416 = vunpack.c.l.b16 %v92
  %v417 = vunpack.c.l.b16 %v93
  %v418 = vunpack.c.l.b16 %v94
  %v419 = vunpack.c.l.b16 %v95
  %v420 = vunpack.c.l.b16 %v96
  %v421 = vunpack.c.l.b16 %v97
  %v422 = vunpack.c.l.b16 %v98
  %v423 = vunpack.c.l.b16 %v99
  %v424 = vunpack.c.l.b16 %v100
  %v425 = vunpack.c.l.b16 %v101
  %v426 = vunpack.c.l.b16 %v102
  %v427 = vunpack.c.l.b16 %v103
  %v428 = vunpack.c.l.b16 %v104
  %v429 = vunpack.c.l.b16 %v105
  %v430 = vunpack.c.l.b16 %v106
  %v431 = vunpack.c.l.b16 %v107
  %v432 = vunpack.c.l.b16 %v108
  %v433 = vunpack.c.l.b16 %v109
  %v434 = vunpack.c.l.b16 %v110
  %v435 = vunpack.c.l.b16 %v111
  %v436 = vunpack.c.l.b16 %v112
  %v437 = vunpack.c.l.b16 %v113
  %v438 = vunpack.c.l.b16 %v114
  %v439 = vunpack.c.l.b16 %v115
  %v440 = vunpack.c.l.b16 %v116
  %v441 = vunpack.c.l.b16 %v117
  %v442 = vunpack.c.l.b16 %v118
  %v443 = vunpack.c.l.b16 %v119
  %v444 = vunpack.c.l.b16 %v120
  %v445 = vunpack.c.l.b16 %v121
  %v446 = vunpack.c.l.b16 %v122
  %v447 = vunpack.c.l.b16 %v123
  %v448 = vunpack.c.l.b16 %v124
  %v449 = vunpack.c.l.b16 %v125
  %v450 = vunpack.c.l.b16 %v126
  %v451 = vunpack.c.l.b16 %v127
  %v452 = vunpack.c.l.b16 %v128
  %v453 = vunpack.c.l.b16 %v129
  %v454 = vunpack.c.l.b16 %v130
  %v455 = vunpack.c.l.b16 %v131
  %v456 = vunpack.c.l.b16 %v132
  %v457 = vunpack.c.l.b16 %v133
  %v458 = vunpack.c.l.b16 %v134
  %v459 = vunpack.c.l.b16 %v135
  %v460 = vunpack.c.l.b16 %v136
  %v461 = vunpack.c.l.b16 %v137
  %v462 = vunpack.c.l.b16 %v138
  %v463 = vunpack.c.l.b16 %v139
  %v464 = vunpack.c.l.b16 %v140
  %v465 = vunpack.c.l.b16 %v141
  %v466 = vunpack.c.l.b16 %v142
  %v467 = vunpack.c.l.b16 %v143
  %v468 = vunpack.c.l.b16 %v144
  %v469 = vunpack.c.l.b16 %v145
  %v470 = vunpack.c.l.b16 %v146
  %v471 = vunpack.c.l.b16 %v147
  %v472 = vunpack.c.l.b16 %v148
  %v473 = vunpack.c.l.b16 %v149
  %v474 = vunpack.c.l.b16 %v150
  %v475 = vunpack.c.l.b16 %v151
  %v476 = vunpack.c.l.b16 %v152
  %v477 = vunpack.c.l.b16 %v153
  %v478 = vunpack.c.l.b16 %v154
  %v479 = vunpack.c.l.b16 %v155
  %v480 = vunpack.c.l.b16 %v156
  %v481 = vunpack.c.l.b16 %v157
  %v482 = vunpack.c.l.b16 %v158
  %v483 = vunpack.c.l.b16 %v159
  %v484 = vunpack.c.l.b16 %v160
  %v485 = vunpack.c.l.b16 %v161
  %v486 = vunpack.c.l.b16 %v162
  %v487 = vunpack.c.l.b16 %v163
  %v488 = vunpack.c.l.b16 %v164
  %v489 = vunpack.c.l.b16 %v165
  %v490 = vpack.c.b16 %v347, %v346
  %v491 = vpack.c.b16 %v349, %v348
  %v492 = vpack.c.b16 %v351, %v350
  %v493 = vpack.c.b16 %v353, %v352
  %v494 = vpack.c.b16 %v355, %v354
  %v495 = vpack.c.b16 %v357, %v356
  %v496 = vpack.c.b16 %v359, %v358
  %v497 = vpack.c.b16 %v361, %v360
  %v498 = vpack.c.b16 %v363, %v362
  %v499 = vpack.c.b16 %v365, %v364
  %v500 = vpack.c.b16 %v367, %v366
  %v501 = vpack.c.b16 %v369, %v368
  %v502 = vpack.c.b16 %v371, %v370
  %v503 = vpack.c.b16 %v373, %v372
  %v504 = vpack.c.b16 %v375, %v374
  %v505 = vpack.c.b16 %v377, %v376
  %v506 = vpack.c.b16 %v379, %v378
  %v507 = vpack.c.b16 %v381, %v380
  %v508 = vpack.c.b16 %v383, %v382
  %v509 = vpack.c.b16 %v385, %v384
  %v510 = vpack.c.b16 %v387, %v386
  %v511 = vpack.c.b16 %v389, %v388
  %v512 = vpack.c.b16 %v391, %v390
  %v513 = vpack.c.b16 %v393, %v392
  %v514 = vpack.c.b16 %v395, %v394
  %v515 = vpack.c.b16 %v397, %v396
  %v516 = vpack.c.b16 %v399, %v398
  %v517 = vpack.c.b16 %v401, %v400
  %v518 = vpack.c.b16 %v403, %v402
  %v519 = vpack.c.b16 %v405, %v404
  %v520 = vpack.c.b16 %v407, %v406
  %v521 = vpack.c.b16 %v409, %v408
  %v522 = vpack.c.b16 %v411, %v410
  %v523 = vpack.c.b16 %v413, %v412
  %v524 = vpack.c.b16 %v415, %v414
  %v525 = vpack.c.b16 %v417, %v416
  %v526 = vpack.c.b16 %v419, %v418
  %v527 = vpack.c.b16 %v421, %v420
  %v528 = vpack.c.b16 %v423, %v422
  %v529 = vpack.c.b16 %v425, %v424
  %v530 = vpack.c.b16 %v427, %v426
  %v531 = vpack.c.b16 %v429, %v428
  %v532 = vpack.c.b16 %v431, %v430
  %v533 = vpack.c.b16 %v433, %v432
  %v534 = vpack.c.b16 %v435, %v434
  %v535 = vpack.c.b16 %v437, %v436
  %v536 = vpack.c.b16 %v439, %v438
  %v537 = vpack.c.b16 %v441, %v440
  %v538 = vpack.c.b16 %v443, %v442
  %v539 = vpack.c.b16 %v445, %v444
  %v540 = vpack.c.b16 %v447, %v446
  %v541 = vpack.c.b16 %v449, %v448
  %v542 = vpack.c.b16 %v451, %v450
  %v543 = vpack.c.b16 %v453, %v452
  %v544 = vpack.c.b16 %v455, %v454
  %v545 = vpack.c.b16 %v457, %v456
  %v546 = vpack.c.b16 %v459, %v458
  %v547 = vpack.c.b16 %v461, %v460
  %v548 = vpack.c.b16 %v463, %v462
  %v549 = vpack.c.b16 %v465, %v464
  %v550 = vpack.c.b16 %v467, %v466
  %v551 = vpack.c.b16 %v469, %v468
  %v552 = vpack.c.b16 %v471, %v470
  %v553 = vpack.c.b16 %v473, %v472
  %v554 = vpack.c.b16 %v475, %v474
  %v555 = vpack.c.b16 %v477, %v476
  %v556 = vpack.c.b16 %v479, %v478
  %v557 = vpack.c.b16 %v481, %v480
  %v558 = vpack.c.b16 %v483, %v482
  %v559 = vpack.c.b16 %v485, %v484
  %v560 = vpack.c.b16 %v487, %v486
  %v561 = vpack.c.b16 %v489, %v488
  %634 = vmatpush.bf16.msra.mxu0 %v497
  %635 = vmatpush.bf16.msra.mxu0 %v496
  %636 = vmatpush.bf16.msra.mxu0 %v495
  %637 = vmatpush.bf16.msra.mxu0 %v494
  %638 = vmatpush.bf16.msra.mxu0 %v493
  %639 = vmatpush.bf16.msra.mxu0 %v492
  %640 = vmatpush.bf16.msra.mxu0 %v491
  %641 = vmatpush.bf16.msra.mxu0 %v490
  %642 = vmatmul.bf16.gmra.mxu0 %v184
  %v643 = vpop.f32.mrf.mxu0
  %v644 = vadd.f32 %v168, %v643
  %v645 = vpop.f32.mrf.mxu0
  %646 = vdwg.mxu0
  %647 = vmatpush.bf16.msra.mxu0 %v505
  %648 = vmatpush.bf16.msra.mxu0 %v504
  %649 = vmatpush.bf16.msra.mxu0 %v503
  %650 = vmatpush.bf16.msra.mxu0 %v502
  %651 = vmatpush.bf16.msra.mxu0 %v501
  %652 = vmatpush.bf16.msra.mxu0 %v500
  %653 = vmatpush.bf16.msra.mxu0 %v499
  %654 = vmatpush.bf16.msra.mxu0 %v498
  %655 = vmatmul.bf16.gmra.mxu0 %v185
  %v656 = vpop.f32.mrf.mxu0
  %v657 = vadd.f32 %v644, %v656
  %v658 = vpop.f32.mrf.mxu0
  %659 = vdwg.mxu0
  %660 = vmatpush.bf16.msra.mxu0 %v513
  %661 = vmatpush.bf16.msra.mxu0 %v512
  %662 = vmatpush.bf16.msra.mxu0 %v511
  %663 = vmatpush.bf16.msra.mxu0 %v510
  %664 = vmatpush.bf16.msra.mxu0 %v509
  %665 = vmatpush.bf16.msra.mxu0 %v508
  %666 = vmatpush.bf16.msra.mxu0 %v507
  %667 = vmatpush.bf16.msra.mxu0 %v506
  %668 = vmatmul.bf16.gmra.mxu0 %v186
  %v669 = vpop.f32.mrf.mxu0
  %v670 = vadd.f32 %v657, %v669
  %v671 = vpop.f32.mrf.mxu0
  %672 = vdwg.mxu0
  %673 = vmatpush.bf16.msra.mxu0 %v521
  %674 = vmatpush.bf16.msra.mxu0 %v520
  %675 = vmatpush.bf16.msra.mxu0 %v519
  %676 = vmatpush.bf16.msra.mxu0 %v518
  %677 = vmatpush.bf16.msra.mxu0 %v517
  %678 = vmatpush.bf16.msra.mxu0 %v516
  %679 = vmatpush.bf16.msra.mxu0 %v515
  %680 = vmatpush.bf16.msra.mxu0 %v514
  %681 = vmatmul.bf16.gmra.mxu0 %v187
  %v682 = vpop.f32.mrf.mxu0
  %v683 = vadd.f32 %v670, %v682
  %v684 = vpop.f32.mrf.mxu0
  %685 = vdwg.mxu0
  %686 = vmatpush.bf16.msra.mxu0 %v529
  %687 = vmatpush.bf16.msra.mxu0 %v528
  %688 = vmatpush.bf16.msra.mxu0 %v527
  %689 = vmatpush.bf16.msra.mxu0 %v526
  %690 = vmatpush.bf16.msra.mxu0 %v525
  %691 = vmatpush.bf16.msra.mxu0 %v524
  %692 = vmatpush.bf16.msra.mxu0 %v523
  %693 = vmatpush.bf16.msra.mxu0 %v522
  %694 = vmatmul.bf16.gmra.mxu0 %v188
  %v695 = vpop.f32.mrf.mxu0
  %v696 = vadd.f32 %v683, %v695
  %v697 = vpop.f32.mrf.mxu0
  %698 = vdwg.mxu0
  %699 = vmatpush.bf16.msra.mxu0 %v537
  %700 = vmatpush.bf16.msra.mxu0 %v536
  %701 = vmatpush.bf16.msra.mxu0 %v535
  %702 = vmatpush.bf16.msra.mxu0 %v534
  %703 = vmatpush.bf16.msra.mxu0 %v533
  %704 = vmatpush.bf16.msra.mxu0 %v532
  %705 = vmatpush.bf16.msra.mxu0 %v531
  %706 = vmatpush.bf16.msra.mxu0 %v530
  %707 = vmatmul.bf16.gmra.mxu0 %v189
  %v708 = vpop.f32.mrf.mxu0
  %v709 = vadd.f32 %v696, %v708
  %v710 = vpop.f32.mrf.mxu0
  %711 = vdwg.mxu0
  %712 = vmatpush.bf16.msra.mxu0 %v545
  %713 = vmatpush.bf16.msra.mxu0 %v544
  %714 = vmatpush.bf16.msra.mxu0 %v543
  %715 = vmatpush.bf16.msra.mxu0 %v542
  %716 = vmatpush.bf16.msra.mxu0 %v541
  %717 = vmatpush.bf16.msra.mxu0 %v540
  %718 = vmatpush.bf16.msra.mxu0 %v539
  %719 = vmatpush.bf16.msra.mxu0 %v538
  %720 = vmatmul.bf16.gmra.mxu0 %v190
  %v721 = vpop.f32.mrf.mxu0
  %v722 = vadd.f32 %v709, %v721
  %v723 = vpop.f32.mrf.mxu0
  %724 = vdwg.mxu0
  %725 = vmatpush.bf16.msra.mxu0 %v553
  %726 = vmatpush.bf16.msra.mxu0 %v552
  %727 = vmatpush.bf16.msra.mxu0 %v551
  %728 = vmatpush.bf16.msra.mxu0 %v550
  %729 = vmatpush.bf16.msra.mxu0 %v549
  %730 = vmatpush.bf16.msra.mxu0 %v548
  %731 = vmatpush.bf16.msra.mxu0 %v547
  %732 = vmatpush.bf16.msra.mxu0 %v546
  %733 = vmatmul.bf16.gmra.mxu0 %v191
  %v734 = vpop.f32.mrf.mxu0
  %v735 = vadd.f32 %v722, %v734
  %v736 = vpop.f32.mrf.mxu0
  %737 = vdwg.mxu0
  %738 = vmatpush.bf16.msra.mxu0 %v561
  %739 = vmatpush.bf16.msra.mxu0 %v560
  %740 = vmatpush.bf16.msra.mxu0 %v559
  %741 = vmatpush.bf16.msra.mxu0 %v558
  %742 = vmatpush.bf16.msra.mxu0 %v557
  %743 = vmatpush.bf16.msra.mxu0 %v556
  %744 = vmatpush.bf16.msra.mxu0 %v555
  %745 = vmatpush.bf16.msra.mxu0 %v554
  %746 = vmatmul.bf16.gmra.mxu0 %v192
  %v747 = vpop.f32.mrf.mxu0
  %v748 = vadd.f32 %v735, %v747
  %v749 = vpop.f32.mrf.mxu0
  %750 = vdwg.mxu0
  %v751 = vld [vmem:[%s3] sm:$0xff]
  %v752 = vadd.f32 %v748, %v751
  %v753 = vmax.f32 %v752, 0.0
  %754 = vst [vmem:[%s4] sm:$0xff] %v753
  // Predicated region
  $region18: #{forward.33} parent=0 // pred_check
    _
  $region19: #{forward.33} parent=0 // pred_check_branch
    %756 = sbr.rel (0) target = $region21
  $region20: #{forward.33} parent=0 // pred_region
    _
  $region21: #{forward.33} parent=0 // pred_fallthru
    _
  // Predicated region
  $region22: #{forward.33} parent=0 // pred_check
    _
  $region23: #{forward.33} parent=0 // pred_check_branch
    %758 = sbr.rel (0) target = $region25
  $region24: #{forward.33} parent=0 // pred_region
    _
  $region25: #{forward.33} parent=0 // pred_fallthru
    _

// kernel: forward.34
$region0: #{forward.34}
  #allocation0 [shape = 'u32[]', space=smem, size = 0x4, offset = 0x4, fixed_abs, tag = 'smem constant byte address 0x4 - core index']
  #allocation1 [shape = 'u32[72,128]{1,0:T(1,128)}', space=vmem, size = 0x9000, scoped, tag = 'internal scratch']
  %s0 = inlined_call_operand.vmem [shape: bf16[8,1152], index: 0, kind: input, shape index: {}]
  %s1 = inlined_call_operand.vmem [shape: bf16[1152,128], index: 1, kind: input, shape index: {}]
  %s2 = inlined_call_operand.vmem [shape: f32[1,128], index: 2, kind: input, shape index: {}]
  %s3 = inlined_call_operand.vmem [shape: f32[8,128], index: 3, kind: output, shape index: {}]
  %s4 = sld [smem:[#allocation0]]
  $region22: #{forward.34} parent=0
    _
  %s6 = ssub.s32 1, %s4
  %s7 = scalar_select 0, %s6, %s4
  // Predicated region
  $region2: #{forward.34} parent=0 // pred_check
    _
  $region3: #{forward.34} parent=0 // pred_check_branch
    %9 = sbr.rel (0) target = $region5
  $region4: #{forward.34} parent=0 // pred_region
    _
  $region5: #{forward.34} parent=0 // pred_fallthru
    _
  // Predicated region
  $region6: #{forward.34} parent=0 // pred_check
    _
  $region7: #{forward.34} parent=0 // pred_check_branch
    %11 = sbr.rel (0) target = $region9
  $region8: #{forward.34} parent=0 // pred_region
    _
  $region9: #{forward.34} parent=0 // pred_fallthru
    _
  // Predicated region
  $region10: #{forward.34} parent=0 // pred_check
    _
  $region11: #{forward.34} parent=0 // pred_check_branch
    %13 = sbr.rel (0) target = $region13
  $region12: #{forward.34} parent=0 // pred_region
    _
  $region13: #{forward.34} parent=0 // pred_fallthru
    _
  %v14 = vld [vmem:[%s0] sm:$0xff]
  %v15 = vld [vmem:[%s0 + $0x8] sm:$0xff]
  %v16 = vld [vmem:[%s0 + $0x10] sm:$0xff]
  %v17 = vld [vmem:[%s0 + $0x18] sm:$0xff]
  %v18 = vld [vmem:[%s0 + $0x20] sm:$0xf]
  %v19 = vld [vmem:[%s1] sm:$0xf]
  %v20 = vld [vmem:[%s1 + $0x4] sm:$0xf]
  %v21 = vld [vmem:[%s1 + $0x8] sm:$0xf]
  %v22 = vld [vmem:[%s1 + $0xc] sm:$0xf]
  %v23 = vld [vmem:[%s1 + $0x10] sm:$0xf]
  %v24 = vld [vmem:[%s1 + $0x14] sm:$0xf]
  %v25 = vld [vmem:[%s1 + $0x18] sm:$0xf]
  %v26 = vld [vmem:[%s1 + $0x1c] sm:$0xf]
  %v27 = vld [vmem:[%s1 + $0x20] sm:$0xf]
  %v28 = vld [vmem:[%s1 + $0x24] sm:$0xf]
  %v29 = vld [vmem:[%s1 + $0x28] sm:$0xf]
  %v30 = vld [vmem:[%s1 + $0x2c] sm:$0xf]
  %v31 = vld [vmem:[%s1 + $0x30] sm:$0xf]
  %v32 = vld [vmem:[%s1 + $0x34] sm:$0xf]
  %v33 = vld [vmem:[%s1 + $0x38] sm:$0xf]
  %v34 = vld [vmem:[%s1 + $0x3c] sm:$0xf]
  %v35 = vld [vmem:[%s1 + $0x40] sm:$0xf]
  %v36 = vld [vmem:[%s1 + $0x44] sm:$0xf]
  %v37 = vld [vmem:[%s1 + $0x48] sm:$0xf]
  %v38 = vld [vmem:[%s1 + $0x4c] sm:$0xf]
  %v39 = vld [vmem:[%s1 + $0x50] sm:$0xf]
  %v40 = vld [vmem:[%s1 + $0x54] sm:$0xf]
  %v41 = vld [vmem:[%s1 + $0x58] sm:$0xf]
  %v42 = vld [vmem:[%s1 + $0x5c] sm:$0xf]
  %v43 = vld [vmem:[%s1 + $0x60] sm:$0xf]
  %v44 = vld [vmem:[%s1 + $0x64] sm:$0xf]
  %v45 = vld [vmem:[%s1 + $0x68] sm:$0xf]
  %v46 = vld [vmem:[%s1 + $0x6c] sm:$0xf]
  %v47 = vld [vmem:[%s1 + $0x70] sm:$0xf]
  %v48 = vld [vmem:[%s1 + $0x74] sm:$0xf]
  %v49 = vld [vmem:[%s1 + $0x78] sm:$0xf]
  %v50 = vld [vmem:[%s1 + $0x7c] sm:$0xf]
  %v51 = vld [vmem:[%s1 + $0x80] sm:$0xf]
  %v52 = vld [vmem:[%s1 + $0x84] sm:$0xf]
  %v53 = vld [vmem:[%s1 + $0x88] sm:$0xf]
  %v54 = vld [vmem:[%s1 + $0x8c] sm:$0xf]
  %v55 = vld [vmem:[%s1 + $0x90] sm:$0xf]
  %v56 = vld [vmem:[%s1 + $0x94] sm:$0xf]
  %v57 = vld [vmem:[%s1 + $0x98] sm:$0xf]
  %v58 = vld [vmem:[%s1 + $0x9c] sm:$0xf]
  %v59 = vld [vmem:[%s1 + $0xa0] sm:$0xf]
  %v60 = vld [vmem:[%s1 + $0xa4] sm:$0xf]
  %v61 = vld [vmem:[%s1 + $0xa8] sm:$0xf]
  %v62 = vld [vmem:[%s1 + $0xac] sm:$0xf]
  %v63 = vld [vmem:[%s1 + $0xb0] sm:$0xf]
  %v64 = vld [vmem:[%s1 + $0xb4] sm:$0xf]
  %v65 = vld [vmem:[%s1 + $0xb8] sm:$0xf]
  %v66 = vld [vmem:[%s1 + $0xbc] sm:$0xf]
  %v67 = vld [vmem:[%s1 + $0xc0] sm:$0xf]
  %v68 = vld [vmem:[%s1 + $0xc4] sm:$0xf]
  %v69 = vld [vmem:[%s1 + $0xc8] sm:$0xf]
  %v70 = vld [vmem:[%s1 + $0xcc] sm:$0xf]
  %v71 = vld [vmem:[%s1 + $0xd0] sm:$0xf]
  %v72 = vld [vmem:[%s1 + $0xd4] sm:$0xf]
  %v73 = vld [vmem:[%s1 + $0xd8] sm:$0xf]
  %v74 = vld [vmem:[%s1 + $0xdc] sm:$0xf]
  %v75 = vld [vmem:[%s1 + $0xe0] sm:$0xf]
  %v76 = vld [vmem:[%s1 + $0xe4] sm:$0xf]
  %v77 = vld [vmem:[%s1 + $0xe8] sm:$0xf]
  %v78 = vld [vmem:[%s1 + $0xec] sm:$0xf]
  %v79 = vld [vmem:[%s1 + $0xf0] sm:$0xf]
  %v80 = vld [vmem:[%s1 + $0xf4] sm:$0xf]
  %v81 = vld [vmem:[%s1 + $0xf8] sm:$0xf]
  %v82 = vld [vmem:[%s1 + $0xfc] sm:$0xf]
  %v83 = vld [vmem:[%s1 + $0x100] sm:$0xf]
  %v84 = vld [vmem:[%s1 + $0x104] sm:$0xf]
  %v85 = vld [vmem:[%s1 + $0x108] sm:$0xf]
  %v86 = vld [vmem:[%s1 + $0x10c] sm:$0xf]
  %v87 = vld [vmem:[%s1 + $0x110] sm:$0xf]
  %v88 = vld [vmem:[%s1 + $0x114] sm:$0xf]
  %v89 = vld [vmem:[%s1 + $0x118] sm:$0xf]
  %v90 = vld [vmem:[%s1 + $0x11c] sm:$0xf]
  %v91 = vld [vmem:[%s1 + $0x120] sm:$0xf]
  %v92 = vld [vmem:[%s1 + $0x124] sm:$0xf]
  %v93 = vld [vmem:[%s1 + $0x128] sm:$0xf]
  %v94 = vld [vmem:[%s1 + $0x12c] sm:$0xf]
  %v95 = vld [vmem:[%s1 + $0x130] sm:$0xf]
  %v96 = vld [vmem:[%s1 + $0x134] sm:$0xf]
  %v97 = vld [vmem:[%s1 + $0x138] sm:$0xf]
  %v98 = vld [vmem:[%s1 + $0x13c] sm:$0xf]
  %v99 = vld [vmem:[%s1 + $0x140] sm:$0xf]
  %v100 = vld [vmem:[%s1 + $0x144] sm:$0xf]
  %v101 = vld [vmem:[%s1 + $0x148] sm:$0xf]
  %v102 = vld [vmem:[%s1 + $0x14c] sm:$0xf]
  %v103 = vld [vmem:[%s1 + $0x150] sm:$0xf]
  %v104 = vld [vmem:[%s1 + $0x154] sm:$0xf]
  %v105 = vld [vmem:[%s1 + $0x158] sm:$0xf]
  %v106 = vld [vmem:[%s1 + $0x15c] sm:$0xf]
  %v107 = vld [vmem:[%s1 + $0x160] sm:$0xf]
  %v108 = vld [vmem:[%s1 + $0x164] sm:$0xf]
  %v109 = vld [vmem:[%s1 + $0x168] sm:$0xf]
  %v110 = vld [vmem:[%s1 + $0x16c] sm:$0xf]
  %v111 = vld [vmem:[%s1 + $0x170] sm:$0xf]
  %v112 = vld [vmem:[%s1 + $0x174] sm:$0xf]
  %v113 = vld [vmem:[%s1 + $0x178] sm:$0xf]
  %v114 = vld [vmem:[%s1 + $0x17c] sm:$0xf]
  %v115 = vld [vmem:[%s1 + $0x180] sm:$0xf]
  %v116 = vld [vmem:[%s1 + $0x184] sm:$0xf]
  %v117 = vld [vmem:[%s1 + $0x188] sm:$0xf]
  %v118 = vld [vmem:[%s1 + $0x18c] sm:$0xf]
  %v119 = vld [vmem:[%s1 + $0x190] sm:$0xf]
  %v120 = vld [vmem:[%s1 + $0x194] sm:$0xf]
  %v121 = vld [vmem:[%s1 + $0x198] sm:$0xf]
  %v122 = vld [vmem:[%s1 + $0x19c] sm:$0xf]
  %v123 = vld [vmem:[%s1 + $0x1a0] sm:$0xf]
  %v124 = vld [vmem:[%s1 + $0x1a4] sm:$0xf]
  %v125 = vld [vmem:[%s1 + $0x1a8] sm:$0xf]
  %v126 = vld [vmem:[%s1 + $0x1ac] sm:$0xf]
  %v127 = vld [vmem:[%s1 + $0x1b0] sm:$0xf]
  %v128 = vld [vmem:[%s1 + $0x1b4] sm:$0xf]
  %v129 = vld [vmem:[%s1 + $0x1b8] sm:$0xf]
  %v130 = vld [vmem:[%s1 + $0x1bc] sm:$0xf]
  %v131 = vld [vmem:[%s1 + $0x1c0] sm:$0xf]
  %v132 = vld [vmem:[%s1 + $0x1c4] sm:$0xf]
  %v133 = vld [vmem:[%s1 + $0x1c8] sm:$0xf]
  %v134 = vld [vmem:[%s1 + $0x1cc] sm:$0xf]
  %v135 = vld [vmem:[%s1 + $0x1d0] sm:$0xf]
  %v136 = vld [vmem:[%s1 + $0x1d4] sm:$0xf]
  %v137 = vld [vmem:[%s1 + $0x1d8] sm:$0xf]
  %v138 = vld [vmem:[%s1 + $0x1dc] sm:$0xf]
  %v139 = vld [vmem:[%s1 + $0x1e0] sm:$0xf]
  %v140 = vld [vmem:[%s1 + $0x1e4] sm:$0xf]
  %v141 = vld [vmem:[%s1 + $0x1e8] sm:$0xf]
  %v142 = vld [vmem:[%s1 + $0x1ec] sm:$0xf]
  %v143 = vld [vmem:[%s1 + $0x1f0] sm:$0xf]
  %v144 = vld [vmem:[%s1 + $0x1f4] sm:$0xf]
  %v145 = vld [vmem:[%s1 + $0x1f8] sm:$0xf]
  %v146 = vld [vmem:[%s1 + $0x1fc] sm:$0xf]
  %v147 = vld [vmem:[%s1 + $0x200] sm:$0xf]
  %v148 = vld [vmem:[%s1 + $0x204] sm:$0xf]
  %v149 = vld [vmem:[%s1 + $0x208] sm:$0xf]
  %v150 = vld [vmem:[%s1 + $0x20c] sm:$0xf]
  %v151 = vld [vmem:[%s1 + $0x210] sm:$0xf]
  %v152 = vld [vmem:[%s1 + $0x214] sm:$0xf]
  %v153 = vld [vmem:[%s1 + $0x218] sm:$0xf]
  %v154 = vld [vmem:[%s1 + $0x21c] sm:$0xf]
  %v155 = vld [vmem:[%s1 + $0x220] sm:$0xf]
  %v156 = vld [vmem:[%s1 + $0x224] sm:$0xf]
  %v157 = vld [vmem:[%s1 + $0x228] sm:$0xf]
  %v158 = vld [vmem:[%s1 + $0x22c] sm:$0xf]
  %v159 = vld [vmem:[%s1 + $0x230] sm:$0xf]
  %v160 = vld [vmem:[%s1 + $0x234] sm:$0xf]
  %v161 = vld [vmem:[%s1 + $0x238] sm:$0xf]
  %v162 = vld [vmem:[%s1 + $0x23c] sm:$0xf]
  %v163 = vld [vmem:[%s2] sm:$0x1]
  %v165 = vperm.slane %v163, 0
  %v172 = vunpack.c.l.b16 %v14
  %v173 = vunpack.c.h.b16 %v14
  %v174 = vunpack.c.l.b16 %v15
  %v175 = vunpack.c.h.b16 %v15
  %v176 = vunpack.c.l.b16 %v16
  %v177 = vunpack.c.h.b16 %v16
  %v178 = vunpack.c.l.b16 %v17
  %v179 = vunpack.c.h.b16 %v17
  %v180 = vunpack.c.l.b16 %v18
  %v181 = vpack.c.b16 %v172, %v172
  %v182 = vpack.c.b16 %v173, %v173
  %v183 = vpack.c.b16 %v174, %v174
  %v184 = vpack.c.b16 %v175, %v175
  %v185 = vpack.c.b16 %v176, %v176
  %v186 = vpack.c.b16 %v177, %v177
  %v187 = vpack.c.b16 %v178, %v178
  %v188 = vpack.c.b16 %v179, %v179
  %v189 = vpack.c.b16 %v180, %v180
  %v343 = vunpack.c.l.b16 %v19
  %v344 = vunpack.c.l.b16 %v20
  %v345 = vunpack.c.l.b16 %v21
  %v346 = vunpack.c.l.b16 %v22
  %v347 = vunpack.c.l.b16 %v23
  %v348 = vunpack.c.l.b16 %v24
  %v349 = vunpack.c.l.b16 %v25
  %v350 = vunpack.c.l.b16 %v26
  %v351 = vunpack.c.l.b16 %v27
  %v352 = vunpack.c.l.b16 %v28
  %v353 = vunpack.c.l.b16 %v29
  %v354 = vunpack.c.l.b16 %v30
  %v355 = vunpack.c.l.b16 %v31
  %v356 = vunpack.c.l.b16 %v32
  %v357 = vunpack.c.l.b16 %v33
  %v358 = vunpack.c.l.b16 %v34
  %v359 = vunpack.c.l.b16 %v35
  %v360 = vunpack.c.l.b16 %v36
  %v361 = vunpack.c.l.b16 %v37
  %v362 = vunpack.c.l.b16 %v38
  %v363 = vunpack.c.l.b16 %v39
  %v364 = vunpack.c.l.b16 %v40
  %v365 = vunpack.c.l.b16 %v41
  %v366 = vunpack.c.l.b16 %v42
  %v367 = vunpack.c.l.b16 %v43
  %v368 = vunpack.c.l.b16 %v44
  %v369 = vunpack.c.l.b16 %v45
  %v370 = vunpack.c.l.b16 %v46
  %v371 = vunpack.c.l.b16 %v47
  %v372 = vunpack.c.l.b16 %v48
  %v373 = vunpack.c.l.b16 %v49
  %v374 = vunpack.c.l.b16 %v50
  %v375 = vunpack.c.l.b16 %v51
  %v376 = vunpack.c.l.b16 %v52
  %v377 = vunpack.c.l.b16 %v53
  %v378 = vunpack.c.l.b16 %v54
  %v379 = vunpack.c.l.b16 %v55
  %v380 = vunpack.c.l.b16 %v56
  %v381 = vunpack.c.l.b16 %v57
  %v382 = vunpack.c.l.b16 %v58
  %v383 = vunpack.c.l.b16 %v59
  %v384 = vunpack.c.l.b16 %v60
  %v385 = vunpack.c.l.b16 %v61
  %v386 = vunpack.c.l.b16 %v62
  %v387 = vunpack.c.l.b16 %v63
  %v388 = vunpack.c.l.b16 %v64
  %v389 = vunpack.c.l.b16 %v65
  %v390 = vunpack.c.l.b16 %v66
  %v391 = vunpack.c.l.b16 %v67
  %v392 = vunpack.c.l.b16 %v68
  %v393 = vunpack.c.l.b16 %v69
  %v394 = vunpack.c.l.b16 %v70
  %v395 = vunpack.c.l.b16 %v71
  %v396 = vunpack.c.l.b16 %v72
  %v397 = vunpack.c.l.b16 %v73
  %v398 = vunpack.c.l.b16 %v74
  %v399 = vunpack.c.l.b16 %v75
  %v400 = vunpack.c.l.b16 %v76
  %v401 = vunpack.c.l.b16 %v77
  %v402 = vunpack.c.l.b16 %v78
  %v403 = vunpack.c.l.b16 %v79
  %v404 = vunpack.c.l.b16 %v80
  %v405 = vunpack.c.l.b16 %v81
  %v406 = vunpack.c.l.b16 %v82
  %v407 = vunpack.c.l.b16 %v83
  %v408 = vunpack.c.l.b16 %v84
  %v409 = vunpack.c.l.b16 %v85
  %v410 = vunpack.c.l.b16 %v86
  %v411 = vunpack.c.l.b16 %v87
  %v412 = vunpack.c.l.b16 %v88
  %v413 = vunpack.c.l.b16 %v89
  %v414 = vunpack.c.l.b16 %v90
  %v415 = vunpack.c.l.b16 %v91
  %v416 = vunpack.c.l.b16 %v92
  %v417 = vunpack.c.l.b16 %v93
  %v418 = vunpack.c.l.b16 %v94
  %v419 = vunpack.c.l.b16 %v95
  %v420 = vunpack.c.l.b16 %v96
  %v421 = vunpack.c.l.b16 %v97
  %v422 = vunpack.c.l.b16 %v98
  %v423 = vunpack.c.l.b16 %v99
  %v424 = vunpack.c.l.b16 %v100
  %v425 = vunpack.c.l.b16 %v101
  %v426 = vunpack.c.l.b16 %v102
  %v427 = vunpack.c.l.b16 %v103
  %v428 = vunpack.c.l.b16 %v104
  %v429 = vunpack.c.l.b16 %v105
  %v430 = vunpack.c.l.b16 %v106
  %v431 = vunpack.c.l.b16 %v107
  %v432 = vunpack.c.l.b16 %v108
  %v433 = vunpack.c.l.b16 %v109
  %v434 = vunpack.c.l.b16 %v110
  %v435 = vunpack.c.l.b16 %v111
  %v436 = vunpack.c.l.b16 %v112
  %v437 = vunpack.c.l.b16 %v113
  %v438 = vunpack.c.l.b16 %v114
  %v439 = vunpack.c.l.b16 %v115
  %v440 = vunpack.c.l.b16 %v116
  %v441 = vunpack.c.l.b16 %v117
  %v442 = vunpack.c.l.b16 %v118
  %v443 = vunpack.c.l.b16 %v119
  %v444 = vunpack.c.l.b16 %v120
  %v445 = vunpack.c.l.b16 %v121
  %v446 = vunpack.c.l.b16 %v122
  %v447 = vunpack.c.l.b16 %v123
  %v448 = vunpack.c.l.b16 %v124
  %v449 = vunpack.c.l.b16 %v125
  %v450 = vunpack.c.l.b16 %v126
  %v451 = vunpack.c.l.b16 %v127
  %v452 = vunpack.c.l.b16 %v128
  %v453 = vunpack.c.l.b16 %v129
  %v454 = vunpack.c.l.b16 %v130
  %v455 = vunpack.c.l.b16 %v131
  %v456 = vunpack.c.l.b16 %v132
  %v457 = vunpack.c.l.b16 %v133
  %v458 = vunpack.c.l.b16 %v134
  %v459 = vunpack.c.l.b16 %v135
  %v460 = vunpack.c.l.b16 %v136
  %v461 = vunpack.c.l.b16 %v137
  %v462 = vunpack.c.l.b16 %v138
  %v463 = vunpack.c.l.b16 %v139
  %v464 = vunpack.c.l.b16 %v140
  %v465 = vunpack.c.l.b16 %v141
  %v466 = vunpack.c.l.b16 %v142
  %v467 = vunpack.c.l.b16 %v143
  %v468 = vunpack.c.l.b16 %v144
  %v469 = vunpack.c.l.b16 %v145
  %v470 = vunpack.c.l.b16 %v146
  %v471 = vunpack.c.l.b16 %v147
  %v472 = vunpack.c.l.b16 %v148
  %v473 = vunpack.c.l.b16 %v149
  %v474 = vunpack.c.l.b16 %v150
  %v475 = vunpack.c.l.b16 %v151
  %v476 = vunpack.c.l.b16 %v152
  %v477 = vunpack.c.l.b16 %v153
  %v478 = vunpack.c.l.b16 %v154
  %v479 = vunpack.c.l.b16 %v155
  %v480 = vunpack.c.l.b16 %v156
  %v481 = vunpack.c.l.b16 %v157
  %v482 = vunpack.c.l.b16 %v158
  %v483 = vunpack.c.l.b16 %v159
  %v484 = vunpack.c.l.b16 %v160
  %v485 = vunpack.c.l.b16 %v161
  %v486 = vunpack.c.l.b16 %v162
  %v487 = vpack.c.b16 %v344, %v343
  %v488 = vpack.c.b16 %v346, %v345
  %v489 = vpack.c.b16 %v348, %v347
  %v490 = vpack.c.b16 %v350, %v349
  %v491 = vpack.c.b16 %v352, %v351
  %v492 = vpack.c.b16 %v354, %v353
  %v493 = vpack.c.b16 %v356, %v355
  %v494 = vpack.c.b16 %v358, %v357
  %v495 = vpack.c.b16 %v360, %v359
  %v496 = vpack.c.b16 %v362, %v361
  %v497 = vpack.c.b16 %v364, %v363
  %v498 = vpack.c.b16 %v366, %v365
  %v499 = vpack.c.b16 %v368, %v367
  %v500 = vpack.c.b16 %v370, %v369
  %v501 = vpack.c.b16 %v372, %v371
  %v502 = vpack.c.b16 %v374, %v373
  %v503 = vpack.c.b16 %v376, %v375
  %v504 = vpack.c.b16 %v378, %v377
  %v505 = vpack.c.b16 %v380, %v379
  %v506 = vpack.c.b16 %v382, %v381
  %v507 = vpack.c.b16 %v384, %v383
  %v508 = vpack.c.b16 %v386, %v385
  %v509 = vpack.c.b16 %v388, %v387
  %v510 = vpack.c.b16 %v390, %v389
  %v511 = vpack.c.b16 %v392, %v391
  %v512 = vpack.c.b16 %v394, %v393
  %v513 = vpack.c.b16 %v396, %v395
  %v514 = vpack.c.b16 %v398, %v397
  %v515 = vpack.c.b16 %v400, %v399
  %v516 = vpack.c.b16 %v402, %v401
  %v517 = vpack.c.b16 %v404, %v403
  %v518 = vpack.c.b16 %v406, %v405
  %v519 = vpack.c.b16 %v408, %v407
  %v520 = vpack.c.b16 %v410, %v409
  %v521 = vpack.c.b16 %v412, %v411
  %v522 = vpack.c.b16 %v414, %v413
  %v523 = vpack.c.b16 %v416, %v415
  %v524 = vpack.c.b16 %v418, %v417
  %v525 = vpack.c.b16 %v420, %v419
  %v526 = vpack.c.b16 %v422, %v421
  %v527 = vpack.c.b16 %v424, %v423
  %v528 = vpack.c.b16 %v426, %v425
  %v529 = vpack.c.b16 %v428, %v427
  %v530 = vpack.c.b16 %v430, %v429
  %v531 = vpack.c.b16 %v432, %v431
  %v532 = vpack.c.b16 %v434, %v433
  %v533 = vpack.c.b16 %v436, %v435
  %v534 = vpack.c.b16 %v438, %v437
  %v535 = vpack.c.b16 %v440, %v439
  %v536 = vpack.c.b16 %v442, %v441
  %v537 = vpack.c.b16 %v444, %v443
  %v538 = vpack.c.b16 %v446, %v445
  %v539 = vpack.c.b16 %v448, %v447
  %v540 = vpack.c.b16 %v450, %v449
  %v541 = vpack.c.b16 %v452, %v451
  %v542 = vpack.c.b16 %v454, %v453
  %v543 = vpack.c.b16 %v456, %v455
  %v544 = vpack.c.b16 %v458, %v457
  %v545 = vpack.c.b16 %v460, %v459
  %v546 = vpack.c.b16 %v462, %v461
  %v547 = vpack.c.b16 %v464, %v463
  %v548 = vpack.c.b16 %v466, %v465
  %v549 = vpack.c.b16 %v468, %v467
  %v550 = vpack.c.b16 %v470, %v469
  %v551 = vpack.c.b16 %v472, %v471
  %v552 = vpack.c.b16 %v474, %v473
  %v553 = vpack.c.b16 %v476, %v475
  %v554 = vpack.c.b16 %v478, %v477
  %v555 = vpack.c.b16 %v480, %v479
  %v556 = vpack.c.b16 %v482, %v481
  %v557 = vpack.c.b16 %v484, %v483
  %v558 = vpack.c.b16 %v486, %v485
  %631 = vmatpush.bf16.msra.mxu0 %v494
  %632 = vmatpush.bf16.msra.mxu0 %v493
  %633 = vmatpush.bf16.msra.mxu0 %v492
  %634 = vmatpush.bf16.msra.mxu0 %v491
  %635 = vmatpush.bf16.msra.mxu0 %v490
  %636 = vmatpush.bf16.msra.mxu0 %v489
  %637 = vmatpush.bf16.msra.mxu0 %v488
  %638 = vmatpush.bf16.msra.mxu0 %v487
  %639 = vmatmul.bf16.gmra.mxu0 %v181
  %v640 = vpop.f32.mrf.mxu0
  %v641 = vadd.f32 %v165, %v640
  %v642 = vpop.f32.mrf.mxu0
  %643 = vdwg.mxu0
  %644 = vmatpush.bf16.msra.mxu0 %v502
  %645 = vmatpush.bf16.msra.mxu0 %v501
  %646 = vmatpush.bf16.msra.mxu0 %v500
  %647 = vmatpush.bf16.msra.mxu0 %v499
  %648 = vmatpush.bf16.msra.mxu0 %v498
  %649 = vmatpush.bf16.msra.mxu0 %v497
  %650 = vmatpush.bf16.msra.mxu0 %v496
  %651 = vmatpush.bf16.msra.mxu0 %v495
  %652 = vmatmul.bf16.gmra.mxu0 %v182
  %v653 = vpop.f32.mrf.mxu0
  %v654 = vadd.f32 %v641, %v653
  %v655 = vpop.f32.mrf.mxu0
  %656 = vdwg.mxu0
  %657 = vmatpush.bf16.msra.mxu0 %v510
  %658 = vmatpush.bf16.msra.mxu0 %v509
  %659 = vmatpush.bf16.msra.mxu0 %v508
  %660 = vmatpush.bf16.msra.mxu0 %v507
  %661 = vmatpush.bf16.msra.mxu0 %v506
  %662 = vmatpush.bf16.msra.mxu0 %v505
  %663 = vmatpush.bf16.msra.mxu0 %v504
  %664 = vmatpush.bf16.msra.mxu0 %v503
  %665 = vmatmul.bf16.gmra.mxu0 %v183
  %v666 = vpop.f32.mrf.mxu0
  %v667 = vadd.f32 %v654, %v666
  %v668 = vpop.f32.mrf.mxu0
  %669 = vdwg.mxu0
  %670 = vmatpush.bf16.msra.mxu0 %v518
  %671 = vmatpush.bf16.msra.mxu0 %v517
  %672 = vmatpush.bf16.msra.mxu0 %v516
  %673 = vmatpush.bf16.msra.mxu0 %v515
  %674 = vmatpush.bf16.msra.mxu0 %v514
  %675 = vmatpush.bf16.msra.mxu0 %v513
  %676 = vmatpush.bf16.msra.mxu0 %v512
  %677 = vmatpush.bf16.msra.mxu0 %v511
  %678 = vmatmul.bf16.gmra.mxu0 %v184
  %v679 = vpop.f32.mrf.mxu0
  %v680 = vadd.f32 %v667, %v679
  %v681 = vpop.f32.mrf.mxu0
  %682 = vdwg.mxu0
  %683 = vmatpush.bf16.msra.mxu0 %v526
  %684 = vmatpush.bf16.msra.mxu0 %v525
  %685 = vmatpush.bf16.msra.mxu0 %v524
  %686 = vmatpush.bf16.msra.mxu0 %v523
  %687 = vmatpush.bf16.msra.mxu0 %v522
  %688 = vmatpush.bf16.msra.mxu0 %v521
  %689 = vmatpush.bf16.msra.mxu0 %v520
  %690 = vmatpush.bf16.msra.mxu0 %v519
  %691 = vmatmul.bf16.gmra.mxu0 %v185
  %v692 = vpop.f32.mrf.mxu0
  %v693 = vadd.f32 %v680, %v692
  %v694 = vpop.f32.mrf.mxu0
  %695 = vdwg.mxu0
  %696 = vmatpush.bf16.msra.mxu0 %v534
  %697 = vmatpush.bf16.msra.mxu0 %v533
  %698 = vmatpush.bf16.msra.mxu0 %v532
  %699 = vmatpush.bf16.msra.mxu0 %v531
  %700 = vmatpush.bf16.msra.mxu0 %v530
  %701 = vmatpush.bf16.msra.mxu0 %v529
  %702 = vmatpush.bf16.msra.mxu0 %v528
  %703 = vmatpush.bf16.msra.mxu0 %v527
  %704 = vmatmul.bf16.gmra.mxu0 %v186
  %v705 = vpop.f32.mrf.mxu0
  %v706 = vadd.f32 %v693, %v705
  %v707 = vpop.f32.mrf.mxu0
  %708 = vdwg.mxu0
  %709 = vmatpush.bf16.msra.mxu0 %v542
  %710 = vmatpush.bf16.msra.mxu0 %v541
  %711 = vmatpush.bf16.msra.mxu0 %v540
  %712 = vmatpush.bf16.msra.mxu0 %v539
  %713 = vmatpush.bf16.msra.mxu0 %v538
  %714 = vmatpush.bf16.msra.mxu0 %v537
  %715 = vmatpush.bf16.msra.mxu0 %v536
  %716 = vmatpush.bf16.msra.mxu0 %v535
  %717 = vmatmul.bf16.gmra.mxu0 %v187
  %v718 = vpop.f32.mrf.mxu0
  %v719 = vadd.f32 %v706, %v718
  %v720 = vpop.f32.mrf.mxu0
  %721 = vdwg.mxu0
  %722 = vmatpush.bf16.msra.mxu0 %v550
  %723 = vmatpush.bf16.msra.mxu0 %v549
  %724 = vmatpush.bf16.msra.mxu0 %v548
  %725 = vmatpush.bf16.msra.mxu0 %v547
  %726 = vmatpush.bf16.msra.mxu0 %v546
  %727 = vmatpush.bf16.msra.mxu0 %v545
  %728 = vmatpush.bf16.msra.mxu0 %v544
  %729 = vmatpush.bf16.msra.mxu0 %v543
  %730 = vmatmul.bf16.gmra.mxu0 %v188
  %v731 = vpop.f32.mrf.mxu0
  %v732 = vadd.f32 %v719, %v731
  %v733 = vpop.f32.mrf.mxu0
  %734 = vdwg.mxu0
  %735 = vmatpush.bf16.msra.mxu0 %v558
  %736 = vmatpush.bf16.msra.mxu0 %v557
  %737 = vmatpush.bf16.msra.mxu0 %v556
  %738 = vmatpush.bf16.msra.mxu0 %v555
  %739 = vmatpush.bf16.msra.mxu0 %v554
  %740 = vmatpush.bf16.msra.mxu0 %v553
  %741 = vmatpush.bf16.msra.mxu0 %v552
  %742 = vmatpush.bf16.msra.mxu0 %v551
  %743 = vmatmul.bf16.gmra.mxu0 %v189
  %v744 = vpop.f32.mrf.mxu0
  %v745 = vadd.f32 %v732, %v744
  %v746 = vpop.f32.mrf.mxu0
  %747 = vdwg.mxu0
  %v748 = vmax.f32 %v745, 0.0
  %749 = vst [vmem:[%s3] sm:$0xff] %v748
  // Predicated region
  $region14: #{forward.34} parent=0 // pred_check
    _
  $region15: #{forward.34} parent=0 // pred_check_branch
    %751 = sbr.rel (0) target = $region17
  $region16: #{forward.34} parent=0 // pred_region
    _
  $region17: #{forward.34} parent=0 // pred_fallthru
    _
  // Predicated region
  $region18: #{forward.34} parent=0 // pred_check
    _
  $region19: #{forward.34} parent=0 // pred_check_branch
    %753 = sbr.rel (0) target = $region21
  $region20: #{forward.34} parent=0 // pred_region
    _
  $region21: #{forward.34} parent=0 // pred_fallthru
    _

// kernel: forward.35
$region0: #{forward.35}
  #allocation0 [shape = 'u32[]', space=smem, size = 0x4, offset = 0x4, fixed_abs, tag = 'smem constant byte address 0x4 - core index']
  #allocation1 [shape = 'u32[72,128]{1,0:T(1,128)}', space=vmem, size = 0x9000, scoped, tag = 'internal scratch']
  %s0 = inlined_call_operand.vmem [shape: bf16[8,1152], index: 0, kind: input, shape index: {}]
  %s1 = inlined_call_operand.vmem [shape: bf16[1152,128], index: 1, kind: input, shape index: {}]
  %s2 = inlined_call_operand.vmem [shape: f32[1,128], index: 2, kind: input, shape index: {}]
  %s3 = inlined_call_operand.vmem [shape: f32[8,128], index: 3, kind: input, shape index: {}]
  %s4 = inlined_call_operand.hbm [shape: f32[8,128], index: 4, kind: output, shape index: {}]
  %s5 = sld [smem:[#allocation0]]
  $region26: #{forward.35} parent=0
    _
  %s7 = ssub.s32 1, %s5
  %s8 = scalar_select 0, %s7, %s5
  $region1: #{forward.35} parent=0
    #allocation2 [shape = 'u8[4096]{0}', space=vmem, size = 0x1000, scoped, tag = 'output window, operand 0, single buffered']
    #allocation3 [shape = 's32[1]{0}', space=sflag, size = 0x4, scoped, tag = 'scoped memory for forward.35']
    %9 = vsyncpa [#allocation3], 0
    // Predicated region
    $region2: #{forward.35} parent=1 // pred_check
      _
    $region3: #{forward.35} parent=1 // pred_check_branch
      %11 = sbr.rel (0) target = $region5
    $region4: #{forward.35} parent=1 // pred_region
      _
    $region5: #{forward.35} parent=1 // pred_fallthru
      _
    // Predicated region
    $region6: #{forward.35} parent=1 // pred_check
      _
    $region7: #{forward.35} parent=1 // pred_check_branch
      %13 = sbr.rel (0) target = $region9
    $region8: #{forward.35} parent=1 // pred_region
      _
    $region9: #{forward.35} parent=1 // pred_fallthru
      _
    // Predicated region
    $region10: #{forward.35} parent=1 // pred_check
      _
    $region11: #{forward.35} parent=1 // pred_check_branch
      %15 = sbr.rel (0) target = $region13
    $region12: #{forward.35} parent=1 // pred_region
      _
    $region13: #{forward.35} parent=1 // pred_fallthru
      _
    // Predicated region
    $region14: #{forward.35} parent=1 // pred_check
      _
    $region15: #{forward.35} parent=1 // pred_check_branch
      %17 = sbr.rel (0) target = $region17
    $region16: #{forward.35} parent=1 // pred_region
      _
    $region17: #{forward.35} parent=1 // pred_fallthru
      _
    %v18 = vld [vmem:[%s0] sm:$0xff]
    %v19 = vld [vmem:[%s0 + $0x8] sm:$0xff]
    %v20 = vld [vmem:[%s0 + $0x10] sm:$0xff]
    %v21 = vld [vmem:[%s0 + $0x18] sm:$0xff]
    %v22 = vld [vmem:[%s0 + $0x20] sm:$0xf]
    %v23 = vld [vmem:[%s1] sm:$0xf]
    %v24 = vld [vmem:[%s1 + $0x4] sm:$0xf]
    %v25 = vld [vmem:[%s1 + $0x8] sm:$0xf]
    %v26 = vld [vmem:[%s1 + $0xc] sm:$0xf]
    %v27 = vld [vmem:[%s1 + $0x10] sm:$0xf]
    %v28 = vld [vmem:[%s1 + $0x14] sm:$0xf]
    %v29 = vld [vmem:[%s1 + $0x18] sm:$0xf]
    %v30 = vld [vmem:[%s1 + $0x1c] sm:$0xf]
    %v31 = vld [vmem:[%s1 + $0x20] sm:$0xf]
    %v32 = vld [vmem:[%s1 + $0x24] sm:$0xf]
    %v33 = vld [vmem:[%s1 + $0x28] sm:$0xf]
    %v34 = vld [vmem:[%s1 + $0x2c] sm:$0xf]
    %v35 = vld [vmem:[%s1 + $0x30] sm:$0xf]
    %v36 = vld [vmem:[%s1 + $0x34] sm:$0xf]
    %v37 = vld [vmem:[%s1 + $0x38] sm:$0xf]
    %v38 = vld [vmem:[%s1 + $0x3c] sm:$0xf]
    %v39 = vld [vmem:[%s1 + $0x40] sm:$0xf]
    %v40 = vld [vmem:[%s1 + $0x44] sm:$0xf]
    %v41 = vld [vmem:[%s1 + $0x48] sm:$0xf]
    %v42 = vld [vmem:[%s1 + $0x4c] sm:$0xf]
    %v43 = vld [vmem:[%s1 + $0x50] sm:$0xf]
    %v44 = vld [vmem:[%s1 + $0x54] sm:$0xf]
    %v45 = vld [vmem:[%s1 + $0x58] sm:$0xf]
    %v46 = vld [vmem:[%s1 + $0x5c] sm:$0xf]
    %v47 = vld [vmem:[%s1 + $0x60] sm:$0xf]
    %v48 = vld [vmem:[%s1 + $0x64] sm:$0xf]
    %v49 = vld [vmem:[%s1 + $0x68] sm:$0xf]
    %v50 = vld [vmem:[%s1 + $0x6c] sm:$0xf]
    %v51 = vld [vmem:[%s1 + $0x70] sm:$0xf]
    %v52 = vld [vmem:[%s1 + $0x74] sm:$0xf]
    %v53 = vld [vmem:[%s1 + $0x78] sm:$0xf]
    %v54 = vld [vmem:[%s1 + $0x7c] sm:$0xf]
    %v55 = vld [vmem:[%s1 + $0x80] sm:$0xf]
    %v56 = vld [vmem:[%s1 + $0x84] sm:$0xf]
    %v57 = vld [vmem:[%s1 + $0x88] sm:$0xf]
    %v58 = vld [vmem:[%s1 + $0x8c] sm:$0xf]
    %v59 = vld [vmem:[%s1 + $0x90] sm:$0xf]
    %v60 = vld [vmem:[%s1 + $0x94] sm:$0xf]
    %v61 = vld [vmem:[%s1 + $0x98] sm:$0xf]
    %v62 = vld [vmem:[%s1 + $0x9c] sm:$0xf]
    %v63 = vld [vmem:[%s1 + $0xa0] sm:$0xf]
    %v64 = vld [vmem:[%s1 + $0xa4] sm:$0xf]
    %v65 = vld [vmem:[%s1 + $0xa8] sm:$0xf]
    %v66 = vld [vmem:[%s1 + $0xac] sm:$0xf]
    %v67 = vld [vmem:[%s1 + $0xb0] sm:$0xf]
    %v68 = vld [vmem:[%s1 + $0xb4] sm:$0xf]
    %v69 = vld [vmem:[%s1 + $0xb8] sm:$0xf]
    %v70 = vld [vmem:[%s1 + $0xbc] sm:$0xf]
    %v71 = vld [vmem:[%s1 + $0xc0] sm:$0xf]
    %v72 = vld [vmem:[%s1 + $0xc4] sm:$0xf]
    %v73 = vld [vmem:[%s1 + $0xc8] sm:$0xf]
    %v74 = vld [vmem:[%s1 + $0xcc] sm:$0xf]
    %v75 = vld [vmem:[%s1 + $0xd0] sm:$0xf]
    %v76 = vld [vmem:[%s1 + $0xd4] sm:$0xf]
    %v77 = vld [vmem:[%s1 + $0xd8] sm:$0xf]
    %v78 = vld [vmem:[%s1 + $0xdc] sm:$0xf]
    %v79 = vld [vmem:[%s1 + $0xe0] sm:$0xf]
    %v80 = vld [vmem:[%s1 + $0xe4] sm:$0xf]
    %v81 = vld [vmem:[%s1 + $0xe8] sm:$0xf]
    %v82 = vld [vmem:[%s1 + $0xec] sm:$0xf]
    %v83 = vld [vmem:[%s1 + $0xf0] sm:$0xf]
    %v84 = vld [vmem:[%s1 + $0xf4] sm:$0xf]
    %v85 = vld [vmem:[%s1 + $0xf8] sm:$0xf]
    %v86 = vld [vmem:[%s1 + $0xfc] sm:$0xf]
    %v87 = vld [vmem:[%s1 + $0x100] sm:$0xf]
    %v88 = vld [vmem:[%s1 + $0x104] sm:$0xf]
    %v89 = vld [vmem:[%s1 + $0x108] sm:$0xf]
    %v90 = vld [vmem:[%s1 + $0x10c] sm:$0xf]
    %v91 = vld [vmem:[%s1 + $0x110] sm:$0xf]
    %v92 = vld [vmem:[%s1 + $0x114] sm:$0xf]
    %v93 = vld [vmem:[%s1 + $0x118] sm:$0xf]
    %v94 = vld [vmem:[%s1 + $0x11c] sm:$0xf]
    %v95 = vld [vmem:[%s1 + $0x120] sm:$0xf]
    %v96 = vld [vmem:[%s1 + $0x124] sm:$0xf]
    %v97 = vld [vmem:[%s1 + $0x128] sm:$0xf]
    %v98 = vld [vmem:[%s1 + $0x12c] sm:$0xf]
    %v99 = vld [vmem:[%s1 + $0x130] sm:$0xf]
    %v100 = vld [vmem:[%s1 + $0x134] sm:$0xf]
    %v101 = vld [vmem:[%s1 + $0x138] sm:$0xf]
    %v102 = vld [vmem:[%s1 + $0x13c] sm:$0xf]
    %v103 = vld [vmem:[%s1 + $0x140] sm:$0xf]
    %v104 = vld [vmem:[%s1 + $0x144] sm:$0xf]
    %v105 = vld [vmem:[%s1 + $0x148] sm:$0xf]
    %v106 = vld [vmem:[%s1 + $0x14c] sm:$0xf]
    %v107 = vld [vmem:[%s1 + $0x150] sm:$0xf]
    %v108 = vld [vmem:[%s1 + $0x154] sm:$0xf]
    %v109 = vld [vmem:[%s1 + $0x158] sm:$0xf]
    %v110 = vld [vmem:[%s1 + $0x15c] sm:$0xf]
    %v111 = vld [vmem:[%s1 + $0x160] sm:$0xf]
    %v112 = vld [vmem:[%s1 + $0x164] sm:$0xf]
    %v113 = vld [vmem:[%s1 + $0x168] sm:$0xf]
    %v114 = vld [vmem:[%s1 + $0x16c] sm:$0xf]
    %v115 = vld [vmem:[%s1 + $0x170] sm:$0xf]
    %v116 = vld [vmem:[%s1 + $0x174] sm:$0xf]
    %v117 = vld [vmem:[%s1 + $0x178] sm:$0xf]
    %v118 = vld [vmem:[%s1 + $0x17c] sm:$0xf]
    %v119 = vld [vmem:[%s1 + $0x180] sm:$0xf]
    %v120 = vld [vmem:[%s1 + $0x184] sm:$0xf]
    %v121 = vld [vmem:[%s1 + $0x188] sm:$0xf]
    %v122 = vld [vmem:[%s1 + $0x18c] sm:$0xf]
    %v123 = vld [vmem:[%s1 + $0x190] sm:$0xf]
    %v124 = vld [vmem:[%s1 + $0x194] sm:$0xf]
    %v125 = vld [vmem:[%s1 + $0x198] sm:$0xf]
    %v126 = vld [vmem:[%s1 + $0x19c] sm:$0xf]
    %v127 = vld [vmem:[%s1 + $0x1a0] sm:$0xf]
    %v128 = vld [vmem:[%s1 + $0x1a4] sm:$0xf]
    %v129 = vld [vmem:[%s1 + $0x1a8] sm:$0xf]
    %v130 = vld [vmem:[%s1 + $0x1ac] sm:$0xf]
    %v131 = vld [vmem:[%s1 + $0x1b0] sm:$0xf]
    %v132 = vld [vmem:[%s1 + $0x1b4] sm:$0xf]
    %v133 = vld [vmem:[%s1 + $0x1b8] sm:$0xf]
    %v134 = vld [vmem:[%s1 + $0x1bc] sm:$0xf]
    %v135 = vld [vmem:[%s1 + $0x1c0] sm:$0xf]
    %v136 = vld [vmem:[%s1 + $0x1c4] sm:$0xf]
    %v137 = vld [vmem:[%s1 + $0x1c8] sm:$0xf]
    %v138 = vld [vmem:[%s1 + $0x1cc] sm:$0xf]
    %v139 = vld [vmem:[%s1 + $0x1d0] sm:$0xf]
    %v140 = vld [vmem:[%s1 + $0x1d4] sm:$0xf]
    %v141 = vld [vmem:[%s1 + $0x1d8] sm:$0xf]
    %v142 = vld [vmem:[%s1 + $0x1dc] sm:$0xf]
    %v143 = vld [vmem:[%s1 + $0x1e0] sm:$0xf]
    %v144 = vld [vmem:[%s1 + $0x1e4] sm:$0xf]
    %v145 = vld [vmem:[%s1 + $0x1e8] sm:$0xf]
    %v146 = vld [vmem:[%s1 + $0x1ec] sm:$0xf]
    %v147 = vld [vmem:[%s1 + $0x1f0] sm:$0xf]
    %v148 = vld [vmem:[%s1 + $0x1f4] sm:$0xf]
    %v149 = vld [vmem:[%s1 + $0x1f8] sm:$0xf]
    %v150 = vld [vmem:[%s1 + $0x1fc] sm:$0xf]
    %v151 = vld [vmem:[%s1 + $0x200] sm:$0xf]
    %v152 = vld [vmem:[%s1 + $0x204] sm:$0xf]
    %v153 = vld [vmem:[%s1 + $0x208] sm:$0xf]
    %v154 = vld [vmem:[%s1 + $0x20c] sm:$0xf]
    %v155 = vld [vmem:[%s1 + $0x210] sm:$0xf]
    %v156 = vld [vmem:[%s1 + $0x214] sm:$0xf]
    %v157 = vld [vmem:[%s1 + $0x218] sm:$0xf]
    %v158 = vld [vmem:[%s1 + $0x21c] sm:$0xf]
    %v159 = vld [vmem:[%s1 + $0x220] sm:$0xf]
    %v160 = vld [vmem:[%s1 + $0x224] sm:$0xf]
    %v161 = vld [vmem:[%s1 + $0x228] sm:$0xf]
    %v162 = vld [vmem:[%s1 + $0x22c] sm:$0xf]
    %v163 = vld [vmem:[%s1 + $0x230] sm:$0xf]
    %v164 = vld [vmem:[%s1 + $0x234] sm:$0xf]
    %v165 = vld [vmem:[%s1 + $0x238] sm:$0xf]
    %v166 = vld [vmem:[%s1 + $0x23c] sm:$0xf]
    %v167 = vld [vmem:[%s2] sm:$0x1]
    %v169 = vperm.slane %v167, 0
    %v176 = vunpack.c.l.b16 %v18
    %v177 = vunpack.c.h.b16 %v18
    %v178 = vunpack.c.l.b16 %v19
    %v179 = vunpack.c.h.b16 %v19
    %v180 = vunpack.c.l.b16 %v20
    %v181 = vunpack.c.h.b16 %v20
    %v182 = vunpack.c.l.b16 %v21
    %v183 = vunpack.c.h.b16 %v21
    %v184 = vunpack.c.l.b16 %v22
    %v185 = vpack.c.b16 %v176, %v176
    %v186 = vpack.c.b16 %v177, %v177
    %v187 = vpack.c.b16 %v178, %v178
    %v188 = vpack.c.b16 %v179, %v179
    %v189 = vpack.c.b16 %v180, %v180
    %v190 = vpack.c.b16 %v181, %v181
    %v191 = vpack.c.b16 %v182, %v182
    %v192 = vpack.c.b16 %v183, %v183
    %v193 = vpack.c.b16 %v184, %v184
    %v347 = vunpack.c.l.b16 %v23
    %v348 = vunpack.c.l.b16 %v24
    %v349 = vunpack.c.l.b16 %v25
    %v350 = vunpack.c.l.b16 %v26
    %v351 = vunpack.c.l.b16 %v27
    %v352 = vunpack.c.l.b16 %v28
    %v353 = vunpack.c.l.b16 %v29
    %v354 = vunpack.c.l.b16 %v30
    %v355 = vunpack.c.l.b16 %v31
    %v356 = vunpack.c.l.b16 %v32
    %v357 = vunpack.c.l.b16 %v33
    %v358 = vunpack.c.l.b16 %v34
    %v359 = vunpack.c.l.b16 %v35
    %v360 = vunpack.c.l.b16 %v36
    %v361 = vunpack.c.l.b16 %v37
    %v362 = vunpack.c.l.b16 %v38
    %v363 = vunpack.c.l.b16 %v39
    %v364 = vunpack.c.l.b16 %v40
    %v365 = vunpack.c.l.b16 %v41
    %v366 = vunpack.c.l.b16 %v42
    %v367 = vunpack.c.l.b16 %v43
    %v368 = vunpack.c.l.b16 %v44
    %v369 = vunpack.c.l.b16 %v45
    %v370 = vunpack.c.l.b16 %v46
    %v371 = vunpack.c.l.b16 %v47
    %v372 = vunpack.c.l.b16 %v48
    %v373 = vunpack.c.l.b16 %v49
    %v374 = vunpack.c.l.b16 %v50
    %v375 = vunpack.c.l.b16 %v51
    %v376 = vunpack.c.l.b16 %v52
    %v377 = vunpack.c.l.b16 %v53
    %v378 = vunpack.c.l.b16 %v54
    %v379 = vunpack.c.l.b16 %v55
    %v380 = vunpack.c.l.b16 %v56
    %v381 = vunpack.c.l.b16 %v57
    %v382 = vunpack.c.l.b16 %v58
    %v383 = vunpack.c.l.b16 %v59
    %v384 = vunpack.c.l.b16 %v60
    %v385 = vunpack.c.l.b16 %v61
    %v386 = vunpack.c.l.b16 %v62
    %v387 = vunpack.c.l.b16 %v63
    %v388 = vunpack.c.l.b16 %v64
    %v389 = vunpack.c.l.b16 %v65
    %v390 = vunpack.c.l.b16 %v66
    %v391 = vunpack.c.l.b16 %v67
    %v392 = vunpack.c.l.b16 %v68
    %v393 = vunpack.c.l.b16 %v69
    %v394 = vunpack.c.l.b16 %v70
    %v395 = vunpack.c.l.b16 %v71
    %v396 = vunpack.c.l.b16 %v72
    %v397 = vunpack.c.l.b16 %v73
    %v398 = vunpack.c.l.b16 %v74
    %v399 = vunpack.c.l.b16 %v75
    %v400 = vunpack.c.l.b16 %v76
    %v401 = vunpack.c.l.b16 %v77
    %v402 = vunpack.c.l.b16 %v78
    %v403 = vunpack.c.l.b16 %v79
    %v404 = vunpack.c.l.b16 %v80
    %v405 = vunpack.c.l.b16 %v81
    %v406 = vunpack.c.l.b16 %v82
    %v407 = vunpack.c.l.b16 %v83
    %v408 = vunpack.c.l.b16 %v84
    %v409 = vunpack.c.l.b16 %v85
    %v410 = vunpack.c.l.b16 %v86
    %v411 = vunpack.c.l.b16 %v87
    %v412 = vunpack.c.l.b16 %v88
    %v413 = vunpack.c.l.b16 %v89
    %v414 = vunpack.c.l.b16 %v90
    %v415 = vunpack.c.l.b16 %v91
    %v416 = vunpack.c.l.b16 %v92
    %v417 = vunpack.c.l.b16 %v93
    %v418 = vunpack.c.l.b16 %v94
    %v419 = vunpack.c.l.b16 %v95
    %v420 = vunpack.c.l.b16 %v96
    %v421 = vunpack.c.l.b16 %v97
    %v422 = vunpack.c.l.b16 %v98
    %v423 = vunpack.c.l.b16 %v99
    %v424 = vunpack.c.l.b16 %v100
    %v425 = vunpack.c.l.b16 %v101
    %v426 = vunpack.c.l.b16 %v102
    %v427 = vunpack.c.l.b16 %v103
    %v428 = vunpack.c.l.b16 %v104
    %v429 = vunpack.c.l.b16 %v105
    %v430 = vunpack.c.l.b16 %v106
    %v431 = vunpack.c.l.b16 %v107
    %v432 = vunpack.c.l.b16 %v108
    %v433 = vunpack.c.l.b16 %v109
    %v434 = vunpack.c.l.b16 %v110
    %v435 = vunpack.c.l.b16 %v111
    %v436 = vunpack.c.l.b16 %v112
    %v437 = vunpack.c.l.b16 %v113
    %v438 = vunpack.c.l.b16 %v114
    %v439 = vunpack.c.l.b16 %v115
    %v440 = vunpack.c.l.b16 %v116
    %v441 = vunpack.c.l.b16 %v117
    %v442 = vunpack.c.l.b16 %v118
    %v443 = vunpack.c.l.b16 %v119
    %v444 = vunpack.c.l.b16 %v120
    %v445 = vunpack.c.l.b16 %v121
    %v446 = vunpack.c.l.b16 %v122
    %v447 = vunpack.c.l.b16 %v123
    %v448 = vunpack.c.l.b16 %v124
    %v449 = vunpack.c.l.b16 %v125
    %v450 = vunpack.c.l.b16 %v126
    %v451 = vunpack.c.l.b16 %v127
    %v452 = vunpack.c.l.b16 %v128
    %v453 = vunpack.c.l.b16 %v129
    %v454 = vunpack.c.l.b16 %v130
    %v455 = vunpack.c.l.b16 %v131
    %v456 = vunpack.c.l.b16 %v132
    %v457 = vunpack.c.l.b16 %v133
    %v458 = vunpack.c.l.b16 %v134
    %v459 = vunpack.c.l.b16 %v135
    %v460 = vunpack.c.l.b16 %v136
    %v461 = vunpack.c.l.b16 %v137
    %v462 = vunpack.c.l.b16 %v138
    %v463 = vunpack.c.l.b16 %v139
    %v464 = vunpack.c.l.b16 %v140
    %v465 = vunpack.c.l.b16 %v141
    %v466 = vunpack.c.l.b16 %v142
    %v467 = vunpack.c.l.b16 %v143
    %v468 = vunpack.c.l.b16 %v144
    %v469 = vunpack.c.l.b16 %v145
    %v470 = vunpack.c.l.b16 %v146
    %v471 = vunpack.c.l.b16 %v147
    %v472 = vunpack.c.l.b16 %v148
    %v473 = vunpack.c.l.b16 %v149
    %v474 = vunpack.c.l.b16 %v150
    %v475 = vunpack.c.l.b16 %v151
    %v476 = vunpack.c.l.b16 %v152
    %v477 = vunpack.c.l.b16 %v153
    %v478 = vunpack.c.l.b16 %v154
    %v479 = vunpack.c.l.b16 %v155
    %v480 = vunpack.c.l.b16 %v156
    %v481 = vunpack.c.l.b16 %v157
    %v482 = vunpack.c.l.b16 %v158
    %v483 = vunpack.c.l.b16 %v159
    %v484 = vunpack.c.l.b16 %v160
    %v485 = vunpack.c.l.b16 %v161
    %v486 = vunpack.c.l.b16 %v162
    %v487 = vunpack.c.l.b16 %v163
    %v488 = vunpack.c.l.b16 %v164
    %v489 = vunpack.c.l.b16 %v165
    %v490 = vunpack.c.l.b16 %v166
    %v491 = vpack.c.b16 %v348, %v347
    %v492 = vpack.c.b16 %v350, %v349
    %v493 = vpack.c.b16 %v352, %v351
    %v494 = vpack.c.b16 %v354, %v353
    %v495 = vpack.c.b16 %v356, %v355
    %v496 = vpack.c.b16 %v358, %v357
    %v497 = vpack.c.b16 %v360, %v359
    %v498 = vpack.c.b16 %v362, %v361
    %v499 = vpack.c.b16 %v364, %v363
    %v500 = vpack.c.b16 %v366, %v365
    %v501 = vpack.c.b16 %v368, %v367
    %v502 = vpack.c.b16 %v370, %v369
    %v503 = vpack.c.b16 %v372, %v371
    %v504 = vpack.c.b16 %v374, %v373
    %v505 = vpack.c.b16 %v376, %v375
    %v506 = vpack.c.b16 %v378, %v377
    %v507 = vpack.c.b16 %v380, %v379
    %v508 = vpack.c.b16 %v382, %v381
    %v509 = vpack.c.b16 %v384, %v383
    %v510 = vpack.c.b16 %v386, %v385
    %v511 = vpack.c.b16 %v388, %v387
    %v512 = vpack.c.b16 %v390, %v389
    %v513 = vpack.c.b16 %v392, %v391
    %v514 = vpack.c.b16 %v394, %v393
    %v515 = vpack.c.b16 %v396, %v395
    %v516 = vpack.c.b16 %v398, %v397
    %v517 = vpack.c.b16 %v400, %v399
    %v518 = vpack.c.b16 %v402, %v401
    %v519 = vpack.c.b16 %v404, %v403
    %v520 = vpack.c.b16 %v406, %v405
    %v521 = vpack.c.b16 %v408, %v407
    %v522 = vpack.c.b16 %v410, %v409
    %v523 = vpack.c.b16 %v412, %v411
    %v524 = vpack.c.b16 %v414, %v413
    %v525 = vpack.c.b16 %v416, %v415
    %v526 = vpack.c.b16 %v418, %v417
    %v527 = vpack.c.b16 %v420, %v419
    %v528 = vpack.c.b16 %v422, %v421
    %v529 = vpack.c.b16 %v424, %v423
    %v530 = vpack.c.b16 %v426, %v425
    %v531 = vpack.c.b16 %v428, %v427
    %v532 = vpack.c.b16 %v430, %v429
    %v533 = vpack.c.b16 %v432, %v431
    %v534 = vpack.c.b16 %v434, %v433
    %v535 = vpack.c.b16 %v436, %v435
    %v536 = vpack.c.b16 %v438, %v437
    %v537 = vpack.c.b16 %v440, %v439
    %v538 = vpack.c.b16 %v442, %v441
    %v539 = vpack.c.b16 %v444, %v443
    %v540 = vpack.c.b16 %v446, %v445
    %v541 = vpack.c.b16 %v448, %v447
    %v542 = vpack.c.b16 %v450, %v449
    %v543 = vpack.c.b16 %v452, %v451
    %v544 = vpack.c.b16 %v454, %v453
    %v545 = vpack.c.b16 %v456, %v455
    %v546 = vpack.c.b16 %v458, %v457
    %v547 = vpack.c.b16 %v460, %v459
    %v548 = vpack.c.b16 %v462, %v461
    %v549 = vpack.c.b16 %v464, %v463
    %v550 = vpack.c.b16 %v466, %v465
    %v551 = vpack.c.b16 %v468, %v467
    %v552 = vpack.c.b16 %v470, %v469
    %v553 = vpack.c.b16 %v472, %v471
    %v554 = vpack.c.b16 %v474, %v473
    %v555 = vpack.c.b16 %v476, %v475
    %v556 = vpack.c.b16 %v478, %v477
    %v557 = vpack.c.b16 %v480, %v479
    %v558 = vpack.c.b16 %v482, %v481
    %v559 = vpack.c.b16 %v484, %v483
    %v560 = vpack.c.b16 %v486, %v485
    %v561 = vpack.c.b16 %v488, %v487
    %v562 = vpack.c.b16 %v490, %v489
    %635 = vmatpush.bf16.msra.mxu0 %v498
    %636 = vmatpush.bf16.msra.mxu0 %v497
    %637 = vmatpush.bf16.msra.mxu0 %v496
    %638 = vmatpush.bf16.msra.mxu0 %v495
    %639 = vmatpush.bf16.msra.mxu0 %v494
    %640 = vmatpush.bf16.msra.mxu0 %v493
    %641 = vmatpush.bf16.msra.mxu0 %v492
    %642 = vmatpush.bf16.msra.mxu0 %v491
    %643 = vmatmul.bf16.gmra.mxu0 %v185
    %v644 = vpop.f32.mrf.mxu0
    %v645 = vadd.f32 %v169, %v644
    %v646 = vpop.f32.mrf.mxu0
    %647 = vdwg.mxu0
    %648 = vmatpush.bf16.msra.mxu0 %v506
    %649 = vmatpush.bf16.msra.mxu0 %v505
    %650 = vmatpush.bf16.msra.mxu0 %v504
    %651 = vmatpush.bf16.msra.mxu0 %v503
    %652 = vmatpush.bf16.msra.mxu0 %v502
    %653 = vmatpush.bf16.msra.mxu0 %v501
    %654 = vmatpush.bf16.msra.mxu0 %v500
    %655 = vmatpush.bf16.msra.mxu0 %v499
    %656 = vmatmul.bf16.gmra.mxu0 %v186
    %v657 = vpop.f32.mrf.mxu0
    %v658 = vadd.f32 %v645, %v657
    %v659 = vpop.f32.mrf.mxu0
    %660 = vdwg.mxu0
    %661 = vmatpush.bf16.msra.mxu0 %v514
    %662 = vmatpush.bf16.msra.mxu0 %v513
    %663 = vmatpush.bf16.msra.mxu0 %v512
    %664 = vmatpush.bf16.msra.mxu0 %v511
    %665 = vmatpush.bf16.msra.mxu0 %v510
    %666 = vmatpush.bf16.msra.mxu0 %v509
    %667 = vmatpush.bf16.msra.mxu0 %v508
    %668 = vmatpush.bf16.msra.mxu0 %v507
    %669 = vmatmul.bf16.gmra.mxu0 %v187
    %v670 = vpop.f32.mrf.mxu0
    %v671 = vadd.f32 %v658, %v670
    %v672 = vpop.f32.mrf.mxu0
    %673 = vdwg.mxu0
    %674 = vmatpush.bf16.msra.mxu0 %v522
    %675 = vmatpush.bf16.msra.mxu0 %v521
    %676 = vmatpush.bf16.msra.mxu0 %v520
    %677 = vmatpush.bf16.msra.mxu0 %v519
    %678 = vmatpush.bf16.msra.mxu0 %v518
    %679 = vmatpush.bf16.msra.mxu0 %v517
    %680 = vmatpush.bf16.msra.mxu0 %v516
    %681 = vmatpush.bf16.msra.mxu0 %v515
    %682 = vmatmul.bf16.gmra.mxu0 %v188
    %v683 = vpop.f32.mrf.mxu0
    %v684 = vadd.f32 %v671, %v683
    %v685 = vpop.f32.mrf.mxu0
    %686 = vdwg.mxu0
    %687 = vmatpush.bf16.msra.mxu0 %v530
    %688 = vmatpush.bf16.msra.mxu0 %v529
    %689 = vmatpush.bf16.msra.mxu0 %v528
    %690 = vmatpush.bf16.msra.mxu0 %v527
    %691 = vmatpush.bf16.msra.mxu0 %v526
    %692 = vmatpush.bf16.msra.mxu0 %v525
    %693 = vmatpush.bf16.msra.mxu0 %v524
    %694 = vmatpush.bf16.msra.mxu0 %v523
    %695 = vmatmul.bf16.gmra.mxu0 %v189
    %v696 = vpop.f32.mrf.mxu0
    %v697 = vadd.f32 %v684, %v696
    %v698 = vpop.f32.mrf.mxu0
    %699 = vdwg.mxu0
    %700 = vmatpush.bf16.msra.mxu0 %v538
    %701 = vmatpush.bf16.msra.mxu0 %v537
    %702 = vmatpush.bf16.msra.mxu0 %v536
    %703 = vmatpush.bf16.msra.mxu0 %v535
    %704 = vmatpush.bf16.msra.mxu0 %v534
    %705 = vmatpush.bf16.msra.mxu0 %v533
    %706 = vmatpush.bf16.msra.mxu0 %v532
    %707 = vmatpush.bf16.msra.mxu0 %v531
    %708 = vmatmul.bf16.gmra.mxu0 %v190
    %v709 = vpop.f32.mrf.mxu0
    %v710 = vadd.f32 %v697, %v709
    %v711 = vpop.f32.mrf.mxu0
    %712 = vdwg.mxu0
    %713 = vmatpush.bf16.msra.mxu0 %v546
    %714 = vmatpush.bf16.msra.mxu0 %v545
    %715 = vmatpush.bf16.msra.mxu0 %v544
    %716 = vmatpush.bf16.msra.mxu0 %v543
    %717 = vmatpush.bf16.msra.mxu0 %v542
    %718 = vmatpush.bf16.msra.mxu0 %v541
    %719 = vmatpush.bf16.msra.mxu0 %v540
    %720 = vmatpush.bf16.msra.mxu0 %v539
    %721 = vmatmul.bf16.gmra.mxu0 %v191
    %v722 = vpop.f32.mrf.mxu0
    %v723 = vadd.f32 %v710, %v722
    %v724 = vpop.f32.mrf.mxu0
    %725 = vdwg.mxu0
    %726 = vmatpush.bf16.msra.mxu0 %v554
    %727 = vmatpush.bf16.msra.mxu0 %v553
    %728 = vmatpush.bf16.msra.mxu0 %v552
    %729 = vmatpush.bf16.msra.mxu0 %v551
    %730 = vmatpush.bf16.msra.mxu0 %v550
    %731 = vmatpush.bf16.msra.mxu0 %v549
    %732 = vmatpush.bf16.msra.mxu0 %v548
    %733 = vmatpush.bf16.msra.mxu0 %v547
    %734 = vmatmul.bf16.gmra.mxu0 %v192
    %v735 = vpop.f32.mrf.mxu0
    %v736 = vadd.f32 %v723, %v735
    %v737 = vpop.f32.mrf.mxu0
    %738 = vdwg.mxu0
    %739 = vmatpush.bf16.msra.mxu0 %v562
    %740 = vmatpush.bf16.msra.mxu0 %v561
    %741 = vmatpush.bf16.msra.mxu0 %v560
    %742 = vmatpush.bf16.msra.mxu0 %v559
    %743 = vmatpush.bf16.msra.mxu0 %v558
    %744 = vmatpush.bf16.msra.mxu0 %v557
    %745 = vmatpush.bf16.msra.mxu0 %v556
    %746 = vmatpush.bf16.msra.mxu0 %v555
    %747 = vmatmul.bf16.gmra.mxu0 %v193
    %v748 = vpop.f32.mrf.mxu0
    %v749 = vadd.f32 %v736, %v748
    %v750 = vpop.f32.mrf.mxu0
    %751 = vdwg.mxu0
    %v752 = vld [vmem:[%s3] sm:$0xff]
    %v753 = vadd.f32 %v749, %v752
    %v754 = vmax.f32 %v753, 0.0
    %755 = vst [vmem:[#allocation2] sm:$0xff] %v754
    // Predicated region
    $region18: #{forward.35} parent=1 // pred_check
      _
    $region19: #{forward.35} parent=1 // pred_check_branch
      %757 = sbr.rel (0) target = $region21
    $region20: #{forward.35} parent=1 // pred_region
      %759 = vsyncadd [#allocation3], 0
      %s761 = sshll.u32 [#allocation2], 4
      %s762 = int_to_ptr.vmem [resolvable:$true] %s761
      %s763 = sshll.u32 %s4, 4
      %s764 = int_to_ptr.hbm [resolvable:$true] %s763
      %766 = dma.vmem_to_hbm [thread:$0]  %s762, 128, %s764, [#allocation3]
    $region21: #{forward.35} parent=1 // pred_fallthru
      _
    // Predicated region
    $region22: #{forward.35} parent=1 // pred_check
      _
    $region23: #{forward.35} parent=1 // pred_check_branch
      %768 = sbr.rel (0) target = $region25
    $region24: #{forward.35} parent=1 // pred_region
      %770 = dma.done [#allocation3], 128
    $region25: #{forward.35} parent=1 // pred_fallthru
      _
    %771 = vsyncpa [#allocation3], 1

</llo_original>
